<compile_context>
chip_gen: v6e
topology: v6e:2x2x1
jax: 0.10.0
libtpu: 0.0.40
codegen_flags: <defaults>
</compile_context>

<pallas_src>
import jax
import jax.numpy as jnp
import numpy as np
from jax import lax
from jax.experimental import pallas as pl
from jax.experimental.pallas import tpu as pltpu

# ----- model shape constants (layer_num=1, fac=1, num_attacks=3) ----------- #
B = 2                                  # batch
CIN, H, W = 96, 10, 10                 # conv2 input (NCHW)
COUT, K = 64, 5                        # conv2 output channels, kernel size
PAD = 2
HP, WP = H + 2 * PAD, W + 2 * PAD      # 14 x 14 zero-padded
PH, PW = H // 2, W // 2                # 5 x 5 after 2x2 max-pool
FLAT = COUT * PH * PW                  # 1600
F1, F2, F3 = 120, 84, 3
F1P = F2P = F3P = 128                  # lane-padded fc widths

# ----- kernel layout constants --------------------------------------------- #
RACC = 336                             # conv rows covering all valid (b,h,w) outputs
RA1 = RACC + 8                         # rows for shift-1 packed pairs (needs RACC+1)
RA14 = RACC + 16                       # rows for shift-14 packed pairs (needs RACC+14)
RIN = 408                              # padded raster-input rows
PCHUNK = 56                            # rows per pool-offset chunk (B*PH*PW=50 -> 56)

# tap packing: pairs (kh, kw0)+(kh, kw0+1) -> shift 1;  leftover kw=4 taps paired
# across kh -> shift 14;  tap (4,4) stays single.
OFFS1 = [kh * WP + kw0 for kh in range(K) for kw0 in (0, 2)]     # 10 offsets
OFFS14 = [0 * WP + 4, 2 * WP + 4]                                # [4, 32]
OFF_S = (K - 1) * WP + (K - 1)                                   # 60

assert RIN >= max(OFFS1) + RA1 and RIN >= max(OFFS14) + RA14 and RIN >= OFF_S + RACC
assert RA1 >= RACC + 1 and RA14 >= RACC + WP
assert RACC >= (B - 1) * HP * WP + (H - 1) * WP + (W - 1) + 1    # valid rows covered
assert PCHUNK >= B * PH * PW


# ------------------------------ fused kernel ------------------------------- #

def fused_kernel(x2_ref, wcp1_ref, wcp14_ref, wcs_ref, bc_ref, sel_hbm, w1_hbm,
                 b1_ref, w2_ref, b2_ref, w3_ref, b3_ref, out_ref,
                 acc_a_scr, acc_b_scr, flat_scr, sel_vmem, w1_vmem, dma_sem):
    f32 = jnp.float32

    # Kick off the copies of the late-stage operands (pooling gather matrix and
    # fc1 weight, ~560 KB) so they hide behind the conv matmuls.
    sel_cp = pltpu.make_async_copy(sel_hbm, sel_vmem, dma_sem.at[0])
    w1_cp = pltpu.make_async_copy(w1_hbm, w1_vmem, dma_sem.at[1])
    sel_cp.start()
    w1_cp.start()

    # ---- conv2: 13 lane-packed, row-shifted matmuls (bf16 in, f32 accumulate)
    # x2 rows are raster-ordered: row = b*HP*WP + hp*WP + wp, so output row r
    # (= b*196 + h*14 + w) at tap offset (kh,kw) reads input row r + kh*14 + kw.
    # Each packed RHS holds two taps in lanes [0:64] / [64:128]; the second
    # tap's contribution lands `shift` rows later and is folded back below.
    acc_a = jnp.dot(x2_ref[OFFS1[0]:OFFS1[0] + RA1, :], wcp1_ref[0],
                    preferred_element_type=f32)
    for i in range(1, len(OFFS1)):                       # static, unrolled
        o = OFFS1[i]
        acc_a = acc_a + jnp.dot(x2_ref[o:o + RA1, :], wcp1_ref[i],
                                preferred_element_type=f32)
    acc_a_scr[...] = acc_a                               # (RA1, 128) f32, one store

    acc_b = jnp.dot(x2_ref[OFFS14[0]:OFFS14[0] + RA14, :], wcp14_ref[0],
                    preferred_element_type=f32)
    acc_b = acc_b + jnp.dot(x2_ref[OFFS14[1]:OFFS14[1] + RA14, :], wcp14_ref[1],
                            preferred_element_type=f32)
    acc_b_scr[...] = acc_b                               # (RA14, 128) f32

    acc_s = jnp.dot(x2_ref[OFF_S:OFF_S + RACC, :], wcs_ref[...],
                    preferred_element_type=f32)          # (RACC, 64) f32

    # Fold the packed lanes back onto the 64 output channels (one-time slices).
    conv = (acc_a_scr[0:RACC, 0:COUT] + acc_a_scr[1:RACC + 1, COUT:2 * COUT]
            + acc_b_scr[0:RACC, 0:COUT] + acc_b_scr[WP:RACC + WP, COUT:2 * COUT]
            + acc_s).astype(jnp.bfloat16)                # (RACC, 64)

    # ---- bias + ReLU + 2x2 max-pool via a 0/1 selection matmul --------------
    sel_cp.wait()
    g = jnp.dot(sel_vmem[...], conv, preferred_element_type=f32)     # (4*PCHUNK, 64)
    p = jnp.maximum(jnp.maximum(g[0:PCHUNK], g[PCHUNK:2 * PCHUNK]),
                    jnp.maximum(g[2 * PCHUNK:3 * PCHUNK], g[3 * PCHUNK:4 * PCHUNK]))
    pooled = jnp.maximum(p + bc_ref[...], 0.0).astype(jnp.bfloat16)   # rows (s,b)

    # ---- flatten to torch order (c*25+s handled in the prepared weight) and
    #      run fc1 as a single (B, 1600) @ (1600, 128) matmul.
    for s in range(PH * PW):                             # 25 tiny lane-window stores
        flat_scr[:, s * COUT:(s + 1) * COUT] = pooled[B * s:B * s + B, :]
    flat = flat_scr[...]                                  # (B, 1600) bf16

    w1_cp.wait()
    h1 = jnp.dot(flat, w1_vmem[...], preferred_element_type=f32) + b1_ref[...]
    h1 = jnp.maximum(h1, 0.0).astype(jnp.bfloat16)
    h2 = jnp.dot(h1, w2_ref[...], preferred_element_type=f32) + b2_ref[...]
    h2 = jnp.maximum(h2, 0.0).astype(jnp.bfloat16)
    out_ref[...] = jnp.dot(h2, w3_ref[...], preferred_element_type=f32) + b3_ref[...]


# ----------------------- one-time parameter preparation --------------------- #

def prepare_params(params):
    """Hoist every weight reshape/transpose/pack/cast out of the per-call forward."""
    conv_w, conv_b, fc1_w, fc1_b, fc2_w, fc2_b, fc3_w, fc3_b = params

    # conv weight (COUT, CIN, K, K) -> per-tap (kh*K+kw, ci, co)
    wc = conv_w.transpose(2, 3, 1, 0).reshape(K * K, CIN, COUT)
    # shift-1 pairs: (kh, kw0) with (kh, kw0+1), kw0 in {0,2}
    p1 = [(kh * K + kw0, kh * K + kw0 + 1) for kh in range(K) for kw0 in (0, 2)]
    wcp1 = jnp.stack([jnp.concatenate([wc[a], wc[b]], axis=1)
                      for a, b in p1]).astype(jnp.bfloat16)           # (10, 96, 128)
    # shift-14 pairs: leftover kw=4 taps paired across kh
    p14 = [(0 * K + 4, 1 * K + 4), (2 * K + 4, 3 * K + 4)]
    wcp14 = jnp.stack([jnp.concatenate([wc[a], wc[b]], axis=1)
                       for a, b in p14]).astype(jnp.bfloat16)          # (2, 96, 128)
    wcs = wc[K * K - 1].astype(jnp.bfloat16)                           # (96, 64)
    bc = conv_b.reshape(1, COUT).astype(jnp.float32)

    # 0/1 pooling gather matrix: row (dh*2+dw)*PCHUNK + s*B + b selects conv row
    # b*HP*WP + (2*ph+dh)*WP + (2*pw+dw), with s = ph*PW + pw.  (0/1 exact in bf16.)
    sel_np = np.zeros((4 * PCHUNK, RACC), np.float32)
    for dh in range(2):
        for dw in range(2):
            for b in range(B):
                for ph in range(PH):
                    for pw in range(PW):
                        row = (dh * 2 + dw) * PCHUNK + (ph * PW + pw) * B + b
                        col = b * HP * WP + (2 * ph + dh) * WP + (2 * pw + dw)
                        sel_np[row, col] = 1.0
    sel = jnp.asarray(sel_np, dtype=jnp.bfloat16)

    # fc1 consumes torch's (c, s) flatten of the NCHW pooled tensor; the kernel's
    # flat LHS is (s, c)-ordered, so regroup: row s*64+c of w1 = fc1_w[:, c*25+s].
    w1r = fc1_w.reshape(F1, COUT, PH * PW).transpose(2, 1, 0).reshape(FLAT, F1)
    w1 = jnp.pad(w1r, ((0, 0), (0, F1P - F1))).astype(jnp.bfloat16)    # (1600, 128)
    b1 = jnp.pad(fc1_b, (0, F1P - F1)).reshape(1, F1P).astype(jnp.float32)
    w2 = jnp.pad(fc2_w.T, ((0, F1P - F1), (0, F2P - F2))).astype(jnp.bfloat16)
    b2 = jnp.pad(fc2_b, (0, F2P - F2)).reshape(1, F2P).astype(jnp.float32)
    w3 = jnp.pad(fc3_w.T, ((0, F2P - F2), (0, F3P - F3))).astype(jnp.bfloat16)
    b3 = jnp.pad(fc3_b, (0, F3P - F3)).reshape(1, F3P).astype(jnp.float32)
    return (wcp1, wcp14, wcs, bc, sel, w1, b1, w2, b2, w3, b3)


# ------------------------------ JAX forward --------------------------------- #

@jax.jit
def classifier_cnn_cifar_forward(x, prepared):
    """x: (B, 96, 10, 10) NCHW float32 -> logits (B, 3)."""
    assert x.shape == (B, CIN, H, W)
    wcp1, wcp14, wcs, bc, sel, w1, b1, w2, b2, w3, b3 = prepared

    # Cheap per-call glue (~75 KB bf16): zero-pad + NHWC raster, rows ordered
    # (b, hp, wp) so the in-kernel conv is pure row-shifted matmuls.
    xp = jnp.pad(x, ((0, 0), (0, 0), (PAD, PAD), (PAD, PAD)))        # (B, CIN, 14, 14)
    x2 = xp.transpose(0, 2, 3, 1).reshape(B * HP * WP, CIN).astype(jnp.bfloat16)
    x2 = jnp.pad(x2, ((0, RIN - B * HP * WP), (0, 0)))               # (RIN, 96) bf16

    args = (x2, wcp1, wcp14, wcs, bc, sel, w1, b1, w2, b2, w3, b3)
    in_specs = [pl.BlockSpec(memory_space=pltpu.MemorySpace.VMEM) for _ in args]
    in_specs[5] = pl.BlockSpec(memory_space=pl.ANY)   # sel  (manual DMA, hidden)
    in_specs[6] = pl.BlockSpec(memory_space=pl.ANY)   # w1   (manual DMA, hidden)

    flops = 2 * (len(OFFS1) * RA1 * CIN * 2 * COUT      # shift-1 packed conv
                 + len(OFFS14) * RA14 * CIN * 2 * COUT  # shift-14 packed conv
                 + RACC * CIN * COUT                    # singleton tap
                 + 4 * PCHUNK * RACC * COUT             # pooling gather matmul
                 + B * FLAT * F1P + B * F1P * F2P + B * F2P * F3P)
    bytes_accessed = sum(int(a.size) * a.dtype.itemsize for a in args) + B * F3P * 4

    out = pl.pallas_call(
        fused_kernel,
        out_shape=jax.ShapeDtypeStruct((B, F3P), jnp.float32),
        in_specs=in_specs,
        out_specs=pl.BlockSpec(memory_space=pltpu.MemorySpace.VMEM),
        scratch_shapes=[
            pltpu.VMEM((RA1, 2 * COUT), jnp.float32),     # shift-1 pair accumulator
            pltpu.VMEM((RA14, 2 * COUT), jnp.float32),    # shift-14 pair accumulator
            pltpu.VMEM((B, FLAT), jnp.bfloat16),          # flattened fc1 LHS
            pltpu.VMEM((4 * PCHUNK, RACC), jnp.bfloat16), # sel landing buffer
            pltpu.VMEM((FLAT, F1P), jnp.bfloat16),        # fc1 weight landing buffer
            pltpu.SemaphoreType.DMA((2,)),
        ],
        cost_estimate=pl.CostEstimate(flops=flops, transcendentals=0,
                                      bytes_accessed=bytes_accessed),
    )(*args)
    return out[:, :F3]


# --------------------------- reference & params ----------------------------- #

def reference_forward(x, params):
    """Pure-JAX (XLA, f32) reference mirroring the PyTorch forward exactly (NCHW)."""
    conv_w, conv_b, fc1_w, fc1_b, fc2_w, fc2_b, fc3_w, fc3_b = params
    y = lax.conv_general_dilated(x, conv_w, window_strides=(1, 1),
                                 padding=((2, 2), (2, 2)),
                                 dimension_numbers=('NCHW', 'OIHW', 'NCHW'))
    y = jnp.maximum(y + conv_b[None, :, None, None], 0.0)
    y = lax.reduce_window(y, -jnp.inf, lax.max, (1, 1, 2, 2), (1, 1, 2, 2), 'VALID')
    y = y.reshape(y.shape[0], -1)
    y = jnp.maximum(y @ fc1_w.T + fc1_b, 0.0)
    y = jnp.maximum(y @ fc2_w.T + fc2_b, 0.0)
    return y @ fc3_w.T + fc3_b


def init_params(key):
    """Deterministic init mimicking PyTorch's default U(-1/sqrt(fan_in), 1/sqrt(fan_in))."""
    def uniform(k, shape, fan_in):
        bound = 1.0 / float(fan_in) ** 0.5
        return jax.random.uniform(k, shape, jnp.float32, -bound, bound)

    ks = jax.random.split(key, 8)
    conv_w = uniform(ks[0], (COUT, CIN, K, K), CIN * K * K)
    conv_b = uniform(ks[1], (COUT,), CIN * K * K)
    fc1_w = uniform(ks[2], (F1, FLAT), FLAT)
    fc1_b = uniform(ks[3], (F1,), FLAT)
    fc2_w = uniform(ks[4], (F2, F1), F1)
    fc2_b = uniform(ks[5], (F2,), F1)
    fc3_w = uniform(ks[6], (F3, F2), F2)
    fc3_b = uniform(ks[7], (F3,), F2)
    return (conv_w, conv_b, fc1_w, fc1_b, fc2_w, fc2_b, fc3_w, fc3_b)


if __name__ == "__main__":
    key = jax.random.PRNGKey(0)
    pkey, xkey = jax.random.split(key)
    params = init_params(pkey)
    prepared = prepare_params(params)          # one-time weight prep (hoisted)
    x = jax.random.normal(xkey, (B, CIN, H, W), dtype=jnp.float32)

    out = classifier_cnn_cifar_forward(x, prepared)
    out = jax.block_until_ready(out)

    ref = reference_forward(x, params)
    assert out.shape == (B, F3), out.shape
    err = float(jnp.max(jnp.abs(out - ref)))
    assert bool(jnp.allclose(out, ref, rtol=2e-2, atol=2e-2)), f"mismatch: max abs err {err}"
    print("KERNEL_OK")
</pallas_src>

<mosaic_0001>
module attributes {stable_mosaic.version = 11 : i64} {
  func.func @fused_kernel(%arg0: memref<408x96xbf16, #tpu.memory_space<vmem>>, %arg1: memref<10x96x128xbf16, #tpu.memory_space<vmem>>, %arg2: memref<2x96x128xbf16, #tpu.memory_space<vmem>>, %arg3: memref<96x64xbf16, #tpu.memory_space<vmem>>, %arg4: memref<1x64xf32, #tpu.memory_space<vmem>>, %arg5: memref<224x336xbf16, #tpu.memory_space<any>>, %arg6: memref<1600x128xbf16, #tpu.memory_space<any>>, %arg7: memref<1x128xf32, #tpu.memory_space<vmem>>, %arg8: memref<128x128xbf16, #tpu.memory_space<vmem>>, %arg9: memref<1x128xf32, #tpu.memory_space<vmem>>, %arg10: memref<128x128xbf16, #tpu.memory_space<vmem>>, %arg11: memref<1x128xf32, #tpu.memory_space<vmem>>, %arg12: memref<2x128xf32, #tpu.memory_space<vmem>>, %arg13: memref<344x128xf32, #tpu.memory_space<vmem>>, %arg14: memref<352x128xf32, #tpu.memory_space<vmem>>, %arg15: memref<2x1600xbf16, #tpu.memory_space<vmem>>, %arg16: memref<224x336xbf16, #tpu.memory_space<vmem>>, %arg17: memref<1600x128xbf16, #tpu.memory_space<vmem>>, %arg18: memref<2x!tpu.dma_semaphore, #tpu.memory_space<semaphore_mem>>) attributes {dimension_semantics = [], scalar_prefetch = 0 : i64, scratch_operands = 6 : i64, tpu.core_type = #tpu.core_type<tc>} {
    %c0_i32 = arith.constant 0 : i32
    %0 = tpu.memref_slice %arg18[%c0_i32] : memref<2x!tpu.dma_semaphore, #tpu.memory_space<semaphore_mem>> -> memref<1x!tpu.dma_semaphore, #tpu.memory_space<semaphore_mem>>
    %1 = tpu.memref_squeeze %0 : memref<1x!tpu.dma_semaphore, #tpu.memory_space<semaphore_mem>> -> memref<!tpu.dma_semaphore, #tpu.memory_space<semaphore_mem>>
    tpu.enqueue_dma source(%arg5 : memref<224x336xbf16, #tpu.memory_space<any>>) target(%arg16 : memref<224x336xbf16, #tpu.memory_space<vmem>>) target_semaphore(%1 : memref<!tpu.dma_semaphore, #tpu.memory_space<semaphore_mem>>)
    %c1_i32 = arith.constant 1 : i32
    %2 = tpu.memref_slice %arg18[%c1_i32] : memref<2x!tpu.dma_semaphore, #tpu.memory_space<semaphore_mem>> -> memref<1x!tpu.dma_semaphore, #tpu.memory_space<semaphore_mem>>
    %3 = tpu.memref_squeeze %2 : memref<1x!tpu.dma_semaphore, #tpu.memory_space<semaphore_mem>> -> memref<!tpu.dma_semaphore, #tpu.memory_space<semaphore_mem>>
    tpu.enqueue_dma source(%arg6 : memref<1600x128xbf16, #tpu.memory_space<any>>) target(%arg17 : memref<1600x128xbf16, #tpu.memory_space<vmem>>) target_semaphore(%3 : memref<!tpu.dma_semaphore, #tpu.memory_space<semaphore_mem>>)
    %c0 = arith.constant 0 : index
    %c0_0 = arith.constant 0 : index
    %4 = vector.load %arg0[%c0, %c0_0] : memref<408x96xbf16, #tpu.memory_space<vmem>>, vector<344x96xbf16>
    %c0_1 = arith.constant 0 : index
    %c0_2 = arith.constant 0 : index
    %c0_3 = arith.constant 0 : index
    %5 = vector.load %arg1[%c0_1, %c0_2, %c0_3] : memref<10x96x128xbf16, #tpu.memory_space<vmem>>, vector<1x96x128xbf16>
    %6 = vector.shape_cast %5 : vector<1x96x128xbf16> to vector<96x128xbf16>
    %cst = arith.constant dense<0.000000e+00> : vector<344x128xf32>
    %7 = tpu.matmul %4, %6, %cst {dimension_numbers = #tpu.dot_dimension_numbers<[1], [0], [0], [1], [0, 0, 1, 1], [], []>} : vector<344x96xbf16>, vector<96x128xbf16>, vector<344x128xf32> -> vector<344x128xf32>
    %c2 = arith.constant 2 : index
    %c0_4 = arith.constant 0 : index
    %8 = vector.load %arg0[%c2, %c0_4] : memref<408x96xbf16, #tpu.memory_space<vmem>>, vector<344x96xbf16>
    %c1 = arith.constant 1 : index
    %c0_5 = arith.constant 0 : index
    %c0_6 = arith.constant 0 : index
    %9 = vector.load %arg1[%c1, %c0_5, %c0_6] : memref<10x96x128xbf16, #tpu.memory_space<vmem>>, vector<1x96x128xbf16>
    %10 = vector.shape_cast %9 : vector<1x96x128xbf16> to vector<96x128xbf16>
    %cst_7 = arith.constant dense<0.000000e+00> : vector<344x128xf32>
    %11 = tpu.matmul %8, %10, %cst_7 {dimension_numbers = #tpu.dot_dimension_numbers<[1], [0], [0], [1], [0, 0, 1, 1], [], []>} : vector<344x96xbf16>, vector<96x128xbf16>, vector<344x128xf32> -> vector<344x128xf32>
    %12 = arith.addf %7, %11 : vector<344x128xf32>
    %c14 = arith.constant 14 : index
    %c0_8 = arith.constant 0 : index
    %13 = vector.load %arg0[%c14, %c0_8] : memref<408x96xbf16, #tpu.memory_space<vmem>>, vector<344x96xbf16>
    %c2_9 = arith.constant 2 : index
    %c0_10 = arith.constant 0 : index
    %c0_11 = arith.constant 0 : index
    %14 = vector.load %arg1[%c2_9, %c0_10, %c0_11] : memref<10x96x128xbf16, #tpu.memory_space<vmem>>, vector<1x96x128xbf16>
    %15 = vector.shape_cast %14 : vector<1x96x128xbf16> to vector<96x128xbf16>
    %cst_12 = arith.constant dense<0.000000e+00> : vector<344x128xf32>
    %16 = tpu.matmul %13, %15, %cst_12 {dimension_numbers = #tpu.dot_dimension_numbers<[1], [0], [0], [1], [0, 0, 1, 1], [], []>} : vector<344x96xbf16>, vector<96x128xbf16>, vector<344x128xf32> -> vector<344x128xf32>
    %17 = arith.addf %12, %16 : vector<344x128xf32>
    %c16 = arith.constant 16 : index
    %c0_13 = arith.constant 0 : index
    %18 = vector.load %arg0[%c16, %c0_13] : memref<408x96xbf16, #tpu.memory_space<vmem>>, vector<344x96xbf16>
    %c3 = arith.constant 3 : index
    %c0_14 = arith.constant 0 : index
    %c0_15 = arith.constant 0 : index
    %19 = vector.load %arg1[%c3, %c0_14, %c0_15] : memref<10x96x128xbf16, #tpu.memory_space<vmem>>, vector<1x96x128xbf16>
    %20 = vector.shape_cast %19 : vector<1x96x128xbf16> to vector<96x128xbf16>
    %cst_16 = arith.constant dense<0.000000e+00> : vector<344x128xf32>
    %21 = tpu.matmul %18, %20, %cst_16 {dimension_numbers = #tpu.dot_dimension_numbers<[1], [0], [0], [1], [0, 0, 1, 1], [], []>} : vector<344x96xbf16>, vector<96x128xbf16>, vector<344x128xf32> -> vector<344x128xf32>
    %22 = arith.addf %17, %21 : vector<344x128xf32>
    %c28 = arith.constant 28 : index
    %c0_17 = arith.constant 0 : index
    %23 = vector.load %arg0[%c28, %c0_17] : memref<408x96xbf16, #tpu.memory_space<vmem>>, vector<344x96xbf16>
    %c4 = arith.constant 4 : index
    %c0_18 = arith.constant 0 : index
    %c0_19 = arith.constant 0 : index
    %24 = vector.load %arg1[%c4, %c0_18, %c0_19] : memref<10x96x128xbf16, #tpu.memory_space<vmem>>, vector<1x96x128xbf16>
    %25 = vector.shape_cast %24 : vector<1x96x128xbf16> to vector<96x128xbf16>
    %cst_20 = arith.constant dense<0.000000e+00> : vector<344x128xf32>
    %26 = tpu.matmul %23, %25, %cst_20 {dimension_numbers = #tpu.dot_dimension_numbers<[1], [0], [0], [1], [0, 0, 1, 1], [], []>} : vector<344x96xbf16>, vector<96x128xbf16>, vector<344x128xf32> -> vector<344x128xf32>
    %27 = arith.addf %22, %26 : vector<344x128xf32>
    %c30 = arith.constant 30 : index
    %c0_21 = arith.constant 0 : index
    %28 = vector.load %arg0[%c30, %c0_21] : memref<408x96xbf16, #tpu.memory_space<vmem>>, vector<344x96xbf16>
    %c5 = arith.constant 5 : index
    %c0_22 = arith.constant 0 : index
    %c0_23 = arith.constant 0 : index
    %29 = vector.load %arg1[%c5, %c0_22, %c0_23] : memref<10x96x128xbf16, #tpu.memory_space<vmem>>, vector<1x96x128xbf16>
    %30 = vector.shape_cast %29 : vector<1x96x128xbf16> to vector<96x128xbf16>
    %cst_24 = arith.constant dense<0.000000e+00> : vector<344x128xf32>
    %31 = tpu.matmul %28, %30, %cst_24 {dimension_numbers = #tpu.dot_dimension_numbers<[1], [0], [0], [1], [0, 0, 1, 1], [], []>} : vector<344x96xbf16>, vector<96x128xbf16>, vector<344x128xf32> -> vector<344x128xf32>
    %32 = arith.addf %27, %31 : vector<344x128xf32>
    %c42 = arith.constant 42 : index
    %c0_25 = arith.constant 0 : index
    %33 = vector.load %arg0[%c42, %c0_25] : memref<408x96xbf16, #tpu.memory_space<vmem>>, vector<344x96xbf16>
    %c6 = arith.constant 6 : index
    %c0_26 = arith.constant 0 : index
    %c0_27 = arith.constant 0 : index
    %34 = vector.load %arg1[%c6, %c0_26, %c0_27] : memref<10x96x128xbf16, #tpu.memory_space<vmem>>, vector<1x96x128xbf16>
    %35 = vector.shape_cast %34 : vector<1x96x128xbf16> to vector<96x128xbf16>
    %cst_28 = arith.constant dense<0.000000e+00> : vector<344x128xf32>
    %36 = tpu.matmul %33, %35, %cst_28 {dimension_numbers = #tpu.dot_dimension_numbers<[1], [0], [0], [1], [0, 0, 1, 1], [], []>} : vector<344x96xbf16>, vector<96x128xbf16>, vector<344x128xf32> -> vector<344x128xf32>
    %37 = arith.addf %32, %36 : vector<344x128xf32>
    %c44 = arith.constant 44 : index
    %c0_29 = arith.constant 0 : index
    %38 = vector.load %arg0[%c44, %c0_29] : memref<408x96xbf16, #tpu.memory_space<vmem>>, vector<344x96xbf16>
    %c7 = arith.constant 7 : index
    %c0_30 = arith.constant 0 : index
    %c0_31 = arith.constant 0 : index
    %39 = vector.load %arg1[%c7, %c0_30, %c0_31] : memref<10x96x128xbf16, #tpu.memory_space<vmem>>, vector<1x96x128xbf16>
    %40 = vector.shape_cast %39 : vector<1x96x128xbf16> to vector<96x128xbf16>
    %cst_32 = arith.constant dense<0.000000e+00> : vector<344x128xf32>
    %41 = tpu.matmul %38, %40, %cst_32 {dimension_numbers = #tpu.dot_dimension_numbers<[1], [0], [0], [1], [0, 0, 1, 1], [], []>} : vector<344x96xbf16>, vector<96x128xbf16>, vector<344x128xf32> -> vector<344x128xf32>
    %42 = arith.addf %37, %41 : vector<344x128xf32>
    %c56 = arith.constant 56 : index
    %c0_33 = arith.constant 0 : index
    %43 = vector.load %arg0[%c56, %c0_33] : memref<408x96xbf16, #tpu.memory_space<vmem>>, vector<344x96xbf16>
    %c8 = arith.constant 8 : index
    %c0_34 = arith.constant 0 : index
    %c0_35 = arith.constant 0 : index
    %44 = vector.load %arg1[%c8, %c0_34, %c0_35] : memref<10x96x128xbf16, #tpu.memory_space<vmem>>, vector<1x96x128xbf16>
    %45 = vector.shape_cast %44 : vector<1x96x128xbf16> to vector<96x128xbf16>
    %cst_36 = arith.constant dense<0.000000e+00> : vector<344x128xf32>
    %46 = tpu.matmul %43, %45, %cst_36 {dimension_numbers = #tpu.dot_dimension_numbers<[1], [0], [0], [1], [0, 0, 1, 1], [], []>} : vector<344x96xbf16>, vector<96x128xbf16>, vector<344x128xf32> -> vector<344x128xf32>
    %47 = arith.addf %42, %46 : vector<344x128xf32>
    %c58 = arith.constant 58 : index
    %c0_37 = arith.constant 0 : index
    %48 = vector.load %arg0[%c58, %c0_37] : memref<408x96xbf16, #tpu.memory_space<vmem>>, vector<344x96xbf16>
    %c9 = arith.constant 9 : index
    %c0_38 = arith.constant 0 : index
    %c0_39 = arith.constant 0 : index
    %49 = vector.load %arg1[%c9, %c0_38, %c0_39] : memref<10x96x128xbf16, #tpu.memory_space<vmem>>, vector<1x96x128xbf16>
    %50 = vector.shape_cast %49 : vector<1x96x128xbf16> to vector<96x128xbf16>
    %cst_40 = arith.constant dense<0.000000e+00> : vector<344x128xf32>
    %51 = tpu.matmul %48, %50, %cst_40 {dimension_numbers = #tpu.dot_dimension_numbers<[1], [0], [0], [1], [0, 0, 1, 1], [], []>} : vector<344x96xbf16>, vector<96x128xbf16>, vector<344x128xf32> -> vector<344x128xf32>
    %52 = arith.addf %47, %51 : vector<344x128xf32>
    %c0_41 = arith.constant 0 : index
    %c0_42 = arith.constant 0 : index
    %53 = vector.load %arg13[%c0_41, %c0_42] : memref<344x128xf32, #tpu.memory_space<vmem>>, vector<344x128xf32>
    tpu.vector_store %arg13[%c0_41, %c0_42], %52 {strides = array<i32>} : memref<344x128xf32, #tpu.memory_space<vmem>>, vector<344x128xf32>,
    %c4_43 = arith.constant 4 : index
    %c0_44 = arith.constant 0 : index
    %54 = vector.load %arg0[%c4_43, %c0_44] : memref<408x96xbf16, #tpu.memory_space<vmem>>, vector<352x96xbf16>
    %c0_45 = arith.constant 0 : index
    %c0_46 = arith.constant 0 : index
    %c0_47 = arith.constant 0 : index
    %55 = vector.load %arg2[%c0_45, %c0_46, %c0_47] : memref<2x96x128xbf16, #tpu.memory_space<vmem>>, vector<1x96x128xbf16>
    %56 = vector.shape_cast %55 : vector<1x96x128xbf16> to vector<96x128xbf16>
    %cst_48 = arith.constant dense<0.000000e+00> : vector<352x128xf32>
    %57 = tpu.matmul %54, %56, %cst_48 {dimension_numbers = #tpu.dot_dimension_numbers<[1], [0], [0], [1], [0, 0, 1, 1], [], []>} : vector<352x96xbf16>, vector<96x128xbf16>, vector<352x128xf32> -> vector<352x128xf32>
    %c32 = arith.constant 32 : index
    %c0_49 = arith.constant 0 : index
    %58 = vector.load %arg0[%c32, %c0_49] : memref<408x96xbf16, #tpu.memory_space<vmem>>, vector<352x96xbf16>
    %c1_50 = arith.constant 1 : index
    %c0_51 = arith.constant 0 : index
    %c0_52 = arith.constant 0 : index
    %59 = vector.load %arg2[%c1_50, %c0_51, %c0_52] : memref<2x96x128xbf16, #tpu.memory_space<vmem>>, vector<1x96x128xbf16>
    %60 = vector.shape_cast %59 : vector<1x96x128xbf16> to vector<96x128xbf16>
    %cst_53 = arith.constant dense<0.000000e+00> : vector<352x128xf32>
    %61 = tpu.matmul %58, %60, %cst_53 {dimension_numbers = #tpu.dot_dimension_numbers<[1], [0], [0], [1], [0, 0, 1, 1], [], []>} : vector<352x96xbf16>, vector<96x128xbf16>, vector<352x128xf32> -> vector<352x128xf32>
    %62 = arith.addf %57, %61 : vector<352x128xf32>
    %c0_54 = arith.constant 0 : index
    %c0_55 = arith.constant 0 : index
    %63 = vector.load %arg14[%c0_54, %c0_55] : memref<352x128xf32, #tpu.memory_space<vmem>>, vector<352x128xf32>
    tpu.vector_store %arg14[%c0_54, %c0_55], %62 {strides = array<i32>} : memref<352x128xf32, #tpu.memory_space<vmem>>, vector<352x128xf32>,
    %c60 = arith.constant 60 : index
    %c0_56 = arith.constant 0 : index
    %64 = vector.load %arg0[%c60, %c0_56] : memref<408x96xbf16, #tpu.memory_space<vmem>>, vector<336x96xbf16>
    %c0_57 = arith.constant 0 : index
    %c0_58 = arith.constant 0 : index
    %65 = vector.load %arg3[%c0_57, %c0_58] : memref<96x64xbf16, #tpu.memory_space<vmem>>, vector<96x64xbf16>
    %cst_59 = arith.constant dense<0.000000e+00> : vector<336x64xf32>
    %66 = tpu.matmul %64, %65, %cst_59 {dimension_numbers = #tpu.dot_dimension_numbers<[1], [0], [0], [1], [0, 0, 1, 1], [], []>} : vector<336x96xbf16>, vector<96x64xbf16>, vector<336x64xf32> -> vector<336x64xf32>
    %c0_60 = arith.constant 0 : index
    %c0_61 = arith.constant 0 : index
    %67 = vector.load %arg13[%c0_60, %c0_61] : memref<344x128xf32, #tpu.memory_space<vmem>>, vector<336x64xf32>
    %c1_62 = arith.constant 1 : index
    %c64 = arith.constant 64 : index
    %68 = vector.load %arg13[%c1_62, %c64] : memref<344x128xf32, #tpu.memory_space<vmem>>, vector<336x64xf32>
    %69 = arith.addf %67, %68 : vector<336x64xf32>
    %c0_63 = arith.constant 0 : index
    %c0_64 = arith.constant 0 : index
    %70 = vector.load %arg14[%c0_63, %c0_64] : memref<352x128xf32, #tpu.memory_space<vmem>>, vector<336x64xf32>
    %71 = arith.addf %69, %70 : vector<336x64xf32>
    %c14_65 = arith.constant 14 : index
    %c64_66 = arith.constant 64 : index
    %72 = vector.load %arg14[%c14_65, %c64_66] : memref<352x128xf32, #tpu.memory_space<vmem>>, vector<336x64xf32>
    %73 = arith.addf %71, %72 : vector<336x64xf32>
    %74 = arith.addf %73, %66 : vector<336x64xf32>
    %75 = arith.truncf %74 : vector<336x64xf32> to vector<336x64xbf16>
    %c0_i32_67 = arith.constant 0 : i32
    %76 = tpu.memref_slice %arg18[%c0_i32_67] : memref<2x!tpu.dma_semaphore, #tpu.memory_space<semaphore_mem>> -> memref<1x!tpu.dma_semaphore, #tpu.memory_space<semaphore_mem>>
    %77 = tpu.memref_squeeze %76 : memref<1x!tpu.dma_semaphore, #tpu.memory_space<semaphore_mem>> -> memref<!tpu.dma_semaphore, #tpu.memory_space<semaphore_mem>>
    tpu.wait_dma2 semaphore(%77 : memref<!tpu.dma_semaphore, #tpu.memory_space<semaphore_mem>>) src(%arg5 : memref<224x336xbf16, #tpu.memory_space<any>>) dst(%arg16 : memref<224x336xbf16, #tpu.memory_space<vmem>>)
    %c0_68 = arith.constant 0 : index
    %c0_69 = arith.constant 0 : index
    %78 = vector.load %arg16[%c0_68, %c0_69] : memref<224x336xbf16, #tpu.memory_space<vmem>>, vector<224x336xbf16>
    %cst_70 = arith.constant dense<0.000000e+00> : vector<224x64xf32>
    %79 = tpu.matmul %78, %75, %cst_70 {dimension_numbers = #tpu.dot_dimension_numbers<[1], [0], [0], [1], [0, 0, 1, 1], [], []>} : vector<224x336xbf16>, vector<336x64xbf16>, vector<224x64xf32> -> vector<224x64xf32>
    %80 = vector.extract_strided_slice %79 {offsets = [0, 0], sizes = [56, 64], strides = [1, 1]} : vector<224x64xf32> to vector<56x64xf32>
    %81 = vector.extract_strided_slice %79 {offsets = [56, 0], sizes = [56, 64], strides = [1, 1]} : vector<224x64xf32> to vector<56x64xf32>
    %82 = arith.maximumf %80, %81 : vector<56x64xf32>
    %83 = vector.extract_strided_slice %79 {offsets = [112, 0], sizes = [56, 64], strides = [1, 1]} : vector<224x64xf32> to vector<56x64xf32>
    %84 = vector.extract_strided_slice %79 {offsets = [168, 0], sizes = [56, 64], strides = [1, 1]} : vector<224x64xf32> to vector<56x64xf32>
    %85 = arith.maximumf %83, %84 : vector<56x64xf32>
    %86 = arith.maximumf %82, %85 : vector<56x64xf32>
    %c0_71 = arith.constant 0 : index
    %c0_72 = arith.constant 0 : index
    %87 = vector.load %arg4[%c0_71, %c0_72] : memref<1x64xf32, #tpu.memory_space<vmem>>, vector<1x64xf32>
    %88 = vector.broadcast %87 : vector<1x64xf32> to vector<56x64xf32>
    %89 = arith.addf %86, %88 : vector<56x64xf32>
    %cst_73 = arith.constant 0.000000e+00 : f32
    %90 = vector.broadcast %cst_73 : f32 to vector<56x64xf32>
    %91 = arith.maximumf %89, %90 : vector<56x64xf32>
    %92 = arith.truncf %91 : vector<56x64xf32> to vector<56x64xbf16>
    %93 = vector.extract_strided_slice %92 {offsets = [0, 0], sizes = [2, 64], strides = [1, 1]} : vector<56x64xbf16> to vector<2x64xbf16>
    %c0_74 = arith.constant 0 : index
    %c0_75 = arith.constant 0 : index
    %94 = vector.load %arg15[%c0_74, %c0_75] : memref<2x1600xbf16, #tpu.memory_space<vmem>>, vector<2x64xbf16>
    tpu.vector_store %arg15[%c0_74, %c0_75], %93 {strides = array<i32>} : memref<2x1600xbf16, #tpu.memory_space<vmem>>, vector<2x64xbf16>,
    %95 = vector.extract_strided_slice %92 {offsets = [2, 0], sizes = [2, 64], strides = [1, 1]} : vector<56x64xbf16> to vector<2x64xbf16>
    %c0_76 = arith.constant 0 : index
    %c64_77 = arith.constant 64 : index
    %96 = vector.load %arg15[%c0_76, %c64_77] : memref<2x1600xbf16, #tpu.memory_space<vmem>>, vector<2x64xbf16>
    tpu.vector_store %arg15[%c0_76, %c64_77], %95 {strides = array<i32>} : memref<2x1600xbf16, #tpu.memory_space<vmem>>, vector<2x64xbf16>,
    %97 = vector.extract_strided_slice %92 {offsets = [4, 0], sizes = [2, 64], strides = [1, 1]} : vector<56x64xbf16> to vector<2x64xbf16>
    %c0_78 = arith.constant 0 : index
    %c128 = arith.constant 128 : index
    %98 = vector.load %arg15[%c0_78, %c128] : memref<2x1600xbf16, #tpu.memory_space<vmem>>, vector<2x64xbf16>
    tpu.vector_store %arg15[%c0_78, %c128], %97 {strides = array<i32>} : memref<2x1600xbf16, #tpu.memory_space<vmem>>, vector<2x64xbf16>,
    %99 = vector.extract_strided_slice %92 {offsets = [6, 0], sizes = [2, 64], strides = [1, 1]} : vector<56x64xbf16> to vector<2x64xbf16>
    %c0_79 = arith.constant 0 : index
    %c192 = arith.constant 192 : index
    %100 = vector.load %arg15[%c0_79, %c192] : memref<2x1600xbf16, #tpu.memory_space<vmem>>, vector<2x64xbf16>
    tpu.vector_store %arg15[%c0_79, %c192], %99 {strides = array<i32>} : memref<2x1600xbf16, #tpu.memory_space<vmem>>, vector<2x64xbf16>,
    %101 = vector.extract_strided_slice %92 {offsets = [8, 0], sizes = [2, 64], strides = [1, 1]} : vector<56x64xbf16> to vector<2x64xbf16>
    %c0_80 = arith.constant 0 : index
    %c256 = arith.constant 256 : index
    %102 = vector.load %arg15[%c0_80, %c256] : memref<2x1600xbf16, #tpu.memory_space<vmem>>, vector<2x64xbf16>
    tpu.vector_store %arg15[%c0_80, %c256], %101 {strides = array<i32>} : memref<2x1600xbf16, #tpu.memory_space<vmem>>, vector<2x64xbf16>,
    %103 = vector.extract_strided_slice %92 {offsets = [10, 0], sizes = [2, 64], strides = [1, 1]} : vector<56x64xbf16> to vector<2x64xbf16>
    %c0_81 = arith.constant 0 : index
    %c320 = arith.constant 320 : index
    %104 = vector.load %arg15[%c0_81, %c320] : memref<2x1600xbf16, #tpu.memory_space<vmem>>, vector<2x64xbf16>
    tpu.vector_store %arg15[%c0_81, %c320], %103 {strides = array<i32>} : memref<2x1600xbf16, #tpu.memory_space<vmem>>, vector<2x64xbf16>,
    %105 = vector.extract_strided_slice %92 {offsets = [12, 0], sizes = [2, 64], strides = [1, 1]} : vector<56x64xbf16> to vector<2x64xbf16>
    %c0_82 = arith.constant 0 : index
    %c384 = arith.constant 384 : index
    %106 = vector.load %arg15[%c0_82, %c384] : memref<2x1600xbf16, #tpu.memory_space<vmem>>, vector<2x64xbf16>
    tpu.vector_store %arg15[%c0_82, %c384], %105 {strides = array<i32>} : memref<2x1600xbf16, #tpu.memory_space<vmem>>, vector<2x64xbf16>,
    %107 = vector.extract_strided_slice %92 {offsets = [14, 0], sizes = [2, 64], strides = [1, 1]} : vector<56x64xbf16> to vector<2x64xbf16>
    %c0_83 = arith.constant 0 : index
    %c448 = arith.constant 448 : index
    %108 = vector.load %arg15[%c0_83, %c448] : memref<2x1600xbf16, #tpu.memory_space<vmem>>, vector<2x64xbf16>
    tpu.vector_store %arg15[%c0_83, %c448], %107 {strides = array<i32>} : memref<2x1600xbf16, #tpu.memory_space<vmem>>, vector<2x64xbf16>,
    %109 = vector.extract_strided_slice %92 {offsets = [16, 0], sizes = [2, 64], strides = [1, 1]} : vector<56x64xbf16> to vector<2x64xbf16>
    %c0_84 = arith.constant 0 : index
    %c512 = arith.constant 512 : index
    %110 = vector.load %arg15[%c0_84, %c512] : memref<2x1600xbf16, #tpu.memory_space<vmem>>, vector<2x64xbf16>
    tpu.vector_store %arg15[%c0_84, %c512], %109 {strides = array<i32>} : memref<2x1600xbf16, #tpu.memory_space<vmem>>, vector<2x64xbf16>,
    %111 = vector.extract_strided_slice %92 {offsets = [18, 0], sizes = [2, 64], strides = [1, 1]} : vector<56x64xbf16> to vector<2x64xbf16>
    %c0_85 = arith.constant 0 : index
    %c576 = arith.constant 576 : index
    %112 = vector.load %arg15[%c0_85, %c576] : memref<2x1600xbf16, #tpu.memory_space<vmem>>, vector<2x64xbf16>
    tpu.vector_store %arg15[%c0_85, %c576], %111 {strides = array<i32>} : memref<2x1600xbf16, #tpu.memory_space<vmem>>, vector<2x64xbf16>,
    %113 = vector.extract_strided_slice %92 {offsets = [20, 0], sizes = [2, 64], strides = [1, 1]} : vector<56x64xbf16> to vector<2x64xbf16>
    %c0_86 = arith.constant 0 : index
    %c640 = arith.constant 640 : index
    %114 = vector.load %arg15[%c0_86, %c640] : memref<2x1600xbf16, #tpu.memory_space<vmem>>, vector<2x64xbf16>
    tpu.vector_store %arg15[%c0_86, %c640], %113 {strides = array<i32>} : memref<2x1600xbf16, #tpu.memory_space<vmem>>, vector<2x64xbf16>,
    %115 = vector.extract_strided_slice %92 {offsets = [22, 0], sizes = [2, 64], strides = [1, 1]} : vector<56x64xbf16> to vector<2x64xbf16>
    %c0_87 = arith.constant 0 : index
    %c704 = arith.constant 704 : index
    %116 = vector.load %arg15[%c0_87, %c704] : memref<2x1600xbf16, #tpu.memory_space<vmem>>, vector<2x64xbf16>
    tpu.vector_store %arg15[%c0_87, %c704], %115 {strides = array<i32>} : memref<2x1600xbf16, #tpu.memory_space<vmem>>, vector<2x64xbf16>,
    %117 = vector.extract_strided_slice %92 {offsets = [24, 0], sizes = [2, 64], strides = [1, 1]} : vector<56x64xbf16> to vector<2x64xbf16>
    %c0_88 = arith.constant 0 : index
    %c768 = arith.constant 768 : index
    %118 = vector.load %arg15[%c0_88, %c768] : memref<2x1600xbf16, #tpu.memory_space<vmem>>, vector<2x64xbf16>
    tpu.vector_store %arg15[%c0_88, %c768], %117 {strides = array<i32>} : memref<2x1600xbf16, #tpu.memory_space<vmem>>, vector<2x64xbf16>,
    %119 = vector.extract_strided_slice %92 {offsets = [26, 0], sizes = [2, 64], strides = [1, 1]} : vector<56x64xbf16> to vector<2x64xbf16>
    %c0_89 = arith.constant 0 : index
    %c832 = arith.constant 832 : index
    %120 = vector.load %arg15[%c0_89, %c832] : memref<2x1600xbf16, #tpu.memory_space<vmem>>, vector<2x64xbf16>
    tpu.vector_store %arg15[%c0_89, %c832], %119 {strides = array<i32>} : memref<2x1600xbf16, #tpu.memory_space<vmem>>, vector<2x64xbf16>,
    %121 = vector.extract_strided_slice %92 {offsets = [28, 0], sizes = [2, 64], strides = [1, 1]} : vector<56x64xbf16> to vector<2x64xbf16>
    %c0_90 = arith.constant 0 : index
    %c896 = arith.constant 896 : index
    %122 = vector.load %arg15[%c0_90, %c896] : memref<2x1600xbf16, #tpu.memory_space<vmem>>, vector<2x64xbf16>
    tpu.vector_store %arg15[%c0_90, %c896], %121 {strides = array<i32>} : memref<2x1600xbf16, #tpu.memory_space<vmem>>, vector<2x64xbf16>,
    %123 = vector.extract_strided_slice %92 {offsets = [30, 0], sizes = [2, 64], strides = [1, 1]} : vector<56x64xbf16> to vector<2x64xbf16>
    %c0_91 = arith.constant 0 : index
    %c960 = arith.constant 960 : index
    %124 = vector.load %arg15[%c0_91, %c960] : memref<2x1600xbf16, #tpu.memory_space<vmem>>, vector<2x64xbf16>
    tpu.vector_store %arg15[%c0_91, %c960], %123 {strides = array<i32>} : memref<2x1600xbf16, #tpu.memory_space<vmem>>, vector<2x64xbf16>,
    %125 = vector.extract_strided_slice %92 {offsets = [32, 0], sizes = [2, 64], strides = [1, 1]} : vector<56x64xbf16> to vector<2x64xbf16>
    %c0_92 = arith.constant 0 : index
    %c1024 = arith.constant 1024 : index
    %126 = vector.load %arg15[%c0_92, %c1024] : memref<2x1600xbf16, #tpu.memory_space<vmem>>, vector<2x64xbf16>
    tpu.vector_store %arg15[%c0_92, %c1024], %125 {strides = array<i32>} : memref<2x1600xbf16, #tpu.memory_space<vmem>>, vector<2x64xbf16>,
    %127 = vector.extract_strided_slice %92 {offsets = [34, 0], sizes = [2, 64], strides = [1, 1]} : vector<56x64xbf16> to vector<2x64xbf16>
    %c0_93 = arith.constant 0 : index
    %c1088 = arith.constant 1088 : index
    %128 = vector.load %arg15[%c0_93, %c1088] : memref<2x1600xbf16, #tpu.memory_space<vmem>>, vector<2x64xbf16>
    tpu.vector_store %arg15[%c0_93, %c1088], %127 {strides = array<i32>} : memref<2x1600xbf16, #tpu.memory_space<vmem>>, vector<2x64xbf16>,
    %129 = vector.extract_strided_slice %92 {offsets = [36, 0], sizes = [2, 64], strides = [1, 1]} : vector<56x64xbf16> to vector<2x64xbf16>
    %c0_94 = arith.constant 0 : index
    %c1152 = arith.constant 1152 : index
    %130 = vector.load %arg15[%c0_94, %c1152] : memref<2x1600xbf16, #tpu.memory_space<vmem>>, vector<2x64xbf16>
    tpu.vector_store %arg15[%c0_94, %c1152], %129 {strides = array<i32>} : memref<2x1600xbf16, #tpu.memory_space<vmem>>, vector<2x64xbf16>,
    %131 = vector.extract_strided_slice %92 {offsets = [38, 0], sizes = [2, 64], strides = [1, 1]} : vector<56x64xbf16> to vector<2x64xbf16>
    %c0_95 = arith.constant 0 : index
    %c1216 = arith.constant 1216 : index
    %132 = vector.load %arg15[%c0_95, %c1216] : memref<2x1600xbf16, #tpu.memory_space<vmem>>, vector<2x64xbf16>
    tpu.vector_store %arg15[%c0_95, %c1216], %131 {strides = array<i32>} : memref<2x1600xbf16, #tpu.memory_space<vmem>>, vector<2x64xbf16>,
    %133 = vector.extract_strided_slice %92 {offsets = [40, 0], sizes = [2, 64], strides = [1, 1]} : vector<56x64xbf16> to vector<2x64xbf16>
    %c0_96 = arith.constant 0 : index
    %c1280 = arith.constant 1280 : index
    %134 = vector.load %arg15[%c0_96, %c1280] : memref<2x1600xbf16, #tpu.memory_space<vmem>>, vector<2x64xbf16>
    tpu.vector_store %arg15[%c0_96, %c1280], %133 {strides = array<i32>} : memref<2x1600xbf16, #tpu.memory_space<vmem>>, vector<2x64xbf16>,
    %135 = vector.extract_strided_slice %92 {offsets = [42, 0], sizes = [2, 64], strides = [1, 1]} : vector<56x64xbf16> to vector<2x64xbf16>
    %c0_97 = arith.constant 0 : index
    %c1344 = arith.constant 1344 : index
    %136 = vector.load %arg15[%c0_97, %c1344] : memref<2x1600xbf16, #tpu.memory_space<vmem>>, vector<2x64xbf16>
    tpu.vector_store %arg15[%c0_97, %c1344], %135 {strides = array<i32>} : memref<2x1600xbf16, #tpu.memory_space<vmem>>, vector<2x64xbf16>,
    %137 = vector.extract_strided_slice %92 {offsets = [44, 0], sizes = [2, 64], strides = [1, 1]} : vector<56x64xbf16> to vector<2x64xbf16>
    %c0_98 = arith.constant 0 : index
    %c1408 = arith.constant 1408 : index
    %138 = vector.load %arg15[%c0_98, %c1408] : memref<2x1600xbf16, #tpu.memory_space<vmem>>, vector<2x64xbf16>
    tpu.vector_store %arg15[%c0_98, %c1408], %137 {strides = array<i32>} : memref<2x1600xbf16, #tpu.memory_space<vmem>>, vector<2x64xbf16>,
    %139 = vector.extract_strided_slice %92 {offsets = [46, 0], sizes = [2, 64], strides = [1, 1]} : vector<56x64xbf16> to vector<2x64xbf16>
    %c0_99 = arith.constant 0 : index
    %c1472 = arith.constant 1472 : index
    %140 = vector.load %arg15[%c0_99, %c1472] : memref<2x1600xbf16, #tpu.memory_space<vmem>>, vector<2x64xbf16>
    tpu.vector_store %arg15[%c0_99, %c1472], %139 {strides = array<i32>} : memref<2x1600xbf16, #tpu.memory_space<vmem>>, vector<2x64xbf16>,
    %141 = vector.extract_strided_slice %92 {offsets = [48, 0], sizes = [2, 64], strides = [1, 1]} : vector<56x64xbf16> to vector<2x64xbf16>
    %c0_100 = arith.constant 0 : index
    %c1536 = arith.constant 1536 : index
    %142 = vector.load %arg15[%c0_100, %c1536] : memref<2x1600xbf16, #tpu.memory_space<vmem>>, vector<2x64xbf16>
    tpu.vector_store %arg15[%c0_100, %c1536], %141 {strides = array<i32>} : memref<2x1600xbf16, #tpu.memory_space<vmem>>, vector<2x64xbf16>,
    %c0_101 = arith.constant 0 : index
    %c0_102 = arith.constant 0 : index
    %143 = vector.load %arg15[%c0_101, %c0_102] : memref<2x1600xbf16, #tpu.memory_space<vmem>>, vector<2x1600xbf16>
    %c1_i32_103 = arith.constant 1 : i32
    %144 = tpu.memref_slice %arg18[%c1_i32_103] : memref<2x!tpu.dma_semaphore, #tpu.memory_space<semaphore_mem>> -> memref<1x!tpu.dma_semaphore, #tpu.memory_space<semaphore_mem>>
    %145 = tpu.memref_squeeze %144 : memref<1x!tpu.dma_semaphore, #tpu.memory_space<semaphore_mem>> -> memref<!tpu.dma_semaphore, #tpu.memory_space<semaphore_mem>>
    tpu.wait_dma2 semaphore(%145 : memref<!tpu.dma_semaphore, #tpu.memory_space<semaphore_mem>>) src(%arg6 : memref<1600x128xbf16, #tpu.memory_space<any>>) dst(%arg17 : memref<1600x128xbf16, #tpu.memory_space<vmem>>)
    %c0_104 = arith.constant 0 : index
    %c0_105 = arith.constant 0 : index
    %146 = vector.load %arg17[%c0_104, %c0_105] : memref<1600x128xbf16, #tpu.memory_space<vmem>>, vector<1600x128xbf16>
    %cst_106 = arith.constant dense<0.000000e+00> : vector<2x128xf32>
    %147 = tpu.matmul %143, %146, %cst_106 {dimension_numbers = #tpu.dot_dimension_numbers<[1], [0], [0], [1], [0, 0, 1, 1], [], []>} : vector<2x1600xbf16>, vector<1600x128xbf16>, vector<2x128xf32> -> vector<2x128xf32>
    %c0_107 = arith.constant 0 : index
    %c0_108 = arith.constant 0 : index
    %148 = vector.load %arg7[%c0_107, %c0_108] : memref<1x128xf32, #tpu.memory_space<vmem>>, vector<1x128xf32>
    %149 = vector.broadcast %148 : vector<1x128xf32> to vector<2x128xf32>
    %150 = arith.addf %147, %149 : vector<2x128xf32>
    %cst_109 = arith.constant 0.000000e+00 : f32
    %151 = vector.broadcast %cst_109 : f32 to vector<2x128xf32>
    %152 = arith.maximumf %150, %151 : vector<2x128xf32>
    %153 = arith.truncf %152 : vector<2x128xf32> to vector<2x128xbf16>
    %c0_110 = arith.constant 0 : index
    %c0_111 = arith.constant 0 : index
    %154 = vector.load %arg8[%c0_110, %c0_111] : memref<128x128xbf16, #tpu.memory_space<vmem>>, vector<128x128xbf16>
    %cst_112 = arith.constant dense<0.000000e+00> : vector<2x128xf32>
    %155 = tpu.matmul %153, %154, %cst_112 {dimension_numbers = #tpu.dot_dimension_numbers<[1], [0], [0], [1], [0, 0, 1, 1], [], []>} : vector<2x128xbf16>, vector<128x128xbf16>, vector<2x128xf32> -> vector<2x128xf32>
    %c0_113 = arith.constant 0 : index
    %c0_114 = arith.constant 0 : index
    %156 = vector.load %arg9[%c0_113, %c0_114] : memref<1x128xf32, #tpu.memory_space<vmem>>, vector<1x128xf32>
    %157 = vector.broadcast %156 : vector<1x128xf32> to vector<2x128xf32>
    %158 = arith.addf %155, %157 : vector<2x128xf32>
    %cst_115 = arith.constant 0.000000e+00 : f32
    %159 = vector.broadcast %cst_115 : f32 to vector<2x128xf32>
    %160 = arith.maximumf %158, %159 : vector<2x128xf32>
    %161 = arith.truncf %160 : vector<2x128xf32> to vector<2x128xbf16>
    %c0_116 = arith.constant 0 : index
    %c0_117 = arith.constant 0 : index
    %162 = vector.load %arg10[%c0_116, %c0_117] : memref<128x128xbf16, #tpu.memory_space<vmem>>, vector<128x128xbf16>
    %cst_118 = arith.constant dense<0.000000e+00> : vector<2x128xf32>
    %163 = tpu.matmul %161, %162, %cst_118 {dimension_numbers = #tpu.dot_dimension_numbers<[1], [0], [0], [1], [0, 0, 1, 1], [], []>} : vector<2x128xbf16>, vector<128x128xbf16>, vector<2x128xf32> -> vector<2x128xf32>
    %c0_119 = arith.constant 0 : index
    %c0_120 = arith.constant 0 : index
    %164 = vector.load %arg11[%c0_119, %c0_120] : memref<1x128xf32, #tpu.memory_space<vmem>>, vector<1x128xf32>
    %165 = vector.broadcast %164 : vector<1x128xf32> to vector<2x128xf32>
    %166 = arith.addf %163, %165 : vector<2x128xf32>
    %c0_121 = arith.constant 0 : index
    %c0_122 = arith.constant 0 : index
    %167 = vector.load %arg12[%c0_121, %c0_122] : memref<2x128xf32, #tpu.memory_space<vmem>>, vector<2x128xf32>
    tpu.vector_store %arg12[%c0_121, %c0_122], %166 {strides = array<i32>} : memref<2x128xf32, #tpu.memory_space<vmem>>, vector<2x128xf32>,
    return
  }
}

</mosaic_0001>

<llo_original>
// kernel: classifier_cnn_cifar_forward.1
$region0: #{classifier_cnn_cifar_forward.1}
  #allocation0 [shape = 'u32[]', space=smem, size = 0x4, offset = 0x4, fixed_abs, tag = 'smem constant byte address 0x4 - core index']
  #allocation1 [shape = 'u32[144,128]{1,0:T(1,128)}', space=vmem, size = 0x12000, scoped, tag = 'internal scratch']
  #allocation2 [shape = 'f32[344,128]{1,0:T(8,128)}', space=vmem, size = 0x2b000, scoped, tag = 'scratch operand']
  #allocation3 [shape = 'f32[352,128]{1,0:T(8,128)}', space=vmem, size = 0x2c000, scoped, tag = 'scratch operand']
  #allocation4 [shape = 'bf16[2,1600]{1,0:T(2,128)(2,1)}', space=vmem, size = 0x1a00, scoped, tag = 'scratch operand']
  #allocation5 [shape = 'bf16[224,336]{1,0:T(8,128)(2,1)}', space=vmem, size = 0x2a000, scoped, tag = 'scratch operand']
  #allocation6 [shape = 'bf16[1600,128]{1,0:T(8,128)(2,1)}', space=vmem, size = 0x64000, scoped, tag = 'scratch operand']
  #allocation7 [shape = 's32[2]{0}', space=sflag, size = 0x8, scoped, tag = 'scratch operand']
  #allocation10 [shape = 's32[]', space=sflag, size = 0x4, offset = 0, fixed_abs, tag = 'sflag constant byte address 0x0 - dummy sync flag']
  #allocation11 [shape = 's32[]', space=sflag, size = 0x4, offset = 0, fixed_abs, tag = 'sflag constant byte address 0x0 - dummy sync flag']
  %s0 = inlined_call_operand.vmem [shape: bf16[408,96], index: 0, kind: input, shape index: {}]
  %s1 = inlined_call_operand.vmem [shape: bf16[10,96,128], index: 1, kind: input, shape index: {}]
  %s2 = inlined_call_operand.vmem [shape: bf16[2,96,128], index: 2, kind: input, shape index: {}]
  %s3 = inlined_call_operand.vmem [shape: bf16[96,64], index: 3, kind: input, shape index: {}]
  %s4 = inlined_call_operand.vmem [shape: f32[1,64], index: 4, kind: input, shape index: {}]
  %s5 = inlined_call_operand.vmem [shape: bf16[224,336], index: 5, kind: input, shape index: {}]
  %s6 = inlined_call_operand.vmem [shape: bf16[1600,128], index: 6, kind: input, shape index: {}]
  %s7 = inlined_call_operand.vmem [shape: f32[1,128], index: 7, kind: input, shape index: {}]
  %s8 = inlined_call_operand.vmem [shape: bf16[128,128], index: 8, kind: input, shape index: {}]
  %s9 = inlined_call_operand.vmem [shape: f32[1,128], index: 9, kind: input, shape index: {}]
  %s10 = inlined_call_operand.vmem [shape: bf16[128,128], index: 10, kind: input, shape index: {}]
  %s11 = inlined_call_operand.vmem [shape: f32[1,128], index: 11, kind: input, shape index: {}]
  %s12 = inlined_call_operand.hbm [shape: f32[2,128], index: 12, kind: output, shape index: {}]
  %s13 = sld [smem:[#allocation0]]
  $region118: #{classifier_cnn_cifar_forward.1} parent=0
    _
  %s15 = ssub.s32 1, %s13
  %s16 = scalar_select 0, %s15, %s13
  $region1: #{classifier_cnn_cifar_forward.1} parent=0
    #allocation8 [shape = 'u8[1024]{0}', space=vmem, size = 0x400, scoped, tag = 'output window, operand 0, single buffered']
    #allocation9 [shape = 's32[1]{0}', space=sflag, size = 0x4, scoped, tag = 'scoped memory for classifier_cnn_cifar_forward.1']
    %17 = vsyncpa [#allocation9], 0
    // Predicated region
    $region2: #{classifier_cnn_cifar_forward.1} parent=1 // pred_check
      _
    $region3: #{classifier_cnn_cifar_forward.1} parent=1 // pred_check_branch
      %19 = sbr.rel (0) target = $region5
    $region4: #{classifier_cnn_cifar_forward.1} parent=1 // pred_region
      _
    $region5: #{classifier_cnn_cifar_forward.1} parent=1 // pred_fallthru
      _
    // Predicated region
    $region6: #{classifier_cnn_cifar_forward.1} parent=1 // pred_check
      _
    $region7: #{classifier_cnn_cifar_forward.1} parent=1 // pred_check_branch
      %21 = sbr.rel (0) target = $region9
    $region8: #{classifier_cnn_cifar_forward.1} parent=1 // pred_region
      _
    $region9: #{classifier_cnn_cifar_forward.1} parent=1 // pred_fallthru
      _
    // Predicated region
    $region10: #{classifier_cnn_cifar_forward.1} parent=1 // pred_check
      _
    $region11: #{classifier_cnn_cifar_forward.1} parent=1 // pred_check_branch
      %23 = sbr.rel (0) target = $region13
    $region12: #{classifier_cnn_cifar_forward.1} parent=1 // pred_region
      _
    $region13: #{classifier_cnn_cifar_forward.1} parent=1 // pred_fallthru
      _
    // Predicated region
    $region14: #{classifier_cnn_cifar_forward.1} parent=1 // pred_check
      _
    $region15: #{classifier_cnn_cifar_forward.1} parent=1 // pred_check_branch
      %25 = sbr.rel (0) target = $region17
    $region16: #{classifier_cnn_cifar_forward.1} parent=1 // pred_region
      _
    $region17: #{classifier_cnn_cifar_forward.1} parent=1 // pred_fallthru
      _
    // Predicated region
    $region18: #{classifier_cnn_cifar_forward.1} parent=1 // pred_check
      _
    $region19: #{classifier_cnn_cifar_forward.1} parent=1 // pred_check_branch
      %27 = sbr.rel (0) target = $region21
    $region20: #{classifier_cnn_cifar_forward.1} parent=1 // pred_region
      _
    $region21: #{classifier_cnn_cifar_forward.1} parent=1 // pred_fallthru
      _
    // Predicated region
    $region22: #{classifier_cnn_cifar_forward.1} parent=1 // pred_check
      _
    $region23: #{classifier_cnn_cifar_forward.1} parent=1 // pred_check_branch
      %29 = sbr.rel (0) target = $region25
    $region24: #{classifier_cnn_cifar_forward.1} parent=1 // pred_region
      _
    $region25: #{classifier_cnn_cifar_forward.1} parent=1 // pred_fallthru
      _
    // Predicated region
    $region26: #{classifier_cnn_cifar_forward.1} parent=1 // pred_check
      _
    $region27: #{classifier_cnn_cifar_forward.1} parent=1 // pred_check_branch
      %31 = sbr.rel (0) target = $region29
    $region28: #{classifier_cnn_cifar_forward.1} parent=1 // pred_region
      _
    $region29: #{classifier_cnn_cifar_forward.1} parent=1 // pred_fallthru
      _
    // Predicated region
    $region30: #{classifier_cnn_cifar_forward.1} parent=1 // pred_check
      _
    $region31: #{classifier_cnn_cifar_forward.1} parent=1 // pred_check_branch
      %33 = sbr.rel (0) target = $region33
    $region32: #{classifier_cnn_cifar_forward.1} parent=1 // pred_region
      _
    $region33: #{classifier_cnn_cifar_forward.1} parent=1 // pred_fallthru
      _
    // Predicated region
    $region34: #{classifier_cnn_cifar_forward.1} parent=1 // pred_check
      _
    $region35: #{classifier_cnn_cifar_forward.1} parent=1 // pred_check_branch
      %35 = sbr.rel (0) target = $region37
    $region36: #{classifier_cnn_cifar_forward.1} parent=1 // pred_region
      _
    $region37: #{classifier_cnn_cifar_forward.1} parent=1 // pred_fallthru
      _
    // Predicated region
    $region38: #{classifier_cnn_cifar_forward.1} parent=1 // pred_check
      _
    $region39: #{classifier_cnn_cifar_forward.1} parent=1 // pred_check_branch
      %37 = sbr.rel (0) target = $region41
    $region40: #{classifier_cnn_cifar_forward.1} parent=1 // pred_region
      _
    $region41: #{classifier_cnn_cifar_forward.1} parent=1 // pred_fallthru
      _
    %p40 = scmp.lt.u32.totalorder 336, 8
    %p41 = pneg %p40
    // Predicated region
    $region42: #{classifier_cnn_cifar_forward.1} parent=1 // pred_check
      _
    $region43: #{classifier_cnn_cifar_forward.1} parent=1 // pred_check_branch
      %43 = sbr.rel (%p40) target = $region45
    $region44: #{classifier_cnn_cifar_forward.1} parent=1 // pred_region
      %s59 = sand.u32 336, 7
      %p60 = scmp.eq.s32.totalorder %s59, 0
      // Predicated region
      $region57: #{classifier_cnn_cifar_forward.1} parent=44 // pred_check
        %p61 = pneg %p60
      $region58: #{classifier_cnn_cifar_forward.1} parent=44 // pred_check_branch
        %63 = sbr.rel (%p61) target = $region60
      $region59: #{classifier_cnn_cifar_forward.1} parent=44 // pred_region
        loop: start=0, step=1, limit=1
        $region61: #{classifier_cnn_cifar_forward.1} parent=59 // loop_pre_header
          _
        $region62: #{classifier_cnn_cifar_forward.1} parent=59 // loop_header
          %s65 = sphi 0, %s69
          %p66 = scmp.ge.s32.totalorder %s65, 1
          %s70 = sphi %s5, %s5
          %s71 = sphi [#allocation5], [#allocation5]
        $region63: #{classifier_cnn_cifar_forward.1} parent=59 // loop_header_branch
          %68 = sbr.rel (%p66) target = $region67
        $region64: #{classifier_cnn_cifar_forward.1} parent=59 // loop_body
          %v72 = vld [vmem:[%s70] sm:$0xff]
          %73 = vst [vmem:[%s71] sm:$0xff] %v72
          %v74 = vld [vmem:[%s70 + $0x8] sm:$0xff]
          %75 = vst [vmem:[%s71 + $0x8] sm:$0xff] %v74
          %v76 = vld [vmem:[%s70 + $0x10] sm:$0xff]
          %77 = vst [vmem:[%s71 + $0x10] sm:$0xff] %v76
          %v78 = vld [vmem:[%s70 + $0x18] sm:$0xff]
          %79 = vst [vmem:[%s71 + $0x18] sm:$0xff] %v78
          %v80 = vld [vmem:[%s70 + $0x20] sm:$0xff]
          %81 = vst [vmem:[%s71 + $0x20] sm:$0xff] %v80
          %v82 = vld [vmem:[%s70 + $0x28] sm:$0xff]
          %83 = vst [vmem:[%s71 + $0x28] sm:$0xff] %v82
          %v84 = vld [vmem:[%s70 + $0x30] sm:$0xff]
          %85 = vst [vmem:[%s71 + $0x30] sm:$0xff] %v84
          %v86 = vld [vmem:[%s70 + $0x38] sm:$0xff]
          %87 = vst [vmem:[%s71 + $0x38] sm:$0xff] %v86
          %v88 = vld [vmem:[%s70 + $0x40] sm:$0xff]
          %89 = vst [vmem:[%s71 + $0x40] sm:$0xff] %v88
          %v90 = vld [vmem:[%s70 + $0x48] sm:$0xff]
          %91 = vst [vmem:[%s71 + $0x48] sm:$0xff] %v90
          %v92 = vld [vmem:[%s70 + $0x50] sm:$0xff]
          %93 = vst [vmem:[%s71 + $0x50] sm:$0xff] %v92
          %v94 = vld [vmem:[%s70 + $0x58] sm:$0xff]
          %95 = vst [vmem:[%s71 + $0x58] sm:$0xff] %v94
          %v96 = vld [vmem:[%s70 + $0x60] sm:$0xff]
          %97 = vst [vmem:[%s71 + $0x60] sm:$0xff] %v96
          %v98 = vld [vmem:[%s70 + $0x68] sm:$0xff]
          %99 = vst [vmem:[%s71 + $0x68] sm:$0xff] %v98
          %v100 = vld [vmem:[%s70 + $0x70] sm:$0xff]
          %101 = vst [vmem:[%s71 + $0x70] sm:$0xff] %v100
          %v102 = vld [vmem:[%s70 + $0x78] sm:$0xff]
          %103 = vst [vmem:[%s71 + $0x78] sm:$0xff] %v102
          %v104 = vld [vmem:[%s70 + $0x80] sm:$0xff]
          %105 = vst [vmem:[%s71 + $0x80] sm:$0xff] %v104
          %v106 = vld [vmem:[%s70 + $0x88] sm:$0xff]
          %107 = vst [vmem:[%s71 + $0x88] sm:$0xff] %v106
          %v108 = vld [vmem:[%s70 + $0x90] sm:$0xff]
          %109 = vst [vmem:[%s71 + $0x90] sm:$0xff] %v108
          %v110 = vld [vmem:[%s70 + $0x98] sm:$0xff]
          %111 = vst [vmem:[%s71 + $0x98] sm:$0xff] %v110
          %v112 = vld [vmem:[%s70 + $0xa0] sm:$0xff]
          %113 = vst [vmem:[%s71 + $0xa0] sm:$0xff] %v112
          %v114 = vld [vmem:[%s70 + $0xa8] sm:$0xff]
          %115 = vst [vmem:[%s71 + $0xa8] sm:$0xff] %v114
          %v116 = vld [vmem:[%s70 + $0xb0] sm:$0xff]
          %117 = vst [vmem:[%s71 + $0xb0] sm:$0xff] %v116
          %v118 = vld [vmem:[%s70 + $0xb8] sm:$0xff]
          %119 = vst [vmem:[%s71 + $0xb8] sm:$0xff] %v118
          %v120 = vld [vmem:[%s70 + $0xc0] sm:$0xff]
          %121 = vst [vmem:[%s71 + $0xc0] sm:$0xff] %v120
          %v122 = vld [vmem:[%s70 + $0xc8] sm:$0xff]
          %123 = vst [vmem:[%s71 + $0xc8] sm:$0xff] %v122
          %v124 = vld [vmem:[%s70 + $0xd0] sm:$0xff]
          %125 = vst [vmem:[%s71 + $0xd0] sm:$0xff] %v124
          %v126 = vld [vmem:[%s70 + $0xd8] sm:$0xff]
          %127 = vst [vmem:[%s71 + $0xd8] sm:$0xff] %v126
          %v128 = vld [vmem:[%s70 + $0xe0] sm:$0xff]
          %129 = vst [vmem:[%s71 + $0xe0] sm:$0xff] %v128
          %v130 = vld [vmem:[%s70 + $0xe8] sm:$0xff]
          %131 = vst [vmem:[%s71 + $0xe8] sm:$0xff] %v130
          %v132 = vld [vmem:[%s70 + $0xf0] sm:$0xff]
          %133 = vst [vmem:[%s71 + $0xf0] sm:$0xff] %v132
          %v134 = vld [vmem:[%s70 + $0xf8] sm:$0xff]
          %135 = vst [vmem:[%s71 + $0xf8] sm:$0xff] %v134
          %v136 = vld [vmem:[%s70 + $0x100] sm:$0xff]
          %137 = vst [vmem:[%s71 + $0x100] sm:$0xff] %v136
          %v138 = vld [vmem:[%s70 + $0x108] sm:$0xff]
          %139 = vst [vmem:[%s71 + $0x108] sm:$0xff] %v138
          %v140 = vld [vmem:[%s70 + $0x110] sm:$0xff]
          %141 = vst [vmem:[%s71 + $0x110] sm:$0xff] %v140
          %v142 = vld [vmem:[%s70 + $0x118] sm:$0xff]
          %143 = vst [vmem:[%s71 + $0x118] sm:$0xff] %v142
          %v144 = vld [vmem:[%s70 + $0x120] sm:$0xff]
          %145 = vst [vmem:[%s71 + $0x120] sm:$0xff] %v144
          %v146 = vld [vmem:[%s70 + $0x128] sm:$0xff]
          %147 = vst [vmem:[%s71 + $0x128] sm:$0xff] %v146
          %v148 = vld [vmem:[%s70 + $0x130] sm:$0xff]
          %149 = vst [vmem:[%s71 + $0x130] sm:$0xff] %v148
          %v150 = vld [vmem:[%s70 + $0x138] sm:$0xff]
          %151 = vst [vmem:[%s71 + $0x138] sm:$0xff] %v150
          %v152 = vld [vmem:[%s70 + $0x140] sm:$0xff]
          %153 = vst [vmem:[%s71 + $0x140] sm:$0xff] %v152
          %v154 = vld [vmem:[%s70 + $0x148] sm:$0xff]
          %155 = vst [vmem:[%s71 + $0x148] sm:$0xff] %v154
        $region65: #{classifier_cnn_cifar_forward.1} parent=59 // loop_footer
          %s69 = sadd.s32 1, %s65
        $region66: #{classifier_cnn_cifar_forward.1} parent=59 // loop_footer_branch
          %64 = sbr.rel target = $region62
        $region67: #{classifier_cnn_cifar_forward.1} parent=59 // loop_exit
          _
      $region60: #{classifier_cnn_cifar_forward.1} parent=44 // pred_fallthru
        _
      %p156 = pneg %p60
      // Predicated region
      $region68: #{classifier_cnn_cifar_forward.1} parent=44 // pred_check
        _
      $region69: #{classifier_cnn_cifar_forward.1} parent=44 // pred_check_branch
        %158 = sbr.rel (%p60) target = $region71
      $region70: #{classifier_cnn_cifar_forward.1} parent=44 // pred_region
        %s159 = sand.u32 336, 7
      $region71: #{classifier_cnn_cifar_forward.1} parent=44 // pred_fallthru
        _
    $region45: #{classifier_cnn_cifar_forward.1} parent=1 // pred_fallthru
      _
    // Predicated region
    $region46: #{classifier_cnn_cifar_forward.1} parent=1 // pred_check
      %p44 = pneg %p40
    $region47: #{classifier_cnn_cifar_forward.1} parent=1 // pred_check_branch
      %46 = sbr.rel (%p44) target = $region49
    $region48: #{classifier_cnn_cifar_forward.1} parent=1 // pred_region
      %s47 = sshll.u32 1, 336
      %s48 = ssub.s32 %s47, 1
      loop: start=0, step=1, limit=1
      $region50: #{classifier_cnn_cifar_forward.1} parent=48 // loop_pre_header
        _
      $region51: #{classifier_cnn_cifar_forward.1} parent=48 // loop_header
        %s50 = sphi 0, %s54
        %p51 = scmp.ge.s32.totalorder %s50, 1
        %s55 = sphi %s5, %s5
        %s56 = sphi [#allocation5], [#allocation5]
      $region52: #{classifier_cnn_cifar_forward.1} parent=48 // loop_header_branch
        %53 = sbr.rel (%p51) target = $region56
      $region53: #{classifier_cnn_cifar_forward.1} parent=48 // loop_body
        %v57 = vld [vmem:[%s55] sm:%s48]
        %58 = vst [vmem:[%s56] sm:%s48] %v57
      $region54: #{classifier_cnn_cifar_forward.1} parent=48 // loop_footer
        %s54 = sadd.s32 1, %s50
      $region55: #{classifier_cnn_cifar_forward.1} parent=48 // loop_footer_branch
        %49 = sbr.rel target = $region51
      $region56: #{classifier_cnn_cifar_forward.1} parent=48 // loop_exit
        _
    $region49: #{classifier_cnn_cifar_forward.1} parent=1 // pred_fallthru
      _
    // Predicated region
    $region72: #{classifier_cnn_cifar_forward.1} parent=1 // pred_check
      _
    $region73: #{classifier_cnn_cifar_forward.1} parent=1 // pred_check_branch
      %162 = sbr.rel (0) target = $region75
    $region74: #{classifier_cnn_cifar_forward.1} parent=1 // pred_region
      %163 = vsyncadd [#allocation7], 5376
    $region75: #{classifier_cnn_cifar_forward.1} parent=1 // pred_fallthru
      _
    %s164 = scalar_lea.sflag [#allocation7], 1
    %p166 = scmp.lt.u32.totalorder 800, 8
    %p167 = pneg %p166
    // Predicated region
    $region76: #{classifier_cnn_cifar_forward.1} parent=1 // pred_check
      _
    $region77: #{classifier_cnn_cifar_forward.1} parent=1 // pred_check_branch
      %169 = sbr.rel (%p166) target = $region79
    $region78: #{classifier_cnn_cifar_forward.1} parent=1 // pred_region
      %s185 = sand.u32 800, 7
      %p186 = scmp.eq.s32.totalorder %s185, 0
      // Predicated region
      $region91: #{classifier_cnn_cifar_forward.1} parent=78 // pred_check
        %p187 = pneg %p186
      $region92: #{classifier_cnn_cifar_forward.1} parent=78 // pred_check_branch
        %189 = sbr.rel (%p187) target = $region94
      $region93: #{classifier_cnn_cifar_forward.1} parent=78 // pred_region
        loop: start=0, step=1, limit=1
        $region95: #{classifier_cnn_cifar_forward.1} parent=93 // loop_pre_header
          _
        $region96: #{classifier_cnn_cifar_forward.1} parent=93 // loop_header
          %s191 = sphi 0, %s195
          %p192 = scmp.ge.s32.totalorder %s191, 1
          %s196 = sphi %s6, %s6
          %s197 = sphi [#allocation6], [#allocation6]
        $region97: #{classifier_cnn_cifar_forward.1} parent=93 // loop_header_branch
          %194 = sbr.rel (%p192) target = $region101
        $region98: #{classifier_cnn_cifar_forward.1} parent=93 // loop_body
          %v198 = vld [vmem:[%s196] sm:$0xff]
          %199 = vst [vmem:[%s197] sm:$0xff] %v198
          %v200 = vld [vmem:[%s196 + $0x8] sm:$0xff]
          %201 = vst [vmem:[%s197 + $0x8] sm:$0xff] %v200
          %v202 = vld [vmem:[%s196 + $0x10] sm:$0xff]
          %203 = vst [vmem:[%s197 + $0x10] sm:$0xff] %v202
          %v204 = vld [vmem:[%s196 + $0x18] sm:$0xff]
          %205 = vst [vmem:[%s197 + $0x18] sm:$0xff] %v204
          %v206 = vld [vmem:[%s196 + $0x20] sm:$0xff]
          %207 = vst [vmem:[%s197 + $0x20] sm:$0xff] %v206
          %v208 = vld [vmem:[%s196 + $0x28] sm:$0xff]
          %209 = vst [vmem:[%s197 + $0x28] sm:$0xff] %v208
          %v210 = vld [vmem:[%s196 + $0x30] sm:$0xff]
          %211 = vst [vmem:[%s197 + $0x30] sm:$0xff] %v210
          %v212 = vld [vmem:[%s196 + $0x38] sm:$0xff]
          %213 = vst [vmem:[%s197 + $0x38] sm:$0xff] %v212
          %v214 = vld [vmem:[%s196 + $0x40] sm:$0xff]
          %215 = vst [vmem:[%s197 + $0x40] sm:$0xff] %v214
          %v216 = vld [vmem:[%s196 + $0x48] sm:$0xff]
          %217 = vst [vmem:[%s197 + $0x48] sm:$0xff] %v216
          %v218 = vld [vmem:[%s196 + $0x50] sm:$0xff]
          %219 = vst [vmem:[%s197 + $0x50] sm:$0xff] %v218
          %v220 = vld [vmem:[%s196 + $0x58] sm:$0xff]
          %221 = vst [vmem:[%s197 + $0x58] sm:$0xff] %v220
          %v222 = vld [vmem:[%s196 + $0x60] sm:$0xff]
          %223 = vst [vmem:[%s197 + $0x60] sm:$0xff] %v222
          %v224 = vld [vmem:[%s196 + $0x68] sm:$0xff]
          %225 = vst [vmem:[%s197 + $0x68] sm:$0xff] %v224
          %v226 = vld [vmem:[%s196 + $0x70] sm:$0xff]
          %227 = vst [vmem:[%s197 + $0x70] sm:$0xff] %v226
          %v228 = vld [vmem:[%s196 + $0x78] sm:$0xff]
          %229 = vst [vmem:[%s197 + $0x78] sm:$0xff] %v228
          %v230 = vld [vmem:[%s196 + $0x80] sm:$0xff]
          %231 = vst [vmem:[%s197 + $0x80] sm:$0xff] %v230
          %v232 = vld [vmem:[%s196 + $0x88] sm:$0xff]
          %233 = vst [vmem:[%s197 + $0x88] sm:$0xff] %v232
          %v234 = vld [vmem:[%s196 + $0x90] sm:$0xff]
          %235 = vst [vmem:[%s197 + $0x90] sm:$0xff] %v234
          %v236 = vld [vmem:[%s196 + $0x98] sm:$0xff]
          %237 = vst [vmem:[%s197 + $0x98] sm:$0xff] %v236
          %v238 = vld [vmem:[%s196 + $0xa0] sm:$0xff]
          %239 = vst [vmem:[%s197 + $0xa0] sm:$0xff] %v238
          %v240 = vld [vmem:[%s196 + $0xa8] sm:$0xff]
          %241 = vst [vmem:[%s197 + $0xa8] sm:$0xff] %v240
          %v242 = vld [vmem:[%s196 + $0xb0] sm:$0xff]
          %243 = vst [vmem:[%s197 + $0xb0] sm:$0xff] %v242
          %v244 = vld [vmem:[%s196 + $0xb8] sm:$0xff]
          %245 = vst [vmem:[%s197 + $0xb8] sm:$0xff] %v244
          %v246 = vld [vmem:[%s196 + $0xc0] sm:$0xff]
          %247 = vst [vmem:[%s197 + $0xc0] sm:$0xff] %v246
          %v248 = vld [vmem:[%s196 + $0xc8] sm:$0xff]
          %249 = vst [vmem:[%s197 + $0xc8] sm:$0xff] %v248
          %v250 = vld [vmem:[%s196 + $0xd0] sm:$0xff]
          %251 = vst [vmem:[%s197 + $0xd0] sm:$0xff] %v250
          %v252 = vld [vmem:[%s196 + $0xd8] sm:$0xff]
          %253 = vst [vmem:[%s197 + $0xd8] sm:$0xff] %v252
          %v254 = vld [vmem:[%s196 + $0xe0] sm:$0xff]
          %255 = vst [vmem:[%s197 + $0xe0] sm:$0xff] %v254
          %v256 = vld [vmem:[%s196 + $0xe8] sm:$0xff]
          %257 = vst [vmem:[%s197 + $0xe8] sm:$0xff] %v256
          %v258 = vld [vmem:[%s196 + $0xf0] sm:$0xff]
          %259 = vst [vmem:[%s197 + $0xf0] sm:$0xff] %v258
          %v260 = vld [vmem:[%s196 + $0xf8] sm:$0xff]
          %261 = vst [vmem:[%s197 + $0xf8] sm:$0xff] %v260
          %v262 = vld [vmem:[%s196 + $0x100] sm:$0xff]
          %263 = vst [vmem:[%s197 + $0x100] sm:$0xff] %v262
          %v264 = vld [vmem:[%s196 + $0x108] sm:$0xff]
          %265 = vst [vmem:[%s197 + $0x108] sm:$0xff] %v264
          %v266 = vld [vmem:[%s196 + $0x110] sm:$0xff]
          %267 = vst [vmem:[%s197 + $0x110] sm:$0xff] %v266
          %v268 = vld [vmem:[%s196 + $0x118] sm:$0xff]
          %269 = vst [vmem:[%s197 + $0x118] sm:$0xff] %v268
          %v270 = vld [vmem:[%s196 + $0x120] sm:$0xff]
          %271 = vst [vmem:[%s197 + $0x120] sm:$0xff] %v270
          %v272 = vld [vmem:[%s196 + $0x128] sm:$0xff]
          %273 = vst [vmem:[%s197 + $0x128] sm:$0xff] %v272
          %v274 = vld [vmem:[%s196 + $0x130] sm:$0xff]
          %275 = vst [vmem:[%s197 + $0x130] sm:$0xff] %v274
          %v276 = vld [vmem:[%s196 + $0x138] sm:$0xff]
          %277 = vst [vmem:[%s197 + $0x138] sm:$0xff] %v276
          %v278 = vld [vmem:[%s196 + $0x140] sm:$0xff]
          %279 = vst [vmem:[%s197 + $0x140] sm:$0xff] %v278
          %v280 = vld [vmem:[%s196 + $0x148] sm:$0xff]
          %281 = vst [vmem:[%s197 + $0x148] sm:$0xff] %v280
          %v282 = vld [vmem:[%s196 + $0x150] sm:$0xff]
          %283 = vst [vmem:[%s197 + $0x150] sm:$0xff] %v282
          %v284 = vld [vmem:[%s196 + $0x158] sm:$0xff]
          %285 = vst [vmem:[%s197 + $0x158] sm:$0xff] %v284
          %v286 = vld [vmem:[%s196 + $0x160] sm:$0xff]
          %287 = vst [vmem:[%s197 + $0x160] sm:$0xff] %v286
          %v288 = vld [vmem:[%s196 + $0x168] sm:$0xff]
          %289 = vst [vmem:[%s197 + $0x168] sm:$0xff] %v288
          %v290 = vld [vmem:[%s196 + $0x170] sm:$0xff]
          %291 = vst [vmem:[%s197 + $0x170] sm:$0xff] %v290
          %v292 = vld [vmem:[%s196 + $0x178] sm:$0xff]
          %293 = vst [vmem:[%s197 + $0x178] sm:$0xff] %v292
          %v294 = vld [vmem:[%s196 + $0x180] sm:$0xff]
          %295 = vst [vmem:[%s197 + $0x180] sm:$0xff] %v294
          %v296 = vld [vmem:[%s196 + $0x188] sm:$0xff]
          %297 = vst [vmem:[%s197 + $0x188] sm:$0xff] %v296
          %v298 = vld [vmem:[%s196 + $0x190] sm:$0xff]
          %299 = vst [vmem:[%s197 + $0x190] sm:$0xff] %v298
          %v300 = vld [vmem:[%s196 + $0x198] sm:$0xff]
          %301 = vst [vmem:[%s197 + $0x198] sm:$0xff] %v300
          %v302 = vld [vmem:[%s196 + $0x1a0] sm:$0xff]
          %303 = vst [vmem:[%s197 + $0x1a0] sm:$0xff] %v302
          %v304 = vld [vmem:[%s196 + $0x1a8] sm:$0xff]
          %305 = vst [vmem:[%s197 + $0x1a8] sm:$0xff] %v304
          %v306 = vld [vmem:[%s196 + $0x1b0] sm:$0xff]
          %307 = vst [vmem:[%s197 + $0x1b0] sm:$0xff] %v306
          %v308 = vld [vmem:[%s196 + $0x1b8] sm:$0xff]
          %309 = vst [vmem:[%s197 + $0x1b8] sm:$0xff] %v308
          %v310 = vld [vmem:[%s196 + $0x1c0] sm:$0xff]
          %311 = vst [vmem:[%s197 + $0x1c0] sm:$0xff] %v310
          %v312 = vld [vmem:[%s196 + $0x1c8] sm:$0xff]
          %313 = vst [vmem:[%s197 + $0x1c8] sm:$0xff] %v312
          %v314 = vld [vmem:[%s196 + $0x1d0] sm:$0xff]
          %315 = vst [vmem:[%s197 + $0x1d0] sm:$0xff] %v314
          %v316 = vld [vmem:[%s196 + $0x1d8] sm:$0xff]
          %317 = vst [vmem:[%s197 + $0x1d8] sm:$0xff] %v316
          %v318 = vld [vmem:[%s196 + $0x1e0] sm:$0xff]
          %319 = vst [vmem:[%s197 + $0x1e0] sm:$0xff] %v318
          %v320 = vld [vmem:[%s196 + $0x1e8] sm:$0xff]
          %321 = vst [vmem:[%s197 + $0x1e8] sm:$0xff] %v320
          %v322 = vld [vmem:[%s196 + $0x1f0] sm:$0xff]
          %323 = vst [vmem:[%s197 + $0x1f0] sm:$0xff] %v322
          %v324 = vld [vmem:[%s196 + $0x1f8] sm:$0xff]
          %325 = vst [vmem:[%s197 + $0x1f8] sm:$0xff] %v324
          %v326 = vld [vmem:[%s196 + $0x200] sm:$0xff]
          %327 = vst [vmem:[%s197 + $0x200] sm:$0xff] %v326
          %v328 = vld [vmem:[%s196 + $0x208] sm:$0xff]
          %329 = vst [vmem:[%s197 + $0x208] sm:$0xff] %v328
          %v330 = vld [vmem:[%s196 + $0x210] sm:$0xff]
          %331 = vst [vmem:[%s197 + $0x210] sm:$0xff] %v330
          %v332 = vld [vmem:[%s196 + $0x218] sm:$0xff]
          %333 = vst [vmem:[%s197 + $0x218] sm:$0xff] %v332
          %v334 = vld [vmem:[%s196 + $0x220] sm:$0xff]
          %335 = vst [vmem:[%s197 + $0x220] sm:$0xff] %v334
          %v336 = vld [vmem:[%s196 + $0x228] sm:$0xff]
          %337 = vst [vmem:[%s197 + $0x228] sm:$0xff] %v336
          %v338 = vld [vmem:[%s196 + $0x230] sm:$0xff]
          %339 = vst [vmem:[%s197 + $0x230] sm:$0xff] %v338
          %v340 = vld [vmem:[%s196 + $0x238] sm:$0xff]
          %341 = vst [vmem:[%s197 + $0x238] sm:$0xff] %v340
          %v342 = vld [vmem:[%s196 + $0x240] sm:$0xff]
          %343 = vst [vmem:[%s197 + $0x240] sm:$0xff] %v342
          %v344 = vld [vmem:[%s196 + $0x248] sm:$0xff]
          %345 = vst [vmem:[%s197 + $0x248] sm:$0xff] %v344
          %v346 = vld [vmem:[%s196 + $0x250] sm:$0xff]
          %347 = vst [vmem:[%s197 + $0x250] sm:$0xff] %v346
          %v348 = vld [vmem:[%s196 + $0x258] sm:$0xff]
          %349 = vst [vmem:[%s197 + $0x258] sm:$0xff] %v348
          %v350 = vld [vmem:[%s196 + $0x260] sm:$0xff]
          %351 = vst [vmem:[%s197 + $0x260] sm:$0xff] %v350
          %v352 = vld [vmem:[%s196 + $0x268] sm:$0xff]
          %353 = vst [vmem:[%s197 + $0x268] sm:$0xff] %v352
          %v354 = vld [vmem:[%s196 + $0x270] sm:$0xff]
          %355 = vst [vmem:[%s197 + $0x270] sm:$0xff] %v354
          %v356 = vld [vmem:[%s196 + $0x278] sm:$0xff]
          %357 = vst [vmem:[%s197 + $0x278] sm:$0xff] %v356
          %v358 = vld [vmem:[%s196 + $0x280] sm:$0xff]
          %359 = vst [vmem:[%s197 + $0x280] sm:$0xff] %v358
          %v360 = vld [vmem:[%s196 + $0x288] sm:$0xff]
          %361 = vst [vmem:[%s197 + $0x288] sm:$0xff] %v360
          %v362 = vld [vmem:[%s196 + $0x290] sm:$0xff]
          %363 = vst [vmem:[%s197 + $0x290] sm:$0xff] %v362
          %v364 = vld [vmem:[%s196 + $0x298] sm:$0xff]
          %365 = vst [vmem:[%s197 + $0x298] sm:$0xff] %v364
          %v366 = vld [vmem:[%s196 + $0x2a0] sm:$0xff]
          %367 = vst [vmem:[%s197 + $0x2a0] sm:$0xff] %v366
          %v368 = vld [vmem:[%s196 + $0x2a8] sm:$0xff]
          %369 = vst [vmem:[%s197 + $0x2a8] sm:$0xff] %v368
          %v370 = vld [vmem:[%s196 + $0x2b0] sm:$0xff]
          %371 = vst [vmem:[%s197 + $0x2b0] sm:$0xff] %v370
          %v372 = vld [vmem:[%s196 + $0x2b8] sm:$0xff]
          %373 = vst [vmem:[%s197 + $0x2b8] sm:$0xff] %v372
          %v374 = vld [vmem:[%s196 + $0x2c0] sm:$0xff]
          %375 = vst [vmem:[%s197 + $0x2c0] sm:$0xff] %v374
          %v376 = vld [vmem:[%s196 + $0x2c8] sm:$0xff]
          %377 = vst [vmem:[%s197 + $0x2c8] sm:$0xff] %v376
          %v378 = vld [vmem:[%s196 + $0x2d0] sm:$0xff]
          %379 = vst [vmem:[%s197 + $0x2d0] sm:$0xff] %v378
          %v380 = vld [vmem:[%s196 + $0x2d8] sm:$0xff]
          %381 = vst [vmem:[%s197 + $0x2d8] sm:$0xff] %v380
          %v382 = vld [vmem:[%s196 + $0x2e0] sm:$0xff]
          %383 = vst [vmem:[%s197 + $0x2e0] sm:$0xff] %v382
          %v384 = vld [vmem:[%s196 + $0x2e8] sm:$0xff]
          %385 = vst [vmem:[%s197 + $0x2e8] sm:$0xff] %v384
          %v386 = vld [vmem:[%s196 + $0x2f0] sm:$0xff]
          %387 = vst [vmem:[%s197 + $0x2f0] sm:$0xff] %v386
          %v388 = vld [vmem:[%s196 + $0x2f8] sm:$0xff]
          %389 = vst [vmem:[%s197 + $0x2f8] sm:$0xff] %v388
          %v390 = vld [vmem:[%s196 + $0x300] sm:$0xff]
          %391 = vst [vmem:[%s197 + $0x300] sm:$0xff] %v390
          %v392 = vld [vmem:[%s196 + $0x308] sm:$0xff]
          %393 = vst [vmem:[%s197 + $0x308] sm:$0xff] %v392
          %v394 = vld [vmem:[%s196 + $0x310] sm:$0xff]
          %395 = vst [vmem:[%s197 + $0x310] sm:$0xff] %v394
          %v396 = vld [vmem:[%s196 + $0x318] sm:$0xff]
          %397 = vst [vmem:[%s197 + $0x318] sm:$0xff] %v396
        $region99: #{classifier_cnn_cifar_forward.1} parent=93 // loop_footer
          %s195 = sadd.s32 1, %s191
        $region100: #{classifier_cnn_cifar_forward.1} parent=93 // loop_footer_branch
          %190 = sbr.rel target = $region96
        $region101: #{classifier_cnn_cifar_forward.1} parent=93 // loop_exit
          _
      $region94: #{classifier_cnn_cifar_forward.1} parent=78 // pred_fallthru
        _
      %p398 = pneg %p186
      // Predicated region
      $region102: #{classifier_cnn_cifar_forward.1} parent=78 // pred_check
        _
      $region103: #{classifier_cnn_cifar_forward.1} parent=78 // pred_check_branch
        %400 = sbr.rel (%p186) target = $region105
      $region104: #{classifier_cnn_cifar_forward.1} parent=78 // pred_region
        %s401 = sand.u32 800, 7
      $region105: #{classifier_cnn_cifar_forward.1} parent=78 // pred_fallthru
        _
    $region79: #{classifier_cnn_cifar_forward.1} parent=1 // pred_fallthru
      _
    // Predicated region
    $region80: #{classifier_cnn_cifar_forward.1} parent=1 // pred_check
      %p170 = pneg %p166
    $region81: #{classifier_cnn_cifar_forward.1} parent=1 // pred_check_branch
      %172 = sbr.rel (%p170) target = $region83
    $region82: #{classifier_cnn_cifar_forward.1} parent=1 // pred_region
      %s173 = sshll.u32 1, 800
      %s174 = ssub.s32 %s173, 1
      loop: start=0, step=1, limit=1
      $region84: #{classifier_cnn_cifar_forward.1} parent=82 // loop_pre_header
        _
      $region85: #{classifier_cnn_cifar_forward.1} parent=82 // loop_header
        %s176 = sphi 0, %s180
        %p177 = scmp.ge.s32.totalorder %s176, 1
        %s181 = sphi %s6, %s6
        %s182 = sphi [#allocation6], [#allocation6]
      $region86: #{classifier_cnn_cifar_forward.1} parent=82 // loop_header_branch
        %179 = sbr.rel (%p177) target = $region90
      $region87: #{classifier_cnn_cifar_forward.1} parent=82 // loop_body
        %v183 = vld [vmem:[%s181] sm:%s174]
        %184 = vst [vmem:[%s182] sm:%s174] %v183
      $region88: #{classifier_cnn_cifar_forward.1} parent=82 // loop_footer
        %s180 = sadd.s32 1, %s176
      $region89: #{classifier_cnn_cifar_forward.1} parent=82 // loop_footer_branch
        %175 = sbr.rel target = $region85
      $region90: #{classifier_cnn_cifar_forward.1} parent=82 // loop_exit
        _
    $region83: #{classifier_cnn_cifar_forward.1} parent=1 // pred_fallthru
      _
    // Predicated region
    $region106: #{classifier_cnn_cifar_forward.1} parent=1 // pred_check
      _
    $region107: #{classifier_cnn_cifar_forward.1} parent=1 // pred_check_branch
      %404 = sbr.rel (0) target = $region109
    $region108: #{classifier_cnn_cifar_forward.1} parent=1 // pred_region
      %405 = vsyncadd %s164, 12800
    $region109: #{classifier_cnn_cifar_forward.1} parent=1 // pred_fallthru
      _
    %v406 = vld [vmem:[%s0] sm:$0xf]
    %v407 = vld [vmem:[%s0 + $0x4] sm:$0xf]
    %v408 = vld [vmem:[%s0 + $0x8] sm:$0xf]
    %v409 = vld [vmem:[%s0 + $0xc] sm:$0xf]
    %v410 = vld [vmem:[%s0 + $0x10] sm:$0xf]
    %v411 = vld [vmem:[%s0 + $0x14] sm:$0xf]
    %v412 = vld [vmem:[%s0 + $0x18] sm:$0xf]
    %v413 = vld [vmem:[%s0 + $0x1c] sm:$0xf]
    %v414 = vld [vmem:[%s0 + $0x20] sm:$0xf]
    %v415 = vld [vmem:[%s0 + $0x24] sm:$0xf]
    %v416 = vld [vmem:[%s0 + $0x28] sm:$0xf]
    %v417 = vld [vmem:[%s0 + $0x2c] sm:$0xf]
    %v418 = vld [vmem:[%s0 + $0x30] sm:$0xf]
    %v419 = vld [vmem:[%s0 + $0x34] sm:$0xf]
    %v420 = vld [vmem:[%s0 + $0x38] sm:$0xf]
    %v421 = vld [vmem:[%s0 + $0x3c] sm:$0xf]
    %v422 = vld [vmem:[%s0 + $0x40] sm:$0xf]
    %v423 = vld [vmem:[%s0 + $0x44] sm:$0xf]
    %v424 = vld [vmem:[%s0 + $0x48] sm:$0xf]
    %v425 = vld [vmem:[%s0 + $0x4c] sm:$0xf]
    %v426 = vld [vmem:[%s0 + $0x50] sm:$0xf]
    %v427 = vld [vmem:[%s0 + $0x54] sm:$0xf]
    %v428 = vld [vmem:[%s0 + $0x58] sm:$0xf]
    %v429 = vld [vmem:[%s0 + $0x5c] sm:$0xf]
    %v430 = vld [vmem:[%s0 + $0x60] sm:$0xf]
    %v431 = vld [vmem:[%s0 + $0x64] sm:$0xf]
    %v432 = vld [vmem:[%s0 + $0x68] sm:$0xf]
    %v433 = vld [vmem:[%s0 + $0x6c] sm:$0xf]
    %v434 = vld [vmem:[%s0 + $0x70] sm:$0xf]
    %v435 = vld [vmem:[%s0 + $0x74] sm:$0xf]
    %v436 = vld [vmem:[%s0 + $0x78] sm:$0xf]
    %v437 = vld [vmem:[%s0 + $0x7c] sm:$0xf]
    %v438 = vld [vmem:[%s0 + $0x80] sm:$0xf]
    %v439 = vld [vmem:[%s0 + $0x84] sm:$0xf]
    %v440 = vld [vmem:[%s0 + $0x88] sm:$0xf]
    %v441 = vld [vmem:[%s0 + $0x8c] sm:$0xf]
    %v442 = vld [vmem:[%s0 + $0x90] sm:$0xf]
    %v443 = vld [vmem:[%s0 + $0x94] sm:$0xf]
    %v444 = vld [vmem:[%s0 + $0x98] sm:$0xf]
    %v445 = vld [vmem:[%s0 + $0x9c] sm:$0xf]
    %v446 = vld [vmem:[%s0 + $0xa0] sm:$0xf]
    %v447 = vld [vmem:[%s0 + $0xa4] sm:$0xf]
    %v448 = vld [vmem:[%s0 + $0xa8] sm:$0xf]
    %v449 = vld [vmem:[%s1] sm:$0xf]
    %v450 = vld [vmem:[%s1 + $0x4] sm:$0xf]
    %v451 = vld [vmem:[%s1 + $0x8] sm:$0xf]
    %v452 = vld [vmem:[%s1 + $0xc] sm:$0xf]
    %v453 = vld [vmem:[%s1 + $0x10] sm:$0xf]
    %v454 = vld [vmem:[%s1 + $0x14] sm:$0xf]
    %v455 = vld [vmem:[%s1 + $0x18] sm:$0xf]
    %v456 = vld [vmem:[%s1 + $0x1c] sm:$0xf]
    %v457 = vld [vmem:[%s1 + $0x20] sm:$0xf]
    %v458 = vld [vmem:[%s1 + $0x24] sm:$0xf]
    %v459 = vld [vmem:[%s1 + $0x28] sm:$0xf]
    %v460 = vld [vmem:[%s1 + $0x2c] sm:$0xf]
    %v461 = vld [vmem:[%s0] sm:$0xe]
    %v462 = vld [vmem:[%s0 + $0xac] sm:$0x1]
    %s463 = scalar_lea.vmem %s1, 48
    %v464 = vld [vmem:[%s463] sm:$0xf]
    %v465 = vld [vmem:[%s463 + $0x4] sm:$0xf]
    %v466 = vld [vmem:[%s463 + $0x8] sm:$0xf]
    %v467 = vld [vmem:[%s463 + $0xc] sm:$0xf]
    %v468 = vld [vmem:[%s463 + $0x10] sm:$0xf]
    %v469 = vld [vmem:[%s463 + $0x14] sm:$0xf]
    %v470 = vld [vmem:[%s463 + $0x18] sm:$0xf]
    %v471 = vld [vmem:[%s463 + $0x1c] sm:$0xf]
    %v472 = vld [vmem:[%s463 + $0x20] sm:$0xf]
    %v473 = vld [vmem:[%s463 + $0x24] sm:$0xf]
    %v474 = vld [vmem:[%s463 + $0x28] sm:$0xf]
    %v475 = vld [vmem:[%s463 + $0x2c] sm:$0xf]
    %v520 = vunpack.c.l.b16 %v461
    %v521 = vunpack.c.l.b16 %v407
    %v522 = vunpack.c.l.b16 %v408
    %v523 = vunpack.c.l.b16 %v409
    %v524 = vunpack.c.l.b16 %v410
    %v525 = vunpack.c.l.b16 %v411
    %v526 = vunpack.c.l.b16 %v412
    %v527 = vunpack.c.l.b16 %v413
    %v528 = vunpack.c.l.b16 %v414
    %v529 = vunpack.c.l.b16 %v415
    %v530 = vunpack.c.l.b16 %v416
    %v531 = vunpack.c.l.b16 %v417
    %v532 = vunpack.c.l.b16 %v418
    %v533 = vunpack.c.l.b16 %v419
    %v534 = vunpack.c.l.b16 %v420
    %v535 = vunpack.c.l.b16 %v421
    %v536 = vunpack.c.l.b16 %v422
    %v537 = vunpack.c.l.b16 %v423
    %v538 = vunpack.c.l.b16 %v424
    %v539 = vunpack.c.l.b16 %v425
    %v540 = vunpack.c.l.b16 %v426
    %v541 = vunpack.c.l.b16 %v427
    %v542 = vunpack.c.l.b16 %v428
    %v543 = vunpack.c.l.b16 %v429
    %v544 = vunpack.c.l.b16 %v430
    %v545 = vunpack.c.l.b16 %v431
    %v546 = vunpack.c.l.b16 %v432
    %v547 = vunpack.c.l.b16 %v433
    %v548 = vunpack.c.l.b16 %v434
    %v549 = vunpack.c.l.b16 %v435
    %v550 = vunpack.c.l.b16 %v436
    %v551 = vunpack.c.l.b16 %v437
    %v552 = vunpack.c.l.b16 %v438
    %v553 = vunpack.c.l.b16 %v439
    %v554 = vunpack.c.l.b16 %v440
    %v555 = vunpack.c.l.b16 %v441
    %v556 = vunpack.c.l.b16 %v442
    %v557 = vunpack.c.l.b16 %v443
    %v558 = vunpack.c.l.b16 %v444
    %v559 = vunpack.c.l.b16 %v445
    %v560 = vunpack.c.l.b16 %v446
    %v561 = vunpack.c.l.b16 %v447
    %v562 = vunpack.c.l.b16 %v448
    %v563 = vunpack.c.l.b16 %v462
    %v564 = vpack.c.b16 %v521, %v520
    %v565 = vpack.c.b16 %v523, %v522
    %v566 = vpack.c.b16 %v525, %v524
    %v567 = vpack.c.b16 %v527, %v526
    %v568 = vpack.c.b16 %v529, %v528
    %v569 = vpack.c.b16 %v531, %v530
    %v570 = vpack.c.b16 %v533, %v532
    %v571 = vpack.c.b16 %v535, %v534
    %v572 = vpack.c.b16 %v537, %v536
    %v573 = vpack.c.b16 %v539, %v538
    %v574 = vpack.c.b16 %v541, %v540
    %v575 = vpack.c.b16 %v543, %v542
    %v576 = vpack.c.b16 %v545, %v544
    %v577 = vpack.c.b16 %v547, %v546
    %v578 = vpack.c.b16 %v549, %v548
    %v579 = vpack.c.b16 %v551, %v550
    %v580 = vpack.c.b16 %v553, %v552
    %v581 = vpack.c.b16 %v555, %v554
    %v582 = vpack.c.b16 %v557, %v556
    %v583 = vpack.c.b16 %v559, %v558
    %v584 = vpack.c.b16 %v561, %v560
    %v585 = vpack.c.b16 %v563, %v562
    %vm586 = vcmask 1046528
    %v587 = vrot.slane %v564, 1
    %v588 = vrot.slane %v565, 1
    %v589 = vsel %vm586, %v587, %v588
    %v590 = vrot.slane %v566, 1
    %v591 = vsel %vm586, %v588, %v590
    %v592 = vrot.slane %v567, 1
    %v593 = vsel %vm586, %v590, %v592
    %v594 = vrot.slane %v568, 1
    %v595 = vsel %vm586, %v592, %v594
    %v596 = vrot.slane %v569, 1
    %v597 = vsel %vm586, %v594, %v596
    %v598 = vrot.slane %v570, 1
    %v599 = vsel %vm586, %v596, %v598
    %v600 = vrot.slane %v571, 1
    %v601 = vsel %vm586, %v598, %v600
    %v602 = vrot.slane %v572, 1
    %v603 = vsel %vm586, %v600, %v602
    %v604 = vrot.slane %v573, 1
    %v605 = vsel %vm586, %v602, %v604
    %v606 = vrot.slane %v574, 1
    %v607 = vsel %vm586, %v604, %v606
    %v608 = vrot.slane %v575, 1
    %v609 = vsel %vm586, %v606, %v608
    %v610 = vrot.slane %v576, 1
    %v611 = vsel %vm586, %v608, %v610
    %v612 = vrot.slane %v577, 1
    %v613 = vsel %vm586, %v610, %v612
    %v614 = vrot.slane %v578, 1
    %v615 = vsel %vm586, %v612, %v614
    %v616 = vrot.slane %v579, 1
    %v617 = vsel %vm586, %v614, %v616
    %v618 = vrot.slane %v580, 1
    %v619 = vsel %vm586, %v616, %v618
    %v620 = vrot.slane %v581, 1
    %v621 = vsel %vm586, %v618, %v620
    %v622 = vrot.slane %v582, 1
    %v623 = vsel %vm586, %v620, %v622
    %v624 = vrot.slane %v583, 1
    %v625 = vsel %vm586, %v622, %v624
    %v626 = vrot.slane %v584, 1
    %v627 = vsel %vm586, %v624, %v626
    %v628 = vrot.slane %v585, 1
    %v629 = vsel %vm586, %v626, %v628
    %v642 = vunpack.c.l.b16 %v464
    %v643 = vunpack.c.l.b16 %v465
    %v644 = vunpack.c.l.b16 %v466
    %v645 = vunpack.c.l.b16 %v467
    %v646 = vunpack.c.l.b16 %v468
    %v647 = vunpack.c.l.b16 %v469
    %v648 = vunpack.c.l.b16 %v470
    %v649 = vunpack.c.l.b16 %v471
    %v650 = vunpack.c.l.b16 %v472
    %v651 = vunpack.c.l.b16 %v473
    %v652 = vunpack.c.l.b16 %v474
    %v653 = vunpack.c.l.b16 %v475
    %v654 = vpack.c.b16 %v643, %v642
    %v655 = vpack.c.b16 %v645, %v644
    %v656 = vpack.c.b16 %v647, %v646
    %v657 = vpack.c.b16 %v649, %v648
    %v658 = vpack.c.b16 %v651, %v650
    %v659 = vpack.c.b16 %v653, %v652
    %vm666 = vcmask 785408
    %v668 = vsel %vm666, %v589, 0
    %v671 = vsel %vm666, %v591, 0
    %v674 = vsel %vm666, %v593, 0
    %v677 = vsel %vm666, %v595, 0
    %v680 = vsel %vm666, %v597, 0
    %v683 = vsel %vm666, %v599, 0
    %v686 = vsel %vm666, %v601, 0
    %v689 = vsel %vm666, %v603, 0
    %v692 = vsel %vm666, %v605, 0
    %v695 = vsel %vm666, %v607, 0
    %v698 = vsel %vm666, %v609, 0
    %v701 = vsel %vm666, %v611, 0
    %v704 = vsel %vm666, %v613, 0
    %v707 = vsel %vm666, %v615, 0
    %v710 = vsel %vm666, %v617, 0
    %v713 = vsel %vm666, %v619, 0
    %v716 = vsel %vm666, %v621, 0
    %v719 = vsel %vm666, %v623, 0
    %v722 = vsel %vm666, %v625, 0
    %v725 = vsel %vm666, %v627, 0
    %v728 = vsel %vm666, %v629, 0
    %v731 = vsel %vm666, %v628, 0
    %733 = vmatprep.subr.bf16.mxu0 0
    %734 = vmatpush1.bf16.msra.mxu0 0
    %735 = vmatprep.subr.bf16.mxu0 0
    %736 = vmatpush1.bf16.msra.mxu0 0
    %737 = vmatprep.subr.bf16.mxu0 0
    %738 = vmatpush1.bf16.msra.mxu0 %v659
    %739 = vmatprep.subr.bf16.mxu0 0
    %740 = vmatpush1.bf16.msra.mxu0 %v658
    %741 = vmatprep.subr.bf16.mxu0 0
    %742 = vmatpush1.bf16.msra.mxu0 %v657
    %743 = vmatprep.subr.bf16.mxu0 0
    %744 = vmatpush1.bf16.msra.mxu0 %v656
    %745 = vmatprep.subr.bf16.mxu0 0
    %746 = vmatpush1.bf16.msra.mxu0 %v655
    %747 = vmatprep.subr.bf16.mxu0 0
    %748 = vmatpush1.bf16.msra.mxu0 %v654
    %749 = vmatprep.subr.bf16.mxu0 0
    %750 = vmatpush2.bf16.msra.mxu0 0
    %751 = vmatprep.subr.bf16.mxu0 0
    %752 = vmatpush2.bf16.msra.mxu0 0
    %753 = vmatprep.subr.bf16.mxu0 0
    %754 = vmatpush2.bf16.msra.mxu0 0
    %755 = vmatprep.subr.bf16.mxu0 0
    %756 = vmatpush2.bf16.msra.mxu0 0
    %757 = vmatprep.subr.bf16.mxu0 0
    %758 = vmatpush2.bf16.msra.mxu0 0
    %759 = vmatprep.subr.bf16.mxu0 0
    %760 = vmatpush2.bf16.msra.mxu0 0
    %761 = vmatprep.subr.bf16.mxu0 0
    %762 = vmatpush2.bf16.msra.mxu0 0
    %763 = vmatprep.subr.bf16.mxu0 0
    %764 = vmatpush2.bf16.msra.mxu0 0
    %765 = vmatprep.mubr.bf16.mxu0 0
    %766 = vmatmul.mubr.bf16.gmra.mxu0 %v668
    %v767 = vpop.f32.mrf.mxu0
    %v768 = vadd.f32 0.0, %v767
    %v769 = vpop.f32.mrf.mxu0
    %v770 = vpop.f32.mrf.mxu0
    %v771 = vadd.f32 0.0, %v770
    %v772 = vpop.f32.mrf.mxu0
    %773 = vmatprep.mubr.bf16.mxu0 0
    %774 = vmatmul.mubr.bf16.gmra.mxu0 %v671
    %v775 = vpop.f32.mrf.mxu0
    %v776 = vadd.f32 0.0, %v775
    %v777 = vpop.f32.mrf.mxu0
    %v778 = vpop.f32.mrf.mxu0
    %v779 = vadd.f32 0.0, %v778
    %v780 = vpop.f32.mrf.mxu0
    %781 = vmatprep.mubr.bf16.mxu0 0
    %782 = vmatmul.mubr.bf16.gmra.mxu0 %v674
    %v783 = vpop.f32.mrf.mxu0
    %v784 = vadd.f32 0.0, %v783
    %v785 = vpop.f32.mrf.mxu0
    %v786 = vpop.f32.mrf.mxu0
    %v787 = vadd.f32 0.0, %v786
    %v788 = vpop.f32.mrf.mxu0
    %789 = vmatprep.mubr.bf16.mxu0 0
    %790 = vmatmul.mubr.bf16.gmra.mxu0 %v677
    %v791 = vpop.f32.mrf.mxu0
    %v792 = vadd.f32 0.0, %v791
    %v793 = vpop.f32.mrf.mxu0
    %v794 = vpop.f32.mrf.mxu0
    %v795 = vadd.f32 0.0, %v794
    %v796 = vpop.f32.mrf.mxu0
    %797 = vmatprep.mubr.bf16.mxu0 0
    %798 = vmatmul.mubr.bf16.gmra.mxu0 %v680
    %v799 = vpop.f32.mrf.mxu0
    %v800 = vadd.f32 0.0, %v799
    %v801 = vpop.f32.mrf.mxu0
    %v802 = vpop.f32.mrf.mxu0
    %v803 = vadd.f32 0.0, %v802
    %v804 = vpop.f32.mrf.mxu0
    %805 = vmatprep.mubr.bf16.mxu0 0
    %806 = vmatmul.mubr.bf16.gmra.mxu0 %v683
    %v807 = vpop.f32.mrf.mxu0
    %v808 = vadd.f32 0.0, %v807
    %v809 = vpop.f32.mrf.mxu0
    %v810 = vpop.f32.mrf.mxu0
    %v811 = vadd.f32 0.0, %v810
    %v812 = vpop.f32.mrf.mxu0
    %813 = vmatprep.mubr.bf16.mxu0 0
    %814 = vmatmul.mubr.bf16.gmra.mxu0 %v686
    %v815 = vpop.f32.mrf.mxu0
    %v816 = vadd.f32 0.0, %v815
    %v817 = vpop.f32.mrf.mxu0
    %v818 = vpop.f32.mrf.mxu0
    %v819 = vadd.f32 0.0, %v818
    %v820 = vpop.f32.mrf.mxu0
    %821 = vmatprep.mubr.bf16.mxu0 0
    %822 = vmatmul.mubr.bf16.gmra.mxu0 %v689
    %v823 = vpop.f32.mrf.mxu0
    %v824 = vadd.f32 0.0, %v823
    %v825 = vpop.f32.mrf.mxu0
    %v826 = vpop.f32.mrf.mxu0
    %v827 = vadd.f32 0.0, %v826
    %v828 = vpop.f32.mrf.mxu0
    %829 = vmatprep.mubr.bf16.mxu0 0
    %830 = vmatmul.mubr.bf16.gmra.mxu0 %v692
    %v831 = vpop.f32.mrf.mxu0
    %v832 = vadd.f32 0.0, %v831
    %v833 = vpop.f32.mrf.mxu0
    %v834 = vpop.f32.mrf.mxu0
    %v835 = vadd.f32 0.0, %v834
    %v836 = vpop.f32.mrf.mxu0
    %837 = vmatprep.mubr.bf16.mxu0 0
    %838 = vmatmul.mubr.bf16.gmra.mxu0 %v695
    %v839 = vpop.f32.mrf.mxu0
    %v840 = vadd.f32 0.0, %v839
    %v841 = vpop.f32.mrf.mxu0
    %v842 = vpop.f32.mrf.mxu0
    %v843 = vadd.f32 0.0, %v842
    %v844 = vpop.f32.mrf.mxu0
    %845 = vmatprep.mubr.bf16.mxu0 0
    %846 = vmatmul.mubr.bf16.gmra.mxu0 %v698
    %v847 = vpop.f32.mrf.mxu0
    %v848 = vadd.f32 0.0, %v847
    %v849 = vpop.f32.mrf.mxu0
    %v850 = vpop.f32.mrf.mxu0
    %v851 = vadd.f32 0.0, %v850
    %v852 = vpop.f32.mrf.mxu0
    %853 = vmatprep.mubr.bf16.mxu0 0
    %854 = vmatmul.mubr.bf16.gmra.mxu0 %v701
    %v855 = vpop.f32.mrf.mxu0
    %v856 = vadd.f32 0.0, %v855
    %v857 = vpop.f32.mrf.mxu0
    %v858 = vpop.f32.mrf.mxu0
    %v859 = vadd.f32 0.0, %v858
    %v860 = vpop.f32.mrf.mxu0
    %861 = vmatprep.mubr.bf16.mxu0 0
    %862 = vmatmul.mubr.bf16.gmra.mxu0 %v704
    %v863 = vpop.f32.mrf.mxu0
    %v864 = vadd.f32 0.0, %v863
    %v865 = vpop.f32.mrf.mxu0
    %v866 = vpop.f32.mrf.mxu0
    %v867 = vadd.f32 0.0, %v866
    %v868 = vpop.f32.mrf.mxu0
    %869 = vmatprep.mubr.bf16.mxu0 0
    %870 = vmatmul.mubr.bf16.gmra.mxu0 %v707
    %v871 = vpop.f32.mrf.mxu0
    %v872 = vadd.f32 0.0, %v871
    %v873 = vpop.f32.mrf.mxu0
    %v874 = vpop.f32.mrf.mxu0
    %v875 = vadd.f32 0.0, %v874
    %v876 = vpop.f32.mrf.mxu0
    %877 = vmatprep.mubr.bf16.mxu0 0
    %878 = vmatmul.mubr.bf16.gmra.mxu0 %v710
    %v879 = vpop.f32.mrf.mxu0
    %v880 = vadd.f32 0.0, %v879
    %v881 = vpop.f32.mrf.mxu0
    %v882 = vpop.f32.mrf.mxu0
    %v883 = vadd.f32 0.0, %v882
    %v884 = vpop.f32.mrf.mxu0
    %885 = vmatprep.mubr.bf16.mxu0 0
    %886 = vmatmul.mubr.bf16.gmra.mxu0 %v713
    %v887 = vpop.f32.mrf.mxu0
    %v888 = vadd.f32 0.0, %v887
    %v889 = vpop.f32.mrf.mxu0
    %v890 = vpop.f32.mrf.mxu0
    %v891 = vadd.f32 0.0, %v890
    %v892 = vpop.f32.mrf.mxu0
    %893 = vmatprep.mubr.bf16.mxu0 0
    %894 = vmatmul.mubr.bf16.gmra.mxu0 %v716
    %v895 = vpop.f32.mrf.mxu0
    %v896 = vadd.f32 0.0, %v895
    %v897 = vpop.f32.mrf.mxu0
    %v898 = vpop.f32.mrf.mxu0
    %v899 = vadd.f32 0.0, %v898
    %v900 = vpop.f32.mrf.mxu0
    %901 = vmatprep.mubr.bf16.mxu0 0
    %902 = vmatmul.mubr.bf16.gmra.mxu0 %v719
    %v903 = vpop.f32.mrf.mxu0
    %v904 = vadd.f32 0.0, %v903
    %v905 = vpop.f32.mrf.mxu0
    %v906 = vpop.f32.mrf.mxu0
    %v907 = vadd.f32 0.0, %v906
    %v908 = vpop.f32.mrf.mxu0
    %909 = vmatprep.mubr.bf16.mxu0 0
    %910 = vmatmul.mubr.bf16.gmra.mxu0 %v722
    %v911 = vpop.f32.mrf.mxu0
    %v912 = vadd.f32 0.0, %v911
    %v913 = vpop.f32.mrf.mxu0
    %v914 = vpop.f32.mrf.mxu0
    %v915 = vadd.f32 0.0, %v914
    %v916 = vpop.f32.mrf.mxu0
    %917 = vmatprep.mubr.bf16.mxu0 0
    %918 = vmatmul.mubr.bf16.gmra.mxu0 %v725
    %v919 = vpop.f32.mrf.mxu0
    %v920 = vadd.f32 0.0, %v919
    %v921 = vpop.f32.mrf.mxu0
    %v922 = vpop.f32.mrf.mxu0
    %v923 = vadd.f32 0.0, %v922
    %v924 = vpop.f32.mrf.mxu0
    %925 = vmatprep.mubr.bf16.mxu0 0
    %926 = vmatmul.mubr.bf16.gmra.mxu0 %v728
    %v927 = vpop.f32.mrf.mxu0
    %v928 = vadd.f32 0.0, %v927
    %v929 = vpop.f32.mrf.mxu0
    %v930 = vpop.f32.mrf.mxu0
    %v931 = vadd.f32 0.0, %v930
    %v932 = vpop.f32.mrf.mxu0
    %933 = vmatprep.mubr.bf16.mxu0 0
    %934 = vmatmul.mubr.bf16.gmra.mxu0 %v731
    %v935 = vpop.f32.mrf.mxu0
    %v936 = vadd.f32 0.0, %v935
    %v937 = vpop.f32.mrf.mxu0
    %v938 = vpop.f32.mrf.mxu0
    %v939 = vpop.f32.mrf.mxu0
    %940 = vdwg.mxu0
    %v942 = vunpack.c.l.b16 %v406
    %v943 = vpack.c.b16 %v521, %v942
    %v944 = vpack.c.b16 %v562, %v562
    %v957 = vunpack.c.l.b16 %v449
    %v958 = vunpack.c.l.b16 %v450
    %v959 = vunpack.c.l.b16 %v451
    %v960 = vunpack.c.l.b16 %v452
    %v961 = vunpack.c.l.b16 %v453
    %v962 = vunpack.c.l.b16 %v454
    %v963 = vunpack.c.l.b16 %v455
    %v964 = vunpack.c.l.b16 %v456
    %v965 = vunpack.c.l.b16 %v457
    %v966 = vunpack.c.l.b16 %v458
    %v967 = vunpack.c.l.b16 %v459
    %v968 = vunpack.c.l.b16 %v460
    %v969 = vpack.c.b16 %v958, %v957
    %v970 = vpack.c.b16 %v960, %v959
    %v971 = vpack.c.b16 %v962, %v961
    %v972 = vpack.c.b16 %v964, %v963
    %v973 = vpack.c.b16 %v966, %v965
    %v974 = vpack.c.b16 %v968, %v967
    %v982 = vsel %vm666, %v943, 0
    %v985 = vsel %vm666, %v565, 0
    %v988 = vsel %vm666, %v566, 0
    %v991 = vsel %vm666, %v567, 0
    %v994 = vsel %vm666, %v568, 0
    %v997 = vsel %vm666, %v569, 0
    %v1000 = vsel %vm666, %v570, 0
    %v1003 = vsel %vm666, %v571, 0
    %v1006 = vsel %vm666, %v572, 0
    %v1009 = vsel %vm666, %v573, 0
    %v1012 = vsel %vm666, %v574, 0
    %v1015 = vsel %vm666, %v575, 0
    %v1018 = vsel %vm666, %v576, 0
    %v1021 = vsel %vm666, %v577, 0
    %v1024 = vsel %vm666, %v578, 0
    %v1027 = vsel %vm666, %v579, 0
    %v1030 = vsel %vm666, %v580, 0
    %v1033 = vsel %vm666, %v581, 0
    %v1036 = vsel %vm666, %v582, 0
    %v1039 = vsel %vm666, %v583, 0
    %v1042 = vsel %vm666, %v584, 0
    %v1045 = vsel %vm666, %v944, 0
    %1047 = vmatprep.subr.bf16.mxu0 0
    %1048 = vmatpush1.bf16.msra.mxu0 0
    %1049 = vmatprep.subr.bf16.mxu0 0
    %1050 = vmatpush1.bf16.msra.mxu0 0
    %1051 = vmatprep.subr.bf16.mxu0 0
    %1052 = vmatpush1.bf16.msra.mxu0 %v974
    %1053 = vmatprep.subr.bf16.mxu0 0
    %1054 = vmatpush1.bf16.msra.mxu0 %v973
    %1055 = vmatprep.subr.bf16.mxu0 0
    %1056 = vmatpush1.bf16.msra.mxu0 %v972
    %1057 = vmatprep.subr.bf16.mxu0 0
    %1058 = vmatpush1.bf16.msra.mxu0 %v971
    %1059 = vmatprep.subr.bf16.mxu0 0
    %1060 = vmatpush1.bf16.msra.mxu0 %v970
    %1061 = vmatprep.subr.bf16.mxu0 0
    %1062 = vmatpush1.bf16.msra.mxu0 %v969
    %1063 = vmatprep.subr.bf16.mxu0 0
    %1064 = vmatpush2.bf16.msra.mxu0 0
    %1065 = vmatprep.subr.bf16.mxu0 0
    %1066 = vmatpush2.bf16.msra.mxu0 0
    %1067 = vmatprep.subr.bf16.mxu0 0
    %1068 = vmatpush2.bf16.msra.mxu0 0
    %1069 = vmatprep.subr.bf16.mxu0 0
    %1070 = vmatpush2.bf16.msra.mxu0 0
    %1071 = vmatprep.subr.bf16.mxu0 0
    %1072 = vmatpush2.bf16.msra.mxu0 0
    %1073 = vmatprep.subr.bf16.mxu0 0
    %1074 = vmatpush2.bf16.msra.mxu0 0
    %1075 = vmatprep.subr.bf16.mxu0 0
    %1076 = vmatpush2.bf16.msra.mxu0 0
    %1077 = vmatprep.subr.bf16.mxu0 0
    %1078 = vmatpush2.bf16.msra.mxu0 0
    %1079 = vmatprep.mubr.bf16.mxu0 0
    %1080 = vmatmul.mubr.bf16.gmra.mxu0 %v982
    %v1081 = vpop.f32.mrf.mxu0
    %v1082 = vadd.f32 %v768, %v1081
    %v1083 = vpop.f32.mrf.mxu0
    %v1084 = vpop.f32.mrf.mxu0
    %v1085 = vadd.f32 %v771, %v1084
    %v1086 = vpop.f32.mrf.mxu0
    %1087 = vmatprep.mubr.bf16.mxu0 0
    %1088 = vmatmul.mubr.bf16.gmra.mxu0 %v985
    %v1089 = vpop.f32.mrf.mxu0
    %v1090 = vadd.f32 %v776, %v1089
    %v1091 = vpop.f32.mrf.mxu0
    %v1092 = vpop.f32.mrf.mxu0
    %v1093 = vadd.f32 %v779, %v1092
    %v1094 = vpop.f32.mrf.mxu0
    %1095 = vmatprep.mubr.bf16.mxu0 0
    %1096 = vmatmul.mubr.bf16.gmra.mxu0 %v988
    %v1097 = vpop.f32.mrf.mxu0
    %v1098 = vadd.f32 %v784, %v1097
    %v1099 = vpop.f32.mrf.mxu0
    %v1100 = vpop.f32.mrf.mxu0
    %v1101 = vadd.f32 %v787, %v1100
    %v1102 = vpop.f32.mrf.mxu0
    %1103 = vmatprep.mubr.bf16.mxu0 0
    %1104 = vmatmul.mubr.bf16.gmra.mxu0 %v991
    %v1105 = vpop.f32.mrf.mxu0
    %v1106 = vadd.f32 %v792, %v1105
    %v1107 = vpop.f32.mrf.mxu0
    %v1108 = vpop.f32.mrf.mxu0
    %v1109 = vadd.f32 %v795, %v1108
    %v1110 = vpop.f32.mrf.mxu0
    %1111 = vmatprep.mubr.bf16.mxu0 0
    %1112 = vmatmul.mubr.bf16.gmra.mxu0 %v994
    %v1113 = vpop.f32.mrf.mxu0
    %v1114 = vadd.f32 %v800, %v1113
    %v1115 = vpop.f32.mrf.mxu0
    %v1116 = vpop.f32.mrf.mxu0
    %v1117 = vadd.f32 %v803, %v1116
    %v1118 = vpop.f32.mrf.mxu0
    %1119 = vmatprep.mubr.bf16.mxu0 0
    %1120 = vmatmul.mubr.bf16.gmra.mxu0 %v997
    %v1121 = vpop.f32.mrf.mxu0
    %v1122 = vadd.f32 %v808, %v1121
    %v1123 = vpop.f32.mrf.mxu0
    %v1124 = vpop.f32.mrf.mxu0
    %v1125 = vadd.f32 %v811, %v1124
    %v1126 = vpop.f32.mrf.mxu0
    %1127 = vmatprep.mubr.bf16.mxu0 0
    %1128 = vmatmul.mubr.bf16.gmra.mxu0 %v1000
    %v1129 = vpop.f32.mrf.mxu0
    %v1130 = vadd.f32 %v816, %v1129
    %v1131 = vpop.f32.mrf.mxu0
    %v1132 = vpop.f32.mrf.mxu0
    %v1133 = vadd.f32 %v819, %v1132
    %v1134 = vpop.f32.mrf.mxu0
    %1135 = vmatprep.mubr.bf16.mxu0 0
    %1136 = vmatmul.mubr.bf16.gmra.mxu0 %v1003
    %v1137 = vpop.f32.mrf.mxu0
    %v1138 = vadd.f32 %v824, %v1137
    %v1139 = vpop.f32.mrf.mxu0
    %v1140 = vpop.f32.mrf.mxu0
    %v1141 = vadd.f32 %v827, %v1140
    %v1142 = vpop.f32.mrf.mxu0
    %1143 = vmatprep.mubr.bf16.mxu0 0
    %1144 = vmatmul.mubr.bf16.gmra.mxu0 %v1006
    %v1145 = vpop.f32.mrf.mxu0
    %v1146 = vadd.f32 %v832, %v1145
    %v1147 = vpop.f32.mrf.mxu0
    %v1148 = vpop.f32.mrf.mxu0
    %v1149 = vadd.f32 %v835, %v1148
    %v1150 = vpop.f32.mrf.mxu0
    %1151 = vmatprep.mubr.bf16.mxu0 0
    %1152 = vmatmul.mubr.bf16.gmra.mxu0 %v1009
    %v1153 = vpop.f32.mrf.mxu0
    %v1154 = vadd.f32 %v840, %v1153
    %v1155 = vpop.f32.mrf.mxu0
    %v1156 = vpop.f32.mrf.mxu0
    %v1157 = vadd.f32 %v843, %v1156
    %v1158 = vpop.f32.mrf.mxu0
    %1159 = vmatprep.mubr.bf16.mxu0 0
    %1160 = vmatmul.mubr.bf16.gmra.mxu0 %v1012
    %v1161 = vpop.f32.mrf.mxu0
    %v1162 = vadd.f32 %v848, %v1161
    %v1163 = vpop.f32.mrf.mxu0
    %v1164 = vpop.f32.mrf.mxu0
    %v1165 = vadd.f32 %v851, %v1164
    %v1166 = vpop.f32.mrf.mxu0
    %1167 = vmatprep.mubr.bf16.mxu0 0
    %1168 = vmatmul.mubr.bf16.gmra.mxu0 %v1015
    %v1169 = vpop.f32.mrf.mxu0
    %v1170 = vadd.f32 %v856, %v1169
    %v1171 = vpop.f32.mrf.mxu0
    %v1172 = vpop.f32.mrf.mxu0
    %v1173 = vadd.f32 %v859, %v1172
    %v1174 = vpop.f32.mrf.mxu0
    %1175 = vmatprep.mubr.bf16.mxu0 0
    %1176 = vmatmul.mubr.bf16.gmra.mxu0 %v1018
    %v1177 = vpop.f32.mrf.mxu0
    %v1178 = vadd.f32 %v864, %v1177
    %v1179 = vpop.f32.mrf.mxu0
    %v1180 = vpop.f32.mrf.mxu0
    %v1181 = vadd.f32 %v867, %v1180
    %v1182 = vpop.f32.mrf.mxu0
    %1183 = vmatprep.mubr.bf16.mxu0 0
    %1184 = vmatmul.mubr.bf16.gmra.mxu0 %v1021
    %v1185 = vpop.f32.mrf.mxu0
    %v1186 = vadd.f32 %v872, %v1185
    %v1187 = vpop.f32.mrf.mxu0
    %v1188 = vpop.f32.mrf.mxu0
    %v1189 = vadd.f32 %v875, %v1188
    %v1190 = vpop.f32.mrf.mxu0
    %1191 = vmatprep.mubr.bf16.mxu0 0
    %1192 = vmatmul.mubr.bf16.gmra.mxu0 %v1024
    %v1193 = vpop.f32.mrf.mxu0
    %v1194 = vadd.f32 %v880, %v1193
    %v1195 = vpop.f32.mrf.mxu0
    %v1196 = vpop.f32.mrf.mxu0
    %v1197 = vadd.f32 %v883, %v1196
    %v1198 = vpop.f32.mrf.mxu0
    %1199 = vmatprep.mubr.bf16.mxu0 0
    %1200 = vmatmul.mubr.bf16.gmra.mxu0 %v1027
    %v1201 = vpop.f32.mrf.mxu0
    %v1202 = vadd.f32 %v888, %v1201
    %v1203 = vpop.f32.mrf.mxu0
    %v1204 = vpop.f32.mrf.mxu0
    %v1205 = vadd.f32 %v891, %v1204
    %v1206 = vpop.f32.mrf.mxu0
    %1207 = vmatprep.mubr.bf16.mxu0 0
    %1208 = vmatmul.mubr.bf16.gmra.mxu0 %v1030
    %v1209 = vpop.f32.mrf.mxu0
    %v1210 = vadd.f32 %v896, %v1209
    %v1211 = vpop.f32.mrf.mxu0
    %v1212 = vpop.f32.mrf.mxu0
    %v1213 = vadd.f32 %v899, %v1212
    %v1214 = vpop.f32.mrf.mxu0
    %1215 = vmatprep.mubr.bf16.mxu0 0
    %1216 = vmatmul.mubr.bf16.gmra.mxu0 %v1033
    %v1217 = vpop.f32.mrf.mxu0
    %v1218 = vadd.f32 %v904, %v1217
    %v1219 = vpop.f32.mrf.mxu0
    %v1220 = vpop.f32.mrf.mxu0
    %v1221 = vadd.f32 %v907, %v1220
    %v1222 = vpop.f32.mrf.mxu0
    %1223 = vmatprep.mubr.bf16.mxu0 0
    %1224 = vmatmul.mubr.bf16.gmra.mxu0 %v1036
    %v1225 = vpop.f32.mrf.mxu0
    %v1226 = vadd.f32 %v912, %v1225
    %v1227 = vpop.f32.mrf.mxu0
    %v1228 = vpop.f32.mrf.mxu0
    %v1229 = vadd.f32 %v915, %v1228
    %v1230 = vpop.f32.mrf.mxu0
    %1231 = vmatprep.mubr.bf16.mxu0 0
    %1232 = vmatmul.mubr.bf16.gmra.mxu0 %v1039
    %v1233 = vpop.f32.mrf.mxu0
    %v1234 = vadd.f32 %v920, %v1233
    %v1235 = vpop.f32.mrf.mxu0
    %v1236 = vpop.f32.mrf.mxu0
    %v1237 = vadd.f32 %v923, %v1236
    %v1238 = vpop.f32.mrf.mxu0
    %1239 = vmatprep.mubr.bf16.mxu0 0
    %1240 = vmatmul.mubr.bf16.gmra.mxu0 %v1042
    %v1241 = vpop.f32.mrf.mxu0
    %v1242 = vadd.f32 %v928, %v1241
    %v1243 = vpop.f32.mrf.mxu0
    %v1244 = vpop.f32.mrf.mxu0
    %v1245 = vadd.f32 %v931, %v1244
    %v1246 = vpop.f32.mrf.mxu0
    %1247 = vmatprep.mubr.bf16.mxu0 0
    %1248 = vmatmul.mubr.bf16.gmra.mxu0 %v1045
    %v1249 = vpop.f32.mrf.mxu0
    %v1250 = vadd.f32 %v936, %v1249
    %v1251 = vpop.f32.mrf.mxu0
    %v1252 = vpop.f32.mrf.mxu0
    %v1253 = vpop.f32.mrf.mxu0
    %1254 = vdwg.mxu0
    %v1255 = vld [vmem:[%s0 + $0x4] sm:$0x8]
    %v1256 = vld [vmem:[%s0 + $0x8] sm:$0xf]
    %v1257 = vld [vmem:[%s0 + $0xc] sm:$0xf]
    %v1258 = vld [vmem:[%s0 + $0x10] sm:$0xf]
    %v1259 = vld [vmem:[%s0 + $0x14] sm:$0xf]
    %v1260 = vld [vmem:[%s0 + $0x18] sm:$0xf]
    %v1261 = vld [vmem:[%s0 + $0x1c] sm:$0xf]
    %v1262 = vld [vmem:[%s0 + $0x20] sm:$0xf]
    %v1263 = vld [vmem:[%s0 + $0x24] sm:$0xf]
    %v1264 = vld [vmem:[%s0 + $0x28] sm:$0xf]
    %v1265 = vld [vmem:[%s0 + $0x2c] sm:$0xf]
    %v1266 = vld [vmem:[%s0 + $0x30] sm:$0xf]
    %v1267 = vld [vmem:[%s0 + $0x34] sm:$0xf]
    %v1268 = vld [vmem:[%s0 + $0x38] sm:$0xf]
    %v1269 = vld [vmem:[%s0 + $0x3c] sm:$0xf]
    %v1270 = vld [vmem:[%s0 + $0x40] sm:$0xf]
    %v1271 = vld [vmem:[%s0 + $0x44] sm:$0xf]
    %v1272 = vld [vmem:[%s0 + $0x48] sm:$0xf]
    %v1273 = vld [vmem:[%s0 + $0x4c] sm:$0xf]
    %v1274 = vld [vmem:[%s0 + $0x50] sm:$0xf]
    %v1275 = vld [vmem:[%s0 + $0x54] sm:$0xf]
    %v1276 = vld [vmem:[%s0 + $0x58] sm:$0xf]
    %v1277 = vld [vmem:[%s0 + $0x5c] sm:$0xf]
    %v1278 = vld [vmem:[%s0 + $0x60] sm:$0xf]
    %v1279 = vld [vmem:[%s0 + $0x64] sm:$0xf]
    %v1280 = vld [vmem:[%s0 + $0x68] sm:$0xf]
    %v1281 = vld [vmem:[%s0 + $0x6c] sm:$0xf]
    %v1282 = vld [vmem:[%s0 + $0x70] sm:$0xf]
    %v1283 = vld [vmem:[%s0 + $0x74] sm:$0xf]
    %v1284 = vld [vmem:[%s0 + $0x78] sm:$0xf]
    %v1285 = vld [vmem:[%s0 + $0x7c] sm:$0xf]
    %v1286 = vld [vmem:[%s0 + $0x80] sm:$0xf]
    %v1287 = vld [vmem:[%s0 + $0x84] sm:$0xf]
    %v1288 = vld [vmem:[%s0 + $0x88] sm:$0xf]
    %v1289 = vld [vmem:[%s0 + $0x8c] sm:$0xf]
    %v1290 = vld [vmem:[%s0 + $0x90] sm:$0xf]
    %v1291 = vld [vmem:[%s0 + $0x94] sm:$0xf]
    %v1292 = vld [vmem:[%s0 + $0x98] sm:$0xf]
    %v1293 = vld [vmem:[%s0 + $0x9c] sm:$0xf]
    %v1294 = vld [vmem:[%s0 + $0xa0] sm:$0xf]
    %v1295 = vld [vmem:[%s0 + $0xa4] sm:$0xf]
    %v1296 = vld [vmem:[%s0 + $0xa8] sm:$0xf]
    %v1297 = vld [vmem:[%s0 + $0xac] sm:$0xf]
    %v1298 = vld [vmem:[%s0 + $0xb0] sm:$0x7]
    %s1299 = scalar_lea.vmem %s1, 96
    %v1300 = vld [vmem:[%s1299] sm:$0xf]
    %v1301 = vld [vmem:[%s1299 + $0x4] sm:$0xf]
    %v1302 = vld [vmem:[%s1299 + $0x8] sm:$0xf]
    %v1303 = vld [vmem:[%s1299 + $0xc] sm:$0xf]
    %v1304 = vld [vmem:[%s1299 + $0x10] sm:$0xf]
    %v1305 = vld [vmem:[%s1299 + $0x14] sm:$0xf]
    %v1306 = vld [vmem:[%s1299 + $0x18] sm:$0xf]
    %v1307 = vld [vmem:[%s1299 + $0x1c] sm:$0xf]
    %v1308 = vld [vmem:[%s1299 + $0x20] sm:$0xf]
    %v1309 = vld [vmem:[%s1299 + $0x24] sm:$0xf]
    %v1310 = vld [vmem:[%s1299 + $0x28] sm:$0xf]
    %v1311 = vld [vmem:[%s1299 + $0x2c] sm:$0xf]
    %v1356 = vunpack.c.l.b16 %v1255
    %v1357 = vunpack.c.l.b16 %v1256
    %v1358 = vunpack.c.l.b16 %v1257
    %v1359 = vunpack.c.l.b16 %v1258
    %v1360 = vunpack.c.l.b16 %v1259
    %v1361 = vunpack.c.l.b16 %v1260
    %v1362 = vunpack.c.l.b16 %v1261
    %v1363 = vunpack.c.l.b16 %v1262
    %v1364 = vunpack.c.l.b16 %v1263
    %v1365 = vunpack.c.l.b16 %v1264
    %v1366 = vunpack.c.l.b16 %v1265
    %v1367 = vunpack.c.l.b16 %v1266
    %v1368 = vunpack.c.l.b16 %v1267
    %v1369 = vunpack.c.l.b16 %v1268
    %v1370 = vunpack.c.l.b16 %v1269
    %v1371 = vunpack.c.l.b16 %v1270
    %v1372 = vunpack.c.l.b16 %v1271
    %v1373 = vunpack.c.l.b16 %v1272
    %v1374 = vunpack.c.l.b16 %v1273
    %v1375 = vunpack.c.l.b16 %v1274
    %v1376 = vunpack.c.l.b16 %v1275
    %v1377 = vunpack.c.l.b16 %v1276
    %v1378 = vunpack.c.l.b16 %v1277
    %v1379 = vunpack.c.l.b16 %v1278
    %v1380 = vunpack.c.l.b16 %v1279
    %v1381 = vunpack.c.l.b16 %v1280
    %v1382 = vunpack.c.l.b16 %v1281
    %v1383 = vunpack.c.l.b16 %v1282
    %v1384 = vunpack.c.l.b16 %v1283
    %v1385 = vunpack.c.l.b16 %v1284
    %v1386 = vunpack.c.l.b16 %v1285
    %v1387 = vunpack.c.l.b16 %v1286
    %v1388 = vunpack.c.l.b16 %v1287
    %v1389 = vunpack.c.l.b16 %v1288
    %v1390 = vunpack.c.l.b16 %v1289
    %v1391 = vunpack.c.l.b16 %v1290
    %v1392 = vunpack.c.l.b16 %v1291
    %v1393 = vunpack.c.l.b16 %v1292
    %v1394 = vunpack.c.l.b16 %v1293
    %v1395 = vunpack.c.l.b16 %v1294
    %v1396 = vunpack.c.l.b16 %v1295
    %v1397 = vunpack.c.l.b16 %v1296
    %v1398 = vunpack.c.l.b16 %v1297
    %v1399 = vunpack.c.l.b16 %v1298
    %v1400 = vpack.c.b16 %v1357, %v1356
    %v1401 = vpack.c.b16 %v1359, %v1358
    %v1402 = vpack.c.b16 %v1361, %v1360
    %v1403 = vpack.c.b16 %v1363, %v1362
    %v1404 = vpack.c.b16 %v1365, %v1364
    %v1405 = vpack.c.b16 %v1367, %v1366
    %v1406 = vpack.c.b16 %v1369, %v1368
    %v1407 = vpack.c.b16 %v1371, %v1370
    %v1408 = vpack.c.b16 %v1373, %v1372
    %v1409 = vpack.c.b16 %v1375, %v1374
    %v1410 = vpack.c.b16 %v1377, %v1376
    %v1411 = vpack.c.b16 %v1379, %v1378
    %v1412 = vpack.c.b16 %v1381, %v1380
    %v1413 = vpack.c.b16 %v1383, %v1382
    %v1414 = vpack.c.b16 %v1385, %v1384
    %v1415 = vpack.c.b16 %v1387, %v1386
    %v1416 = vpack.c.b16 %v1389, %v1388
    %v1417 = vpack.c.b16 %v1391, %v1390
    %v1418 = vpack.c.b16 %v1393, %v1392
    %v1419 = vpack.c.b16 %v1395, %v1394
    %v1420 = vpack.c.b16 %v1397, %v1396
    %v1421 = vpack.c.b16 %v1399, %v1398
    %vm1422 = vcmask 1044480
    %v1423 = vrot.slane %v1400, 3
    %v1424 = vrot.slane %v1401, 3
    %v1425 = vsel %vm1422, %v1423, %v1424
    %v1426 = vrot.slane %v1402, 3
    %v1427 = vsel %vm1422, %v1424, %v1426
    %v1428 = vrot.slane %v1403, 3
    %v1429 = vsel %vm1422, %v1426, %v1428
    %v1430 = vrot.slane %v1404, 3
    %v1431 = vsel %vm1422, %v1428, %v1430
    %v1432 = vrot.slane %v1405, 3
    %v1433 = vsel %vm1422, %v1430, %v1432
    %v1434 = vrot.slane %v1406, 3
    %v1435 = vsel %vm1422, %v1432, %v1434
    %v1436 = vrot.slane %v1407, 3
    %v1437 = vsel %vm1422, %v1434, %v1436
    %v1438 = vrot.slane %v1408, 3
    %v1439 = vsel %vm1422, %v1436, %v1438
    %v1440 = vrot.slane %v1409, 3
    %v1441 = vsel %vm1422, %v1438, %v1440
    %v1442 = vrot.slane %v1410, 3
    %v1443 = vsel %vm1422, %v1440, %v1442
    %v1444 = vrot.slane %v1411, 3
    %v1445 = vsel %vm1422, %v1442, %v1444
    %v1446 = vrot.slane %v1412, 3
    %v1447 = vsel %vm1422, %v1444, %v1446
    %v1448 = vrot.slane %v1413, 3
    %v1449 = vsel %vm1422, %v1446, %v1448
    %v1450 = vrot.slane %v1414, 3
    %v1451 = vsel %vm1422, %v1448, %v1450
    %v1452 = vrot.slane %v1415, 3
    %v1453 = vsel %vm1422, %v1450, %v1452
    %v1454 = vrot.slane %v1416, 3
    %v1455 = vsel %vm1422, %v1452, %v1454
    %v1456 = vrot.slane %v1417, 3
    %v1457 = vsel %vm1422, %v1454, %v1456
    %v1458 = vrot.slane %v1418, 3
    %v1459 = vsel %vm1422, %v1456, %v1458
    %v1460 = vrot.slane %v1419, 3
    %v1461 = vsel %vm1422, %v1458, %v1460
    %v1462 = vrot.slane %v1420, 3
    %v1463 = vsel %vm1422, %v1460, %v1462
    %v1464 = vrot.slane %v1421, 3
    %v1465 = vsel %vm1422, %v1462, %v1464
    %v1478 = vunpack.c.l.b16 %v1300
    %v1479 = vunpack.c.l.b16 %v1301
    %v1480 = vunpack.c.l.b16 %v1302
    %v1481 = vunpack.c.l.b16 %v1303
    %v1482 = vunpack.c.l.b16 %v1304
    %v1483 = vunpack.c.l.b16 %v1305
    %v1484 = vunpack.c.l.b16 %v1306
    %v1485 = vunpack.c.l.b16 %v1307
    %v1486 = vunpack.c.l.b16 %v1308
    %v1487 = vunpack.c.l.b16 %v1309
    %v1488 = vunpack.c.l.b16 %v1310
    %v1489 = vunpack.c.l.b16 %v1311
    %v1490 = vpack.c.b16 %v1479, %v1478
    %v1491 = vpack.c.b16 %v1481, %v1480
    %v1492 = vpack.c.b16 %v1483, %v1482
    %v1493 = vpack.c.b16 %v1485, %v1484
    %v1494 = vpack.c.b16 %v1487, %v1486
    %v1495 = vpack.c.b16 %v1489, %v1488
    %v1503 = vsel %vm666, %v1425, 0
    %v1506 = vsel %vm666, %v1427, 0
    %v1509 = vsel %vm666, %v1429, 0
    %v1512 = vsel %vm666, %v1431, 0
    %v1515 = vsel %vm666, %v1433, 0
    %v1518 = vsel %vm666, %v1435, 0
    %v1521 = vsel %vm666, %v1437, 0
    %v1524 = vsel %vm666, %v1439, 0
    %v1527 = vsel %vm666, %v1441, 0
    %v1530 = vsel %vm666, %v1443, 0
    %v1533 = vsel %vm666, %v1445, 0
    %v1536 = vsel %vm666, %v1447, 0
    %v1539 = vsel %vm666, %v1449, 0
    %v1542 = vsel %vm666, %v1451, 0
    %v1545 = vsel %vm666, %v1453, 0
    %v1548 = vsel %vm666, %v1455, 0
    %v1551 = vsel %vm666, %v1457, 0
    %v1554 = vsel %vm666, %v1459, 0
    %v1557 = vsel %vm666, %v1461, 0
    %v1560 = vsel %vm666, %v1463, 0
    %v1563 = vsel %vm666, %v1465, 0
    %v1566 = vsel %vm666, %v1464, 0
    %1568 = vmatprep.subr.bf16.mxu0 0
    %1569 = vmatpush1.bf16.msra.mxu0 0
    %1570 = vmatprep.subr.bf16.mxu0 0
    %1571 = vmatpush1.bf16.msra.mxu0 0
    %1572 = vmatprep.subr.bf16.mxu0 0
    %1573 = vmatpush1.bf16.msra.mxu0 %v1495
    %1574 = vmatprep.subr.bf16.mxu0 0
    %1575 = vmatpush1.bf16.msra.mxu0 %v1494
    %1576 = vmatprep.subr.bf16.mxu0 0
    %1577 = vmatpush1.bf16.msra.mxu0 %v1493
    %1578 = vmatprep.subr.bf16.mxu0 0
    %1579 = vmatpush1.bf16.msra.mxu0 %v1492
    %1580 = vmatprep.subr.bf16.mxu0 0
    %1581 = vmatpush1.bf16.msra.mxu0 %v1491
    %1582 = vmatprep.subr.bf16.mxu0 0
    %1583 = vmatpush1.bf16.msra.mxu0 %v1490
    %1584 = vmatprep.subr.bf16.mxu0 0
    %1585 = vmatpush2.bf16.msra.mxu0 0
    %1586 = vmatprep.subr.bf16.mxu0 0
    %1587 = vmatpush2.bf16.msra.mxu0 0
    %1588 = vmatprep.subr.bf16.mxu0 0
    %1589 = vmatpush2.bf16.msra.mxu0 0
    %1590 = vmatprep.subr.bf16.mxu0 0
    %1591 = vmatpush2.bf16.msra.mxu0 0
    %1592 = vmatprep.subr.bf16.mxu0 0
    %1593 = vmatpush2.bf16.msra.mxu0 0
    %1594 = vmatprep.subr.bf16.mxu0 0
    %1595 = vmatpush2.bf16.msra.mxu0 0
    %1596 = vmatprep.subr.bf16.mxu0 0
    %1597 = vmatpush2.bf16.msra.mxu0 0
    %1598 = vmatprep.subr.bf16.mxu0 0
    %1599 = vmatpush2.bf16.msra.mxu0 0
    %1600 = vmatprep.mubr.bf16.mxu0 0
    %1601 = vmatmul.mubr.bf16.gmra.mxu0 %v1503
    %v1602 = vpop.f32.mrf.mxu0
    %v1603 = vadd.f32 0.0, %v1602
    %v1604 = vpop.f32.mrf.mxu0
    %v1605 = vpop.f32.mrf.mxu0
    %v1606 = vadd.f32 0.0, %v1605
    %v1607 = vpop.f32.mrf.mxu0
    %1608 = vmatprep.mubr.bf16.mxu0 0
    %1609 = vmatmul.mubr.bf16.gmra.mxu0 %v1506
    %v1610 = vpop.f32.mrf.mxu0
    %v1611 = vadd.f32 0.0, %v1610
    %v1612 = vpop.f32.mrf.mxu0
    %v1613 = vpop.f32.mrf.mxu0
    %v1614 = vadd.f32 0.0, %v1613
    %v1615 = vpop.f32.mrf.mxu0
    %1616 = vmatprep.mubr.bf16.mxu0 0
    %1617 = vmatmul.mubr.bf16.gmra.mxu0 %v1509
    %v1618 = vpop.f32.mrf.mxu0
    %v1619 = vadd.f32 0.0, %v1618
    %v1620 = vpop.f32.mrf.mxu0
    %v1621 = vpop.f32.mrf.mxu0
    %v1622 = vadd.f32 0.0, %v1621
    %v1623 = vpop.f32.mrf.mxu0
    %1624 = vmatprep.mubr.bf16.mxu0 0
    %1625 = vmatmul.mubr.bf16.gmra.mxu0 %v1512
    %v1626 = vpop.f32.mrf.mxu0
    %v1627 = vadd.f32 0.0, %v1626
    %v1628 = vpop.f32.mrf.mxu0
    %v1629 = vpop.f32.mrf.mxu0
    %v1630 = vadd.f32 0.0, %v1629
    %v1631 = vpop.f32.mrf.mxu0
    %1632 = vmatprep.mubr.bf16.mxu0 0
    %1633 = vmatmul.mubr.bf16.gmra.mxu0 %v1515
    %v1634 = vpop.f32.mrf.mxu0
    %v1635 = vadd.f32 0.0, %v1634
    %v1636 = vpop.f32.mrf.mxu0
    %v1637 = vpop.f32.mrf.mxu0
    %v1638 = vadd.f32 0.0, %v1637
    %v1639 = vpop.f32.mrf.mxu0
    %1640 = vmatprep.mubr.bf16.mxu0 0
    %1641 = vmatmul.mubr.bf16.gmra.mxu0 %v1518
    %v1642 = vpop.f32.mrf.mxu0
    %v1643 = vadd.f32 0.0, %v1642
    %v1644 = vpop.f32.mrf.mxu0
    %v1645 = vpop.f32.mrf.mxu0
    %v1646 = vadd.f32 0.0, %v1645
    %v1647 = vpop.f32.mrf.mxu0
    %1648 = vmatprep.mubr.bf16.mxu0 0
    %1649 = vmatmul.mubr.bf16.gmra.mxu0 %v1521
    %v1650 = vpop.f32.mrf.mxu0
    %v1651 = vadd.f32 0.0, %v1650
    %v1652 = vpop.f32.mrf.mxu0
    %v1653 = vpop.f32.mrf.mxu0
    %v1654 = vadd.f32 0.0, %v1653
    %v1655 = vpop.f32.mrf.mxu0
    %1656 = vmatprep.mubr.bf16.mxu0 0
    %1657 = vmatmul.mubr.bf16.gmra.mxu0 %v1524
    %v1658 = vpop.f32.mrf.mxu0
    %v1659 = vadd.f32 0.0, %v1658
    %v1660 = vpop.f32.mrf.mxu0
    %v1661 = vpop.f32.mrf.mxu0
    %v1662 = vadd.f32 0.0, %v1661
    %v1663 = vpop.f32.mrf.mxu0
    %1664 = vmatprep.mubr.bf16.mxu0 0
    %1665 = vmatmul.mubr.bf16.gmra.mxu0 %v1527
    %v1666 = vpop.f32.mrf.mxu0
    %v1667 = vadd.f32 0.0, %v1666
    %v1668 = vpop.f32.mrf.mxu0
    %v1669 = vpop.f32.mrf.mxu0
    %v1670 = vadd.f32 0.0, %v1669
    %v1671 = vpop.f32.mrf.mxu0
    %1672 = vmatprep.mubr.bf16.mxu0 0
    %1673 = vmatmul.mubr.bf16.gmra.mxu0 %v1530
    %v1674 = vpop.f32.mrf.mxu0
    %v1675 = vadd.f32 0.0, %v1674
    %v1676 = vpop.f32.mrf.mxu0
    %v1677 = vpop.f32.mrf.mxu0
    %v1678 = vadd.f32 0.0, %v1677
    %v1679 = vpop.f32.mrf.mxu0
    %1680 = vmatprep.mubr.bf16.mxu0 0
    %1681 = vmatmul.mubr.bf16.gmra.mxu0 %v1533
    %v1682 = vpop.f32.mrf.mxu0
    %v1683 = vadd.f32 0.0, %v1682
    %v1684 = vpop.f32.mrf.mxu0
    %v1685 = vpop.f32.mrf.mxu0
    %v1686 = vadd.f32 0.0, %v1685
    %v1687 = vpop.f32.mrf.mxu0
    %1688 = vmatprep.mubr.bf16.mxu0 0
    %1689 = vmatmul.mubr.bf16.gmra.mxu0 %v1536
    %v1690 = vpop.f32.mrf.mxu0
    %v1691 = vadd.f32 0.0, %v1690
    %v1692 = vpop.f32.mrf.mxu0
    %v1693 = vpop.f32.mrf.mxu0
    %v1694 = vadd.f32 0.0, %v1693
    %v1695 = vpop.f32.mrf.mxu0
    %1696 = vmatprep.mubr.bf16.mxu0 0
    %1697 = vmatmul.mubr.bf16.gmra.mxu0 %v1539
    %v1698 = vpop.f32.mrf.mxu0
    %v1699 = vadd.f32 0.0, %v1698
    %v1700 = vpop.f32.mrf.mxu0
    %v1701 = vpop.f32.mrf.mxu0
    %v1702 = vadd.f32 0.0, %v1701
    %v1703 = vpop.f32.mrf.mxu0
    %1704 = vmatprep.mubr.bf16.mxu0 0
    %1705 = vmatmul.mubr.bf16.gmra.mxu0 %v1542
    %v1706 = vpop.f32.mrf.mxu0
    %v1707 = vadd.f32 0.0, %v1706
    %v1708 = vpop.f32.mrf.mxu0
    %v1709 = vpop.f32.mrf.mxu0
    %v1710 = vadd.f32 0.0, %v1709
    %v1711 = vpop.f32.mrf.mxu0
    %1712 = vmatprep.mubr.bf16.mxu0 0
    %1713 = vmatmul.mubr.bf16.gmra.mxu0 %v1545
    %v1714 = vpop.f32.mrf.mxu0
    %v1715 = vadd.f32 0.0, %v1714
    %v1716 = vpop.f32.mrf.mxu0
    %v1717 = vpop.f32.mrf.mxu0
    %v1718 = vadd.f32 0.0, %v1717
    %v1719 = vpop.f32.mrf.mxu0
    %1720 = vmatprep.mubr.bf16.mxu0 0
    %1721 = vmatmul.mubr.bf16.gmra.mxu0 %v1548
    %v1722 = vpop.f32.mrf.mxu0
    %v1723 = vadd.f32 0.0, %v1722
    %v1724 = vpop.f32.mrf.mxu0
    %v1725 = vpop.f32.mrf.mxu0
    %v1726 = vadd.f32 0.0, %v1725
    %v1727 = vpop.f32.mrf.mxu0
    %1728 = vmatprep.mubr.bf16.mxu0 0
    %1729 = vmatmul.mubr.bf16.gmra.mxu0 %v1551
    %v1730 = vpop.f32.mrf.mxu0
    %v1731 = vadd.f32 0.0, %v1730
    %v1732 = vpop.f32.mrf.mxu0
    %v1733 = vpop.f32.mrf.mxu0
    %v1734 = vadd.f32 0.0, %v1733
    %v1735 = vpop.f32.mrf.mxu0
    %1736 = vmatprep.mubr.bf16.mxu0 0
    %1737 = vmatmul.mubr.bf16.gmra.mxu0 %v1554
    %v1738 = vpop.f32.mrf.mxu0
    %v1739 = vadd.f32 0.0, %v1738
    %v1740 = vpop.f32.mrf.mxu0
    %v1741 = vpop.f32.mrf.mxu0
    %v1742 = vadd.f32 0.0, %v1741
    %v1743 = vpop.f32.mrf.mxu0
    %1744 = vmatprep.mubr.bf16.mxu0 0
    %1745 = vmatmul.mubr.bf16.gmra.mxu0 %v1557
    %v1746 = vpop.f32.mrf.mxu0
    %v1747 = vadd.f32 0.0, %v1746
    %v1748 = vpop.f32.mrf.mxu0
    %v1749 = vpop.f32.mrf.mxu0
    %v1750 = vadd.f32 0.0, %v1749
    %v1751 = vpop.f32.mrf.mxu0
    %1752 = vmatprep.mubr.bf16.mxu0 0
    %1753 = vmatmul.mubr.bf16.gmra.mxu0 %v1560
    %v1754 = vpop.f32.mrf.mxu0
    %v1755 = vadd.f32 0.0, %v1754
    %v1756 = vpop.f32.mrf.mxu0
    %v1757 = vpop.f32.mrf.mxu0
    %v1758 = vadd.f32 0.0, %v1757
    %v1759 = vpop.f32.mrf.mxu0
    %1760 = vmatprep.mubr.bf16.mxu0 0
    %1761 = vmatmul.mubr.bf16.gmra.mxu0 %v1563
    %v1762 = vpop.f32.mrf.mxu0
    %v1763 = vadd.f32 0.0, %v1762
    %v1764 = vpop.f32.mrf.mxu0
    %v1765 = vpop.f32.mrf.mxu0
    %v1766 = vadd.f32 0.0, %v1765
    %v1767 = vpop.f32.mrf.mxu0
    %1768 = vmatprep.mubr.bf16.mxu0 0
    %1769 = vmatmul.mubr.bf16.gmra.mxu0 %v1566
    %v1770 = vpop.f32.mrf.mxu0
    %v1771 = vadd.f32 0.0, %v1770
    %v1772 = vpop.f32.mrf.mxu0
    %v1773 = vpop.f32.mrf.mxu0
    %v1774 = vpop.f32.mrf.mxu0
    %1775 = vdwg.mxu0
    %v1776 = vadd.f32 %v1082, %v1603
    %v1777 = vadd.f32 %v1085, %v1606
    %v1778 = vadd.f32 %v1090, %v1611
    %v1779 = vadd.f32 %v1093, %v1614
    %v1780 = vadd.f32 %v1098, %v1619
    %v1781 = vadd.f32 %v1101, %v1622
    %v1782 = vadd.f32 %v1106, %v1627
    %v1783 = vadd.f32 %v1109, %v1630
    %v1784 = vadd.f32 %v1114, %v1635
    %v1785 = vadd.f32 %v1117, %v1638
    %v1786 = vadd.f32 %v1122, %v1643
    %v1787 = vadd.f32 %v1125, %v1646
    %v1788 = vadd.f32 %v1130, %v1651
    %v1789 = vadd.f32 %v1133, %v1654
    %v1790 = vadd.f32 %v1138, %v1659
    %v1791 = vadd.f32 %v1141, %v1662
    %v1792 = vadd.f32 %v1146, %v1667
    %v1793 = vadd.f32 %v1149, %v1670
    %v1794 = vadd.f32 %v1154, %v1675
    %v1795 = vadd.f32 %v1157, %v1678
    %v1796 = vadd.f32 %v1162, %v1683
    %v1797 = vadd.f32 %v1165, %v1686
    %v1798 = vadd.f32 %v1170, %v1691
    %v1799 = vadd.f32 %v1173, %v1694
    %v1800 = vadd.f32 %v1178, %v1699
    %v1801 = vadd.f32 %v1181, %v1702
    %v1802 = vadd.f32 %v1186, %v1707
    %v1803 = vadd.f32 %v1189, %v1710
    %v1804 = vadd.f32 %v1194, %v1715
    %v1805 = vadd.f32 %v1197, %v1718
    %v1806 = vadd.f32 %v1202, %v1723
    %v1807 = vadd.f32 %v1205, %v1726
    %v1808 = vadd.f32 %v1210, %v1731
    %v1809 = vadd.f32 %v1213, %v1734
    %v1810 = vadd.f32 %v1218, %v1739
    %v1811 = vadd.f32 %v1221, %v1742
    %v1812 = vadd.f32 %v1226, %v1747
    %v1813 = vadd.f32 %v1229, %v1750
    %v1814 = vadd.f32 %v1234, %v1755
    %v1815 = vadd.f32 %v1237, %v1758
    %v1816 = vadd.f32 %v1242, %v1763
    %v1817 = vadd.f32 %v1245, %v1766
    %v1818 = vadd.f32 %v1250, %v1771
    %v1819 = vld [vmem:[%s0 + $0xb0] sm:$0xf]
    %s1820 = scalar_lea.vmem %s1, 144
    %v1821 = vld [vmem:[%s1820] sm:$0xf]
    %v1822 = vld [vmem:[%s1820 + $0x4] sm:$0xf]
    %v1823 = vld [vmem:[%s1820 + $0x8] sm:$0xf]
    %v1824 = vld [vmem:[%s1820 + $0xc] sm:$0xf]
    %v1825 = vld [vmem:[%s1820 + $0x10] sm:$0xf]
    %v1826 = vld [vmem:[%s1820 + $0x14] sm:$0xf]
    %v1827 = vld [vmem:[%s1820 + $0x18] sm:$0xf]
    %v1828 = vld [vmem:[%s1820 + $0x1c] sm:$0xf]
    %v1829 = vld [vmem:[%s1820 + $0x20] sm:$0xf]
    %v1830 = vld [vmem:[%s1820 + $0x24] sm:$0xf]
    %v1831 = vld [vmem:[%s1820 + $0x28] sm:$0xf]
    %v1832 = vld [vmem:[%s1820 + $0x2c] sm:$0xf]
    %v1834 = vunpack.c.l.b16 %v1819
    %v1835 = vpack.c.b16 %v1358, %v1357
    %v1836 = vpack.c.b16 %v1360, %v1359
    %v1837 = vpack.c.b16 %v1362, %v1361
    %v1838 = vpack.c.b16 %v1364, %v1363
    %v1839 = vpack.c.b16 %v1366, %v1365
    %v1840 = vpack.c.b16 %v1368, %v1367
    %v1841 = vpack.c.b16 %v1370, %v1369
    %v1842 = vpack.c.b16 %v1372, %v1371
    %v1843 = vpack.c.b16 %v1374, %v1373
    %v1844 = vpack.c.b16 %v1376, %v1375
    %v1845 = vpack.c.b16 %v1378, %v1377
    %v1846 = vpack.c.b16 %v1380, %v1379
    %v1847 = vpack.c.b16 %v1382, %v1381
    %v1848 = vpack.c.b16 %v1384, %v1383
    %v1849 = vpack.c.b16 %v1386, %v1385
    %v1850 = vpack.c.b16 %v1388, %v1387
    %v1851 = vpack.c.b16 %v1390, %v1389
    %v1852 = vpack.c.b16 %v1392, %v1391
    %v1853 = vpack.c.b16 %v1394, %v1393
    %v1854 = vpack.c.b16 %v1396, %v1395
    %v1855 = vpack.c.b16 %v1398, %v1397
    %v1856 = vpack.c.b16 %v1834, %v1834
    %v1869 = vunpack.c.l.b16 %v1821
    %v1870 = vunpack.c.l.b16 %v1822
    %v1871 = vunpack.c.l.b16 %v1823
    %v1872 = vunpack.c.l.b16 %v1824
    %v1873 = vunpack.c.l.b16 %v1825
    %v1874 = vunpack.c.l.b16 %v1826
    %v1875 = vunpack.c.l.b16 %v1827
    %v1876 = vunpack.c.l.b16 %v1828
    %v1877 = vunpack.c.l.b16 %v1829
    %v1878 = vunpack.c.l.b16 %v1830
    %v1879 = vunpack.c.l.b16 %v1831
    %v1880 = vunpack.c.l.b16 %v1832
    %v1881 = vpack.c.b16 %v1870, %v1869
    %v1882 = vpack.c.b16 %v1872, %v1871
    %v1883 = vpack.c.b16 %v1874, %v1873
    %v1884 = vpack.c.b16 %v1876, %v1875
    %v1885 = vpack.c.b16 %v1878, %v1877
    %v1886 = vpack.c.b16 %v1880, %v1879
    %v1894 = vsel %vm666, %v1835, 0
    %v1897 = vsel %vm666, %v1836, 0
    %v1900 = vsel %vm666, %v1837, 0
    %v1903 = vsel %vm666, %v1838, 0
    %v1906 = vsel %vm666, %v1839, 0
    %v1909 = vsel %vm666, %v1840, 0
    %v1912 = vsel %vm666, %v1841, 0
    %v1915 = vsel %vm666, %v1842, 0
    %v1918 = vsel %vm666, %v1843, 0
    %v1921 = vsel %vm666, %v1844, 0
    %v1924 = vsel %vm666, %v1845, 0
    %v1927 = vsel %vm666, %v1846, 0
    %v1930 = vsel %vm666, %v1847, 0
    %v1933 = vsel %vm666, %v1848, 0
    %v1936 = vsel %vm666, %v1849, 0
    %v1939 = vsel %vm666, %v1850, 0
    %v1942 = vsel %vm666, %v1851, 0
    %v1945 = vsel %vm666, %v1852, 0
    %v1948 = vsel %vm666, %v1853, 0
    %v1951 = vsel %vm666, %v1854, 0
    %v1954 = vsel %vm666, %v1855, 0
    %v1957 = vsel %vm666, %v1856, 0
    %1959 = vmatprep.subr.bf16.mxu0 0
    %1960 = vmatpush1.bf16.msra.mxu0 0
    %1961 = vmatprep.subr.bf16.mxu0 0
    %1962 = vmatpush1.bf16.msra.mxu0 0
    %1963 = vmatprep.subr.bf16.mxu0 0
    %1964 = vmatpush1.bf16.msra.mxu0 %v1886
    %1965 = vmatprep.subr.bf16.mxu0 0
    %1966 = vmatpush1.bf16.msra.mxu0 %v1885
    %1967 = vmatprep.subr.bf16.mxu0 0
    %1968 = vmatpush1.bf16.msra.mxu0 %v1884
    %1969 = vmatprep.subr.bf16.mxu0 0
    %1970 = vmatpush1.bf16.msra.mxu0 %v1883
    %1971 = vmatprep.subr.bf16.mxu0 0
    %1972 = vmatpush1.bf16.msra.mxu0 %v1882
    %1973 = vmatprep.subr.bf16.mxu0 0
    %1974 = vmatpush1.bf16.msra.mxu0 %v1881
    %1975 = vmatprep.subr.bf16.mxu0 0
    %1976 = vmatpush2.bf16.msra.mxu0 0
    %1977 = vmatprep.subr.bf16.mxu0 0
    %1978 = vmatpush2.bf16.msra.mxu0 0
    %1979 = vmatprep.subr.bf16.mxu0 0
    %1980 = vmatpush2.bf16.msra.mxu0 0
    %1981 = vmatprep.subr.bf16.mxu0 0
    %1982 = vmatpush2.bf16.msra.mxu0 0
    %1983 = vmatprep.subr.bf16.mxu0 0
    %1984 = vmatpush2.bf16.msra.mxu0 0
    %1985 = vmatprep.subr.bf16.mxu0 0
    %1986 = vmatpush2.bf16.msra.mxu0 0
    %1987 = vmatprep.subr.bf16.mxu0 0
    %1988 = vmatpush2.bf16.msra.mxu0 0
    %1989 = vmatprep.subr.bf16.mxu0 0
    %1990 = vmatpush2.bf16.msra.mxu0 0
    %1991 = vmatprep.mubr.bf16.mxu0 0
    %1992 = vmatmul.mubr.bf16.gmra.mxu0 %v1894
    %v1993 = vpop.f32.mrf.mxu0
    %v1994 = vadd.f32 0.0, %v1993
    %v1995 = vpop.f32.mrf.mxu0
    %v1996 = vpop.f32.mrf.mxu0
    %v1997 = vadd.f32 0.0, %v1996
    %v1998 = vpop.f32.mrf.mxu0
    %1999 = vmatprep.mubr.bf16.mxu0 0
    %2000 = vmatmul.mubr.bf16.gmra.mxu0 %v1897
    %v2001 = vpop.f32.mrf.mxu0
    %v2002 = vadd.f32 0.0, %v2001
    %v2003 = vpop.f32.mrf.mxu0
    %v2004 = vpop.f32.mrf.mxu0
    %v2005 = vadd.f32 0.0, %v2004
    %v2006 = vpop.f32.mrf.mxu0
    %2007 = vmatprep.mubr.bf16.mxu0 0
    %2008 = vmatmul.mubr.bf16.gmra.mxu0 %v1900
    %v2009 = vpop.f32.mrf.mxu0
    %v2010 = vadd.f32 0.0, %v2009
    %v2011 = vpop.f32.mrf.mxu0
    %v2012 = vpop.f32.mrf.mxu0
    %v2013 = vadd.f32 0.0, %v2012
    %v2014 = vpop.f32.mrf.mxu0
    %2015 = vmatprep.mubr.bf16.mxu0 0
    %2016 = vmatmul.mubr.bf16.gmra.mxu0 %v1903
    %v2017 = vpop.f32.mrf.mxu0
    %v2018 = vadd.f32 0.0, %v2017
    %v2019 = vpop.f32.mrf.mxu0
    %v2020 = vpop.f32.mrf.mxu0
    %v2021 = vadd.f32 0.0, %v2020
    %v2022 = vpop.f32.mrf.mxu0
    %2023 = vmatprep.mubr.bf16.mxu0 0
    %2024 = vmatmul.mubr.bf16.gmra.mxu0 %v1906
    %v2025 = vpop.f32.mrf.mxu0
    %v2026 = vadd.f32 0.0, %v2025
    %v2027 = vpop.f32.mrf.mxu0
    %v2028 = vpop.f32.mrf.mxu0
    %v2029 = vadd.f32 0.0, %v2028
    %v2030 = vpop.f32.mrf.mxu0
    %2031 = vmatprep.mubr.bf16.mxu0 0
    %2032 = vmatmul.mubr.bf16.gmra.mxu0 %v1909
    %v2033 = vpop.f32.mrf.mxu0
    %v2034 = vadd.f32 0.0, %v2033
    %v2035 = vpop.f32.mrf.mxu0
    %v2036 = vpop.f32.mrf.mxu0
    %v2037 = vadd.f32 0.0, %v2036
    %v2038 = vpop.f32.mrf.mxu0
    %2039 = vmatprep.mubr.bf16.mxu0 0
    %2040 = vmatmul.mubr.bf16.gmra.mxu0 %v1912
    %v2041 = vpop.f32.mrf.mxu0
    %v2042 = vadd.f32 0.0, %v2041
    %v2043 = vpop.f32.mrf.mxu0
    %v2044 = vpop.f32.mrf.mxu0
    %v2045 = vadd.f32 0.0, %v2044
    %v2046 = vpop.f32.mrf.mxu0
    %2047 = vmatprep.mubr.bf16.mxu0 0
    %2048 = vmatmul.mubr.bf16.gmra.mxu0 %v1915
    %v2049 = vpop.f32.mrf.mxu0
    %v2050 = vadd.f32 0.0, %v2049
    %v2051 = vpop.f32.mrf.mxu0
    %v2052 = vpop.f32.mrf.mxu0
    %v2053 = vadd.f32 0.0, %v2052
    %v2054 = vpop.f32.mrf.mxu0
    %2055 = vmatprep.mubr.bf16.mxu0 0
    %2056 = vmatmul.mubr.bf16.gmra.mxu0 %v1918
    %v2057 = vpop.f32.mrf.mxu0
    %v2058 = vadd.f32 0.0, %v2057
    %v2059 = vpop.f32.mrf.mxu0
    %v2060 = vpop.f32.mrf.mxu0
    %v2061 = vadd.f32 0.0, %v2060
    %v2062 = vpop.f32.mrf.mxu0
    %2063 = vmatprep.mubr.bf16.mxu0 0
    %2064 = vmatmul.mubr.bf16.gmra.mxu0 %v1921
    %v2065 = vpop.f32.mrf.mxu0
    %v2066 = vadd.f32 0.0, %v2065
    %v2067 = vpop.f32.mrf.mxu0
    %v2068 = vpop.f32.mrf.mxu0
    %v2069 = vadd.f32 0.0, %v2068
    %v2070 = vpop.f32.mrf.mxu0
    %2071 = vmatprep.mubr.bf16.mxu0 0
    %2072 = vmatmul.mubr.bf16.gmra.mxu0 %v1924
    %v2073 = vpop.f32.mrf.mxu0
    %v2074 = vadd.f32 0.0, %v2073
    %v2075 = vpop.f32.mrf.mxu0
    %v2076 = vpop.f32.mrf.mxu0
    %v2077 = vadd.f32 0.0, %v2076
    %v2078 = vpop.f32.mrf.mxu0
    %2079 = vmatprep.mubr.bf16.mxu0 0
    %2080 = vmatmul.mubr.bf16.gmra.mxu0 %v1927
    %v2081 = vpop.f32.mrf.mxu0
    %v2082 = vadd.f32 0.0, %v2081
    %v2083 = vpop.f32.mrf.mxu0
    %v2084 = vpop.f32.mrf.mxu0
    %v2085 = vadd.f32 0.0, %v2084
    %v2086 = vpop.f32.mrf.mxu0
    %2087 = vmatprep.mubr.bf16.mxu0 0
    %2088 = vmatmul.mubr.bf16.gmra.mxu0 %v1930
    %v2089 = vpop.f32.mrf.mxu0
    %v2090 = vadd.f32 0.0, %v2089
    %v2091 = vpop.f32.mrf.mxu0
    %v2092 = vpop.f32.mrf.mxu0
    %v2093 = vadd.f32 0.0, %v2092
    %v2094 = vpop.f32.mrf.mxu0
    %2095 = vmatprep.mubr.bf16.mxu0 0
    %2096 = vmatmul.mubr.bf16.gmra.mxu0 %v1933
    %v2097 = vpop.f32.mrf.mxu0
    %v2098 = vadd.f32 0.0, %v2097
    %v2099 = vpop.f32.mrf.mxu0
    %v2100 = vpop.f32.mrf.mxu0
    %v2101 = vadd.f32 0.0, %v2100
    %v2102 = vpop.f32.mrf.mxu0
    %2103 = vmatprep.mubr.bf16.mxu0 0
    %2104 = vmatmul.mubr.bf16.gmra.mxu0 %v1936
    %v2105 = vpop.f32.mrf.mxu0
    %v2106 = vadd.f32 0.0, %v2105
    %v2107 = vpop.f32.mrf.mxu0
    %v2108 = vpop.f32.mrf.mxu0
    %v2109 = vadd.f32 0.0, %v2108
    %v2110 = vpop.f32.mrf.mxu0
    %2111 = vmatprep.mubr.bf16.mxu0 0
    %2112 = vmatmul.mubr.bf16.gmra.mxu0 %v1939
    %v2113 = vpop.f32.mrf.mxu0
    %v2114 = vadd.f32 0.0, %v2113
    %v2115 = vpop.f32.mrf.mxu0
    %v2116 = vpop.f32.mrf.mxu0
    %v2117 = vadd.f32 0.0, %v2116
    %v2118 = vpop.f32.mrf.mxu0
    %2119 = vmatprep.mubr.bf16.mxu0 0
    %2120 = vmatmul.mubr.bf16.gmra.mxu0 %v1942
    %v2121 = vpop.f32.mrf.mxu0
    %v2122 = vadd.f32 0.0, %v2121
    %v2123 = vpop.f32.mrf.mxu0
    %v2124 = vpop.f32.mrf.mxu0
    %v2125 = vadd.f32 0.0, %v2124
    %v2126 = vpop.f32.mrf.mxu0
    %2127 = vmatprep.mubr.bf16.mxu0 0
    %2128 = vmatmul.mubr.bf16.gmra.mxu0 %v1945
    %v2129 = vpop.f32.mrf.mxu0
    %v2130 = vadd.f32 0.0, %v2129
    %v2131 = vpop.f32.mrf.mxu0
    %v2132 = vpop.f32.mrf.mxu0
    %v2133 = vadd.f32 0.0, %v2132
    %v2134 = vpop.f32.mrf.mxu0
    %2135 = vmatprep.mubr.bf16.mxu0 0
    %2136 = vmatmul.mubr.bf16.gmra.mxu0 %v1948
    %v2137 = vpop.f32.mrf.mxu0
    %v2138 = vadd.f32 0.0, %v2137
    %v2139 = vpop.f32.mrf.mxu0
    %v2140 = vpop.f32.mrf.mxu0
    %v2141 = vadd.f32 0.0, %v2140
    %v2142 = vpop.f32.mrf.mxu0
    %2143 = vmatprep.mubr.bf16.mxu0 0
    %2144 = vmatmul.mubr.bf16.gmra.mxu0 %v1951
    %v2145 = vpop.f32.mrf.mxu0
    %v2146 = vadd.f32 0.0, %v2145
    %v2147 = vpop.f32.mrf.mxu0
    %v2148 = vpop.f32.mrf.mxu0
    %v2149 = vadd.f32 0.0, %v2148
    %v2150 = vpop.f32.mrf.mxu0
    %2151 = vmatprep.mubr.bf16.mxu0 0
    %2152 = vmatmul.mubr.bf16.gmra.mxu0 %v1954
    %v2153 = vpop.f32.mrf.mxu0
    %v2154 = vadd.f32 0.0, %v2153
    %v2155 = vpop.f32.mrf.mxu0
    %v2156 = vpop.f32.mrf.mxu0
    %v2157 = vadd.f32 0.0, %v2156
    %v2158 = vpop.f32.mrf.mxu0
    %2159 = vmatprep.mubr.bf16.mxu0 0
    %2160 = vmatmul.mubr.bf16.gmra.mxu0 %v1957
    %v2161 = vpop.f32.mrf.mxu0
    %v2162 = vadd.f32 0.0, %v2161
    %v2163 = vpop.f32.mrf.mxu0
    %v2164 = vpop.f32.mrf.mxu0
    %v2165 = vpop.f32.mrf.mxu0
    %2166 = vdwg.mxu0
    %v2167 = vadd.f32 %v1776, %v1994
    %v2168 = vadd.f32 %v1777, %v1997
    %v2169 = vadd.f32 %v1778, %v2002
    %v2170 = vadd.f32 %v1779, %v2005
    %v2171 = vadd.f32 %v1780, %v2010
    %v2172 = vadd.f32 %v1781, %v2013
    %v2173 = vadd.f32 %v1782, %v2018
    %v2174 = vadd.f32 %v1783, %v2021
    %v2175 = vadd.f32 %v1784, %v2026
    %v2176 = vadd.f32 %v1785, %v2029
    %v2177 = vadd.f32 %v1786, %v2034
    %v2178 = vadd.f32 %v1787, %v2037
    %v2179 = vadd.f32 %v1788, %v2042
    %v2180 = vadd.f32 %v1789, %v2045
    %v2181 = vadd.f32 %v1790, %v2050
    %v2182 = vadd.f32 %v1791, %v2053
    %v2183 = vadd.f32 %v1792, %v2058
    %v2184 = vadd.f32 %v1793, %v2061
    %v2185 = vadd.f32 %v1794, %v2066
    %v2186 = vadd.f32 %v1795, %v2069
    %v2187 = vadd.f32 %v1796, %v2074
    %v2188 = vadd.f32 %v1797, %v2077
    %v2189 = vadd.f32 %v1798, %v2082
    %v2190 = vadd.f32 %v1799, %v2085
    %v2191 = vadd.f32 %v1800, %v2090
    %v2192 = vadd.f32 %v1801, %v2093
    %v2193 = vadd.f32 %v1802, %v2098
    %v2194 = vadd.f32 %v1803, %v2101
    %v2195 = vadd.f32 %v1804, %v2106
    %v2196 = vadd.f32 %v1805, %v2109
    %v2197 = vadd.f32 %v1806, %v2114
    %v2198 = vadd.f32 %v1807, %v2117
    %v2199 = vadd.f32 %v1808, %v2122
    %v2200 = vadd.f32 %v1809, %v2125
    %v2201 = vadd.f32 %v1810, %v2130
    %v2202 = vadd.f32 %v1811, %v2133
    %v2203 = vadd.f32 %v1812, %v2138
    %v2204 = vadd.f32 %v1813, %v2141
    %v2205 = vadd.f32 %v1814, %v2146
    %v2206 = vadd.f32 %v1815, %v2149
    %v2207 = vadd.f32 %v1816, %v2154
    %v2208 = vadd.f32 %v1817, %v2157
    %v2209 = vadd.f32 %v1818, %v2162
    %v2210 = vld [vmem:[%s0 + $0xc] sm:$0xc]
    %v2211 = vld [vmem:[%s0 + $0x10] sm:$0xf]
    %v2212 = vld [vmem:[%s0 + $0x14] sm:$0xf]
    %v2213 = vld [vmem:[%s0 + $0x18] sm:$0xf]
    %v2214 = vld [vmem:[%s0 + $0x1c] sm:$0xf]
    %v2215 = vld [vmem:[%s0 + $0x20] sm:$0xf]
    %v2216 = vld [vmem:[%s0 + $0x24] sm:$0xf]
    %v2217 = vld [vmem:[%s0 + $0x28] sm:$0xf]
    %v2218 = vld [vmem:[%s0 + $0x2c] sm:$0xf]
    %v2219 = vld [vmem:[%s0 + $0x30] sm:$0xf]
    %v2220 = vld [vmem:[%s0 + $0x34] sm:$0xf]
    %v2221 = vld [vmem:[%s0 + $0x38] sm:$0xf]
    %v2222 = vld [vmem:[%s0 + $0x3c] sm:$0xf]
    %v2223 = vld [vmem:[%s0 + $0x40] sm:$0xf]
    %v2224 = vld [vmem:[%s0 + $0x44] sm:$0xf]
    %v2225 = vld [vmem:[%s0 + $0x48] sm:$0xf]
    %v2226 = vld [vmem:[%s0 + $0x4c] sm:$0xf]
    %v2227 = vld [vmem:[%s0 + $0x50] sm:$0xf]
    %v2228 = vld [vmem:[%s0 + $0x54] sm:$0xf]
    %v2229 = vld [vmem:[%s0 + $0x58] sm:$0xf]
    %v2230 = vld [vmem:[%s0 + $0x5c] sm:$0xf]
    %v2231 = vld [vmem:[%s0 + $0x60] sm:$0xf]
    %v2232 = vld [vmem:[%s0 + $0x64] sm:$0xf]
    %v2233 = vld [vmem:[%s0 + $0x68] sm:$0xf]
    %v2234 = vld [vmem:[%s0 + $0x6c] sm:$0xf]
    %v2235 = vld [vmem:[%s0 + $0x70] sm:$0xf]
    %v2236 = vld [vmem:[%s0 + $0x74] sm:$0xf]
    %v2237 = vld [vmem:[%s0 + $0x78] sm:$0xf]
    %v2238 = vld [vmem:[%s0 + $0x7c] sm:$0xf]
    %v2239 = vld [vmem:[%s0 + $0x80] sm:$0xf]
    %v2240 = vld [vmem:[%s0 + $0x84] sm:$0xf]
    %v2241 = vld [vmem:[%s0 + $0x88] sm:$0xf]
    %v2242 = vld [vmem:[%s0 + $0x8c] sm:$0xf]
    %v2243 = vld [vmem:[%s0 + $0x90] sm:$0xf]
    %v2244 = vld [vmem:[%s0 + $0x94] sm:$0xf]
    %v2245 = vld [vmem:[%s0 + $0x98] sm:$0xf]
    %v2246 = vld [vmem:[%s0 + $0x9c] sm:$0xf]
    %v2247 = vld [vmem:[%s0 + $0xa0] sm:$0xf]
    %v2248 = vld [vmem:[%s0 + $0xa4] sm:$0xf]
    %v2249 = vld [vmem:[%s0 + $0xa8] sm:$0xf]
    %v2250 = vld [vmem:[%s0 + $0xac] sm:$0xf]
    %v2251 = vld [vmem:[%s0 + $0xb0] sm:$0xf]
    %v2252 = vld [vmem:[%s0 + $0xb4] sm:$0xf]
    %v2253 = vld [vmem:[%s0 + $0xb8] sm:$0x3]
    %s2254 = scalar_lea.vmem %s1, 192
    %v2255 = vld [vmem:[%s2254] sm:$0xf]
    %v2256 = vld [vmem:[%s2254 + $0x4] sm:$0xf]
    %v2257 = vld [vmem:[%s2254 + $0x8] sm:$0xf]
    %v2258 = vld [vmem:[%s2254 + $0xc] sm:$0xf]
    %v2259 = vld [vmem:[%s2254 + $0x10] sm:$0xf]
    %v2260 = vld [vmem:[%s2254 + $0x14] sm:$0xf]
    %v2261 = vld [vmem:[%s2254 + $0x18] sm:$0xf]
    %v2262 = vld [vmem:[%s2254 + $0x1c] sm:$0xf]
    %v2263 = vld [vmem:[%s2254 + $0x20] sm:$0xf]
    %v2264 = vld [vmem:[%s2254 + $0x24] sm:$0xf]
    %v2265 = vld [vmem:[%s2254 + $0x28] sm:$0xf]
    %v2266 = vld [vmem:[%s2254 + $0x2c] sm:$0xf]
    %v2311 = vunpack.c.l.b16 %v2210
    %v2312 = vunpack.c.l.b16 %v2211
    %v2313 = vunpack.c.l.b16 %v2212
    %v2314 = vunpack.c.l.b16 %v2213
    %v2315 = vunpack.c.l.b16 %v2214
    %v2316 = vunpack.c.l.b16 %v2215
    %v2317 = vunpack.c.l.b16 %v2216
    %v2318 = vunpack.c.l.b16 %v2217
    %v2319 = vunpack.c.l.b16 %v2218
    %v2320 = vunpack.c.l.b16 %v2219
    %v2321 = vunpack.c.l.b16 %v2220
    %v2322 = vunpack.c.l.b16 %v2221
    %v2323 = vunpack.c.l.b16 %v2222
    %v2324 = vunpack.c.l.b16 %v2223
    %v2325 = vunpack.c.l.b16 %v2224
    %v2326 = vunpack.c.l.b16 %v2225
    %v2327 = vunpack.c.l.b16 %v2226
    %v2328 = vunpack.c.l.b16 %v2227
    %v2329 = vunpack.c.l.b16 %v2228
    %v2330 = vunpack.c.l.b16 %v2229
    %v2331 = vunpack.c.l.b16 %v2230
    %v2332 = vunpack.c.l.b16 %v2231
    %v2333 = vunpack.c.l.b16 %v2232
    %v2334 = vunpack.c.l.b16 %v2233
    %v2335 = vunpack.c.l.b16 %v2234
    %v2336 = vunpack.c.l.b16 %v2235
    %v2337 = vunpack.c.l.b16 %v2236
    %v2338 = vunpack.c.l.b16 %v2237
    %v2339 = vunpack.c.l.b16 %v2238
    %v2340 = vunpack.c.l.b16 %v2239
    %v2341 = vunpack.c.l.b16 %v2240
    %v2342 = vunpack.c.l.b16 %v2241
    %v2343 = vunpack.c.l.b16 %v2242
    %v2344 = vunpack.c.l.b16 %v2243
    %v2345 = vunpack.c.l.b16 %v2244
    %v2346 = vunpack.c.l.b16 %v2245
    %v2347 = vunpack.c.l.b16 %v2246
    %v2348 = vunpack.c.l.b16 %v2247
    %v2349 = vunpack.c.l.b16 %v2248
    %v2350 = vunpack.c.l.b16 %v2249
    %v2351 = vunpack.c.l.b16 %v2250
    %v2352 = vunpack.c.l.b16 %v2251
    %v2353 = vunpack.c.l.b16 %v2252
    %v2354 = vunpack.c.l.b16 %v2253
    %v2355 = vpack.c.b16 %v2312, %v2311
    %v2356 = vpack.c.b16 %v2314, %v2313
    %v2357 = vpack.c.b16 %v2316, %v2315
    %v2358 = vpack.c.b16 %v2318, %v2317
    %v2359 = vpack.c.b16 %v2320, %v2319
    %v2360 = vpack.c.b16 %v2322, %v2321
    %v2361 = vpack.c.b16 %v2324, %v2323
    %v2362 = vpack.c.b16 %v2326, %v2325
    %v2363 = vpack.c.b16 %v2328, %v2327
    %v2364 = vpack.c.b16 %v2330, %v2329
    %v2365 = vpack.c.b16 %v2332, %v2331
    %v2366 = vpack.c.b16 %v2334, %v2333
    %v2367 = vpack.c.b16 %v2336, %v2335
    %v2368 = vpack.c.b16 %v2338, %v2337
    %v2369 = vpack.c.b16 %v2340, %v2339
    %v2370 = vpack.c.b16 %v2342, %v2341
    %v2371 = vpack.c.b16 %v2344, %v2343
    %v2372 = vpack.c.b16 %v2346, %v2345
    %v2373 = vpack.c.b16 %v2348, %v2347
    %v2374 = vpack.c.b16 %v2350, %v2349
    %v2375 = vpack.c.b16 %v2352, %v2351
    %v2376 = vpack.c.b16 %v2354, %v2353
    %vm2377 = vcmask 1045504
    %v2378 = vrot.slane %v2355, 2
    %v2379 = vrot.slane %v2356, 2
    %v2380 = vsel %vm2377, %v2378, %v2379
    %v2381 = vrot.slane %v2357, 2
    %v2382 = vsel %vm2377, %v2379, %v2381
    %v2383 = vrot.slane %v2358, 2
    %v2384 = vsel %vm2377, %v2381, %v2383
    %v2385 = vrot.slane %v2359, 2
    %v2386 = vsel %vm2377, %v2383, %v2385
    %v2387 = vrot.slane %v2360, 2
    %v2388 = vsel %vm2377, %v2385, %v2387
    %v2389 = vrot.slane %v2361, 2
    %v2390 = vsel %vm2377, %v2387, %v2389
    %v2391 = vrot.slane %v2362, 2
    %v2392 = vsel %vm2377, %v2389, %v2391
    %v2393 = vrot.slane %v2363, 2
    %v2394 = vsel %vm2377, %v2391, %v2393
    %v2395 = vrot.slane %v2364, 2
    %v2396 = vsel %vm2377, %v2393, %v2395
    %v2397 = vrot.slane %v2365, 2
    %v2398 = vsel %vm2377, %v2395, %v2397
    %v2399 = vrot.slane %v2366, 2
    %v2400 = vsel %vm2377, %v2397, %v2399
    %v2401 = vrot.slane %v2367, 2
    %v2402 = vsel %vm2377, %v2399, %v2401
    %v2403 = vrot.slane %v2368, 2
    %v2404 = vsel %vm2377, %v2401, %v2403
    %v2405 = vrot.slane %v2369, 2
    %v2406 = vsel %vm2377, %v2403, %v2405
    %v2407 = vrot.slane %v2370, 2
    %v2408 = vsel %vm2377, %v2405, %v2407
    %v2409 = vrot.slane %v2371, 2
    %v2410 = vsel %vm2377, %v2407, %v2409
    %v2411 = vrot.slane %v2372, 2
    %v2412 = vsel %vm2377, %v2409, %v2411
    %v2413 = vrot.slane %v2373, 2
    %v2414 = vsel %vm2377, %v2411, %v2413
    %v2415 = vrot.slane %v2374, 2
    %v2416 = vsel %vm2377, %v2413, %v2415
    %v2417 = vrot.slane %v2375, 2
    %v2418 = vsel %vm2377, %v2415, %v2417
    %v2419 = vrot.slane %v2376, 2
    %v2420 = vsel %vm2377, %v2417, %v2419
    %v2433 = vunpack.c.l.b16 %v2255
    %v2434 = vunpack.c.l.b16 %v2256
    %v2435 = vunpack.c.l.b16 %v2257
    %v2436 = vunpack.c.l.b16 %v2258
    %v2437 = vunpack.c.l.b16 %v2259
    %v2438 = vunpack.c.l.b16 %v2260
    %v2439 = vunpack.c.l.b16 %v2261
    %v2440 = vunpack.c.l.b16 %v2262
    %v2441 = vunpack.c.l.b16 %v2263
    %v2442 = vunpack.c.l.b16 %v2264
    %v2443 = vunpack.c.l.b16 %v2265
    %v2444 = vunpack.c.l.b16 %v2266
    %v2445 = vpack.c.b16 %v2434, %v2433
    %v2446 = vpack.c.b16 %v2436, %v2435
    %v2447 = vpack.c.b16 %v2438, %v2437
    %v2448 = vpack.c.b16 %v2440, %v2439
    %v2449 = vpack.c.b16 %v2442, %v2441
    %v2450 = vpack.c.b16 %v2444, %v2443
    %v2458 = vsel %vm666, %v2380, 0
    %v2461 = vsel %vm666, %v2382, 0
    %v2464 = vsel %vm666, %v2384, 0
    %v2467 = vsel %vm666, %v2386, 0
    %v2470 = vsel %vm666, %v2388, 0
    %v2473 = vsel %vm666, %v2390, 0
    %v2476 = vsel %vm666, %v2392, 0
    %v2479 = vsel %vm666, %v2394, 0
    %v2482 = vsel %vm666, %v2396, 0
    %v2485 = vsel %vm666, %v2398, 0
    %v2488 = vsel %vm666, %v2400, 0
    %v2491 = vsel %vm666, %v2402, 0
    %v2494 = vsel %vm666, %v2404, 0
    %v2497 = vsel %vm666, %v2406, 0
    %v2500 = vsel %vm666, %v2408, 0
    %v2503 = vsel %vm666, %v2410, 0
    %v2506 = vsel %vm666, %v2412, 0
    %v2509 = vsel %vm666, %v2414, 0
    %v2512 = vsel %vm666, %v2416, 0
    %v2515 = vsel %vm666, %v2418, 0
    %v2518 = vsel %vm666, %v2420, 0
    %v2521 = vsel %vm666, %v2419, 0
    %2523 = vmatprep.subr.bf16.mxu0 0
    %2524 = vmatpush1.bf16.msra.mxu0 0
    %2525 = vmatprep.subr.bf16.mxu0 0
    %2526 = vmatpush1.bf16.msra.mxu0 0
    %2527 = vmatprep.subr.bf16.mxu0 0
    %2528 = vmatpush1.bf16.msra.mxu0 %v2450
    %2529 = vmatprep.subr.bf16.mxu0 0
    %2530 = vmatpush1.bf16.msra.mxu0 %v2449
    %2531 = vmatprep.subr.bf16.mxu0 0
    %2532 = vmatpush1.bf16.msra.mxu0 %v2448
    %2533 = vmatprep.subr.bf16.mxu0 0
    %2534 = vmatpush1.bf16.msra.mxu0 %v2447
    %2535 = vmatprep.subr.bf16.mxu0 0
    %2536 = vmatpush1.bf16.msra.mxu0 %v2446
    %2537 = vmatprep.subr.bf16.mxu0 0
    %2538 = vmatpush1.bf16.msra.mxu0 %v2445
    %2539 = vmatprep.subr.bf16.mxu0 0
    %2540 = vmatpush2.bf16.msra.mxu0 0
    %2541 = vmatprep.subr.bf16.mxu0 0
    %2542 = vmatpush2.bf16.msra.mxu0 0
    %2543 = vmatprep.subr.bf16.mxu0 0
    %2544 = vmatpush2.bf16.msra.mxu0 0
    %2545 = vmatprep.subr.bf16.mxu0 0
    %2546 = vmatpush2.bf16.msra.mxu0 0
    %2547 = vmatprep.subr.bf16.mxu0 0
    %2548 = vmatpush2.bf16.msra.mxu0 0
    %2549 = vmatprep.subr.bf16.mxu0 0
    %2550 = vmatpush2.bf16.msra.mxu0 0
    %2551 = vmatprep.subr.bf16.mxu0 0
    %2552 = vmatpush2.bf16.msra.mxu0 0
    %2553 = vmatprep.subr.bf16.mxu0 0
    %2554 = vmatpush2.bf16.msra.mxu0 0
    %2555 = vmatprep.mubr.bf16.mxu0 0
    %2556 = vmatmul.mubr.bf16.gmra.mxu0 %v2458
    %v2557 = vpop.f32.mrf.mxu0
    %v2558 = vadd.f32 0.0, %v2557
    %v2559 = vpop.f32.mrf.mxu0
    %v2560 = vpop.f32.mrf.mxu0
    %v2561 = vadd.f32 0.0, %v2560
    %v2562 = vpop.f32.mrf.mxu0
    %2563 = vmatprep.mubr.bf16.mxu0 0
    %2564 = vmatmul.mubr.bf16.gmra.mxu0 %v2461
    %v2565 = vpop.f32.mrf.mxu0
    %v2566 = vadd.f32 0.0, %v2565
    %v2567 = vpop.f32.mrf.mxu0
    %v2568 = vpop.f32.mrf.mxu0
    %v2569 = vadd.f32 0.0, %v2568
    %v2570 = vpop.f32.mrf.mxu0
    %2571 = vmatprep.mubr.bf16.mxu0 0
    %2572 = vmatmul.mubr.bf16.gmra.mxu0 %v2464
    %v2573 = vpop.f32.mrf.mxu0
    %v2574 = vadd.f32 0.0, %v2573
    %v2575 = vpop.f32.mrf.mxu0
    %v2576 = vpop.f32.mrf.mxu0
    %v2577 = vadd.f32 0.0, %v2576
    %v2578 = vpop.f32.mrf.mxu0
    %2579 = vmatprep.mubr.bf16.mxu0 0
    %2580 = vmatmul.mubr.bf16.gmra.mxu0 %v2467
    %v2581 = vpop.f32.mrf.mxu0
    %v2582 = vadd.f32 0.0, %v2581
    %v2583 = vpop.f32.mrf.mxu0
    %v2584 = vpop.f32.mrf.mxu0
    %v2585 = vadd.f32 0.0, %v2584
    %v2586 = vpop.f32.mrf.mxu0
    %2587 = vmatprep.mubr.bf16.mxu0 0
    %2588 = vmatmul.mubr.bf16.gmra.mxu0 %v2470
    %v2589 = vpop.f32.mrf.mxu0
    %v2590 = vadd.f32 0.0, %v2589
    %v2591 = vpop.f32.mrf.mxu0
    %v2592 = vpop.f32.mrf.mxu0
    %v2593 = vadd.f32 0.0, %v2592
    %v2594 = vpop.f32.mrf.mxu0
    %2595 = vmatprep.mubr.bf16.mxu0 0
    %2596 = vmatmul.mubr.bf16.gmra.mxu0 %v2473
    %v2597 = vpop.f32.mrf.mxu0
    %v2598 = vadd.f32 0.0, %v2597
    %v2599 = vpop.f32.mrf.mxu0
    %v2600 = vpop.f32.mrf.mxu0
    %v2601 = vadd.f32 0.0, %v2600
    %v2602 = vpop.f32.mrf.mxu0
    %2603 = vmatprep.mubr.bf16.mxu0 0
    %2604 = vmatmul.mubr.bf16.gmra.mxu0 %v2476
    %v2605 = vpop.f32.mrf.mxu0
    %v2606 = vadd.f32 0.0, %v2605
    %v2607 = vpop.f32.mrf.mxu0
    %v2608 = vpop.f32.mrf.mxu0
    %v2609 = vadd.f32 0.0, %v2608
    %v2610 = vpop.f32.mrf.mxu0
    %2611 = vmatprep.mubr.bf16.mxu0 0
    %2612 = vmatmul.mubr.bf16.gmra.mxu0 %v2479
    %v2613 = vpop.f32.mrf.mxu0
    %v2614 = vadd.f32 0.0, %v2613
    %v2615 = vpop.f32.mrf.mxu0
    %v2616 = vpop.f32.mrf.mxu0
    %v2617 = vadd.f32 0.0, %v2616
    %v2618 = vpop.f32.mrf.mxu0
    %2619 = vmatprep.mubr.bf16.mxu0 0
    %2620 = vmatmul.mubr.bf16.gmra.mxu0 %v2482
    %v2621 = vpop.f32.mrf.mxu0
    %v2622 = vadd.f32 0.0, %v2621
    %v2623 = vpop.f32.mrf.mxu0
    %v2624 = vpop.f32.mrf.mxu0
    %v2625 = vadd.f32 0.0, %v2624
    %v2626 = vpop.f32.mrf.mxu0
    %2627 = vmatprep.mubr.bf16.mxu0 0
    %2628 = vmatmul.mubr.bf16.gmra.mxu0 %v2485
    %v2629 = vpop.f32.mrf.mxu0
    %v2630 = vadd.f32 0.0, %v2629
    %v2631 = vpop.f32.mrf.mxu0
    %v2632 = vpop.f32.mrf.mxu0
    %v2633 = vadd.f32 0.0, %v2632
    %v2634 = vpop.f32.mrf.mxu0
    %2635 = vmatprep.mubr.bf16.mxu0 0
    %2636 = vmatmul.mubr.bf16.gmra.mxu0 %v2488
    %v2637 = vpop.f32.mrf.mxu0
    %v2638 = vadd.f32 0.0, %v2637
    %v2639 = vpop.f32.mrf.mxu0
    %v2640 = vpop.f32.mrf.mxu0
    %v2641 = vadd.f32 0.0, %v2640
    %v2642 = vpop.f32.mrf.mxu0
    %2643 = vmatprep.mubr.bf16.mxu0 0
    %2644 = vmatmul.mubr.bf16.gmra.mxu0 %v2491
    %v2645 = vpop.f32.mrf.mxu0
    %v2646 = vadd.f32 0.0, %v2645
    %v2647 = vpop.f32.mrf.mxu0
    %v2648 = vpop.f32.mrf.mxu0
    %v2649 = vadd.f32 0.0, %v2648
    %v2650 = vpop.f32.mrf.mxu0
    %2651 = vmatprep.mubr.bf16.mxu0 0
    %2652 = vmatmul.mubr.bf16.gmra.mxu0 %v2494
    %v2653 = vpop.f32.mrf.mxu0
    %v2654 = vadd.f32 0.0, %v2653
    %v2655 = vpop.f32.mrf.mxu0
    %v2656 = vpop.f32.mrf.mxu0
    %v2657 = vadd.f32 0.0, %v2656
    %v2658 = vpop.f32.mrf.mxu0
    %2659 = vmatprep.mubr.bf16.mxu0 0
    %2660 = vmatmul.mubr.bf16.gmra.mxu0 %v2497
    %v2661 = vpop.f32.mrf.mxu0
    %v2662 = vadd.f32 0.0, %v2661
    %v2663 = vpop.f32.mrf.mxu0
    %v2664 = vpop.f32.mrf.mxu0
    %v2665 = vadd.f32 0.0, %v2664
    %v2666 = vpop.f32.mrf.mxu0
    %2667 = vmatprep.mubr.bf16.mxu0 0
    %2668 = vmatmul.mubr.bf16.gmra.mxu0 %v2500
    %v2669 = vpop.f32.mrf.mxu0
    %v2670 = vadd.f32 0.0, %v2669
    %v2671 = vpop.f32.mrf.mxu0
    %v2672 = vpop.f32.mrf.mxu0
    %v2673 = vadd.f32 0.0, %v2672
    %v2674 = vpop.f32.mrf.mxu0
    %2675 = vmatprep.mubr.bf16.mxu0 0
    %2676 = vmatmul.mubr.bf16.gmra.mxu0 %v2503
    %v2677 = vpop.f32.mrf.mxu0
    %v2678 = vadd.f32 0.0, %v2677
    %v2679 = vpop.f32.mrf.mxu0
    %v2680 = vpop.f32.mrf.mxu0
    %v2681 = vadd.f32 0.0, %v2680
    %v2682 = vpop.f32.mrf.mxu0
    %2683 = vmatprep.mubr.bf16.mxu0 0
    %2684 = vmatmul.mubr.bf16.gmra.mxu0 %v2506
    %v2685 = vpop.f32.mrf.mxu0
    %v2686 = vadd.f32 0.0, %v2685
    %v2687 = vpop.f32.mrf.mxu0
    %v2688 = vpop.f32.mrf.mxu0
    %v2689 = vadd.f32 0.0, %v2688
    %v2690 = vpop.f32.mrf.mxu0
    %2691 = vmatprep.mubr.bf16.mxu0 0
    %2692 = vmatmul.mubr.bf16.gmra.mxu0 %v2509
    %v2693 = vpop.f32.mrf.mxu0
    %v2694 = vadd.f32 0.0, %v2693
    %v2695 = vpop.f32.mrf.mxu0
    %v2696 = vpop.f32.mrf.mxu0
    %v2697 = vadd.f32 0.0, %v2696
    %v2698 = vpop.f32.mrf.mxu0
    %2699 = vmatprep.mubr.bf16.mxu0 0
    %2700 = vmatmul.mubr.bf16.gmra.mxu0 %v2512
    %v2701 = vpop.f32.mrf.mxu0
    %v2702 = vadd.f32 0.0, %v2701
    %v2703 = vpop.f32.mrf.mxu0
    %v2704 = vpop.f32.mrf.mxu0
    %v2705 = vadd.f32 0.0, %v2704
    %v2706 = vpop.f32.mrf.mxu0
    %2707 = vmatprep.mubr.bf16.mxu0 0
    %2708 = vmatmul.mubr.bf16.gmra.mxu0 %v2515
    %v2709 = vpop.f32.mrf.mxu0
    %v2710 = vadd.f32 0.0, %v2709
    %v2711 = vpop.f32.mrf.mxu0
    %v2712 = vpop.f32.mrf.mxu0
    %v2713 = vadd.f32 0.0, %v2712
    %v2714 = vpop.f32.mrf.mxu0
    %2715 = vmatprep.mubr.bf16.mxu0 0
    %2716 = vmatmul.mubr.bf16.gmra.mxu0 %v2518
    %v2717 = vpop.f32.mrf.mxu0
    %v2718 = vadd.f32 0.0, %v2717
    %v2719 = vpop.f32.mrf.mxu0
    %v2720 = vpop.f32.mrf.mxu0
    %v2721 = vadd.f32 0.0, %v2720
    %v2722 = vpop.f32.mrf.mxu0
    %2723 = vmatprep.mubr.bf16.mxu0 0
    %2724 = vmatmul.mubr.bf16.gmra.mxu0 %v2521
    %v2725 = vpop.f32.mrf.mxu0
    %v2726 = vadd.f32 0.0, %v2725
    %v2727 = vpop.f32.mrf.mxu0
    %v2728 = vpop.f32.mrf.mxu0
    %v2729 = vpop.f32.mrf.mxu0
    %2730 = vdwg.mxu0
    %v2731 = vadd.f32 %v2167, %v2558
    %v2732 = vadd.f32 %v2168, %v2561
    %v2733 = vadd.f32 %v2169, %v2566
    %v2734 = vadd.f32 %v2170, %v2569
    %v2735 = vadd.f32 %v2171, %v2574
    %v2736 = vadd.f32 %v2172, %v2577
    %v2737 = vadd.f32 %v2173, %v2582
    %v2738 = vadd.f32 %v2174, %v2585
    %v2739 = vadd.f32 %v2175, %v2590
    %v2740 = vadd.f32 %v2176, %v2593
    %v2741 = vadd.f32 %v2177, %v2598
    %v2742 = vadd.f32 %v2178, %v2601
    %v2743 = vadd.f32 %v2179, %v2606
    %v2744 = vadd.f32 %v2180, %v2609
    %v2745 = vadd.f32 %v2181, %v2614
    %v2746 = vadd.f32 %v2182, %v2617
    %v2747 = vadd.f32 %v2183, %v2622
    %v2748 = vadd.f32 %v2184, %v2625
    %v2749 = vadd.f32 %v2185, %v2630
    %v2750 = vadd.f32 %v2186, %v2633
    %v2751 = vadd.f32 %v2187, %v2638
    %v2752 = vadd.f32 %v2188, %v2641
    %v2753 = vadd.f32 %v2189, %v2646
    %v2754 = vadd.f32 %v2190, %v2649
    %v2755 = vadd.f32 %v2191, %v2654
    %v2756 = vadd.f32 %v2192, %v2657
    %v2757 = vadd.f32 %v2193, %v2662
    %v2758 = vadd.f32 %v2194, %v2665
    %v2759 = vadd.f32 %v2195, %v2670
    %v2760 = vadd.f32 %v2196, %v2673
    %v2761 = vadd.f32 %v2197, %v2678
    %v2762 = vadd.f32 %v2198, %v2681
    %v2763 = vadd.f32 %v2199, %v2686
    %v2764 = vadd.f32 %v2200, %v2689
    %v2765 = vadd.f32 %v2201, %v2694
    %v2766 = vadd.f32 %v2202, %v2697
    %v2767 = vadd.f32 %v2203, %v2702
    %v2768 = vadd.f32 %v2204, %v2705
    %v2769 = vadd.f32 %v2205, %v2710
    %v2770 = vadd.f32 %v2206, %v2713
    %v2771 = vadd.f32 %v2207, %v2718
    %v2772 = vadd.f32 %v2208, %v2721
    %v2773 = vadd.f32 %v2209, %v2726
    %v2774 = vld [vmem:[%s0 + $0xc] sm:$0x8]
    %v2775 = vld [vmem:[%s0 + $0xb8] sm:$0x7]
    %s2776 = scalar_lea.vmem %s1, 240
    %v2777 = vld [vmem:[%s2776] sm:$0xf]
    %v2778 = vld [vmem:[%s2776 + $0x4] sm:$0xf]
    %v2779 = vld [vmem:[%s2776 + $0x8] sm:$0xf]
    %v2780 = vld [vmem:[%s2776 + $0xc] sm:$0xf]
    %v2781 = vld [vmem:[%s2776 + $0x10] sm:$0xf]
    %v2782 = vld [vmem:[%s2776 + $0x14] sm:$0xf]
    %v2783 = vld [vmem:[%s2776 + $0x18] sm:$0xf]
    %v2784 = vld [vmem:[%s2776 + $0x1c] sm:$0xf]
    %v2785 = vld [vmem:[%s2776 + $0x20] sm:$0xf]
    %v2786 = vld [vmem:[%s2776 + $0x24] sm:$0xf]
    %v2787 = vld [vmem:[%s2776 + $0x28] sm:$0xf]
    %v2788 = vld [vmem:[%s2776 + $0x2c] sm:$0xf]
    %v2791 = vunpack.c.l.b16 %v2774
    %v2792 = vunpack.c.l.b16 %v2775
    %v2793 = vpack.c.b16 %v2312, %v2791
    %v2794 = vpack.c.b16 %v2792, %v2353
    %v2795 = vrot.slane %v2793, 3
    %v2796 = vrot.slane %v2356, 3
    %v2797 = vsel %vm1422, %v2795, %v2796
    %v2798 = vrot.slane %v2357, 3
    %v2799 = vsel %vm1422, %v2796, %v2798
    %v2800 = vrot.slane %v2358, 3
    %v2801 = vsel %vm1422, %v2798, %v2800
    %v2802 = vrot.slane %v2359, 3
    %v2803 = vsel %vm1422, %v2800, %v2802
    %v2804 = vrot.slane %v2360, 3
    %v2805 = vsel %vm1422, %v2802, %v2804
    %v2806 = vrot.slane %v2361, 3
    %v2807 = vsel %vm1422, %v2804, %v2806
    %v2808 = vrot.slane %v2362, 3
    %v2809 = vsel %vm1422, %v2806, %v2808
    %v2810 = vrot.slane %v2363, 3
    %v2811 = vsel %vm1422, %v2808, %v2810
    %v2812 = vrot.slane %v2364, 3
    %v2813 = vsel %vm1422, %v2810, %v2812
    %v2814 = vrot.slane %v2365, 3
    %v2815 = vsel %vm1422, %v2812, %v2814
    %v2816 = vrot.slane %v2366, 3
    %v2817 = vsel %vm1422, %v2814, %v2816
    %v2818 = vrot.slane %v2367, 3
    %v2819 = vsel %vm1422, %v2816, %v2818
    %v2820 = vrot.slane %v2368, 3
    %v2821 = vsel %vm1422, %v2818, %v2820
    %v2822 = vrot.slane %v2369, 3
    %v2823 = vsel %vm1422, %v2820, %v2822
    %v2824 = vrot.slane %v2370, 3
    %v2825 = vsel %vm1422, %v2822, %v2824
    %v2826 = vrot.slane %v2371, 3
    %v2827 = vsel %vm1422, %v2824, %v2826
    %v2828 = vrot.slane %v2372, 3
    %v2829 = vsel %vm1422, %v2826, %v2828
    %v2830 = vrot.slane %v2373, 3
    %v2831 = vsel %vm1422, %v2828, %v2830
    %v2832 = vrot.slane %v2374, 3
    %v2833 = vsel %vm1422, %v2830, %v2832
    %v2834 = vrot.slane %v2375, 3
    %v2835 = vsel %vm1422, %v2832, %v2834
    %v2836 = vrot.slane %v2794, 3
    %v2837 = vsel %vm1422, %v2834, %v2836
    %v2850 = vunpack.c.l.b16 %v2777
    %v2851 = vunpack.c.l.b16 %v2778
    %v2852 = vunpack.c.l.b16 %v2779
    %v2853 = vunpack.c.l.b16 %v2780
    %v2854 = vunpack.c.l.b16 %v2781
    %v2855 = vunpack.c.l.b16 %v2782
    %v2856 = vunpack.c.l.b16 %v2783
    %v2857 = vunpack.c.l.b16 %v2784
    %v2858 = vunpack.c.l.b16 %v2785
    %v2859 = vunpack.c.l.b16 %v2786
    %v2860 = vunpack.c.l.b16 %v2787
    %v2861 = vunpack.c.l.b16 %v2788
    %v2862 = vpack.c.b16 %v2851, %v2850
    %v2863 = vpack.c.b16 %v2853, %v2852
    %v2864 = vpack.c.b16 %v2855, %v2854
    %v2865 = vpack.c.b16 %v2857, %v2856
    %v2866 = vpack.c.b16 %v2859, %v2858
    %v2867 = vpack.c.b16 %v2861, %v2860
    %v2875 = vsel %vm666, %v2797, 0
    %v2878 = vsel %vm666, %v2799, 0
    %v2881 = vsel %vm666, %v2801, 0
    %v2884 = vsel %vm666, %v2803, 0
    %v2887 = vsel %vm666, %v2805, 0
    %v2890 = vsel %vm666, %v2807, 0
    %v2893 = vsel %vm666, %v2809, 0
    %v2896 = vsel %vm666, %v2811, 0
    %v2899 = vsel %vm666, %v2813, 0
    %v2902 = vsel %vm666, %v2815, 0
    %v2905 = vsel %vm666, %v2817, 0
    %v2908 = vsel %vm666, %v2819, 0
    %v2911 = vsel %vm666, %v2821, 0
    %v2914 = vsel %vm666, %v2823, 0
    %v2917 = vsel %vm666, %v2825, 0
    %v2920 = vsel %vm666, %v2827, 0
    %v2923 = vsel %vm666, %v2829, 0
    %v2926 = vsel %vm666, %v2831, 0
    %v2929 = vsel %vm666, %v2833, 0
    %v2932 = vsel %vm666, %v2835, 0
    %v2935 = vsel %vm666, %v2837, 0
    %v2938 = vsel %vm666, %v2836, 0
    %2940 = vmatprep.subr.bf16.mxu0 0
    %2941 = vmatpush1.bf16.msra.mxu0 0
    %2942 = vmatprep.subr.bf16.mxu0 0
    %2943 = vmatpush1.bf16.msra.mxu0 0
    %2944 = vmatprep.subr.bf16.mxu0 0
    %2945 = vmatpush1.bf16.msra.mxu0 %v2867
    %2946 = vmatprep.subr.bf16.mxu0 0
    %2947 = vmatpush1.bf16.msra.mxu0 %v2866
    %2948 = vmatprep.subr.bf16.mxu0 0
    %2949 = vmatpush1.bf16.msra.mxu0 %v2865
    %2950 = vmatprep.subr.bf16.mxu0 0
    %2951 = vmatpush1.bf16.msra.mxu0 %v2864
    %2952 = vmatprep.subr.bf16.mxu0 0
    %2953 = vmatpush1.bf16.msra.mxu0 %v2863
    %2954 = vmatprep.subr.bf16.mxu0 0
    %2955 = vmatpush1.bf16.msra.mxu0 %v2862
    %2956 = vmatprep.subr.bf16.mxu0 0
    %2957 = vmatpush2.bf16.msra.mxu0 0
    %2958 = vmatprep.subr.bf16.mxu0 0
    %2959 = vmatpush2.bf16.msra.mxu0 0
    %2960 = vmatprep.subr.bf16.mxu0 0
    %2961 = vmatpush2.bf16.msra.mxu0 0
    %2962 = vmatprep.subr.bf16.mxu0 0
    %2963 = vmatpush2.bf16.msra.mxu0 0
    %2964 = vmatprep.subr.bf16.mxu0 0
    %2965 = vmatpush2.bf16.msra.mxu0 0
    %2966 = vmatprep.subr.bf16.mxu0 0
    %2967 = vmatpush2.bf16.msra.mxu0 0
    %2968 = vmatprep.subr.bf16.mxu0 0
    %2969 = vmatpush2.bf16.msra.mxu0 0
    %2970 = vmatprep.subr.bf16.mxu0 0
    %2971 = vmatpush2.bf16.msra.mxu0 0
    %2972 = vmatprep.mubr.bf16.mxu0 0
    %2973 = vmatmul.mubr.bf16.gmra.mxu0 %v2875
    %v2974 = vpop.f32.mrf.mxu0
    %v2975 = vadd.f32 0.0, %v2974
    %v2976 = vpop.f32.mrf.mxu0
    %v2977 = vpop.f32.mrf.mxu0
    %v2978 = vadd.f32 0.0, %v2977
    %v2979 = vpop.f32.mrf.mxu0
    %2980 = vmatprep.mubr.bf16.mxu0 0
    %2981 = vmatmul.mubr.bf16.gmra.mxu0 %v2878
    %v2982 = vpop.f32.mrf.mxu0
    %v2983 = vadd.f32 0.0, %v2982
    %v2984 = vpop.f32.mrf.mxu0
    %v2985 = vpop.f32.mrf.mxu0
    %v2986 = vadd.f32 0.0, %v2985
    %v2987 = vpop.f32.mrf.mxu0
    %2988 = vmatprep.mubr.bf16.mxu0 0
    %2989 = vmatmul.mubr.bf16.gmra.mxu0 %v2881
    %v2990 = vpop.f32.mrf.mxu0
    %v2991 = vadd.f32 0.0, %v2990
    %v2992 = vpop.f32.mrf.mxu0
    %v2993 = vpop.f32.mrf.mxu0
    %v2994 = vadd.f32 0.0, %v2993
    %v2995 = vpop.f32.mrf.mxu0
    %2996 = vmatprep.mubr.bf16.mxu0 0
    %2997 = vmatmul.mubr.bf16.gmra.mxu0 %v2884
    %v2998 = vpop.f32.mrf.mxu0
    %v2999 = vadd.f32 0.0, %v2998
    %v3000 = vpop.f32.mrf.mxu0
    %v3001 = vpop.f32.mrf.mxu0
    %v3002 = vadd.f32 0.0, %v3001
    %v3003 = vpop.f32.mrf.mxu0
    %3004 = vmatprep.mubr.bf16.mxu0 0
    %3005 = vmatmul.mubr.bf16.gmra.mxu0 %v2887
    %v3006 = vpop.f32.mrf.mxu0
    %v3007 = vadd.f32 0.0, %v3006
    %v3008 = vpop.f32.mrf.mxu0
    %v3009 = vpop.f32.mrf.mxu0
    %v3010 = vadd.f32 0.0, %v3009
    %v3011 = vpop.f32.mrf.mxu0
    %3012 = vmatprep.mubr.bf16.mxu0 0
    %3013 = vmatmul.mubr.bf16.gmra.mxu0 %v2890
    %v3014 = vpop.f32.mrf.mxu0
    %v3015 = vadd.f32 0.0, %v3014
    %v3016 = vpop.f32.mrf.mxu0
    %v3017 = vpop.f32.mrf.mxu0
    %v3018 = vadd.f32 0.0, %v3017
    %v3019 = vpop.f32.mrf.mxu0
    %3020 = vmatprep.mubr.bf16.mxu0 0
    %3021 = vmatmul.mubr.bf16.gmra.mxu0 %v2893
    %v3022 = vpop.f32.mrf.mxu0
    %v3023 = vadd.f32 0.0, %v3022
    %v3024 = vpop.f32.mrf.mxu0
    %v3025 = vpop.f32.mrf.mxu0
    %v3026 = vadd.f32 0.0, %v3025
    %v3027 = vpop.f32.mrf.mxu0
    %3028 = vmatprep.mubr.bf16.mxu0 0
    %3029 = vmatmul.mubr.bf16.gmra.mxu0 %v2896
    %v3030 = vpop.f32.mrf.mxu0
    %v3031 = vadd.f32 0.0, %v3030
    %v3032 = vpop.f32.mrf.mxu0
    %v3033 = vpop.f32.mrf.mxu0
    %v3034 = vadd.f32 0.0, %v3033
    %v3035 = vpop.f32.mrf.mxu0
    %3036 = vmatprep.mubr.bf16.mxu0 0
    %3037 = vmatmul.mubr.bf16.gmra.mxu0 %v2899
    %v3038 = vpop.f32.mrf.mxu0
    %v3039 = vadd.f32 0.0, %v3038
    %v3040 = vpop.f32.mrf.mxu0
    %v3041 = vpop.f32.mrf.mxu0
    %v3042 = vadd.f32 0.0, %v3041
    %v3043 = vpop.f32.mrf.mxu0
    %3044 = vmatprep.mubr.bf16.mxu0 0
    %3045 = vmatmul.mubr.bf16.gmra.mxu0 %v2902
    %v3046 = vpop.f32.mrf.mxu0
    %v3047 = vadd.f32 0.0, %v3046
    %v3048 = vpop.f32.mrf.mxu0
    %v3049 = vpop.f32.mrf.mxu0
    %v3050 = vadd.f32 0.0, %v3049
    %v3051 = vpop.f32.mrf.mxu0
    %3052 = vmatprep.mubr.bf16.mxu0 0
    %3053 = vmatmul.mubr.bf16.gmra.mxu0 %v2905
    %v3054 = vpop.f32.mrf.mxu0
    %v3055 = vadd.f32 0.0, %v3054
    %v3056 = vpop.f32.mrf.mxu0
    %v3057 = vpop.f32.mrf.mxu0
    %v3058 = vadd.f32 0.0, %v3057
    %v3059 = vpop.f32.mrf.mxu0
    %3060 = vmatprep.mubr.bf16.mxu0 0
    %3061 = vmatmul.mubr.bf16.gmra.mxu0 %v2908
    %v3062 = vpop.f32.mrf.mxu0
    %v3063 = vadd.f32 0.0, %v3062
    %v3064 = vpop.f32.mrf.mxu0
    %v3065 = vpop.f32.mrf.mxu0
    %v3066 = vadd.f32 0.0, %v3065
    %v3067 = vpop.f32.mrf.mxu0
    %3068 = vmatprep.mubr.bf16.mxu0 0
    %3069 = vmatmul.mubr.bf16.gmra.mxu0 %v2911
    %v3070 = vpop.f32.mrf.mxu0
    %v3071 = vadd.f32 0.0, %v3070
    %v3072 = vpop.f32.mrf.mxu0
    %v3073 = vpop.f32.mrf.mxu0
    %v3074 = vadd.f32 0.0, %v3073
    %v3075 = vpop.f32.mrf.mxu0
    %3076 = vmatprep.mubr.bf16.mxu0 0
    %3077 = vmatmul.mubr.bf16.gmra.mxu0 %v2914
    %v3078 = vpop.f32.mrf.mxu0
    %v3079 = vadd.f32 0.0, %v3078
    %v3080 = vpop.f32.mrf.mxu0
    %v3081 = vpop.f32.mrf.mxu0
    %v3082 = vadd.f32 0.0, %v3081
    %v3083 = vpop.f32.mrf.mxu0
    %3084 = vmatprep.mubr.bf16.mxu0 0
    %3085 = vmatmul.mubr.bf16.gmra.mxu0 %v2917
    %v3086 = vpop.f32.mrf.mxu0
    %v3087 = vadd.f32 0.0, %v3086
    %v3088 = vpop.f32.mrf.mxu0
    %v3089 = vpop.f32.mrf.mxu0
    %v3090 = vadd.f32 0.0, %v3089
    %v3091 = vpop.f32.mrf.mxu0
    %3092 = vmatprep.mubr.bf16.mxu0 0
    %3093 = vmatmul.mubr.bf16.gmra.mxu0 %v2920
    %v3094 = vpop.f32.mrf.mxu0
    %v3095 = vadd.f32 0.0, %v3094
    %v3096 = vpop.f32.mrf.mxu0
    %v3097 = vpop.f32.mrf.mxu0
    %v3098 = vadd.f32 0.0, %v3097
    %v3099 = vpop.f32.mrf.mxu0
    %3100 = vmatprep.mubr.bf16.mxu0 0
    %3101 = vmatmul.mubr.bf16.gmra.mxu0 %v2923
    %v3102 = vpop.f32.mrf.mxu0
    %v3103 = vadd.f32 0.0, %v3102
    %v3104 = vpop.f32.mrf.mxu0
    %v3105 = vpop.f32.mrf.mxu0
    %v3106 = vadd.f32 0.0, %v3105
    %v3107 = vpop.f32.mrf.mxu0
    %3108 = vmatprep.mubr.bf16.mxu0 0
    %3109 = vmatmul.mubr.bf16.gmra.mxu0 %v2926
    %v3110 = vpop.f32.mrf.mxu0
    %v3111 = vadd.f32 0.0, %v3110
    %v3112 = vpop.f32.mrf.mxu0
    %v3113 = vpop.f32.mrf.mxu0
    %v3114 = vadd.f32 0.0, %v3113
    %v3115 = vpop.f32.mrf.mxu0
    %3116 = vmatprep.mubr.bf16.mxu0 0
    %3117 = vmatmul.mubr.bf16.gmra.mxu0 %v2929
    %v3118 = vpop.f32.mrf.mxu0
    %v3119 = vadd.f32 0.0, %v3118
    %v3120 = vpop.f32.mrf.mxu0
    %v3121 = vpop.f32.mrf.mxu0
    %v3122 = vadd.f32 0.0, %v3121
    %v3123 = vpop.f32.mrf.mxu0
    %3124 = vmatprep.mubr.bf16.mxu0 0
    %3125 = vmatmul.mubr.bf16.gmra.mxu0 %v2932
    %v3126 = vpop.f32.mrf.mxu0
    %v3127 = vadd.f32 0.0, %v3126
    %v3128 = vpop.f32.mrf.mxu0
    %v3129 = vpop.f32.mrf.mxu0
    %v3130 = vadd.f32 0.0, %v3129
    %v3131 = vpop.f32.mrf.mxu0
    %3132 = vmatprep.mubr.bf16.mxu0 0
    %3133 = vmatmul.mubr.bf16.gmra.mxu0 %v2935
    %v3134 = vpop.f32.mrf.mxu0
    %v3135 = vadd.f32 0.0, %v3134
    %v3136 = vpop.f32.mrf.mxu0
    %v3137 = vpop.f32.mrf.mxu0
    %v3138 = vadd.f32 0.0, %v3137
    %v3139 = vpop.f32.mrf.mxu0
    %3140 = vmatprep.mubr.bf16.mxu0 0
    %3141 = vmatmul.mubr.bf16.gmra.mxu0 %v2938
    %v3142 = vpop.f32.mrf.mxu0
    %v3143 = vadd.f32 0.0, %v3142
    %v3144 = vpop.f32.mrf.mxu0
    %v3145 = vpop.f32.mrf.mxu0
    %v3146 = vpop.f32.mrf.mxu0
    %3147 = vdwg.mxu0
    %v3148 = vadd.f32 %v2731, %v2975
    %v3149 = vadd.f32 %v2732, %v2978
    %v3150 = vadd.f32 %v2733, %v2983
    %v3151 = vadd.f32 %v2734, %v2986
    %v3152 = vadd.f32 %v2735, %v2991
    %v3153 = vadd.f32 %v2736, %v2994
    %v3154 = vadd.f32 %v2737, %v2999
    %v3155 = vadd.f32 %v2738, %v3002
    %v3156 = vadd.f32 %v2739, %v3007
    %v3157 = vadd.f32 %v2740, %v3010
    %v3158 = vadd.f32 %v2741, %v3015
    %v3159 = vadd.f32 %v2742, %v3018
    %v3160 = vadd.f32 %v2743, %v3023
    %v3161 = vadd.f32 %v2744, %v3026
    %v3162 = vadd.f32 %v2745, %v3031
    %v3163 = vadd.f32 %v2746, %v3034
    %v3164 = vadd.f32 %v2747, %v3039
    %v3165 = vadd.f32 %v2748, %v3042
    %v3166 = vadd.f32 %v2749, %v3047
    %v3167 = vadd.f32 %v2750, %v3050
    %v3168 = vadd.f32 %v2751, %v3055
    %v3169 = vadd.f32 %v2752, %v3058
    %v3170 = vadd.f32 %v2753, %v3063
    %v3171 = vadd.f32 %v2754, %v3066
    %v3172 = vadd.f32 %v2755, %v3071
    %v3173 = vadd.f32 %v2756, %v3074
    %v3174 = vadd.f32 %v2757, %v3079
    %v3175 = vadd.f32 %v2758, %v3082
    %v3176 = vadd.f32 %v2759, %v3087
    %v3177 = vadd.f32 %v2760, %v3090
    %v3178 = vadd.f32 %v2761, %v3095
    %v3179 = vadd.f32 %v2762, %v3098
    %v3180 = vadd.f32 %v2763, %v3103
    %v3181 = vadd.f32 %v2764, %v3106
    %v3182 = vadd.f32 %v2765, %v3111
    %v3183 = vadd.f32 %v2766, %v3114
    %v3184 = vadd.f32 %v2767, %v3119
    %v3185 = vadd.f32 %v2768, %v3122
    %v3186 = vadd.f32 %v2769, %v3127
    %v3187 = vadd.f32 %v2770, %v3130
    %v3188 = vadd.f32 %v2771, %v3135
    %v3189 = vadd.f32 %v2772, %v3138
    %v3190 = vadd.f32 %v2773, %v3143
    %v3191 = vld [vmem:[%s0 + $0x14] sm:$0xe]
    %v3192 = vld [vmem:[%s0 + $0x18] sm:$0xf]
    %v3193 = vld [vmem:[%s0 + $0x1c] sm:$0xf]
    %v3194 = vld [vmem:[%s0 + $0x20] sm:$0xf]
    %v3195 = vld [vmem:[%s0 + $0x24] sm:$0xf]
    %v3196 = vld [vmem:[%s0 + $0x28] sm:$0xf]
    %v3197 = vld [vmem:[%s0 + $0x2c] sm:$0xf]
    %v3198 = vld [vmem:[%s0 + $0x30] sm:$0xf]
    %v3199 = vld [vmem:[%s0 + $0x34] sm:$0xf]
    %v3200 = vld [vmem:[%s0 + $0x38] sm:$0xf]
    %v3201 = vld [vmem:[%s0 + $0x3c] sm:$0xf]
    %v3202 = vld [vmem:[%s0 + $0x40] sm:$0xf]
    %v3203 = vld [vmem:[%s0 + $0x44] sm:$0xf]
    %v3204 = vld [vmem:[%s0 + $0x48] sm:$0xf]
    %v3205 = vld [vmem:[%s0 + $0x4c] sm:$0xf]
    %v3206 = vld [vmem:[%s0 + $0x50] sm:$0xf]
    %v3207 = vld [vmem:[%s0 + $0x54] sm:$0xf]
    %v3208 = vld [vmem:[%s0 + $0x58] sm:$0xf]
    %v3209 = vld [vmem:[%s0 + $0x5c] sm:$0xf]
    %v3210 = vld [vmem:[%s0 + $0x60] sm:$0xf]
    %v3211 = vld [vmem:[%s0 + $0x64] sm:$0xf]
    %v3212 = vld [vmem:[%s0 + $0x68] sm:$0xf]
    %v3213 = vld [vmem:[%s0 + $0x6c] sm:$0xf]
    %v3214 = vld [vmem:[%s0 + $0x70] sm:$0xf]
    %v3215 = vld [vmem:[%s0 + $0x74] sm:$0xf]
    %v3216 = vld [vmem:[%s0 + $0x78] sm:$0xf]
    %v3217 = vld [vmem:[%s0 + $0x7c] sm:$0xf]
    %v3218 = vld [vmem:[%s0 + $0x80] sm:$0xf]
    %v3219 = vld [vmem:[%s0 + $0x84] sm:$0xf]
    %v3220 = vld [vmem:[%s0 + $0x88] sm:$0xf]
    %v3221 = vld [vmem:[%s0 + $0x8c] sm:$0xf]
    %v3222 = vld [vmem:[%s0 + $0x90] sm:$0xf]
    %v3223 = vld [vmem:[%s0 + $0x94] sm:$0xf]
    %v3224 = vld [vmem:[%s0 + $0x98] sm:$0xf]
    %v3225 = vld [vmem:[%s0 + $0x9c] sm:$0xf]
    %v3226 = vld [vmem:[%s0 + $0xa0] sm:$0xf]
    %v3227 = vld [vmem:[%s0 + $0xa4] sm:$0xf]
    %v3228 = vld [vmem:[%s0 + $0xa8] sm:$0xf]
    %v3229 = vld [vmem:[%s0 + $0xac] sm:$0xf]
    %v3230 = vld [vmem:[%s0 + $0xb0] sm:$0xf]
    %v3231 = vld [vmem:[%s0 + $0xb4] sm:$0xf]
    %v3232 = vld [vmem:[%s0 + $0xb8] sm:$0xf]
    %v3233 = vld [vmem:[%s0 + $0xbc] sm:$0xf]
    %v3234 = vld [vmem:[%s0 + $0xc0] sm:$0x1]
    %s3235 = scalar_lea.vmem %s1, 288
    %v3236 = vld [vmem:[%s3235] sm:$0xf]
    %v3237 = vld [vmem:[%s3235 + $0x4] sm:$0xf]
    %v3238 = vld [vmem:[%s3235 + $0x8] sm:$0xf]
    %v3239 = vld [vmem:[%s3235 + $0xc] sm:$0xf]
    %v3240 = vld [vmem:[%s3235 + $0x10] sm:$0xf]
    %v3241 = vld [vmem:[%s3235 + $0x14] sm:$0xf]
    %v3242 = vld [vmem:[%s3235 + $0x18] sm:$0xf]
    %v3243 = vld [vmem:[%s3235 + $0x1c] sm:$0xf]
    %v3244 = vld [vmem:[%s3235 + $0x20] sm:$0xf]
    %v3245 = vld [vmem:[%s3235 + $0x24] sm:$0xf]
    %v3246 = vld [vmem:[%s3235 + $0x28] sm:$0xf]
    %v3247 = vld [vmem:[%s3235 + $0x2c] sm:$0xf]
    %v3292 = vunpack.c.l.b16 %v3191
    %v3293 = vunpack.c.l.b16 %v3192
    %v3294 = vunpack.c.l.b16 %v3193
    %v3295 = vunpack.c.l.b16 %v3194
    %v3296 = vunpack.c.l.b16 %v3195
    %v3297 = vunpack.c.l.b16 %v3196
    %v3298 = vunpack.c.l.b16 %v3197
    %v3299 = vunpack.c.l.b16 %v3198
    %v3300 = vunpack.c.l.b16 %v3199
    %v3301 = vunpack.c.l.b16 %v3200
    %v3302 = vunpack.c.l.b16 %v3201
    %v3303 = vunpack.c.l.b16 %v3202
    %v3304 = vunpack.c.l.b16 %v3203
    %v3305 = vunpack.c.l.b16 %v3204
    %v3306 = vunpack.c.l.b16 %v3205
    %v3307 = vunpack.c.l.b16 %v3206
    %v3308 = vunpack.c.l.b16 %v3207
    %v3309 = vunpack.c.l.b16 %v3208
    %v3310 = vunpack.c.l.b16 %v3209
    %v3311 = vunpack.c.l.b16 %v3210
    %v3312 = vunpack.c.l.b16 %v3211
    %v3313 = vunpack.c.l.b16 %v3212
    %v3314 = vunpack.c.l.b16 %v3213
    %v3315 = vunpack.c.l.b16 %v3214
    %v3316 = vunpack.c.l.b16 %v3215
    %v3317 = vunpack.c.l.b16 %v3216
    %v3318 = vunpack.c.l.b16 %v3217
    %v3319 = vunpack.c.l.b16 %v3218
    %v3320 = vunpack.c.l.b16 %v3219
    %v3321 = vunpack.c.l.b16 %v3220
    %v3322 = vunpack.c.l.b16 %v3221
    %v3323 = vunpack.c.l.b16 %v3222
    %v3324 = vunpack.c.l.b16 %v3223
    %v3325 = vunpack.c.l.b16 %v3224
    %v3326 = vunpack.c.l.b16 %v3225
    %v3327 = vunpack.c.l.b16 %v3226
    %v3328 = vunpack.c.l.b16 %v3227
    %v3329 = vunpack.c.l.b16 %v3228
    %v3330 = vunpack.c.l.b16 %v3229
    %v3331 = vunpack.c.l.b16 %v3230
    %v3332 = vunpack.c.l.b16 %v3231
    %v3333 = vunpack.c.l.b16 %v3232
    %v3334 = vunpack.c.l.b16 %v3233
    %v3335 = vunpack.c.l.b16 %v3234
    %v3336 = vpack.c.b16 %v3293, %v3292
    %v3337 = vpack.c.b16 %v3295, %v3294
    %v3338 = vpack.c.b16 %v3297, %v3296
    %v3339 = vpack.c.b16 %v3299, %v3298
    %v3340 = vpack.c.b16 %v3301, %v3300
    %v3341 = vpack.c.b16 %v3303, %v3302
    %v3342 = vpack.c.b16 %v3305, %v3304
    %v3343 = vpack.c.b16 %v3307, %v3306
    %v3344 = vpack.c.b16 %v3309, %v3308
    %v3345 = vpack.c.b16 %v3311, %v3310
    %v3346 = vpack.c.b16 %v3313, %v3312
    %v3347 = vpack.c.b16 %v3315, %v3314
    %v3348 = vpack.c.b16 %v3317, %v3316
    %v3349 = vpack.c.b16 %v3319, %v3318
    %v3350 = vpack.c.b16 %v3321, %v3320
    %v3351 = vpack.c.b16 %v3323, %v3322
    %v3352 = vpack.c.b16 %v3325, %v3324
    %v3353 = vpack.c.b16 %v3327, %v3326
    %v3354 = vpack.c.b16 %v3329, %v3328
    %v3355 = vpack.c.b16 %v3331, %v3330
    %v3356 = vpack.c.b16 %v3333, %v3332
    %v3357 = vpack.c.b16 %v3335, %v3334
    %v3358 = vrot.slane %v3336, 1
    %v3359 = vrot.slane %v3337, 1
    %v3360 = vsel %vm586, %v3358, %v3359
    %v3361 = vrot.slane %v3338, 1
    %v3362 = vsel %vm586, %v3359, %v3361
    %v3363 = vrot.slane %v3339, 1
    %v3364 = vsel %vm586, %v3361, %v3363
    %v3365 = vrot.slane %v3340, 1
    %v3366 = vsel %vm586, %v3363, %v3365
    %v3367 = vrot.slane %v3341, 1
    %v3368 = vsel %vm586, %v3365, %v3367
    %v3369 = vrot.slane %v3342, 1
    %v3370 = vsel %vm586, %v3367, %v3369
    %v3371 = vrot.slane %v3343, 1
    %v3372 = vsel %vm586, %v3369, %v3371
    %v3373 = vrot.slane %v3344, 1
    %v3374 = vsel %vm586, %v3371, %v3373
    %v3375 = vrot.slane %v3345, 1
    %v3376 = vsel %vm586, %v3373, %v3375
    %v3377 = vrot.slane %v3346, 1
    %v3378 = vsel %vm586, %v3375, %v3377
    %v3379 = vrot.slane %v3347, 1
    %v3380 = vsel %vm586, %v3377, %v3379
    %v3381 = vrot.slane %v3348, 1
    %v3382 = vsel %vm586, %v3379, %v3381
    %v3383 = vrot.slane %v3349, 1
    %v3384 = vsel %vm586, %v3381, %v3383
    %v3385 = vrot.slane %v3350, 1
    %v3386 = vsel %vm586, %v3383, %v3385
    %v3387 = vrot.slane %v3351, 1
    %v3388 = vsel %vm586, %v3385, %v3387
    %v3389 = vrot.slane %v3352, 1
    %v3390 = vsel %vm586, %v3387, %v3389
    %v3391 = vrot.slane %v3353, 1
    %v3392 = vsel %vm586, %v3389, %v3391
    %v3393 = vrot.slane %v3354, 1
    %v3394 = vsel %vm586, %v3391, %v3393
    %v3395 = vrot.slane %v3355, 1
    %v3396 = vsel %vm586, %v3393, %v3395
    %v3397 = vrot.slane %v3356, 1
    %v3398 = vsel %vm586, %v3395, %v3397
    %v3399 = vrot.slane %v3357, 1
    %v3400 = vsel %vm586, %v3397, %v3399
    %v3413 = vunpack.c.l.b16 %v3236
    %v3414 = vunpack.c.l.b16 %v3237
    %v3415 = vunpack.c.l.b16 %v3238
    %v3416 = vunpack.c.l.b16 %v3239
    %v3417 = vunpack.c.l.b16 %v3240
    %v3418 = vunpack.c.l.b16 %v3241
    %v3419 = vunpack.c.l.b16 %v3242
    %v3420 = vunpack.c.l.b16 %v3243
    %v3421 = vunpack.c.l.b16 %v3244
    %v3422 = vunpack.c.l.b16 %v3245
    %v3423 = vunpack.c.l.b16 %v3246
    %v3424 = vunpack.c.l.b16 %v3247
    %v3425 = vpack.c.b16 %v3414, %v3413
    %v3426 = vpack.c.b16 %v3416, %v3415
    %v3427 = vpack.c.b16 %v3418, %v3417
    %v3428 = vpack.c.b16 %v3420, %v3419
    %v3429 = vpack.c.b16 %v3422, %v3421
    %v3430 = vpack.c.b16 %v3424, %v3423
    %v3438 = vsel %vm666, %v3360, 0
    %v3441 = vsel %vm666, %v3362, 0
    %v3444 = vsel %vm666, %v3364, 0
    %v3447 = vsel %vm666, %v3366, 0
    %v3450 = vsel %vm666, %v3368, 0
    %v3453 = vsel %vm666, %v3370, 0
    %v3456 = vsel %vm666, %v3372, 0
    %v3459 = vsel %vm666, %v3374, 0
    %v3462 = vsel %vm666, %v3376, 0
    %v3465 = vsel %vm666, %v3378, 0
    %v3468 = vsel %vm666, %v3380, 0
    %v3471 = vsel %vm666, %v3382, 0
    %v3474 = vsel %vm666, %v3384, 0
    %v3477 = vsel %vm666, %v3386, 0
    %v3480 = vsel %vm666, %v3388, 0
    %v3483 = vsel %vm666, %v3390, 0
    %v3486 = vsel %vm666, %v3392, 0
    %v3489 = vsel %vm666, %v3394, 0
    %v3492 = vsel %vm666, %v3396, 0
    %v3495 = vsel %vm666, %v3398, 0
    %v3498 = vsel %vm666, %v3400, 0
    %v3501 = vsel %vm666, %v3399, 0
    %3503 = vmatprep.subr.bf16.mxu0 0
    %3504 = vmatpush1.bf16.msra.mxu0 0
    %3505 = vmatprep.subr.bf16.mxu0 0
    %3506 = vmatpush1.bf16.msra.mxu0 0
    %3507 = vmatprep.subr.bf16.mxu0 0
    %3508 = vmatpush1.bf16.msra.mxu0 %v3430
    %3509 = vmatprep.subr.bf16.mxu0 0
    %3510 = vmatpush1.bf16.msra.mxu0 %v3429
    %3511 = vmatprep.subr.bf16.mxu0 0
    %3512 = vmatpush1.bf16.msra.mxu0 %v3428
    %3513 = vmatprep.subr.bf16.mxu0 0
    %3514 = vmatpush1.bf16.msra.mxu0 %v3427
    %3515 = vmatprep.subr.bf16.mxu0 0
    %3516 = vmatpush1.bf16.msra.mxu0 %v3426
    %3517 = vmatprep.subr.bf16.mxu0 0
    %3518 = vmatpush1.bf16.msra.mxu0 %v3425
    %3519 = vmatprep.subr.bf16.mxu0 0
    %3520 = vmatpush2.bf16.msra.mxu0 0
    %3521 = vmatprep.subr.bf16.mxu0 0
    %3522 = vmatpush2.bf16.msra.mxu0 0
    %3523 = vmatprep.subr.bf16.mxu0 0
    %3524 = vmatpush2.bf16.msra.mxu0 0
    %3525 = vmatprep.subr.bf16.mxu0 0
    %3526 = vmatpush2.bf16.msra.mxu0 0
    %3527 = vmatprep.subr.bf16.mxu0 0
    %3528 = vmatpush2.bf16.msra.mxu0 0
    %3529 = vmatprep.subr.bf16.mxu0 0
    %3530 = vmatpush2.bf16.msra.mxu0 0
    %3531 = vmatprep.subr.bf16.mxu0 0
    %3532 = vmatpush2.bf16.msra.mxu0 0
    %3533 = vmatprep.subr.bf16.mxu0 0
    %3534 = vmatpush2.bf16.msra.mxu0 0
    %3535 = vmatprep.mubr.bf16.mxu0 0
    %3536 = vmatmul.mubr.bf16.gmra.mxu0 %v3438
    %v3537 = vpop.f32.mrf.mxu0
    %v3538 = vadd.f32 0.0, %v3537
    %v3539 = vpop.f32.mrf.mxu0
    %v3540 = vpop.f32.mrf.mxu0
    %v3541 = vadd.f32 0.0, %v3540
    %v3542 = vpop.f32.mrf.mxu0
    %3543 = vmatprep.mubr.bf16.mxu0 0
    %3544 = vmatmul.mubr.bf16.gmra.mxu0 %v3441
    %v3545 = vpop.f32.mrf.mxu0
    %v3546 = vadd.f32 0.0, %v3545
    %v3547 = vpop.f32.mrf.mxu0
    %v3548 = vpop.f32.mrf.mxu0
    %v3549 = vadd.f32 0.0, %v3548
    %v3550 = vpop.f32.mrf.mxu0
    %3551 = vmatprep.mubr.bf16.mxu0 0
    %3552 = vmatmul.mubr.bf16.gmra.mxu0 %v3444
    %v3553 = vpop.f32.mrf.mxu0
    %v3554 = vadd.f32 0.0, %v3553
    %v3555 = vpop.f32.mrf.mxu0
    %v3556 = vpop.f32.mrf.mxu0
    %v3557 = vadd.f32 0.0, %v3556
    %v3558 = vpop.f32.mrf.mxu0
    %3559 = vmatprep.mubr.bf16.mxu0 0
    %3560 = vmatmul.mubr.bf16.gmra.mxu0 %v3447
    %v3561 = vpop.f32.mrf.mxu0
    %v3562 = vadd.f32 0.0, %v3561
    %v3563 = vpop.f32.mrf.mxu0
    %v3564 = vpop.f32.mrf.mxu0
    %v3565 = vadd.f32 0.0, %v3564
    %v3566 = vpop.f32.mrf.mxu0
    %3567 = vmatprep.mubr.bf16.mxu0 0
    %3568 = vmatmul.mubr.bf16.gmra.mxu0 %v3450
    %v3569 = vpop.f32.mrf.mxu0
    %v3570 = vadd.f32 0.0, %v3569
    %v3571 = vpop.f32.mrf.mxu0
    %v3572 = vpop.f32.mrf.mxu0
    %v3573 = vadd.f32 0.0, %v3572
    %v3574 = vpop.f32.mrf.mxu0
    %3575 = vmatprep.mubr.bf16.mxu0 0
    %3576 = vmatmul.mubr.bf16.gmra.mxu0 %v3453
    %v3577 = vpop.f32.mrf.mxu0
    %v3578 = vadd.f32 0.0, %v3577
    %v3579 = vpop.f32.mrf.mxu0
    %v3580 = vpop.f32.mrf.mxu0
    %v3581 = vadd.f32 0.0, %v3580
    %v3582 = vpop.f32.mrf.mxu0
    %3583 = vmatprep.mubr.bf16.mxu0 0
    %3584 = vmatmul.mubr.bf16.gmra.mxu0 %v3456
    %v3585 = vpop.f32.mrf.mxu0
    %v3586 = vadd.f32 0.0, %v3585
    %v3587 = vpop.f32.mrf.mxu0
    %v3588 = vpop.f32.mrf.mxu0
    %v3589 = vadd.f32 0.0, %v3588
    %v3590 = vpop.f32.mrf.mxu0
    %3591 = vmatprep.mubr.bf16.mxu0 0
    %3592 = vmatmul.mubr.bf16.gmra.mxu0 %v3459
    %v3593 = vpop.f32.mrf.mxu0
    %v3594 = vadd.f32 0.0, %v3593
    %v3595 = vpop.f32.mrf.mxu0
    %v3596 = vpop.f32.mrf.mxu0
    %v3597 = vadd.f32 0.0, %v3596
    %v3598 = vpop.f32.mrf.mxu0
    %3599 = vmatprep.mubr.bf16.mxu0 0
    %3600 = vmatmul.mubr.bf16.gmra.mxu0 %v3462
    %v3601 = vpop.f32.mrf.mxu0
    %v3602 = vadd.f32 0.0, %v3601
    %v3603 = vpop.f32.mrf.mxu0
    %v3604 = vpop.f32.mrf.mxu0
    %v3605 = vadd.f32 0.0, %v3604
    %v3606 = vpop.f32.mrf.mxu0
    %3607 = vmatprep.mubr.bf16.mxu0 0
    %3608 = vmatmul.mubr.bf16.gmra.mxu0 %v3465
    %v3609 = vpop.f32.mrf.mxu0
    %v3610 = vadd.f32 0.0, %v3609
    %v3611 = vpop.f32.mrf.mxu0
    %v3612 = vpop.f32.mrf.mxu0
    %v3613 = vadd.f32 0.0, %v3612
    %v3614 = vpop.f32.mrf.mxu0
    %3615 = vmatprep.mubr.bf16.mxu0 0
    %3616 = vmatmul.mubr.bf16.gmra.mxu0 %v3468
    %v3617 = vpop.f32.mrf.mxu0
    %v3618 = vadd.f32 0.0, %v3617
    %v3619 = vpop.f32.mrf.mxu0
    %v3620 = vpop.f32.mrf.mxu0
    %v3621 = vadd.f32 0.0, %v3620
    %v3622 = vpop.f32.mrf.mxu0
    %3623 = vmatprep.mubr.bf16.mxu0 0
    %3624 = vmatmul.mubr.bf16.gmra.mxu0 %v3471
    %v3625 = vpop.f32.mrf.mxu0
    %v3626 = vadd.f32 0.0, %v3625
    %v3627 = vpop.f32.mrf.mxu0
    %v3628 = vpop.f32.mrf.mxu0
    %v3629 = vadd.f32 0.0, %v3628
    %v3630 = vpop.f32.mrf.mxu0
    %3631 = vmatprep.mubr.bf16.mxu0 0
    %3632 = vmatmul.mubr.bf16.gmra.mxu0 %v3474
    %v3633 = vpop.f32.mrf.mxu0
    %v3634 = vadd.f32 0.0, %v3633
    %v3635 = vpop.f32.mrf.mxu0
    %v3636 = vpop.f32.mrf.mxu0
    %v3637 = vadd.f32 0.0, %v3636
    %v3638 = vpop.f32.mrf.mxu0
    %3639 = vmatprep.mubr.bf16.mxu0 0
    %3640 = vmatmul.mubr.bf16.gmra.mxu0 %v3477
    %v3641 = vpop.f32.mrf.mxu0
    %v3642 = vadd.f32 0.0, %v3641
    %v3643 = vpop.f32.mrf.mxu0
    %v3644 = vpop.f32.mrf.mxu0
    %v3645 = vadd.f32 0.0, %v3644
    %v3646 = vpop.f32.mrf.mxu0
    %3647 = vmatprep.mubr.bf16.mxu0 0
    %3648 = vmatmul.mubr.bf16.gmra.mxu0 %v3480
    %v3649 = vpop.f32.mrf.mxu0
    %v3650 = vadd.f32 0.0, %v3649
    %v3651 = vpop.f32.mrf.mxu0
    %v3652 = vpop.f32.mrf.mxu0
    %v3653 = vadd.f32 0.0, %v3652
    %v3654 = vpop.f32.mrf.mxu0
    %3655 = vmatprep.mubr.bf16.mxu0 0
    %3656 = vmatmul.mubr.bf16.gmra.mxu0 %v3483
    %v3657 = vpop.f32.mrf.mxu0
    %v3658 = vadd.f32 0.0, %v3657
    %v3659 = vpop.f32.mrf.mxu0
    %v3660 = vpop.f32.mrf.mxu0
    %v3661 = vadd.f32 0.0, %v3660
    %v3662 = vpop.f32.mrf.mxu0
    %3663 = vmatprep.mubr.bf16.mxu0 0
    %3664 = vmatmul.mubr.bf16.gmra.mxu0 %v3486
    %v3665 = vpop.f32.mrf.mxu0
    %v3666 = vadd.f32 0.0, %v3665
    %v3667 = vpop.f32.mrf.mxu0
    %v3668 = vpop.f32.mrf.mxu0
    %v3669 = vadd.f32 0.0, %v3668
    %v3670 = vpop.f32.mrf.mxu0
    %3671 = vmatprep.mubr.bf16.mxu0 0
    %3672 = vmatmul.mubr.bf16.gmra.mxu0 %v3489
    %v3673 = vpop.f32.mrf.mxu0
    %v3674 = vadd.f32 0.0, %v3673
    %v3675 = vpop.f32.mrf.mxu0
    %v3676 = vpop.f32.mrf.mxu0
    %v3677 = vadd.f32 0.0, %v3676
    %v3678 = vpop.f32.mrf.mxu0
    %3679 = vmatprep.mubr.bf16.mxu0 0
    %3680 = vmatmul.mubr.bf16.gmra.mxu0 %v3492
    %v3681 = vpop.f32.mrf.mxu0
    %v3682 = vadd.f32 0.0, %v3681
    %v3683 = vpop.f32.mrf.mxu0
    %v3684 = vpop.f32.mrf.mxu0
    %v3685 = vadd.f32 0.0, %v3684
    %v3686 = vpop.f32.mrf.mxu0
    %3687 = vmatprep.mubr.bf16.mxu0 0
    %3688 = vmatmul.mubr.bf16.gmra.mxu0 %v3495
    %v3689 = vpop.f32.mrf.mxu0
    %v3690 = vadd.f32 0.0, %v3689
    %v3691 = vpop.f32.mrf.mxu0
    %v3692 = vpop.f32.mrf.mxu0
    %v3693 = vadd.f32 0.0, %v3692
    %v3694 = vpop.f32.mrf.mxu0
    %3695 = vmatprep.mubr.bf16.mxu0 0
    %3696 = vmatmul.mubr.bf16.gmra.mxu0 %v3498
    %v3697 = vpop.f32.mrf.mxu0
    %v3698 = vadd.f32 0.0, %v3697
    %v3699 = vpop.f32.mrf.mxu0
    %v3700 = vpop.f32.mrf.mxu0
    %v3701 = vadd.f32 0.0, %v3700
    %v3702 = vpop.f32.mrf.mxu0
    %3703 = vmatprep.mubr.bf16.mxu0 0
    %3704 = vmatmul.mubr.bf16.gmra.mxu0 %v3501
    %v3705 = vpop.f32.mrf.mxu0
    %v3706 = vadd.f32 0.0, %v3705
    %v3707 = vpop.f32.mrf.mxu0
    %v3708 = vpop.f32.mrf.mxu0
    %v3709 = vpop.f32.mrf.mxu0
    %3710 = vdwg.mxu0
    %v3711 = vadd.f32 %v3148, %v3538
    %v3712 = vadd.f32 %v3149, %v3541
    %v3713 = vadd.f32 %v3150, %v3546
    %v3714 = vadd.f32 %v3151, %v3549
    %v3715 = vadd.f32 %v3152, %v3554
    %v3716 = vadd.f32 %v3153, %v3557
    %v3717 = vadd.f32 %v3154, %v3562
    %v3718 = vadd.f32 %v3155, %v3565
    %v3719 = vadd.f32 %v3156, %v3570
    %v3720 = vadd.f32 %v3157, %v3573
    %v3721 = vadd.f32 %v3158, %v3578
    %v3722 = vadd.f32 %v3159, %v3581
    %v3723 = vadd.f32 %v3160, %v3586
    %v3724 = vadd.f32 %v3161, %v3589
    %v3725 = vadd.f32 %v3162, %v3594
    %v3726 = vadd.f32 %v3163, %v3597
    %v3727 = vadd.f32 %v3164, %v3602
    %v3728 = vadd.f32 %v3165, %v3605
    %v3729 = vadd.f32 %v3166, %v3610
    %v3730 = vadd.f32 %v3167, %v3613
    %v3731 = vadd.f32 %v3168, %v3618
    %v3732 = vadd.f32 %v3169, %v3621
    %v3733 = vadd.f32 %v3170, %v3626
    %v3734 = vadd.f32 %v3171, %v3629
    %v3735 = vadd.f32 %v3172, %v3634
    %v3736 = vadd.f32 %v3173, %v3637
    %v3737 = vadd.f32 %v3174, %v3642
    %v3738 = vadd.f32 %v3175, %v3645
    %v3739 = vadd.f32 %v3176, %v3650
    %v3740 = vadd.f32 %v3177, %v3653
    %v3741 = vadd.f32 %v3178, %v3658
    %v3742 = vadd.f32 %v3179, %v3661
    %v3743 = vadd.f32 %v3180, %v3666
    %v3744 = vadd.f32 %v3181, %v3669
    %v3745 = vadd.f32 %v3182, %v3674
    %v3746 = vadd.f32 %v3183, %v3677
    %v3747 = vadd.f32 %v3184, %v3682
    %v3748 = vadd.f32 %v3185, %v3685
    %v3749 = vadd.f32 %v3186, %v3690
    %v3750 = vadd.f32 %v3187, %v3693
    %v3751 = vadd.f32 %v3188, %v3698
    %v3752 = vadd.f32 %v3189, %v3701
    %v3753 = vadd.f32 %v3190, %v3706
    %v3754 = vld [vmem:[%s0 + $0x14] sm:$0xc]
    %v3755 = vld [vmem:[%s0 + $0xc0] sm:$0x3]
    %s3756 = scalar_lea.vmem %s1, 336
    %v3757 = vld [vmem:[%s3756] sm:$0xf]
    %v3758 = vld [vmem:[%s3756 + $0x4] sm:$0xf]
    %v3759 = vld [vmem:[%s3756 + $0x8] sm:$0xf]
    %v3760 = vld [vmem:[%s3756 + $0xc] sm:$0xf]
    %v3761 = vld [vmem:[%s3756 + $0x10] sm:$0xf]
    %v3762 = vld [vmem:[%s3756 + $0x14] sm:$0xf]
    %v3763 = vld [vmem:[%s3756 + $0x18] sm:$0xf]
    %v3764 = vld [vmem:[%s3756 + $0x1c] sm:$0xf]
    %v3765 = vld [vmem:[%s3756 + $0x20] sm:$0xf]
    %v3766 = vld [vmem:[%s3756 + $0x24] sm:$0xf]
    %v3767 = vld [vmem:[%s3756 + $0x28] sm:$0xf]
    %v3768 = vld [vmem:[%s3756 + $0x2c] sm:$0xf]
    %v3771 = vunpack.c.l.b16 %v3754
    %v3772 = vunpack.c.l.b16 %v3755
    %v3773 = vpack.c.b16 %v3293, %v3771
    %v3774 = vpack.c.b16 %v3772, %v3334
    %v3775 = vrot.slane %v3773, 2
    %v3776 = vrot.slane %v3337, 2
    %v3777 = vsel %vm2377, %v3775, %v3776
    %v3778 = vrot.slane %v3338, 2
    %v3779 = vsel %vm2377, %v3776, %v3778
    %v3780 = vrot.slane %v3339, 2
    %v3781 = vsel %vm2377, %v3778, %v3780
    %v3782 = vrot.slane %v3340, 2
    %v3783 = vsel %vm2377, %v3780, %v3782
    %v3784 = vrot.slane %v3341, 2
    %v3785 = vsel %vm2377, %v3782, %v3784
    %v3786 = vrot.slane %v3342, 2
    %v3787 = vsel %vm2377, %v3784, %v3786
    %v3788 = vrot.slane %v3343, 2
    %v3789 = vsel %vm2377, %v3786, %v3788
    %v3790 = vrot.slane %v3344, 2
    %v3791 = vsel %vm2377, %v3788, %v3790
    %v3792 = vrot.slane %v3345, 2
    %v3793 = vsel %vm2377, %v3790, %v3792
    %v3794 = vrot.slane %v3346, 2
    %v3795 = vsel %vm2377, %v3792, %v3794
    %v3796 = vrot.slane %v3347, 2
    %v3797 = vsel %vm2377, %v3794, %v3796
    %v3798 = vrot.slane %v3348, 2
    %v3799 = vsel %vm2377, %v3796, %v3798
    %v3800 = vrot.slane %v3349, 2
    %v3801 = vsel %vm2377, %v3798, %v3800
    %v3802 = vrot.slane %v3350, 2
    %v3803 = vsel %vm2377, %v3800, %v3802
    %v3804 = vrot.slane %v3351, 2
    %v3805 = vsel %vm2377, %v3802, %v3804
    %v3806 = vrot.slane %v3352, 2
    %v3807 = vsel %vm2377, %v3804, %v3806
    %v3808 = vrot.slane %v3353, 2
    %v3809 = vsel %vm2377, %v3806, %v3808
    %v3810 = vrot.slane %v3354, 2
    %v3811 = vsel %vm2377, %v3808, %v3810
    %v3812 = vrot.slane %v3355, 2
    %v3813 = vsel %vm2377, %v3810, %v3812
    %v3814 = vrot.slane %v3356, 2
    %v3815 = vsel %vm2377, %v3812, %v3814
    %v3816 = vrot.slane %v3774, 2
    %v3817 = vsel %vm2377, %v3814, %v3816
    %v3830 = vunpack.c.l.b16 %v3757
    %v3831 = vunpack.c.l.b16 %v3758
    %v3832 = vunpack.c.l.b16 %v3759
    %v3833 = vunpack.c.l.b16 %v3760
    %v3834 = vunpack.c.l.b16 %v3761
    %v3835 = vunpack.c.l.b16 %v3762
    %v3836 = vunpack.c.l.b16 %v3763
    %v3837 = vunpack.c.l.b16 %v3764
    %v3838 = vunpack.c.l.b16 %v3765
    %v3839 = vunpack.c.l.b16 %v3766
    %v3840 = vunpack.c.l.b16 %v3767
    %v3841 = vunpack.c.l.b16 %v3768
    %v3842 = vpack.c.b16 %v3831, %v3830
    %v3843 = vpack.c.b16 %v3833, %v3832
    %v3844 = vpack.c.b16 %v3835, %v3834
    %v3845 = vpack.c.b16 %v3837, %v3836
    %v3846 = vpack.c.b16 %v3839, %v3838
    %v3847 = vpack.c.b16 %v3841, %v3840
    %v3855 = vsel %vm666, %v3777, 0
    %v3858 = vsel %vm666, %v3779, 0
    %v3861 = vsel %vm666, %v3781, 0
    %v3864 = vsel %vm666, %v3783, 0
    %v3867 = vsel %vm666, %v3785, 0
    %v3870 = vsel %vm666, %v3787, 0
    %v3873 = vsel %vm666, %v3789, 0
    %v3876 = vsel %vm666, %v3791, 0
    %v3879 = vsel %vm666, %v3793, 0
    %v3882 = vsel %vm666, %v3795, 0
    %v3885 = vsel %vm666, %v3797, 0
    %v3888 = vsel %vm666, %v3799, 0
    %v3891 = vsel %vm666, %v3801, 0
    %v3894 = vsel %vm666, %v3803, 0
    %v3897 = vsel %vm666, %v3805, 0
    %v3900 = vsel %vm666, %v3807, 0
    %v3903 = vsel %vm666, %v3809, 0
    %v3906 = vsel %vm666, %v3811, 0
    %v3909 = vsel %vm666, %v3813, 0
    %v3912 = vsel %vm666, %v3815, 0
    %v3915 = vsel %vm666, %v3817, 0
    %v3918 = vsel %vm666, %v3816, 0
    %3920 = vmatprep.subr.bf16.mxu0 0
    %3921 = vmatpush1.bf16.msra.mxu0 0
    %3922 = vmatprep.subr.bf16.mxu0 0
    %3923 = vmatpush1.bf16.msra.mxu0 0
    %3924 = vmatprep.subr.bf16.mxu0 0
    %3925 = vmatpush1.bf16.msra.mxu0 %v3847
    %3926 = vmatprep.subr.bf16.mxu0 0
    %3927 = vmatpush1.bf16.msra.mxu0 %v3846
    %3928 = vmatprep.subr.bf16.mxu0 0
    %3929 = vmatpush1.bf16.msra.mxu0 %v3845
    %3930 = vmatprep.subr.bf16.mxu0 0
    %3931 = vmatpush1.bf16.msra.mxu0 %v3844
    %3932 = vmatprep.subr.bf16.mxu0 0
    %3933 = vmatpush1.bf16.msra.mxu0 %v3843
    %3934 = vmatprep.subr.bf16.mxu0 0
    %3935 = vmatpush1.bf16.msra.mxu0 %v3842
    %3936 = vmatprep.subr.bf16.mxu0 0
    %3937 = vmatpush2.bf16.msra.mxu0 0
    %3938 = vmatprep.subr.bf16.mxu0 0
    %3939 = vmatpush2.bf16.msra.mxu0 0
    %3940 = vmatprep.subr.bf16.mxu0 0
    %3941 = vmatpush2.bf16.msra.mxu0 0
    %3942 = vmatprep.subr.bf16.mxu0 0
    %3943 = vmatpush2.bf16.msra.mxu0 0
    %3944 = vmatprep.subr.bf16.mxu0 0
    %3945 = vmatpush2.bf16.msra.mxu0 0
    %3946 = vmatprep.subr.bf16.mxu0 0
    %3947 = vmatpush2.bf16.msra.mxu0 0
    %3948 = vmatprep.subr.bf16.mxu0 0
    %3949 = vmatpush2.bf16.msra.mxu0 0
    %3950 = vmatprep.subr.bf16.mxu0 0
    %3951 = vmatpush2.bf16.msra.mxu0 0
    %3952 = vmatprep.mubr.bf16.mxu0 0
    %3953 = vmatmul.mubr.bf16.gmra.mxu0 %v3855
    %v3954 = vpop.f32.mrf.mxu0
    %v3955 = vadd.f32 0.0, %v3954
    %v3956 = vpop.f32.mrf.mxu0
    %v3957 = vpop.f32.mrf.mxu0
    %v3958 = vadd.f32 0.0, %v3957
    %v3959 = vpop.f32.mrf.mxu0
    %3960 = vmatprep.mubr.bf16.mxu0 0
    %3961 = vmatmul.mubr.bf16.gmra.mxu0 %v3858
    %v3962 = vpop.f32.mrf.mxu0
    %v3963 = vadd.f32 0.0, %v3962
    %v3964 = vpop.f32.mrf.mxu0
    %v3965 = vpop.f32.mrf.mxu0
    %v3966 = vadd.f32 0.0, %v3965
    %v3967 = vpop.f32.mrf.mxu0
    %3968 = vmatprep.mubr.bf16.mxu0 0
    %3969 = vmatmul.mubr.bf16.gmra.mxu0 %v3861
    %v3970 = vpop.f32.mrf.mxu0
    %v3971 = vadd.f32 0.0, %v3970
    %v3972 = vpop.f32.mrf.mxu0
    %v3973 = vpop.f32.mrf.mxu0
    %v3974 = vadd.f32 0.0, %v3973
    %v3975 = vpop.f32.mrf.mxu0
    %3976 = vmatprep.mubr.bf16.mxu0 0
    %3977 = vmatmul.mubr.bf16.gmra.mxu0 %v3864
    %v3978 = vpop.f32.mrf.mxu0
    %v3979 = vadd.f32 0.0, %v3978
    %v3980 = vpop.f32.mrf.mxu0
    %v3981 = vpop.f32.mrf.mxu0
    %v3982 = vadd.f32 0.0, %v3981
    %v3983 = vpop.f32.mrf.mxu0
    %3984 = vmatprep.mubr.bf16.mxu0 0
    %3985 = vmatmul.mubr.bf16.gmra.mxu0 %v3867
    %v3986 = vpop.f32.mrf.mxu0
    %v3987 = vadd.f32 0.0, %v3986
    %v3988 = vpop.f32.mrf.mxu0
    %v3989 = vpop.f32.mrf.mxu0
    %v3990 = vadd.f32 0.0, %v3989
    %v3991 = vpop.f32.mrf.mxu0
    %3992 = vmatprep.mubr.bf16.mxu0 0
    %3993 = vmatmul.mubr.bf16.gmra.mxu0 %v3870
    %v3994 = vpop.f32.mrf.mxu0
    %v3995 = vadd.f32 0.0, %v3994
    %v3996 = vpop.f32.mrf.mxu0
    %v3997 = vpop.f32.mrf.mxu0
    %v3998 = vadd.f32 0.0, %v3997
    %v3999 = vpop.f32.mrf.mxu0
    %4000 = vmatprep.mubr.bf16.mxu0 0
    %4001 = vmatmul.mubr.bf16.gmra.mxu0 %v3873
    %v4002 = vpop.f32.mrf.mxu0
    %v4003 = vadd.f32 0.0, %v4002
    %v4004 = vpop.f32.mrf.mxu0
    %v4005 = vpop.f32.mrf.mxu0
    %v4006 = vadd.f32 0.0, %v4005
    %v4007 = vpop.f32.mrf.mxu0
    %4008 = vmatprep.mubr.bf16.mxu0 0
    %4009 = vmatmul.mubr.bf16.gmra.mxu0 %v3876
    %v4010 = vpop.f32.mrf.mxu0
    %v4011 = vadd.f32 0.0, %v4010
    %v4012 = vpop.f32.mrf.mxu0
    %v4013 = vpop.f32.mrf.mxu0
    %v4014 = vadd.f32 0.0, %v4013
    %v4015 = vpop.f32.mrf.mxu0
    %4016 = vmatprep.mubr.bf16.mxu0 0
    %4017 = vmatmul.mubr.bf16.gmra.mxu0 %v3879
    %v4018 = vpop.f32.mrf.mxu0
    %v4019 = vadd.f32 0.0, %v4018
    %v4020 = vpop.f32.mrf.mxu0
    %v4021 = vpop.f32.mrf.mxu0
    %v4022 = vadd.f32 0.0, %v4021
    %v4023 = vpop.f32.mrf.mxu0
    %4024 = vmatprep.mubr.bf16.mxu0 0
    %4025 = vmatmul.mubr.bf16.gmra.mxu0 %v3882
    %v4026 = vpop.f32.mrf.mxu0
    %v4027 = vadd.f32 0.0, %v4026
    %v4028 = vpop.f32.mrf.mxu0
    %v4029 = vpop.f32.mrf.mxu0
    %v4030 = vadd.f32 0.0, %v4029
    %v4031 = vpop.f32.mrf.mxu0
    %4032 = vmatprep.mubr.bf16.mxu0 0
    %4033 = vmatmul.mubr.bf16.gmra.mxu0 %v3885
    %v4034 = vpop.f32.mrf.mxu0
    %v4035 = vadd.f32 0.0, %v4034
    %v4036 = vpop.f32.mrf.mxu0
    %v4037 = vpop.f32.mrf.mxu0
    %v4038 = vadd.f32 0.0, %v4037
    %v4039 = vpop.f32.mrf.mxu0
    %4040 = vmatprep.mubr.bf16.mxu0 0
    %4041 = vmatmul.mubr.bf16.gmra.mxu0 %v3888
    %v4042 = vpop.f32.mrf.mxu0
    %v4043 = vadd.f32 0.0, %v4042
    %v4044 = vpop.f32.mrf.mxu0
    %v4045 = vpop.f32.mrf.mxu0
    %v4046 = vadd.f32 0.0, %v4045
    %v4047 = vpop.f32.mrf.mxu0
    %4048 = vmatprep.mubr.bf16.mxu0 0
    %4049 = vmatmul.mubr.bf16.gmra.mxu0 %v3891
    %v4050 = vpop.f32.mrf.mxu0
    %v4051 = vadd.f32 0.0, %v4050
    %v4052 = vpop.f32.mrf.mxu0
    %v4053 = vpop.f32.mrf.mxu0
    %v4054 = vadd.f32 0.0, %v4053
    %v4055 = vpop.f32.mrf.mxu0
    %4056 = vmatprep.mubr.bf16.mxu0 0
    %4057 = vmatmul.mubr.bf16.gmra.mxu0 %v3894
    %v4058 = vpop.f32.mrf.mxu0
    %v4059 = vadd.f32 0.0, %v4058
    %v4060 = vpop.f32.mrf.mxu0
    %v4061 = vpop.f32.mrf.mxu0
    %v4062 = vadd.f32 0.0, %v4061
    %v4063 = vpop.f32.mrf.mxu0
    %4064 = vmatprep.mubr.bf16.mxu0 0
    %4065 = vmatmul.mubr.bf16.gmra.mxu0 %v3897
    %v4066 = vpop.f32.mrf.mxu0
    %v4067 = vadd.f32 0.0, %v4066
    %v4068 = vpop.f32.mrf.mxu0
    %v4069 = vpop.f32.mrf.mxu0
    %v4070 = vadd.f32 0.0, %v4069
    %v4071 = vpop.f32.mrf.mxu0
    %4072 = vmatprep.mubr.bf16.mxu0 0
    %4073 = vmatmul.mubr.bf16.gmra.mxu0 %v3900
    %v4074 = vpop.f32.mrf.mxu0
    %v4075 = vadd.f32 0.0, %v4074
    %v4076 = vpop.f32.mrf.mxu0
    %v4077 = vpop.f32.mrf.mxu0
    %v4078 = vadd.f32 0.0, %v4077
    %v4079 = vpop.f32.mrf.mxu0
    %4080 = vmatprep.mubr.bf16.mxu0 0
    %4081 = vmatmul.mubr.bf16.gmra.mxu0 %v3903
    %v4082 = vpop.f32.mrf.mxu0
    %v4083 = vadd.f32 0.0, %v4082
    %v4084 = vpop.f32.mrf.mxu0
    %v4085 = vpop.f32.mrf.mxu0
    %v4086 = vadd.f32 0.0, %v4085
    %v4087 = vpop.f32.mrf.mxu0
    %4088 = vmatprep.mubr.bf16.mxu0 0
    %4089 = vmatmul.mubr.bf16.gmra.mxu0 %v3906
    %v4090 = vpop.f32.mrf.mxu0
    %v4091 = vadd.f32 0.0, %v4090
    %v4092 = vpop.f32.mrf.mxu0
    %v4093 = vpop.f32.mrf.mxu0
    %v4094 = vadd.f32 0.0, %v4093
    %v4095 = vpop.f32.mrf.mxu0
    %4096 = vmatprep.mubr.bf16.mxu0 0
    %4097 = vmatmul.mubr.bf16.gmra.mxu0 %v3909
    %v4098 = vpop.f32.mrf.mxu0
    %v4099 = vadd.f32 0.0, %v4098
    %v4100 = vpop.f32.mrf.mxu0
    %v4101 = vpop.f32.mrf.mxu0
    %v4102 = vadd.f32 0.0, %v4101
    %v4103 = vpop.f32.mrf.mxu0
    %4104 = vmatprep.mubr.bf16.mxu0 0
    %4105 = vmatmul.mubr.bf16.gmra.mxu0 %v3912
    %v4106 = vpop.f32.mrf.mxu0
    %v4107 = vadd.f32 0.0, %v4106
    %v4108 = vpop.f32.mrf.mxu0
    %v4109 = vpop.f32.mrf.mxu0
    %v4110 = vadd.f32 0.0, %v4109
    %v4111 = vpop.f32.mrf.mxu0
    %4112 = vmatprep.mubr.bf16.mxu0 0
    %4113 = vmatmul.mubr.bf16.gmra.mxu0 %v3915
    %v4114 = vpop.f32.mrf.mxu0
    %v4115 = vadd.f32 0.0, %v4114
    %v4116 = vpop.f32.mrf.mxu0
    %v4117 = vpop.f32.mrf.mxu0
    %v4118 = vadd.f32 0.0, %v4117
    %v4119 = vpop.f32.mrf.mxu0
    %4120 = vmatprep.mubr.bf16.mxu0 0
    %4121 = vmatmul.mubr.bf16.gmra.mxu0 %v3918
    %v4122 = vpop.f32.mrf.mxu0
    %v4123 = vadd.f32 0.0, %v4122
    %v4124 = vpop.f32.mrf.mxu0
    %v4125 = vpop.f32.mrf.mxu0
    %v4126 = vpop.f32.mrf.mxu0
    %4127 = vdwg.mxu0
    %v4128 = vadd.f32 %v3711, %v3955
    %v4129 = vadd.f32 %v3712, %v3958
    %v4130 = vadd.f32 %v3713, %v3963
    %v4131 = vadd.f32 %v3714, %v3966
    %v4132 = vadd.f32 %v3715, %v3971
    %v4133 = vadd.f32 %v3716, %v3974
    %v4134 = vadd.f32 %v3717, %v3979
    %v4135 = vadd.f32 %v3718, %v3982
    %v4136 = vadd.f32 %v3719, %v3987
    %v4137 = vadd.f32 %v3720, %v3990
    %v4138 = vadd.f32 %v3721, %v3995
    %v4139 = vadd.f32 %v3722, %v3998
    %v4140 = vadd.f32 %v3723, %v4003
    %v4141 = vadd.f32 %v3724, %v4006
    %v4142 = vadd.f32 %v3725, %v4011
    %v4143 = vadd.f32 %v3726, %v4014
    %v4144 = vadd.f32 %v3727, %v4019
    %v4145 = vadd.f32 %v3728, %v4022
    %v4146 = vadd.f32 %v3729, %v4027
    %v4147 = vadd.f32 %v3730, %v4030
    %v4148 = vadd.f32 %v3731, %v4035
    %v4149 = vadd.f32 %v3732, %v4038
    %v4150 = vadd.f32 %v3733, %v4043
    %v4151 = vadd.f32 %v3734, %v4046
    %v4152 = vadd.f32 %v3735, %v4051
    %v4153 = vadd.f32 %v3736, %v4054
    %v4154 = vadd.f32 %v3737, %v4059
    %v4155 = vadd.f32 %v3738, %v4062
    %v4156 = vadd.f32 %v3739, %v4067
    %v4157 = vadd.f32 %v3740, %v4070
    %v4158 = vadd.f32 %v3741, %v4075
    %v4159 = vadd.f32 %v3742, %v4078
    %v4160 = vadd.f32 %v3743, %v4083
    %v4161 = vadd.f32 %v3744, %v4086
    %v4162 = vadd.f32 %v3745, %v4091
    %v4163 = vadd.f32 %v3746, %v4094
    %v4164 = vadd.f32 %v3747, %v4099
    %v4165 = vadd.f32 %v3748, %v4102
    %v4166 = vadd.f32 %v3749, %v4107
    %v4167 = vadd.f32 %v3750, %v4110
    %v4168 = vadd.f32 %v3751, %v4115
    %v4169 = vadd.f32 %v3752, %v4118
    %v4170 = vadd.f32 %v3753, %v4123
    %v4171 = vld [vmem:[%s0 + $0x1c] sm:$0xf]
    %v4172 = vld [vmem:[%s0 + $0x20] sm:$0xf]
    %v4173 = vld [vmem:[%s0 + $0x24] sm:$0xf]
    %v4174 = vld [vmem:[%s0 + $0x28] sm:$0xf]
    %v4175 = vld [vmem:[%s0 + $0x2c] sm:$0xf]
    %v4176 = vld [vmem:[%s0 + $0x30] sm:$0xf]
    %v4177 = vld [vmem:[%s0 + $0x34] sm:$0xf]
    %v4178 = vld [vmem:[%s0 + $0x38] sm:$0xf]
    %v4179 = vld [vmem:[%s0 + $0x3c] sm:$0xf]
    %v4180 = vld [vmem:[%s0 + $0x40] sm:$0xf]
    %v4181 = vld [vmem:[%s0 + $0x44] sm:$0xf]
    %v4182 = vld [vmem:[%s0 + $0x48] sm:$0xf]
    %v4183 = vld [vmem:[%s0 + $0x4c] sm:$0xf]
    %v4184 = vld [vmem:[%s0 + $0x50] sm:$0xf]
    %v4185 = vld [vmem:[%s0 + $0x54] sm:$0xf]
    %v4186 = vld [vmem:[%s0 + $0x58] sm:$0xf]
    %v4187 = vld [vmem:[%s0 + $0x5c] sm:$0xf]
    %v4188 = vld [vmem:[%s0 + $0x60] sm:$0xf]
    %v4189 = vld [vmem:[%s0 + $0x64] sm:$0xf]
    %v4190 = vld [vmem:[%s0 + $0x68] sm:$0xf]
    %v4191 = vld [vmem:[%s0 + $0x6c] sm:$0xf]
    %v4192 = vld [vmem:[%s0 + $0x70] sm:$0xf]
    %v4193 = vld [vmem:[%s0 + $0x74] sm:$0xf]
    %v4194 = vld [vmem:[%s0 + $0x78] sm:$0xf]
    %v4195 = vld [vmem:[%s0 + $0x7c] sm:$0xf]
    %v4196 = vld [vmem:[%s0 + $0x80] sm:$0xf]
    %v4197 = vld [vmem:[%s0 + $0x84] sm:$0xf]
    %v4198 = vld [vmem:[%s0 + $0x88] sm:$0xf]
    %v4199 = vld [vmem:[%s0 + $0x8c] sm:$0xf]
    %v4200 = vld [vmem:[%s0 + $0x90] sm:$0xf]
    %v4201 = vld [vmem:[%s0 + $0x94] sm:$0xf]
    %v4202 = vld [vmem:[%s0 + $0x98] sm:$0xf]
    %v4203 = vld [vmem:[%s0 + $0x9c] sm:$0xf]
    %v4204 = vld [vmem:[%s0 + $0xa0] sm:$0xf]
    %v4205 = vld [vmem:[%s0 + $0xa4] sm:$0xf]
    %v4206 = vld [vmem:[%s0 + $0xa8] sm:$0xf]
    %v4207 = vld [vmem:[%s0 + $0xac] sm:$0xf]
    %v4208 = vld [vmem:[%s0 + $0xb0] sm:$0xf]
    %v4209 = vld [vmem:[%s0 + $0xb4] sm:$0xf]
    %v4210 = vld [vmem:[%s0 + $0xb8] sm:$0xf]
    %v4211 = vld [vmem:[%s0 + $0xbc] sm:$0xf]
    %v4212 = vld [vmem:[%s0 + $0xc0] sm:$0xf]
    %v4213 = vld [vmem:[%s0 + $0xc4] sm:$0xf]
    %s4214 = scalar_lea.vmem %s1, 384
    %v4215 = vld [vmem:[%s4214] sm:$0xf]
    %v4216 = vld [vmem:[%s4214 + $0x4] sm:$0xf]
    %v4217 = vld [vmem:[%s4214 + $0x8] sm:$0xf]
    %v4218 = vld [vmem:[%s4214 + $0xc] sm:$0xf]
    %v4219 = vld [vmem:[%s4214 + $0x10] sm:$0xf]
    %v4220 = vld [vmem:[%s4214 + $0x14] sm:$0xf]
    %v4221 = vld [vmem:[%s4214 + $0x18] sm:$0xf]
    %v4222 = vld [vmem:[%s4214 + $0x1c] sm:$0xf]
    %v4223 = vld [vmem:[%s4214 + $0x20] sm:$0xf]
    %v4224 = vld [vmem:[%s4214 + $0x24] sm:$0xf]
    %v4225 = vld [vmem:[%s4214 + $0x28] sm:$0xf]
    %v4226 = vld [vmem:[%s4214 + $0x2c] sm:$0xf]
    %v4270 = vunpack.c.l.b16 %v4171
    %v4271 = vunpack.c.l.b16 %v4172
    %v4272 = vunpack.c.l.b16 %v4173
    %v4273 = vunpack.c.l.b16 %v4174
    %v4274 = vunpack.c.l.b16 %v4175
    %v4275 = vunpack.c.l.b16 %v4176
    %v4276 = vunpack.c.l.b16 %v4177
    %v4277 = vunpack.c.l.b16 %v4178
    %v4278 = vunpack.c.l.b16 %v4179
    %v4279 = vunpack.c.l.b16 %v4180
    %v4280 = vunpack.c.l.b16 %v4181
    %v4281 = vunpack.c.l.b16 %v4182
    %v4282 = vunpack.c.l.b16 %v4183
    %v4283 = vunpack.c.l.b16 %v4184
    %v4284 = vunpack.c.l.b16 %v4185
    %v4285 = vunpack.c.l.b16 %v4186
    %v4286 = vunpack.c.l.b16 %v4187
    %v4287 = vunpack.c.l.b16 %v4188
    %v4288 = vunpack.c.l.b16 %v4189
    %v4289 = vunpack.c.l.b16 %v4190
    %v4290 = vunpack.c.l.b16 %v4191
    %v4291 = vunpack.c.l.b16 %v4192
    %v4292 = vunpack.c.l.b16 %v4193
    %v4293 = vunpack.c.l.b16 %v4194
    %v4294 = vunpack.c.l.b16 %v4195
    %v4295 = vunpack.c.l.b16 %v4196
    %v4296 = vunpack.c.l.b16 %v4197
    %v4297 = vunpack.c.l.b16 %v4198
    %v4298 = vunpack.c.l.b16 %v4199
    %v4299 = vunpack.c.l.b16 %v4200
    %v4300 = vunpack.c.l.b16 %v4201
    %v4301 = vunpack.c.l.b16 %v4202
    %v4302 = vunpack.c.l.b16 %v4203
    %v4303 = vunpack.c.l.b16 %v4204
    %v4304 = vunpack.c.l.b16 %v4205
    %v4305 = vunpack.c.l.b16 %v4206
    %v4306 = vunpack.c.l.b16 %v4207
    %v4307 = vunpack.c.l.b16 %v4208
    %v4308 = vunpack.c.l.b16 %v4209
    %v4309 = vunpack.c.l.b16 %v4210
    %v4310 = vunpack.c.l.b16 %v4211
    %v4311 = vunpack.c.l.b16 %v4212
    %v4312 = vunpack.c.l.b16 %v4213
    %v4313 = vpack.c.b16 %v4271, %v4270
    %v4314 = vpack.c.b16 %v4273, %v4272
    %v4315 = vpack.c.b16 %v4275, %v4274
    %v4316 = vpack.c.b16 %v4277, %v4276
    %v4317 = vpack.c.b16 %v4279, %v4278
    %v4318 = vpack.c.b16 %v4281, %v4280
    %v4319 = vpack.c.b16 %v4283, %v4282
    %v4320 = vpack.c.b16 %v4285, %v4284
    %v4321 = vpack.c.b16 %v4287, %v4286
    %v4322 = vpack.c.b16 %v4289, %v4288
    %v4323 = vpack.c.b16 %v4291, %v4290
    %v4324 = vpack.c.b16 %v4293, %v4292
    %v4325 = vpack.c.b16 %v4295, %v4294
    %v4326 = vpack.c.b16 %v4297, %v4296
    %v4327 = vpack.c.b16 %v4299, %v4298
    %v4328 = vpack.c.b16 %v4301, %v4300
    %v4329 = vpack.c.b16 %v4303, %v4302
    %v4330 = vpack.c.b16 %v4305, %v4304
    %v4331 = vpack.c.b16 %v4307, %v4306
    %v4332 = vpack.c.b16 %v4309, %v4308
    %v4333 = vpack.c.b16 %v4311, %v4310
    %v4334 = vpack.c.b16 %v4312, %v4312
    %v4347 = vunpack.c.l.b16 %v4215
    %v4348 = vunpack.c.l.b16 %v4216
    %v4349 = vunpack.c.l.b16 %v4217
    %v4350 = vunpack.c.l.b16 %v4218
    %v4351 = vunpack.c.l.b16 %v4219
    %v4352 = vunpack.c.l.b16 %v4220
    %v4353 = vunpack.c.l.b16 %v4221
    %v4354 = vunpack.c.l.b16 %v4222
    %v4355 = vunpack.c.l.b16 %v4223
    %v4356 = vunpack.c.l.b16 %v4224
    %v4357 = vunpack.c.l.b16 %v4225
    %v4358 = vunpack.c.l.b16 %v4226
    %v4359 = vpack.c.b16 %v4348, %v4347
    %v4360 = vpack.c.b16 %v4350, %v4349
    %v4361 = vpack.c.b16 %v4352, %v4351
    %v4362 = vpack.c.b16 %v4354, %v4353
    %v4363 = vpack.c.b16 %v4356, %v4355
    %v4364 = vpack.c.b16 %v4358, %v4357
    %v4372 = vsel %vm666, %v4313, 0
    %v4375 = vsel %vm666, %v4314, 0
    %v4378 = vsel %vm666, %v4315, 0
    %v4381 = vsel %vm666, %v4316, 0
    %v4384 = vsel %vm666, %v4317, 0
    %v4387 = vsel %vm666, %v4318, 0
    %v4390 = vsel %vm666, %v4319, 0
    %v4393 = vsel %vm666, %v4320, 0
    %v4396 = vsel %vm666, %v4321, 0
    %v4399 = vsel %vm666, %v4322, 0
    %v4402 = vsel %vm666, %v4323, 0
    %v4405 = vsel %vm666, %v4324, 0
    %v4408 = vsel %vm666, %v4325, 0
    %v4411 = vsel %vm666, %v4326, 0
    %v4414 = vsel %vm666, %v4327, 0
    %v4417 = vsel %vm666, %v4328, 0
    %v4420 = vsel %vm666, %v4329, 0
    %v4423 = vsel %vm666, %v4330, 0
    %v4426 = vsel %vm666, %v4331, 0
    %v4429 = vsel %vm666, %v4332, 0
    %v4432 = vsel %vm666, %v4333, 0
    %v4435 = vsel %vm666, %v4334, 0
    %4437 = vmatprep.subr.bf16.mxu0 0
    %4438 = vmatpush1.bf16.msra.mxu0 0
    %4439 = vmatprep.subr.bf16.mxu0 0
    %4440 = vmatpush1.bf16.msra.mxu0 0
    %4441 = vmatprep.subr.bf16.mxu0 0
    %4442 = vmatpush1.bf16.msra.mxu0 %v4364
    %4443 = vmatprep.subr.bf16.mxu0 0
    %4444 = vmatpush1.bf16.msra.mxu0 %v4363
    %4445 = vmatprep.subr.bf16.mxu0 0
    %4446 = vmatpush1.bf16.msra.mxu0 %v4362
    %4447 = vmatprep.subr.bf16.mxu0 0
    %4448 = vmatpush1.bf16.msra.mxu0 %v4361
    %4449 = vmatprep.subr.bf16.mxu0 0
    %4450 = vmatpush1.bf16.msra.mxu0 %v4360
    %4451 = vmatprep.subr.bf16.mxu0 0
    %4452 = vmatpush1.bf16.msra.mxu0 %v4359
    %4453 = vmatprep.subr.bf16.mxu0 0
    %4454 = vmatpush2.bf16.msra.mxu0 0
    %4455 = vmatprep.subr.bf16.mxu0 0
    %4456 = vmatpush2.bf16.msra.mxu0 0
    %4457 = vmatprep.subr.bf16.mxu0 0
    %4458 = vmatpush2.bf16.msra.mxu0 0
    %4459 = vmatprep.subr.bf16.mxu0 0
    %4460 = vmatpush2.bf16.msra.mxu0 0
    %4461 = vmatprep.subr.bf16.mxu0 0
    %4462 = vmatpush2.bf16.msra.mxu0 0
    %4463 = vmatprep.subr.bf16.mxu0 0
    %4464 = vmatpush2.bf16.msra.mxu0 0
    %4465 = vmatprep.subr.bf16.mxu0 0
    %4466 = vmatpush2.bf16.msra.mxu0 0
    %4467 = vmatprep.subr.bf16.mxu0 0
    %4468 = vmatpush2.bf16.msra.mxu0 0
    %4469 = vmatprep.mubr.bf16.mxu0 0
    %4470 = vmatmul.mubr.bf16.gmra.mxu0 %v4372
    %v4471 = vpop.f32.mrf.mxu0
    %v4472 = vadd.f32 0.0, %v4471
    %v4473 = vpop.f32.mrf.mxu0
    %v4474 = vpop.f32.mrf.mxu0
    %v4475 = vadd.f32 0.0, %v4474
    %v4476 = vpop.f32.mrf.mxu0
    %4477 = vmatprep.mubr.bf16.mxu0 0
    %4478 = vmatmul.mubr.bf16.gmra.mxu0 %v4375
    %v4479 = vpop.f32.mrf.mxu0
    %v4480 = vadd.f32 0.0, %v4479
    %v4481 = vpop.f32.mrf.mxu0
    %v4482 = vpop.f32.mrf.mxu0
    %v4483 = vadd.f32 0.0, %v4482
    %v4484 = vpop.f32.mrf.mxu0
    %4485 = vmatprep.mubr.bf16.mxu0 0
    %4486 = vmatmul.mubr.bf16.gmra.mxu0 %v4378
    %v4487 = vpop.f32.mrf.mxu0
    %v4488 = vadd.f32 0.0, %v4487
    %v4489 = vpop.f32.mrf.mxu0
    %v4490 = vpop.f32.mrf.mxu0
    %v4491 = vadd.f32 0.0, %v4490
    %v4492 = vpop.f32.mrf.mxu0
    %4493 = vmatprep.mubr.bf16.mxu0 0
    %4494 = vmatmul.mubr.bf16.gmra.mxu0 %v4381
    %v4495 = vpop.f32.mrf.mxu0
    %v4496 = vadd.f32 0.0, %v4495
    %v4497 = vpop.f32.mrf.mxu0
    %v4498 = vpop.f32.mrf.mxu0
    %v4499 = vadd.f32 0.0, %v4498
    %v4500 = vpop.f32.mrf.mxu0
    %4501 = vmatprep.mubr.bf16.mxu0 0
    %4502 = vmatmul.mubr.bf16.gmra.mxu0 %v4384
    %v4503 = vpop.f32.mrf.mxu0
    %v4504 = vadd.f32 0.0, %v4503
    %v4505 = vpop.f32.mrf.mxu0
    %v4506 = vpop.f32.mrf.mxu0
    %v4507 = vadd.f32 0.0, %v4506
    %v4508 = vpop.f32.mrf.mxu0
    %4509 = vmatprep.mubr.bf16.mxu0 0
    %4510 = vmatmul.mubr.bf16.gmra.mxu0 %v4387
    %v4511 = vpop.f32.mrf.mxu0
    %v4512 = vadd.f32 0.0, %v4511
    %v4513 = vpop.f32.mrf.mxu0
    %v4514 = vpop.f32.mrf.mxu0
    %v4515 = vadd.f32 0.0, %v4514
    %v4516 = vpop.f32.mrf.mxu0
    %4517 = vmatprep.mubr.bf16.mxu0 0
    %4518 = vmatmul.mubr.bf16.gmra.mxu0 %v4390
    %v4519 = vpop.f32.mrf.mxu0
    %v4520 = vadd.f32 0.0, %v4519
    %v4521 = vpop.f32.mrf.mxu0
    %v4522 = vpop.f32.mrf.mxu0
    %v4523 = vadd.f32 0.0, %v4522
    %v4524 = vpop.f32.mrf.mxu0
    %4525 = vmatprep.mubr.bf16.mxu0 0
    %4526 = vmatmul.mubr.bf16.gmra.mxu0 %v4393
    %v4527 = vpop.f32.mrf.mxu0
    %v4528 = vadd.f32 0.0, %v4527
    %v4529 = vpop.f32.mrf.mxu0
    %v4530 = vpop.f32.mrf.mxu0
    %v4531 = vadd.f32 0.0, %v4530
    %v4532 = vpop.f32.mrf.mxu0
    %4533 = vmatprep.mubr.bf16.mxu0 0
    %4534 = vmatmul.mubr.bf16.gmra.mxu0 %v4396
    %v4535 = vpop.f32.mrf.mxu0
    %v4536 = vadd.f32 0.0, %v4535
    %v4537 = vpop.f32.mrf.mxu0
    %v4538 = vpop.f32.mrf.mxu0
    %v4539 = vadd.f32 0.0, %v4538
    %v4540 = vpop.f32.mrf.mxu0
    %4541 = vmatprep.mubr.bf16.mxu0 0
    %4542 = vmatmul.mubr.bf16.gmra.mxu0 %v4399
    %v4543 = vpop.f32.mrf.mxu0
    %v4544 = vadd.f32 0.0, %v4543
    %v4545 = vpop.f32.mrf.mxu0
    %v4546 = vpop.f32.mrf.mxu0
    %v4547 = vadd.f32 0.0, %v4546
    %v4548 = vpop.f32.mrf.mxu0
    %4549 = vmatprep.mubr.bf16.mxu0 0
    %4550 = vmatmul.mubr.bf16.gmra.mxu0 %v4402
    %v4551 = vpop.f32.mrf.mxu0
    %v4552 = vadd.f32 0.0, %v4551
    %v4553 = vpop.f32.mrf.mxu0
    %v4554 = vpop.f32.mrf.mxu0
    %v4555 = vadd.f32 0.0, %v4554
    %v4556 = vpop.f32.mrf.mxu0
    %4557 = vmatprep.mubr.bf16.mxu0 0
    %4558 = vmatmul.mubr.bf16.gmra.mxu0 %v4405
    %v4559 = vpop.f32.mrf.mxu0
    %v4560 = vadd.f32 0.0, %v4559
    %v4561 = vpop.f32.mrf.mxu0
    %v4562 = vpop.f32.mrf.mxu0
    %v4563 = vadd.f32 0.0, %v4562
    %v4564 = vpop.f32.mrf.mxu0
    %4565 = vmatprep.mubr.bf16.mxu0 0
    %4566 = vmatmul.mubr.bf16.gmra.mxu0 %v4408
    %v4567 = vpop.f32.mrf.mxu0
    %v4568 = vadd.f32 0.0, %v4567
    %v4569 = vpop.f32.mrf.mxu0
    %v4570 = vpop.f32.mrf.mxu0
    %v4571 = vadd.f32 0.0, %v4570
    %v4572 = vpop.f32.mrf.mxu0
    %4573 = vmatprep.mubr.bf16.mxu0 0
    %4574 = vmatmul.mubr.bf16.gmra.mxu0 %v4411
    %v4575 = vpop.f32.mrf.mxu0
    %v4576 = vadd.f32 0.0, %v4575
    %v4577 = vpop.f32.mrf.mxu0
    %v4578 = vpop.f32.mrf.mxu0
    %v4579 = vadd.f32 0.0, %v4578
    %v4580 = vpop.f32.mrf.mxu0
    %4581 = vmatprep.mubr.bf16.mxu0 0
    %4582 = vmatmul.mubr.bf16.gmra.mxu0 %v4414
    %v4583 = vpop.f32.mrf.mxu0
    %v4584 = vadd.f32 0.0, %v4583
    %v4585 = vpop.f32.mrf.mxu0
    %v4586 = vpop.f32.mrf.mxu0
    %v4587 = vadd.f32 0.0, %v4586
    %v4588 = vpop.f32.mrf.mxu0
    %4589 = vmatprep.mubr.bf16.mxu0 0
    %4590 = vmatmul.mubr.bf16.gmra.mxu0 %v4417
    %v4591 = vpop.f32.mrf.mxu0
    %v4592 = vadd.f32 0.0, %v4591
    %v4593 = vpop.f32.mrf.mxu0
    %v4594 = vpop.f32.mrf.mxu0
    %v4595 = vadd.f32 0.0, %v4594
    %v4596 = vpop.f32.mrf.mxu0
    %4597 = vmatprep.mubr.bf16.mxu0 0
    %4598 = vmatmul.mubr.bf16.gmra.mxu0 %v4420
    %v4599 = vpop.f32.mrf.mxu0
    %v4600 = vadd.f32 0.0, %v4599
    %v4601 = vpop.f32.mrf.mxu0
    %v4602 = vpop.f32.mrf.mxu0
    %v4603 = vadd.f32 0.0, %v4602
    %v4604 = vpop.f32.mrf.mxu0
    %4605 = vmatprep.mubr.bf16.mxu0 0
    %4606 = vmatmul.mubr.bf16.gmra.mxu0 %v4423
    %v4607 = vpop.f32.mrf.mxu0
    %v4608 = vadd.f32 0.0, %v4607
    %v4609 = vpop.f32.mrf.mxu0
    %v4610 = vpop.f32.mrf.mxu0
    %v4611 = vadd.f32 0.0, %v4610
    %v4612 = vpop.f32.mrf.mxu0
    %4613 = vmatprep.mubr.bf16.mxu0 0
    %4614 = vmatmul.mubr.bf16.gmra.mxu0 %v4426
    %v4615 = vpop.f32.mrf.mxu0
    %v4616 = vadd.f32 0.0, %v4615
    %v4617 = vpop.f32.mrf.mxu0
    %v4618 = vpop.f32.mrf.mxu0
    %v4619 = vadd.f32 0.0, %v4618
    %v4620 = vpop.f32.mrf.mxu0
    %4621 = vmatprep.mubr.bf16.mxu0 0
    %4622 = vmatmul.mubr.bf16.gmra.mxu0 %v4429
    %v4623 = vpop.f32.mrf.mxu0
    %v4624 = vadd.f32 0.0, %v4623
    %v4625 = vpop.f32.mrf.mxu0
    %v4626 = vpop.f32.mrf.mxu0
    %v4627 = vadd.f32 0.0, %v4626
    %v4628 = vpop.f32.mrf.mxu0
    %4629 = vmatprep.mubr.bf16.mxu0 0
    %4630 = vmatmul.mubr.bf16.gmra.mxu0 %v4432
    %v4631 = vpop.f32.mrf.mxu0
    %v4632 = vadd.f32 0.0, %v4631
    %v4633 = vpop.f32.mrf.mxu0
    %v4634 = vpop.f32.mrf.mxu0
    %v4635 = vadd.f32 0.0, %v4634
    %v4636 = vpop.f32.mrf.mxu0
    %4637 = vmatprep.mubr.bf16.mxu0 0
    %4638 = vmatmul.mubr.bf16.gmra.mxu0 %v4435
    %v4639 = vpop.f32.mrf.mxu0
    %v4640 = vadd.f32 0.0, %v4639
    %v4641 = vpop.f32.mrf.mxu0
    %v4642 = vpop.f32.mrf.mxu0
    %v4643 = vpop.f32.mrf.mxu0
    %4644 = vdwg.mxu0
    %v4645 = vadd.f32 %v4128, %v4472
    %v4646 = vadd.f32 %v4129, %v4475
    %v4647 = vadd.f32 %v4130, %v4480
    %v4648 = vadd.f32 %v4131, %v4483
    %v4649 = vadd.f32 %v4132, %v4488
    %v4650 = vadd.f32 %v4133, %v4491
    %v4651 = vadd.f32 %v4134, %v4496
    %v4652 = vadd.f32 %v4135, %v4499
    %v4653 = vadd.f32 %v4136, %v4504
    %v4654 = vadd.f32 %v4137, %v4507
    %v4655 = vadd.f32 %v4138, %v4512
    %v4656 = vadd.f32 %v4139, %v4515
    %v4657 = vadd.f32 %v4140, %v4520
    %v4658 = vadd.f32 %v4141, %v4523
    %v4659 = vadd.f32 %v4142, %v4528
    %v4660 = vadd.f32 %v4143, %v4531
    %v4661 = vadd.f32 %v4144, %v4536
    %v4662 = vadd.f32 %v4145, %v4539
    %v4663 = vadd.f32 %v4146, %v4544
    %v4664 = vadd.f32 %v4147, %v4547
    %v4665 = vadd.f32 %v4148, %v4552
    %v4666 = vadd.f32 %v4149, %v4555
    %v4667 = vadd.f32 %v4150, %v4560
    %v4668 = vadd.f32 %v4151, %v4563
    %v4669 = vadd.f32 %v4152, %v4568
    %v4670 = vadd.f32 %v4153, %v4571
    %v4671 = vadd.f32 %v4154, %v4576
    %v4672 = vadd.f32 %v4155, %v4579
    %v4673 = vadd.f32 %v4156, %v4584
    %v4674 = vadd.f32 %v4157, %v4587
    %v4675 = vadd.f32 %v4158, %v4592
    %v4676 = vadd.f32 %v4159, %v4595
    %v4677 = vadd.f32 %v4160, %v4600
    %v4678 = vadd.f32 %v4161, %v4603
    %v4679 = vadd.f32 %v4162, %v4608
    %v4680 = vadd.f32 %v4163, %v4611
    %v4681 = vadd.f32 %v4164, %v4616
    %v4682 = vadd.f32 %v4165, %v4619
    %v4683 = vadd.f32 %v4166, %v4624
    %v4684 = vadd.f32 %v4167, %v4627
    %v4685 = vadd.f32 %v4168, %v4632
    %v4686 = vadd.f32 %v4169, %v4635
    %v4687 = vadd.f32 %v4170, %v4640
    %v4688 = vld [vmem:[%s0 + $0x1c] sm:$0xe]
    %v4689 = vld [vmem:[%s0 + $0x20] sm:$0xf]
    %v4690 = vld [vmem:[%s0 + $0x24] sm:$0xf]
    %v4691 = vld [vmem:[%s0 + $0x28] sm:$0xf]
    %v4692 = vld [vmem:[%s0 + $0x2c] sm:$0xf]
    %v4693 = vld [vmem:[%s0 + $0x30] sm:$0xf]
    %v4694 = vld [vmem:[%s0 + $0x34] sm:$0xf]
    %v4695 = vld [vmem:[%s0 + $0x38] sm:$0xf]
    %v4696 = vld [vmem:[%s0 + $0x3c] sm:$0xf]
    %v4697 = vld [vmem:[%s0 + $0x40] sm:$0xf]
    %v4698 = vld [vmem:[%s0 + $0x44] sm:$0xf]
    %v4699 = vld [vmem:[%s0 + $0x48] sm:$0xf]
    %v4700 = vld [vmem:[%s0 + $0x4c] sm:$0xf]
    %v4701 = vld [vmem:[%s0 + $0x50] sm:$0xf]
    %v4702 = vld [vmem:[%s0 + $0x54] sm:$0xf]
    %v4703 = vld [vmem:[%s0 + $0x58] sm:$0xf]
    %v4704 = vld [vmem:[%s0 + $0x5c] sm:$0xf]
    %v4705 = vld [vmem:[%s0 + $0x60] sm:$0xf]
    %v4706 = vld [vmem:[%s0 + $0x64] sm:$0xf]
    %v4707 = vld [vmem:[%s0 + $0x68] sm:$0xf]
    %v4708 = vld [vmem:[%s0 + $0x6c] sm:$0xf]
    %v4709 = vld [vmem:[%s0 + $0x70] sm:$0xf]
    %v4710 = vld [vmem:[%s0 + $0x74] sm:$0xf]
    %v4711 = vld [vmem:[%s0 + $0x78] sm:$0xf]
    %v4712 = vld [vmem:[%s0 + $0x7c] sm:$0xf]
    %v4713 = vld [vmem:[%s0 + $0x80] sm:$0xf]
    %v4714 = vld [vmem:[%s0 + $0x84] sm:$0xf]
    %v4715 = vld [vmem:[%s0 + $0x88] sm:$0xf]
    %v4716 = vld [vmem:[%s0 + $0x8c] sm:$0xf]
    %v4717 = vld [vmem:[%s0 + $0x90] sm:$0xf]
    %v4718 = vld [vmem:[%s0 + $0x94] sm:$0xf]
    %v4719 = vld [vmem:[%s0 + $0x98] sm:$0xf]
    %v4720 = vld [vmem:[%s0 + $0x9c] sm:$0xf]
    %v4721 = vld [vmem:[%s0 + $0xa0] sm:$0xf]
    %v4722 = vld [vmem:[%s0 + $0xa4] sm:$0xf]
    %v4723 = vld [vmem:[%s0 + $0xa8] sm:$0xf]
    %v4724 = vld [vmem:[%s0 + $0xac] sm:$0xf]
    %v4725 = vld [vmem:[%s0 + $0xb0] sm:$0xf]
    %v4726 = vld [vmem:[%s0 + $0xb4] sm:$0xf]
    %v4727 = vld [vmem:[%s0 + $0xb8] sm:$0xf]
    %v4728 = vld [vmem:[%s0 + $0xbc] sm:$0xf]
    %v4729 = vld [vmem:[%s0 + $0xc0] sm:$0xf]
    %v4730 = vld [vmem:[%s0 + $0xc4] sm:$0xf]
    %v4731 = vld [vmem:[%s0 + $0xc8] sm:$0x1]
    %s4732 = scalar_lea.vmem %s1, 432
    %v4733 = vld [vmem:[%s4732] sm:$0xf]
    %v4734 = vld [vmem:[%s4732 + $0x4] sm:$0xf]
    %v4735 = vld [vmem:[%s4732 + $0x8] sm:$0xf]
    %v4736 = vld [vmem:[%s4732 + $0xc] sm:$0xf]
    %v4737 = vld [vmem:[%s4732 + $0x10] sm:$0xf]
    %v4738 = vld [vmem:[%s4732 + $0x14] sm:$0xf]
    %v4739 = vld [vmem:[%s4732 + $0x18] sm:$0xf]
    %v4740 = vld [vmem:[%s4732 + $0x1c] sm:$0xf]
    %v4741 = vld [vmem:[%s4732 + $0x20] sm:$0xf]
    %v4742 = vld [vmem:[%s4732 + $0x24] sm:$0xf]
    %v4743 = vld [vmem:[%s4732 + $0x28] sm:$0xf]
    %v4744 = vld [vmem:[%s4732 + $0x2c] sm:$0xf]
    %v4789 = vunpack.c.l.b16 %v4688
    %v4790 = vunpack.c.l.b16 %v4689
    %v4791 = vunpack.c.l.b16 %v4690
    %v4792 = vunpack.c.l.b16 %v4691
    %v4793 = vunpack.c.l.b16 %v4692
    %v4794 = vunpack.c.l.b16 %v4693
    %v4795 = vunpack.c.l.b16 %v4694
    %v4796 = vunpack.c.l.b16 %v4695
    %v4797 = vunpack.c.l.b16 %v4696
    %v4798 = vunpack.c.l.b16 %v4697
    %v4799 = vunpack.c.l.b16 %v4698
    %v4800 = vunpack.c.l.b16 %v4699
    %v4801 = vunpack.c.l.b16 %v4700
    %v4802 = vunpack.c.l.b16 %v4701
    %v4803 = vunpack.c.l.b16 %v4702
    %v4804 = vunpack.c.l.b16 %v4703
    %v4805 = vunpack.c.l.b16 %v4704
    %v4806 = vunpack.c.l.b16 %v4705
    %v4807 = vunpack.c.l.b16 %v4706
    %v4808 = vunpack.c.l.b16 %v4707
    %v4809 = vunpack.c.l.b16 %v4708
    %v4810 = vunpack.c.l.b16 %v4709
    %v4811 = vunpack.c.l.b16 %v4710
    %v4812 = vunpack.c.l.b16 %v4711
    %v4813 = vunpack.c.l.b16 %v4712
    %v4814 = vunpack.c.l.b16 %v4713
    %v4815 = vunpack.c.l.b16 %v4714
    %v4816 = vunpack.c.l.b16 %v4715
    %v4817 = vunpack.c.l.b16 %v4716
    %v4818 = vunpack.c.l.b16 %v4717
    %v4819 = vunpack.c.l.b16 %v4718
    %v4820 = vunpack.c.l.b16 %v4719
    %v4821 = vunpack.c.l.b16 %v4720
    %v4822 = vunpack.c.l.b16 %v4721
    %v4823 = vunpack.c.l.b16 %v4722
    %v4824 = vunpack.c.l.b16 %v4723
    %v4825 = vunpack.c.l.b16 %v4724
    %v4826 = vunpack.c.l.b16 %v4725
    %v4827 = vunpack.c.l.b16 %v4726
    %v4828 = vunpack.c.l.b16 %v4727
    %v4829 = vunpack.c.l.b16 %v4728
    %v4830 = vunpack.c.l.b16 %v4729
    %v4831 = vunpack.c.l.b16 %v4730
    %v4832 = vunpack.c.l.b16 %v4731
    %v4833 = vpack.c.b16 %v4790, %v4789
    %v4834 = vpack.c.b16 %v4792, %v4791
    %v4835 = vpack.c.b16 %v4794, %v4793
    %v4836 = vpack.c.b16 %v4796, %v4795
    %v4837 = vpack.c.b16 %v4798, %v4797
    %v4838 = vpack.c.b16 %v4800, %v4799
    %v4839 = vpack.c.b16 %v4802, %v4801
    %v4840 = vpack.c.b16 %v4804, %v4803
    %v4841 = vpack.c.b16 %v4806, %v4805
    %v4842 = vpack.c.b16 %v4808, %v4807
    %v4843 = vpack.c.b16 %v4810, %v4809
    %v4844 = vpack.c.b16 %v4812, %v4811
    %v4845 = vpack.c.b16 %v4814, %v4813
    %v4846 = vpack.c.b16 %v4816, %v4815
    %v4847 = vpack.c.b16 %v4818, %v4817
    %v4848 = vpack.c.b16 %v4820, %v4819
    %v4849 = vpack.c.b16 %v4822, %v4821
    %v4850 = vpack.c.b16 %v4824, %v4823
    %v4851 = vpack.c.b16 %v4826, %v4825
    %v4852 = vpack.c.b16 %v4828, %v4827
    %v4853 = vpack.c.b16 %v4830, %v4829
    %v4854 = vpack.c.b16 %v4832, %v4831
    %v4855 = vrot.slane %v4833, 1
    %v4856 = vrot.slane %v4834, 1
    %v4857 = vsel %vm586, %v4855, %v4856
    %v4858 = vrot.slane %v4835, 1
    %v4859 = vsel %vm586, %v4856, %v4858
    %v4860 = vrot.slane %v4836, 1
    %v4861 = vsel %vm586, %v4858, %v4860
    %v4862 = vrot.slane %v4837, 1
    %v4863 = vsel %vm586, %v4860, %v4862
    %v4864 = vrot.slane %v4838, 1
    %v4865 = vsel %vm586, %v4862, %v4864
    %v4866 = vrot.slane %v4839, 1
    %v4867 = vsel %vm586, %v4864, %v4866
    %v4868 = vrot.slane %v4840, 1
    %v4869 = vsel %vm586, %v4866, %v4868
    %v4870 = vrot.slane %v4841, 1
    %v4871 = vsel %vm586, %v4868, %v4870
    %v4872 = vrot.slane %v4842, 1
    %v4873 = vsel %vm586, %v4870, %v4872
    %v4874 = vrot.slane %v4843, 1
    %v4875 = vsel %vm586, %v4872, %v4874
    %v4876 = vrot.slane %v4844, 1
    %v4877 = vsel %vm586, %v4874, %v4876
    %v4878 = vrot.slane %v4845, 1
    %v4879 = vsel %vm586, %v4876, %v4878
    %v4880 = vrot.slane %v4846, 1
    %v4881 = vsel %vm586, %v4878, %v4880
    %v4882 = vrot.slane %v4847, 1
    %v4883 = vsel %vm586, %v4880, %v4882
    %v4884 = vrot.slane %v4848, 1
    %v4885 = vsel %vm586, %v4882, %v4884
    %v4886 = vrot.slane %v4849, 1
    %v4887 = vsel %vm586, %v4884, %v4886
    %v4888 = vrot.slane %v4850, 1
    %v4889 = vsel %vm586, %v4886, %v4888
    %v4890 = vrot.slane %v4851, 1
    %v4891 = vsel %vm586, %v4888, %v4890
    %v4892 = vrot.slane %v4852, 1
    %v4893 = vsel %vm586, %v4890, %v4892
    %v4894 = vrot.slane %v4853, 1
    %v4895 = vsel %vm586, %v4892, %v4894
    %v4896 = vrot.slane %v4854, 1
    %v4897 = vsel %vm586, %v4894, %v4896
    %v4910 = vunpack.c.l.b16 %v4733
    %v4911 = vunpack.c.l.b16 %v4734
    %v4912 = vunpack.c.l.b16 %v4735
    %v4913 = vunpack.c.l.b16 %v4736
    %v4914 = vunpack.c.l.b16 %v4737
    %v4915 = vunpack.c.l.b16 %v4738
    %v4916 = vunpack.c.l.b16 %v4739
    %v4917 = vunpack.c.l.b16 %v4740
    %v4918 = vunpack.c.l.b16 %v4741
    %v4919 = vunpack.c.l.b16 %v4742
    %v4920 = vunpack.c.l.b16 %v4743
    %v4921 = vunpack.c.l.b16 %v4744
    %v4922 = vpack.c.b16 %v4911, %v4910
    %v4923 = vpack.c.b16 %v4913, %v4912
    %v4924 = vpack.c.b16 %v4915, %v4914
    %v4925 = vpack.c.b16 %v4917, %v4916
    %v4926 = vpack.c.b16 %v4919, %v4918
    %v4927 = vpack.c.b16 %v4921, %v4920
    %v4935 = vsel %vm666, %v4857, 0
    %v4938 = vsel %vm666, %v4859, 0
    %v4941 = vsel %vm666, %v4861, 0
    %v4944 = vsel %vm666, %v4863, 0
    %v4947 = vsel %vm666, %v4865, 0
    %v4950 = vsel %vm666, %v4867, 0
    %v4953 = vsel %vm666, %v4869, 0
    %v4956 = vsel %vm666, %v4871, 0
    %v4959 = vsel %vm666, %v4873, 0
    %v4962 = vsel %vm666, %v4875, 0
    %v4965 = vsel %vm666, %v4877, 0
    %v4968 = vsel %vm666, %v4879, 0
    %v4971 = vsel %vm666, %v4881, 0
    %v4974 = vsel %vm666, %v4883, 0
    %v4977 = vsel %vm666, %v4885, 0
    %v4980 = vsel %vm666, %v4887, 0
    %v4983 = vsel %vm666, %v4889, 0
    %v4986 = vsel %vm666, %v4891, 0
    %v4989 = vsel %vm666, %v4893, 0
    %v4992 = vsel %vm666, %v4895, 0
    %v4995 = vsel %vm666, %v4897, 0
    %v4998 = vsel %vm666, %v4896, 0
    %5000 = vmatprep.subr.bf16.mxu0 0
    %5001 = vmatpush1.bf16.msra.mxu0 0
    %5002 = vmatprep.subr.bf16.mxu0 0
    %5003 = vmatpush1.bf16.msra.mxu0 0
    %5004 = vmatprep.subr.bf16.mxu0 0
    %5005 = vmatpush1.bf16.msra.mxu0 %v4927
    %5006 = vmatprep.subr.bf16.mxu0 0
    %5007 = vmatpush1.bf16.msra.mxu0 %v4926
    %5008 = vmatprep.subr.bf16.mxu0 0
    %5009 = vmatpush1.bf16.msra.mxu0 %v4925
    %5010 = vmatprep.subr.bf16.mxu0 0
    %5011 = vmatpush1.bf16.msra.mxu0 %v4924
    %5012 = vmatprep.subr.bf16.mxu0 0
    %5013 = vmatpush1.bf16.msra.mxu0 %v4923
    %5014 = vmatprep.subr.bf16.mxu0 0
    %5015 = vmatpush1.bf16.msra.mxu0 %v4922
    %5016 = vmatprep.subr.bf16.mxu0 0
    %5017 = vmatpush2.bf16.msra.mxu0 0
    %5018 = vmatprep.subr.bf16.mxu0 0
    %5019 = vmatpush2.bf16.msra.mxu0 0
    %5020 = vmatprep.subr.bf16.mxu0 0
    %5021 = vmatpush2.bf16.msra.mxu0 0
    %5022 = vmatprep.subr.bf16.mxu0 0
    %5023 = vmatpush2.bf16.msra.mxu0 0
    %5024 = vmatprep.subr.bf16.mxu0 0
    %5025 = vmatpush2.bf16.msra.mxu0 0
    %5026 = vmatprep.subr.bf16.mxu0 0
    %5027 = vmatpush2.bf16.msra.mxu0 0
    %5028 = vmatprep.subr.bf16.mxu0 0
    %5029 = vmatpush2.bf16.msra.mxu0 0
    %5030 = vmatprep.subr.bf16.mxu0 0
    %5031 = vmatpush2.bf16.msra.mxu0 0
    %5032 = vmatprep.mubr.bf16.mxu0 0
    %5033 = vmatmul.mubr.bf16.gmra.mxu0 %v4935
    %v5034 = vpop.f32.mrf.mxu0
    %v5035 = vadd.f32 0.0, %v5034
    %v5036 = vpop.f32.mrf.mxu0
    %v5037 = vpop.f32.mrf.mxu0
    %v5038 = vadd.f32 0.0, %v5037
    %v5039 = vpop.f32.mrf.mxu0
    %5040 = vmatprep.mubr.bf16.mxu0 0
    %5041 = vmatmul.mubr.bf16.gmra.mxu0 %v4938
    %v5042 = vpop.f32.mrf.mxu0
    %v5043 = vadd.f32 0.0, %v5042
    %v5044 = vpop.f32.mrf.mxu0
    %v5045 = vpop.f32.mrf.mxu0
    %v5046 = vadd.f32 0.0, %v5045
    %v5047 = vpop.f32.mrf.mxu0
    %5048 = vmatprep.mubr.bf16.mxu0 0
    %5049 = vmatmul.mubr.bf16.gmra.mxu0 %v4941
    %v5050 = vpop.f32.mrf.mxu0
    %v5051 = vadd.f32 0.0, %v5050
    %v5052 = vpop.f32.mrf.mxu0
    %v5053 = vpop.f32.mrf.mxu0
    %v5054 = vadd.f32 0.0, %v5053
    %v5055 = vpop.f32.mrf.mxu0
    %5056 = vmatprep.mubr.bf16.mxu0 0
    %5057 = vmatmul.mubr.bf16.gmra.mxu0 %v4944
    %v5058 = vpop.f32.mrf.mxu0
    %v5059 = vadd.f32 0.0, %v5058
    %v5060 = vpop.f32.mrf.mxu0
    %v5061 = vpop.f32.mrf.mxu0
    %v5062 = vadd.f32 0.0, %v5061
    %v5063 = vpop.f32.mrf.mxu0
    %5064 = vmatprep.mubr.bf16.mxu0 0
    %5065 = vmatmul.mubr.bf16.gmra.mxu0 %v4947
    %v5066 = vpop.f32.mrf.mxu0
    %v5067 = vadd.f32 0.0, %v5066
    %v5068 = vpop.f32.mrf.mxu0
    %v5069 = vpop.f32.mrf.mxu0
    %v5070 = vadd.f32 0.0, %v5069
    %v5071 = vpop.f32.mrf.mxu0
    %5072 = vmatprep.mubr.bf16.mxu0 0
    %5073 = vmatmul.mubr.bf16.gmra.mxu0 %v4950
    %v5074 = vpop.f32.mrf.mxu0
    %v5075 = vadd.f32 0.0, %v5074
    %v5076 = vpop.f32.mrf.mxu0
    %v5077 = vpop.f32.mrf.mxu0
    %v5078 = vadd.f32 0.0, %v5077
    %v5079 = vpop.f32.mrf.mxu0
    %5080 = vmatprep.mubr.bf16.mxu0 0
    %5081 = vmatmul.mubr.bf16.gmra.mxu0 %v4953
    %v5082 = vpop.f32.mrf.mxu0
    %v5083 = vadd.f32 0.0, %v5082
    %v5084 = vpop.f32.mrf.mxu0
    %v5085 = vpop.f32.mrf.mxu0
    %v5086 = vadd.f32 0.0, %v5085
    %v5087 = vpop.f32.mrf.mxu0
    %5088 = vmatprep.mubr.bf16.mxu0 0
    %5089 = vmatmul.mubr.bf16.gmra.mxu0 %v4956
    %v5090 = vpop.f32.mrf.mxu0
    %v5091 = vadd.f32 0.0, %v5090
    %v5092 = vpop.f32.mrf.mxu0
    %v5093 = vpop.f32.mrf.mxu0
    %v5094 = vadd.f32 0.0, %v5093
    %v5095 = vpop.f32.mrf.mxu0
    %5096 = vmatprep.mubr.bf16.mxu0 0
    %5097 = vmatmul.mubr.bf16.gmra.mxu0 %v4959
    %v5098 = vpop.f32.mrf.mxu0
    %v5099 = vadd.f32 0.0, %v5098
    %v5100 = vpop.f32.mrf.mxu0
    %v5101 = vpop.f32.mrf.mxu0
    %v5102 = vadd.f32 0.0, %v5101
    %v5103 = vpop.f32.mrf.mxu0
    %5104 = vmatprep.mubr.bf16.mxu0 0
    %5105 = vmatmul.mubr.bf16.gmra.mxu0 %v4962
    %v5106 = vpop.f32.mrf.mxu0
    %v5107 = vadd.f32 0.0, %v5106
    %v5108 = vpop.f32.mrf.mxu0
    %v5109 = vpop.f32.mrf.mxu0
    %v5110 = vadd.f32 0.0, %v5109
    %v5111 = vpop.f32.mrf.mxu0
    %5112 = vmatprep.mubr.bf16.mxu0 0
    %5113 = vmatmul.mubr.bf16.gmra.mxu0 %v4965
    %v5114 = vpop.f32.mrf.mxu0
    %v5115 = vadd.f32 0.0, %v5114
    %v5116 = vpop.f32.mrf.mxu0
    %v5117 = vpop.f32.mrf.mxu0
    %v5118 = vadd.f32 0.0, %v5117
    %v5119 = vpop.f32.mrf.mxu0
    %5120 = vmatprep.mubr.bf16.mxu0 0
    %5121 = vmatmul.mubr.bf16.gmra.mxu0 %v4968
    %v5122 = vpop.f32.mrf.mxu0
    %v5123 = vadd.f32 0.0, %v5122
    %v5124 = vpop.f32.mrf.mxu0
    %v5125 = vpop.f32.mrf.mxu0
    %v5126 = vadd.f32 0.0, %v5125
    %v5127 = vpop.f32.mrf.mxu0
    %5128 = vmatprep.mubr.bf16.mxu0 0
    %5129 = vmatmul.mubr.bf16.gmra.mxu0 %v4971
    %v5130 = vpop.f32.mrf.mxu0
    %v5131 = vadd.f32 0.0, %v5130
    %v5132 = vpop.f32.mrf.mxu0
    %v5133 = vpop.f32.mrf.mxu0
    %v5134 = vadd.f32 0.0, %v5133
    %v5135 = vpop.f32.mrf.mxu0
    %5136 = vmatprep.mubr.bf16.mxu0 0
    %5137 = vmatmul.mubr.bf16.gmra.mxu0 %v4974
    %v5138 = vpop.f32.mrf.mxu0
    %v5139 = vadd.f32 0.0, %v5138
    %v5140 = vpop.f32.mrf.mxu0
    %v5141 = vpop.f32.mrf.mxu0
    %v5142 = vadd.f32 0.0, %v5141
    %v5143 = vpop.f32.mrf.mxu0
    %5144 = vmatprep.mubr.bf16.mxu0 0
    %5145 = vmatmul.mubr.bf16.gmra.mxu0 %v4977
    %v5146 = vpop.f32.mrf.mxu0
    %v5147 = vadd.f32 0.0, %v5146
    %v5148 = vpop.f32.mrf.mxu0
    %v5149 = vpop.f32.mrf.mxu0
    %v5150 = vadd.f32 0.0, %v5149
    %v5151 = vpop.f32.mrf.mxu0
    %5152 = vmatprep.mubr.bf16.mxu0 0
    %5153 = vmatmul.mubr.bf16.gmra.mxu0 %v4980
    %v5154 = vpop.f32.mrf.mxu0
    %v5155 = vadd.f32 0.0, %v5154
    %v5156 = vpop.f32.mrf.mxu0
    %v5157 = vpop.f32.mrf.mxu0
    %v5158 = vadd.f32 0.0, %v5157
    %v5159 = vpop.f32.mrf.mxu0
    %5160 = vmatprep.mubr.bf16.mxu0 0
    %5161 = vmatmul.mubr.bf16.gmra.mxu0 %v4983
    %v5162 = vpop.f32.mrf.mxu0
    %v5163 = vadd.f32 0.0, %v5162
    %v5164 = vpop.f32.mrf.mxu0
    %v5165 = vpop.f32.mrf.mxu0
    %v5166 = vadd.f32 0.0, %v5165
    %v5167 = vpop.f32.mrf.mxu0
    %5168 = vmatprep.mubr.bf16.mxu0 0
    %5169 = vmatmul.mubr.bf16.gmra.mxu0 %v4986
    %v5170 = vpop.f32.mrf.mxu0
    %v5171 = vadd.f32 0.0, %v5170
    %v5172 = vpop.f32.mrf.mxu0
    %v5173 = vpop.f32.mrf.mxu0
    %v5174 = vadd.f32 0.0, %v5173
    %v5175 = vpop.f32.mrf.mxu0
    %5176 = vmatprep.mubr.bf16.mxu0 0
    %5177 = vmatmul.mubr.bf16.gmra.mxu0 %v4989
    %v5178 = vpop.f32.mrf.mxu0
    %v5179 = vadd.f32 0.0, %v5178
    %v5180 = vpop.f32.mrf.mxu0
    %v5181 = vpop.f32.mrf.mxu0
    %v5182 = vadd.f32 0.0, %v5181
    %v5183 = vpop.f32.mrf.mxu0
    %5184 = vmatprep.mubr.bf16.mxu0 0
    %5185 = vmatmul.mubr.bf16.gmra.mxu0 %v4992
    %v5186 = vpop.f32.mrf.mxu0
    %v5187 = vadd.f32 0.0, %v5186
    %v5188 = vpop.f32.mrf.mxu0
    %v5189 = vpop.f32.mrf.mxu0
    %v5190 = vadd.f32 0.0, %v5189
    %v5191 = vpop.f32.mrf.mxu0
    %5192 = vmatprep.mubr.bf16.mxu0 0
    %5193 = vmatmul.mubr.bf16.gmra.mxu0 %v4995
    %v5194 = vpop.f32.mrf.mxu0
    %v5195 = vadd.f32 0.0, %v5194
    %v5196 = vpop.f32.mrf.mxu0
    %v5197 = vpop.f32.mrf.mxu0
    %v5198 = vadd.f32 0.0, %v5197
    %v5199 = vpop.f32.mrf.mxu0
    %5200 = vmatprep.mubr.bf16.mxu0 0
    %5201 = vmatmul.mubr.bf16.gmra.mxu0 %v4998
    %v5202 = vpop.f32.mrf.mxu0
    %v5203 = vadd.f32 0.0, %v5202
    %v5204 = vpop.f32.mrf.mxu0
    %v5205 = vpop.f32.mrf.mxu0
    %v5206 = vpop.f32.mrf.mxu0
    %5207 = vdwg.mxu0
    %v5208 = vadd.f32 %v4645, %v5035
    %v5209 = vadd.f32 %v4646, %v5038
    %v5210 = vadd.f32 %v4647, %v5043
    %v5211 = vadd.f32 %v4648, %v5046
    %v5212 = vadd.f32 %v4649, %v5051
    %v5213 = vadd.f32 %v4650, %v5054
    %v5214 = vadd.f32 %v4651, %v5059
    %v5215 = vadd.f32 %v4652, %v5062
    %v5216 = vadd.f32 %v4653, %v5067
    %v5217 = vadd.f32 %v4654, %v5070
    %v5218 = vadd.f32 %v4655, %v5075
    %v5219 = vadd.f32 %v4656, %v5078
    %v5220 = vadd.f32 %v4657, %v5083
    %v5221 = vadd.f32 %v4658, %v5086
    %v5222 = vadd.f32 %v4659, %v5091
    %v5223 = vadd.f32 %v4660, %v5094
    %v5224 = vadd.f32 %v4661, %v5099
    %v5225 = vadd.f32 %v4662, %v5102
    %v5226 = vadd.f32 %v4663, %v5107
    %v5227 = vadd.f32 %v4664, %v5110
    %v5228 = vadd.f32 %v4665, %v5115
    %v5229 = vadd.f32 %v4666, %v5118
    %v5230 = vadd.f32 %v4667, %v5123
    %v5231 = vadd.f32 %v4668, %v5126
    %v5232 = vadd.f32 %v4669, %v5131
    %v5233 = vadd.f32 %v4670, %v5134
    %v5234 = vadd.f32 %v4671, %v5139
    %v5235 = vadd.f32 %v4672, %v5142
    %v5236 = vadd.f32 %v4673, %v5147
    %v5237 = vadd.f32 %v4674, %v5150
    %v5238 = vadd.f32 %v4675, %v5155
    %v5239 = vadd.f32 %v4676, %v5158
    %v5240 = vadd.f32 %v4677, %v5163
    %v5241 = vadd.f32 %v4678, %v5166
    %v5242 = vadd.f32 %v4679, %v5171
    %v5243 = vadd.f32 %v4680, %v5174
    %v5244 = vadd.f32 %v4681, %v5179
    %v5245 = vadd.f32 %v4682, %v5182
    %v5246 = vadd.f32 %v4683, %v5187
    %v5247 = vadd.f32 %v4684, %v5190
    %v5248 = vadd.f32 %v4685, %v5195
    %v5249 = vadd.f32 %v4686, %v5198
    %v5250 = vadd.f32 %v4687, %v5203
    %5251 = vst [vmem:[#allocation2] sm:$0xff] %v5208
    %5252 = vst [vmem:[#allocation2 + $0x8] sm:$0xff] %v5209
    %5253 = vst [vmem:[#allocation2 + $0x10] sm:$0xff] %v5210
    %5254 = vst [vmem:[#allocation2 + $0x18] sm:$0xff] %v5211
    %5255 = vst [vmem:[#allocation2 + $0x20] sm:$0xff] %v5212
    %5256 = vst [vmem:[#allocation2 + $0x28] sm:$0xff] %v5213
    %5257 = vst [vmem:[#allocation2 + $0x30] sm:$0xff] %v5214
    %5258 = vst [vmem:[#allocation2 + $0x38] sm:$0xff] %v5215
    %5259 = vst [vmem:[#allocation2 + $0x40] sm:$0xff] %v5216
    %5260 = vst [vmem:[#allocation2 + $0x48] sm:$0xff] %v5217
    %5261 = vst [vmem:[#allocation2 + $0x50] sm:$0xff] %v5218
    %5262 = vst [vmem:[#allocation2 + $0x58] sm:$0xff] %v5219
    %5263 = vst [vmem:[#allocation2 + $0x60] sm:$0xff] %v5220
    %5264 = vst [vmem:[#allocation2 + $0x68] sm:$0xff] %v5221
    %5265 = vst [vmem:[#allocation2 + $0x70] sm:$0xff] %v5222
    %5266 = vst [vmem:[#allocation2 + $0x78] sm:$0xff] %v5223
    %5267 = vst [vmem:[#allocation2 + $0x80] sm:$0xff] %v5224
    %5268 = vst [vmem:[#allocation2 + $0x88] sm:$0xff] %v5225
    %5269 = vst [vmem:[#allocation2 + $0x90] sm:$0xff] %v5226
    %5270 = vst [vmem:[#allocation2 + $0x98] sm:$0xff] %v5227
    %5271 = vst [vmem:[#allocation2 + $0xa0] sm:$0xff] %v5228
    %5272 = vst [vmem:[#allocation2 + $0xa8] sm:$0xff] %v5229
    %5273 = vst [vmem:[#allocation2 + $0xb0] sm:$0xff] %v5230
    %5274 = vst [vmem:[#allocation2 + $0xb8] sm:$0xff] %v5231
    %5275 = vst [vmem:[#allocation2 + $0xc0] sm:$0xff] %v5232
    %5276 = vst [vmem:[#allocation2 + $0xc8] sm:$0xff] %v5233
    %5277 = vst [vmem:[#allocation2 + $0xd0] sm:$0xff] %v5234
    %5278 = vst [vmem:[#allocation2 + $0xd8] sm:$0xff] %v5235
    %5279 = vst [vmem:[#allocation2 + $0xe0] sm:$0xff] %v5236
    %5280 = vst [vmem:[#allocation2 + $0xe8] sm:$0xff] %v5237
    %5281 = vst [vmem:[#allocation2 + $0xf0] sm:$0xff] %v5238
    %5282 = vst [vmem:[#allocation2 + $0xf8] sm:$0xff] %v5239
    %5283 = vst [vmem:[#allocation2 + $0x100] sm:$0xff] %v5240
    %5284 = vst [vmem:[#allocation2 + $0x108] sm:$0xff] %v5241
    %5285 = vst [vmem:[#allocation2 + $0x110] sm:$0xff] %v5242
    %5286 = vst [vmem:[#allocation2 + $0x118] sm:$0xff] %v5243
    %5287 = vst [vmem:[#allocation2 + $0x120] sm:$0xff] %v5244
    %5288 = vst [vmem:[#allocation2 + $0x128] sm:$0xff] %v5245
    %5289 = vst [vmem:[#allocation2 + $0x130] sm:$0xff] %v5246
    %5290 = vst [vmem:[#allocation2 + $0x138] sm:$0xff] %v5247
    %5291 = vst [vmem:[#allocation2 + $0x140] sm:$0xff] %v5248
    %5292 = vst [vmem:[#allocation2 + $0x148] sm:$0xff] %v5249
    %5293 = vst [vmem:[#allocation2 + $0x150] sm:$0xff] %v5250
    %v5294 = vld [vmem:[%s0] sm:$0xc]
    %v5295 = vld [vmem:[%s0 + $0x4] sm:$0xf]
    %v5296 = vld [vmem:[%s0 + $0x8] sm:$0xf]
    %v5297 = vld [vmem:[%s0 + $0xc] sm:$0xf]
    %v5298 = vld [vmem:[%s0 + $0x10] sm:$0xf]
    %v5299 = vld [vmem:[%s0 + $0x14] sm:$0xf]
    %v5300 = vld [vmem:[%s0 + $0x18] sm:$0xf]
    %v5301 = vld [vmem:[%s0 + $0x1c] sm:$0xf]
    %v5302 = vld [vmem:[%s0 + $0x20] sm:$0xf]
    %v5303 = vld [vmem:[%s0 + $0x24] sm:$0xf]
    %v5304 = vld [vmem:[%s0 + $0x28] sm:$0xf]
    %v5305 = vld [vmem:[%s0 + $0x2c] sm:$0xf]
    %v5306 = vld [vmem:[%s0 + $0x30] sm:$0xf]
    %v5307 = vld [vmem:[%s0 + $0x34] sm:$0xf]
    %v5308 = vld [vmem:[%s0 + $0x38] sm:$0xf]
    %v5309 = vld [vmem:[%s0 + $0x3c] sm:$0xf]
    %v5310 = vld [vmem:[%s0 + $0x40] sm:$0xf]
    %v5311 = vld [vmem:[%s0 + $0x44] sm:$0xf]
    %v5312 = vld [vmem:[%s0 + $0x48] sm:$0xf]
    %v5313 = vld [vmem:[%s0 + $0x4c] sm:$0xf]
    %v5314 = vld [vmem:[%s0 + $0x50] sm:$0xf]
    %v5315 = vld [vmem:[%s0 + $0x54] sm:$0xf]
    %v5316 = vld [vmem:[%s0 + $0x58] sm:$0xf]
    %v5317 = vld [vmem:[%s0 + $0x5c] sm:$0xf]
    %v5318 = vld [vmem:[%s0 + $0x60] sm:$0xf]
    %v5319 = vld [vmem:[%s0 + $0x64] sm:$0xf]
    %v5320 = vld [vmem:[%s0 + $0x68] sm:$0xf]
    %v5321 = vld [vmem:[%s0 + $0x6c] sm:$0xf]
    %v5322 = vld [vmem:[%s0 + $0x70] sm:$0xf]
    %v5323 = vld [vmem:[%s0 + $0x74] sm:$0xf]
    %v5324 = vld [vmem:[%s0 + $0x78] sm:$0xf]
    %v5325 = vld [vmem:[%s0 + $0x7c] sm:$0xf]
    %v5326 = vld [vmem:[%s0 + $0x80] sm:$0xf]
    %v5327 = vld [vmem:[%s0 + $0x84] sm:$0xf]
    %v5328 = vld [vmem:[%s0 + $0x88] sm:$0xf]
    %v5329 = vld [vmem:[%s0 + $0x8c] sm:$0xf]
    %v5330 = vld [vmem:[%s0 + $0x90] sm:$0xf]
    %v5331 = vld [vmem:[%s0 + $0x94] sm:$0xf]
    %v5332 = vld [vmem:[%s0 + $0x98] sm:$0xf]
    %v5333 = vld [vmem:[%s0 + $0x9c] sm:$0xf]
    %v5334 = vld [vmem:[%s0 + $0xa0] sm:$0xf]
    %v5335 = vld [vmem:[%s0 + $0xa4] sm:$0xf]
    %v5336 = vld [vmem:[%s0 + $0xa8] sm:$0xf]
    %v5337 = vld [vmem:[%s0 + $0xac] sm:$0xf]
    %v5338 = vld [vmem:[%s0 + $0xb0] sm:$0x3]
    %v5339 = vld [vmem:[%s2] sm:$0xf]
    %v5340 = vld [vmem:[%s2 + $0x4] sm:$0xf]
    %v5341 = vld [vmem:[%s2 + $0x8] sm:$0xf]
    %v5342 = vld [vmem:[%s2 + $0xc] sm:$0xf]
    %v5343 = vld [vmem:[%s2 + $0x10] sm:$0xf]
    %v5344 = vld [vmem:[%s2 + $0x14] sm:$0xf]
    %v5345 = vld [vmem:[%s2 + $0x18] sm:$0xf]
    %v5346 = vld [vmem:[%s2 + $0x1c] sm:$0xf]
    %v5347 = vld [vmem:[%s2 + $0x20] sm:$0xf]
    %v5348 = vld [vmem:[%s2 + $0x24] sm:$0xf]
    %v5349 = vld [vmem:[%s2 + $0x28] sm:$0xf]
    %v5350 = vld [vmem:[%s2 + $0x2c] sm:$0xf]
    %v5351 = vld [vmem:[%s0 + $0xb0] sm:$0xf]
    %v5352 = vld [vmem:[%s0 + $0xb4] sm:$0xf]
    %v5353 = vld [vmem:[%s0 + $0xb8] sm:$0xf]
    %v5354 = vld [vmem:[%s0 + $0xbc] sm:$0xf]
    %s5355 = scalar_lea.vmem %s2, 48
    %v5356 = vld [vmem:[%s5355] sm:$0xf]
    %v5357 = vld [vmem:[%s5355 + $0x4] sm:$0xf]
    %v5358 = vld [vmem:[%s5355 + $0x8] sm:$0xf]
    %v5359 = vld [vmem:[%s5355 + $0xc] sm:$0xf]
    %v5360 = vld [vmem:[%s5355 + $0x10] sm:$0xf]
    %v5361 = vld [vmem:[%s5355 + $0x14] sm:$0xf]
    %v5362 = vld [vmem:[%s5355 + $0x18] sm:$0xf]
    %v5363 = vld [vmem:[%s5355 + $0x1c] sm:$0xf]
    %v5364 = vld [vmem:[%s5355 + $0x20] sm:$0xf]
    %v5365 = vld [vmem:[%s5355 + $0x24] sm:$0xf]
    %v5366 = vld [vmem:[%s5355 + $0x28] sm:$0xf]
    %v5367 = vld [vmem:[%s5355 + $0x2c] sm:$0xf]
    %v5412 = vunpack.c.l.b16 %v5298
    %v5413 = vunpack.c.l.b16 %v5299
    %v5414 = vunpack.c.l.b16 %v5300
    %v5415 = vunpack.c.l.b16 %v5301
    %v5416 = vunpack.c.l.b16 %v5302
    %v5417 = vunpack.c.l.b16 %v5303
    %v5418 = vunpack.c.l.b16 %v5304
    %v5419 = vunpack.c.l.b16 %v5305
    %v5420 = vunpack.c.l.b16 %v5306
    %v5421 = vunpack.c.l.b16 %v5307
    %v5422 = vunpack.c.l.b16 %v5308
    %v5423 = vunpack.c.l.b16 %v5309
    %v5424 = vunpack.c.l.b16 %v5310
    %v5425 = vunpack.c.l.b16 %v5311
    %v5426 = vunpack.c.l.b16 %v5312
    %v5427 = vunpack.c.l.b16 %v5313
    %v5428 = vunpack.c.l.b16 %v5314
    %v5429 = vunpack.c.l.b16 %v5315
    %v5430 = vunpack.c.l.b16 %v5316
    %v5431 = vunpack.c.l.b16 %v5317
    %v5432 = vunpack.c.l.b16 %v5318
    %v5433 = vunpack.c.l.b16 %v5319
    %v5434 = vunpack.c.l.b16 %v5320
    %v5435 = vunpack.c.l.b16 %v5321
    %v5436 = vunpack.c.l.b16 %v5322
    %v5437 = vunpack.c.l.b16 %v5323
    %v5438 = vunpack.c.l.b16 %v5324
    %v5439 = vunpack.c.l.b16 %v5325
    %v5440 = vunpack.c.l.b16 %v5326
    %v5441 = vunpack.c.l.b16 %v5327
    %v5442 = vunpack.c.l.b16 %v5328
    %v5443 = vunpack.c.l.b16 %v5329
    %v5444 = vunpack.c.l.b16 %v5330
    %v5445 = vunpack.c.l.b16 %v5331
    %v5446 = vunpack.c.l.b16 %v5332
    %v5447 = vunpack.c.l.b16 %v5333
    %v5448 = vunpack.c.l.b16 %v5334
    %v5449 = vunpack.c.l.b16 %v5335
    %v5450 = vunpack.c.l.b16 %v5336
    %v5451 = vunpack.c.l.b16 %v5337
    %v5452 = vunpack.c.l.b16 %v5351
    %v5453 = vunpack.c.l.b16 %v5352
    %v5454 = vunpack.c.l.b16 %v5353
    %v5455 = vunpack.c.l.b16 %v5354
    %v5456 = vpack.c.b16 %v5413, %v5412
    %v5457 = vpack.c.b16 %v5415, %v5414
    %v5458 = vpack.c.b16 %v5417, %v5416
    %v5459 = vpack.c.b16 %v5419, %v5418
    %v5460 = vpack.c.b16 %v5421, %v5420
    %v5461 = vpack.c.b16 %v5423, %v5422
    %v5462 = vpack.c.b16 %v5425, %v5424
    %v5463 = vpack.c.b16 %v5427, %v5426
    %v5464 = vpack.c.b16 %v5429, %v5428
    %v5465 = vpack.c.b16 %v5431, %v5430
    %v5466 = vpack.c.b16 %v5433, %v5432
    %v5467 = vpack.c.b16 %v5435, %v5434
    %v5468 = vpack.c.b16 %v5437, %v5436
    %v5469 = vpack.c.b16 %v5439, %v5438
    %v5470 = vpack.c.b16 %v5441, %v5440
    %v5471 = vpack.c.b16 %v5443, %v5442
    %v5472 = vpack.c.b16 %v5445, %v5444
    %v5473 = vpack.c.b16 %v5447, %v5446
    %v5474 = vpack.c.b16 %v5449, %v5448
    %v5475 = vpack.c.b16 %v5451, %v5450
    %v5476 = vpack.c.b16 %v5453, %v5452
    %v5477 = vpack.c.b16 %v5455, %v5454
    %v5490 = vunpack.c.l.b16 %v5356
    %v5491 = vunpack.c.l.b16 %v5357
    %v5492 = vunpack.c.l.b16 %v5358
    %v5493 = vunpack.c.l.b16 %v5359
    %v5494 = vunpack.c.l.b16 %v5360
    %v5495 = vunpack.c.l.b16 %v5361
    %v5496 = vunpack.c.l.b16 %v5362
    %v5497 = vunpack.c.l.b16 %v5363
    %v5498 = vunpack.c.l.b16 %v5364
    %v5499 = vunpack.c.l.b16 %v5365
    %v5500 = vunpack.c.l.b16 %v5366
    %v5501 = vunpack.c.l.b16 %v5367
    %v5502 = vpack.c.b16 %v5491, %v5490
    %v5503 = vpack.c.b16 %v5493, %v5492
    %v5504 = vpack.c.b16 %v5495, %v5494
    %v5505 = vpack.c.b16 %v5497, %v5496
    %v5506 = vpack.c.b16 %v5499, %v5498
    %v5507 = vpack.c.b16 %v5501, %v5500
    %v5515 = vsel %vm666, %v5456, 0
    %v5518 = vsel %vm666, %v5457, 0
    %v5521 = vsel %vm666, %v5458, 0
    %v5524 = vsel %vm666, %v5459, 0
    %v5527 = vsel %vm666, %v5460, 0
    %v5530 = vsel %vm666, %v5461, 0
    %v5533 = vsel %vm666, %v5462, 0
    %v5536 = vsel %vm666, %v5463, 0
    %v5539 = vsel %vm666, %v5464, 0
    %v5542 = vsel %vm666, %v5465, 0
    %v5545 = vsel %vm666, %v5466, 0
    %v5548 = vsel %vm666, %v5467, 0
    %v5551 = vsel %vm666, %v5468, 0
    %v5554 = vsel %vm666, %v5469, 0
    %v5557 = vsel %vm666, %v5470, 0
    %v5560 = vsel %vm666, %v5471, 0
    %v5563 = vsel %vm666, %v5472, 0
    %v5566 = vsel %vm666, %v5473, 0
    %v5569 = vsel %vm666, %v5474, 0
    %v5572 = vsel %vm666, %v5475, 0
    %v5575 = vsel %vm666, %v5476, 0
    %v5578 = vsel %vm666, %v5477, 0
    %5580 = vmatprep.subr.bf16.mxu0 0
    %5581 = vmatpush1.bf16.msra.mxu0 0
    %5582 = vmatprep.subr.bf16.mxu0 0
    %5583 = vmatpush1.bf16.msra.mxu0 0
    %5584 = vmatprep.subr.bf16.mxu0 0
    %5585 = vmatpush1.bf16.msra.mxu0 %v5507
    %5586 = vmatprep.subr.bf16.mxu0 0
    %5587 = vmatpush1.bf16.msra.mxu0 %v5506
    %5588 = vmatprep.subr.bf16.mxu0 0
    %5589 = vmatpush1.bf16.msra.mxu0 %v5505
    %5590 = vmatprep.subr.bf16.mxu0 0
    %5591 = vmatpush1.bf16.msra.mxu0 %v5504
    %5592 = vmatprep.subr.bf16.mxu0 0
    %5593 = vmatpush1.bf16.msra.mxu0 %v5503
    %5594 = vmatprep.subr.bf16.mxu0 0
    %5595 = vmatpush1.bf16.msra.mxu0 %v5502
    %5596 = vmatprep.subr.bf16.mxu0 0
    %5597 = vmatpush2.bf16.msra.mxu0 0
    %5598 = vmatprep.subr.bf16.mxu0 0
    %5599 = vmatpush2.bf16.msra.mxu0 0
    %5600 = vmatprep.subr.bf16.mxu0 0
    %5601 = vmatpush2.bf16.msra.mxu0 0
    %5602 = vmatprep.subr.bf16.mxu0 0
    %5603 = vmatpush2.bf16.msra.mxu0 0
    %5604 = vmatprep.subr.bf16.mxu0 0
    %5605 = vmatpush2.bf16.msra.mxu0 0
    %5606 = vmatprep.subr.bf16.mxu0 0
    %5607 = vmatpush2.bf16.msra.mxu0 0
    %5608 = vmatprep.subr.bf16.mxu0 0
    %5609 = vmatpush2.bf16.msra.mxu0 0
    %5610 = vmatprep.subr.bf16.mxu0 0
    %5611 = vmatpush2.bf16.msra.mxu0 0
    %5612 = vmatprep.mubr.bf16.mxu0 0
    %5613 = vmatmul.mubr.bf16.gmra.mxu0 %v5515
    %v5614 = vpop.f32.mrf.mxu0
    %v5615 = vadd.f32 0.0, %v5614
    %v5616 = vpop.f32.mrf.mxu0
    %v5617 = vpop.f32.mrf.mxu0
    %v5618 = vadd.f32 0.0, %v5617
    %v5619 = vpop.f32.mrf.mxu0
    %5620 = vmatprep.mubr.bf16.mxu0 0
    %5621 = vmatmul.mubr.bf16.gmra.mxu0 %v5518
    %v5622 = vpop.f32.mrf.mxu0
    %v5623 = vadd.f32 0.0, %v5622
    %v5624 = vpop.f32.mrf.mxu0
    %v5625 = vpop.f32.mrf.mxu0
    %v5626 = vadd.f32 0.0, %v5625
    %v5627 = vpop.f32.mrf.mxu0
    %5628 = vmatprep.mubr.bf16.mxu0 0
    %5629 = vmatmul.mubr.bf16.gmra.mxu0 %v5521
    %v5630 = vpop.f32.mrf.mxu0
    %v5631 = vadd.f32 0.0, %v5630
    %v5632 = vpop.f32.mrf.mxu0
    %v5633 = vpop.f32.mrf.mxu0
    %v5634 = vadd.f32 0.0, %v5633
    %v5635 = vpop.f32.mrf.mxu0
    %5636 = vmatprep.mubr.bf16.mxu0 0
    %5637 = vmatmul.mubr.bf16.gmra.mxu0 %v5524
    %v5638 = vpop.f32.mrf.mxu0
    %v5639 = vadd.f32 0.0, %v5638
    %v5640 = vpop.f32.mrf.mxu0
    %v5641 = vpop.f32.mrf.mxu0
    %v5642 = vadd.f32 0.0, %v5641
    %v5643 = vpop.f32.mrf.mxu0
    %5644 = vmatprep.mubr.bf16.mxu0 0
    %5645 = vmatmul.mubr.bf16.gmra.mxu0 %v5527
    %v5646 = vpop.f32.mrf.mxu0
    %v5647 = vadd.f32 0.0, %v5646
    %v5648 = vpop.f32.mrf.mxu0
    %v5649 = vpop.f32.mrf.mxu0
    %v5650 = vadd.f32 0.0, %v5649
    %v5651 = vpop.f32.mrf.mxu0
    %5652 = vmatprep.mubr.bf16.mxu0 0
    %5653 = vmatmul.mubr.bf16.gmra.mxu0 %v5530
    %v5654 = vpop.f32.mrf.mxu0
    %v5655 = vadd.f32 0.0, %v5654
    %v5656 = vpop.f32.mrf.mxu0
    %v5657 = vpop.f32.mrf.mxu0
    %v5658 = vadd.f32 0.0, %v5657
    %v5659 = vpop.f32.mrf.mxu0
    %5660 = vmatprep.mubr.bf16.mxu0 0
    %5661 = vmatmul.mubr.bf16.gmra.mxu0 %v5533
    %v5662 = vpop.f32.mrf.mxu0
    %v5663 = vadd.f32 0.0, %v5662
    %v5664 = vpop.f32.mrf.mxu0
    %v5665 = vpop.f32.mrf.mxu0
    %v5666 = vadd.f32 0.0, %v5665
    %v5667 = vpop.f32.mrf.mxu0
    %5668 = vmatprep.mubr.bf16.mxu0 0
    %5669 = vmatmul.mubr.bf16.gmra.mxu0 %v5536
    %v5670 = vpop.f32.mrf.mxu0
    %v5671 = vadd.f32 0.0, %v5670
    %v5672 = vpop.f32.mrf.mxu0
    %v5673 = vpop.f32.mrf.mxu0
    %v5674 = vadd.f32 0.0, %v5673
    %v5675 = vpop.f32.mrf.mxu0
    %5676 = vmatprep.mubr.bf16.mxu0 0
    %5677 = vmatmul.mubr.bf16.gmra.mxu0 %v5539
    %v5678 = vpop.f32.mrf.mxu0
    %v5679 = vadd.f32 0.0, %v5678
    %v5680 = vpop.f32.mrf.mxu0
    %v5681 = vpop.f32.mrf.mxu0
    %v5682 = vadd.f32 0.0, %v5681
    %v5683 = vpop.f32.mrf.mxu0
    %5684 = vmatprep.mubr.bf16.mxu0 0
    %5685 = vmatmul.mubr.bf16.gmra.mxu0 %v5542
    %v5686 = vpop.f32.mrf.mxu0
    %v5687 = vadd.f32 0.0, %v5686
    %v5688 = vpop.f32.mrf.mxu0
    %v5689 = vpop.f32.mrf.mxu0
    %v5690 = vadd.f32 0.0, %v5689
    %v5691 = vpop.f32.mrf.mxu0
    %5692 = vmatprep.mubr.bf16.mxu0 0
    %5693 = vmatmul.mubr.bf16.gmra.mxu0 %v5545
    %v5694 = vpop.f32.mrf.mxu0
    %v5695 = vadd.f32 0.0, %v5694
    %v5696 = vpop.f32.mrf.mxu0
    %v5697 = vpop.f32.mrf.mxu0
    %v5698 = vadd.f32 0.0, %v5697
    %v5699 = vpop.f32.mrf.mxu0
    %5700 = vmatprep.mubr.bf16.mxu0 0
    %5701 = vmatmul.mubr.bf16.gmra.mxu0 %v5548
    %v5702 = vpop.f32.mrf.mxu0
    %v5703 = vadd.f32 0.0, %v5702
    %v5704 = vpop.f32.mrf.mxu0
    %v5705 = vpop.f32.mrf.mxu0
    %v5706 = vadd.f32 0.0, %v5705
    %v5707 = vpop.f32.mrf.mxu0
    %5708 = vmatprep.mubr.bf16.mxu0 0
    %5709 = vmatmul.mubr.bf16.gmra.mxu0 %v5551
    %v5710 = vpop.f32.mrf.mxu0
    %v5711 = vadd.f32 0.0, %v5710
    %v5712 = vpop.f32.mrf.mxu0
    %v5713 = vpop.f32.mrf.mxu0
    %v5714 = vadd.f32 0.0, %v5713
    %v5715 = vpop.f32.mrf.mxu0
    %5716 = vmatprep.mubr.bf16.mxu0 0
    %5717 = vmatmul.mubr.bf16.gmra.mxu0 %v5554
    %v5718 = vpop.f32.mrf.mxu0
    %v5719 = vadd.f32 0.0, %v5718
    %v5720 = vpop.f32.mrf.mxu0
    %v5721 = vpop.f32.mrf.mxu0
    %v5722 = vadd.f32 0.0, %v5721
    %v5723 = vpop.f32.mrf.mxu0
    %5724 = vmatprep.mubr.bf16.mxu0 0
    %5725 = vmatmul.mubr.bf16.gmra.mxu0 %v5557
    %v5726 = vpop.f32.mrf.mxu0
    %v5727 = vadd.f32 0.0, %v5726
    %v5728 = vpop.f32.mrf.mxu0
    %v5729 = vpop.f32.mrf.mxu0
    %v5730 = vadd.f32 0.0, %v5729
    %v5731 = vpop.f32.mrf.mxu0
    %5732 = vmatprep.mubr.bf16.mxu0 0
    %5733 = vmatmul.mubr.bf16.gmra.mxu0 %v5560
    %v5734 = vpop.f32.mrf.mxu0
    %v5735 = vadd.f32 0.0, %v5734
    %v5736 = vpop.f32.mrf.mxu0
    %v5737 = vpop.f32.mrf.mxu0
    %v5738 = vadd.f32 0.0, %v5737
    %v5739 = vpop.f32.mrf.mxu0
    %5740 = vmatprep.mubr.bf16.mxu0 0
    %5741 = vmatmul.mubr.bf16.gmra.mxu0 %v5563
    %v5742 = vpop.f32.mrf.mxu0
    %v5743 = vadd.f32 0.0, %v5742
    %v5744 = vpop.f32.mrf.mxu0
    %v5745 = vpop.f32.mrf.mxu0
    %v5746 = vadd.f32 0.0, %v5745
    %v5747 = vpop.f32.mrf.mxu0
    %5748 = vmatprep.mubr.bf16.mxu0 0
    %5749 = vmatmul.mubr.bf16.gmra.mxu0 %v5566
    %v5750 = vpop.f32.mrf.mxu0
    %v5751 = vadd.f32 0.0, %v5750
    %v5752 = vpop.f32.mrf.mxu0
    %v5753 = vpop.f32.mrf.mxu0
    %v5754 = vadd.f32 0.0, %v5753
    %v5755 = vpop.f32.mrf.mxu0
    %5756 = vmatprep.mubr.bf16.mxu0 0
    %5757 = vmatmul.mubr.bf16.gmra.mxu0 %v5569
    %v5758 = vpop.f32.mrf.mxu0
    %v5759 = vadd.f32 0.0, %v5758
    %v5760 = vpop.f32.mrf.mxu0
    %v5761 = vpop.f32.mrf.mxu0
    %v5762 = vadd.f32 0.0, %v5761
    %v5763 = vpop.f32.mrf.mxu0
    %5764 = vmatprep.mubr.bf16.mxu0 0
    %5765 = vmatmul.mubr.bf16.gmra.mxu0 %v5572
    %v5766 = vpop.f32.mrf.mxu0
    %v5767 = vadd.f32 0.0, %v5766
    %v5768 = vpop.f32.mrf.mxu0
    %v5769 = vpop.f32.mrf.mxu0
    %v5770 = vadd.f32 0.0, %v5769
    %v5771 = vpop.f32.mrf.mxu0
    %5772 = vmatprep.mubr.bf16.mxu0 0
    %5773 = vmatmul.mubr.bf16.gmra.mxu0 %v5575
    %v5774 = vpop.f32.mrf.mxu0
    %v5775 = vadd.f32 0.0, %v5774
    %v5776 = vpop.f32.mrf.mxu0
    %v5777 = vpop.f32.mrf.mxu0
    %v5778 = vadd.f32 0.0, %v5777
    %v5779 = vpop.f32.mrf.mxu0
    %5780 = vmatprep.mubr.bf16.mxu0 0
    %5781 = vmatmul.mubr.bf16.gmra.mxu0 %v5578
    %v5782 = vpop.f32.mrf.mxu0
    %v5783 = vadd.f32 0.0, %v5782
    %v5784 = vpop.f32.mrf.mxu0
    %v5785 = vpop.f32.mrf.mxu0
    %v5786 = vadd.f32 0.0, %v5785
    %v5787 = vpop.f32.mrf.mxu0
    %5788 = vdwg.mxu0
    %v5794 = vunpack.c.l.b16 %v5294
    %v5795 = vunpack.c.l.b16 %v5295
    %v5796 = vunpack.c.l.b16 %v5296
    %v5797 = vunpack.c.l.b16 %v5297
    %v5798 = vunpack.c.l.b16 %v5338
    %v5799 = vpack.c.b16 %v5795, %v5794
    %v5800 = vpack.c.b16 %v5797, %v5796
    %v5801 = vpack.c.b16 %v5798, %v5798
    %v5802 = vrot.slane %v5799, 2
    %v5803 = vrot.slane %v5800, 2
    %v5804 = vsel %vm2377, %v5802, %v5803
    %v5805 = vrot.slane %v5456, 2
    %v5806 = vsel %vm2377, %v5803, %v5805
    %v5807 = vrot.slane %v5457, 2
    %v5808 = vsel %vm2377, %v5805, %v5807
    %v5809 = vrot.slane %v5458, 2
    %v5810 = vsel %vm2377, %v5807, %v5809
    %v5811 = vrot.slane %v5459, 2
    %v5812 = vsel %vm2377, %v5809, %v5811
    %v5813 = vrot.slane %v5460, 2
    %v5814 = vsel %vm2377, %v5811, %v5813
    %v5815 = vrot.slane %v5461, 2
    %v5816 = vsel %vm2377, %v5813, %v5815
    %v5817 = vrot.slane %v5462, 2
    %v5818 = vsel %vm2377, %v5815, %v5817
    %v5819 = vrot.slane %v5463, 2
    %v5820 = vsel %vm2377, %v5817, %v5819
    %v5821 = vrot.slane %v5464, 2
    %v5822 = vsel %vm2377, %v5819, %v5821
    %v5823 = vrot.slane %v5465, 2
    %v5824 = vsel %vm2377, %v5821, %v5823
    %v5825 = vrot.slane %v5466, 2
    %v5826 = vsel %vm2377, %v5823, %v5825
    %v5827 = vrot.slane %v5467, 2
    %v5828 = vsel %vm2377, %v5825, %v5827
    %v5829 = vrot.slane %v5468, 2
    %v5830 = vsel %vm2377, %v5827, %v5829
    %v5831 = vrot.slane %v5469, 2
    %v5832 = vsel %vm2377, %v5829, %v5831
    %v5833 = vrot.slane %v5470, 2
    %v5834 = vsel %vm2377, %v5831, %v5833
    %v5835 = vrot.slane %v5471, 2
    %v5836 = vsel %vm2377, %v5833, %v5835
    %v5837 = vrot.slane %v5472, 2
    %v5838 = vsel %vm2377, %v5835, %v5837
    %v5839 = vrot.slane %v5473, 2
    %v5840 = vsel %vm2377, %v5837, %v5839
    %v5841 = vrot.slane %v5474, 2
    %v5842 = vsel %vm2377, %v5839, %v5841
    %v5843 = vrot.slane %v5475, 2
    %v5844 = vsel %vm2377, %v5841, %v5843
    %v5845 = vrot.slane %v5801, 2
    %v5846 = vsel %vm2377, %v5843, %v5845
    %v5859 = vunpack.c.l.b16 %v5339
    %v5860 = vunpack.c.l.b16 %v5340
    %v5861 = vunpack.c.l.b16 %v5341
    %v5862 = vunpack.c.l.b16 %v5342
    %v5863 = vunpack.c.l.b16 %v5343
    %v5864 = vunpack.c.l.b16 %v5344
    %v5865 = vunpack.c.l.b16 %v5345
    %v5866 = vunpack.c.l.b16 %v5346
    %v5867 = vunpack.c.l.b16 %v5347
    %v5868 = vunpack.c.l.b16 %v5348
    %v5869 = vunpack.c.l.b16 %v5349
    %v5870 = vunpack.c.l.b16 %v5350
    %v5871 = vpack.c.b16 %v5860, %v5859
    %v5872 = vpack.c.b16 %v5862, %v5861
    %v5873 = vpack.c.b16 %v5864, %v5863
    %v5874 = vpack.c.b16 %v5866, %v5865
    %v5875 = vpack.c.b16 %v5868, %v5867
    %v5876 = vpack.c.b16 %v5870, %v5869
    %v5884 = vsel %vm666, %v5804, 0
    %v5887 = vsel %vm666, %v5806, 0
    %v5890 = vsel %vm666, %v5808, 0
    %v5893 = vsel %vm666, %v5810, 0
    %v5896 = vsel %vm666, %v5812, 0
    %v5899 = vsel %vm666, %v5814, 0
    %v5902 = vsel %vm666, %v5816, 0
    %v5905 = vsel %vm666, %v5818, 0
    %v5908 = vsel %vm666, %v5820, 0
    %v5911 = vsel %vm666, %v5822, 0
    %v5914 = vsel %vm666, %v5824, 0
    %v5917 = vsel %vm666, %v5826, 0
    %v5920 = vsel %vm666, %v5828, 0
    %v5923 = vsel %vm666, %v5830, 0
    %v5926 = vsel %vm666, %v5832, 0
    %v5929 = vsel %vm666, %v5834, 0
    %v5932 = vsel %vm666, %v5836, 0
    %v5935 = vsel %vm666, %v5838, 0
    %v5938 = vsel %vm666, %v5840, 0
    %v5941 = vsel %vm666, %v5842, 0
    %v5944 = vsel %vm666, %v5844, 0
    %v5947 = vsel %vm666, %v5846, 0
    %5949 = vmatprep.subr.bf16.mxu0 0
    %5950 = vmatpush1.bf16.msra.mxu0 0
    %5951 = vmatprep.subr.bf16.mxu0 0
    %5952 = vmatpush1.bf16.msra.mxu0 0
    %5953 = vmatprep.subr.bf16.mxu0 0
    %5954 = vmatpush1.bf16.msra.mxu0 %v5876
    %5955 = vmatprep.subr.bf16.mxu0 0
    %5956 = vmatpush1.bf16.msra.mxu0 %v5875
    %5957 = vmatprep.subr.bf16.mxu0 0
    %5958 = vmatpush1.bf16.msra.mxu0 %v5874
    %5959 = vmatprep.subr.bf16.mxu0 0
    %5960 = vmatpush1.bf16.msra.mxu0 %v5873
    %5961 = vmatprep.subr.bf16.mxu0 0
    %5962 = vmatpush1.bf16.msra.mxu0 %v5872
    %5963 = vmatprep.subr.bf16.mxu0 0
    %5964 = vmatpush1.bf16.msra.mxu0 %v5871
    %5965 = vmatprep.subr.bf16.mxu0 0
    %5966 = vmatpush2.bf16.msra.mxu0 0
    %5967 = vmatprep.subr.bf16.mxu0 0
    %5968 = vmatpush2.bf16.msra.mxu0 0
    %5969 = vmatprep.subr.bf16.mxu0 0
    %5970 = vmatpush2.bf16.msra.mxu0 0
    %5971 = vmatprep.subr.bf16.mxu0 0
    %5972 = vmatpush2.bf16.msra.mxu0 0
    %5973 = vmatprep.subr.bf16.mxu0 0
    %5974 = vmatpush2.bf16.msra.mxu0 0
    %5975 = vmatprep.subr.bf16.mxu0 0
    %5976 = vmatpush2.bf16.msra.mxu0 0
    %5977 = vmatprep.subr.bf16.mxu0 0
    %5978 = vmatpush2.bf16.msra.mxu0 0
    %5979 = vmatprep.subr.bf16.mxu0 0
    %5980 = vmatpush2.bf16.msra.mxu0 0
    %5981 = vmatprep.mubr.bf16.mxu0 0
    %5982 = vmatmul.mubr.bf16.gmra.mxu0 %v5884
    %v5983 = vpop.f32.mrf.mxu0
    %v5984 = vadd.f32 %v5615, %v5983
    %v5985 = vpop.f32.mrf.mxu0
    %v5986 = vpop.f32.mrf.mxu0
    %v5987 = vadd.f32 %v5618, %v5986
    %v5988 = vpop.f32.mrf.mxu0
    %5989 = vmatprep.mubr.bf16.mxu0 0
    %5990 = vmatmul.mubr.bf16.gmra.mxu0 %v5887
    %v5991 = vpop.f32.mrf.mxu0
    %v5992 = vadd.f32 %v5623, %v5991
    %v5993 = vpop.f32.mrf.mxu0
    %v5994 = vpop.f32.mrf.mxu0
    %v5995 = vadd.f32 %v5626, %v5994
    %v5996 = vpop.f32.mrf.mxu0
    %5997 = vmatprep.mubr.bf16.mxu0 0
    %5998 = vmatmul.mubr.bf16.gmra.mxu0 %v5890
    %v5999 = vpop.f32.mrf.mxu0
    %v6000 = vadd.f32 %v5631, %v5999
    %v6001 = vpop.f32.mrf.mxu0
    %v6002 = vpop.f32.mrf.mxu0
    %v6003 = vadd.f32 %v5634, %v6002
    %v6004 = vpop.f32.mrf.mxu0
    %6005 = vmatprep.mubr.bf16.mxu0 0
    %6006 = vmatmul.mubr.bf16.gmra.mxu0 %v5893
    %v6007 = vpop.f32.mrf.mxu0
    %v6008 = vadd.f32 %v5639, %v6007
    %v6009 = vpop.f32.mrf.mxu0
    %v6010 = vpop.f32.mrf.mxu0
    %v6011 = vadd.f32 %v5642, %v6010
    %v6012 = vpop.f32.mrf.mxu0
    %6013 = vmatprep.mubr.bf16.mxu0 0
    %6014 = vmatmul.mubr.bf16.gmra.mxu0 %v5896
    %v6015 = vpop.f32.mrf.mxu0
    %v6016 = vadd.f32 %v5647, %v6015
    %v6017 = vpop.f32.mrf.mxu0
    %v6018 = vpop.f32.mrf.mxu0
    %v6019 = vadd.f32 %v5650, %v6018
    %v6020 = vpop.f32.mrf.mxu0
    %6021 = vmatprep.mubr.bf16.mxu0 0
    %6022 = vmatmul.mubr.bf16.gmra.mxu0 %v5899
    %v6023 = vpop.f32.mrf.mxu0
    %v6024 = vadd.f32 %v5655, %v6023
    %v6025 = vpop.f32.mrf.mxu0
    %v6026 = vpop.f32.mrf.mxu0
    %v6027 = vadd.f32 %v5658, %v6026
    %v6028 = vpop.f32.mrf.mxu0
    %6029 = vmatprep.mubr.bf16.mxu0 0
    %6030 = vmatmul.mubr.bf16.gmra.mxu0 %v5902
    %v6031 = vpop.f32.mrf.mxu0
    %v6032 = vadd.f32 %v5663, %v6031
    %v6033 = vpop.f32.mrf.mxu0
    %v6034 = vpop.f32.mrf.mxu0
    %v6035 = vadd.f32 %v5666, %v6034
    %v6036 = vpop.f32.mrf.mxu0
    %6037 = vmatprep.mubr.bf16.mxu0 0
    %6038 = vmatmul.mubr.bf16.gmra.mxu0 %v5905
    %v6039 = vpop.f32.mrf.mxu0
    %v6040 = vadd.f32 %v5671, %v6039
    %v6041 = vpop.f32.mrf.mxu0
    %v6042 = vpop.f32.mrf.mxu0
    %v6043 = vadd.f32 %v5674, %v6042
    %v6044 = vpop.f32.mrf.mxu0
    %6045 = vmatprep.mubr.bf16.mxu0 0
    %6046 = vmatmul.mubr.bf16.gmra.mxu0 %v5908
    %v6047 = vpop.f32.mrf.mxu0
    %v6048 = vadd.f32 %v5679, %v6047
    %v6049 = vpop.f32.mrf.mxu0
    %v6050 = vpop.f32.mrf.mxu0
    %v6051 = vadd.f32 %v5682, %v6050
    %v6052 = vpop.f32.mrf.mxu0
    %6053 = vmatprep.mubr.bf16.mxu0 0
    %6054 = vmatmul.mubr.bf16.gmra.mxu0 %v5911
    %v6055 = vpop.f32.mrf.mxu0
    %v6056 = vadd.f32 %v5687, %v6055
    %v6057 = vpop.f32.mrf.mxu0
    %v6058 = vpop.f32.mrf.mxu0
    %v6059 = vadd.f32 %v5690, %v6058
    %v6060 = vpop.f32.mrf.mxu0
    %6061 = vmatprep.mubr.bf16.mxu0 0
    %6062 = vmatmul.mubr.bf16.gmra.mxu0 %v5914
    %v6063 = vpop.f32.mrf.mxu0
    %v6064 = vadd.f32 %v5695, %v6063
    %v6065 = vpop.f32.mrf.mxu0
    %v6066 = vpop.f32.mrf.mxu0
    %v6067 = vadd.f32 %v5698, %v6066
    %v6068 = vpop.f32.mrf.mxu0
    %6069 = vmatprep.mubr.bf16.mxu0 0
    %6070 = vmatmul.mubr.bf16.gmra.mxu0 %v5917
    %v6071 = vpop.f32.mrf.mxu0
    %v6072 = vadd.f32 %v5703, %v6071
    %v6073 = vpop.f32.mrf.mxu0
    %v6074 = vpop.f32.mrf.mxu0
    %v6075 = vadd.f32 %v5706, %v6074
    %v6076 = vpop.f32.mrf.mxu0
    %6077 = vmatprep.mubr.bf16.mxu0 0
    %6078 = vmatmul.mubr.bf16.gmra.mxu0 %v5920
    %v6079 = vpop.f32.mrf.mxu0
    %v6080 = vadd.f32 %v5711, %v6079
    %v6081 = vpop.f32.mrf.mxu0
    %v6082 = vpop.f32.mrf.mxu0
    %v6083 = vadd.f32 %v5714, %v6082
    %v6084 = vpop.f32.mrf.mxu0
    %6085 = vmatprep.mubr.bf16.mxu0 0
    %6086 = vmatmul.mubr.bf16.gmra.mxu0 %v5923
    %v6087 = vpop.f32.mrf.mxu0
    %v6088 = vadd.f32 %v5719, %v6087
    %v6089 = vpop.f32.mrf.mxu0
    %v6090 = vpop.f32.mrf.mxu0
    %v6091 = vadd.f32 %v5722, %v6090
    %v6092 = vpop.f32.mrf.mxu0
    %6093 = vmatprep.mubr.bf16.mxu0 0
    %6094 = vmatmul.mubr.bf16.gmra.mxu0 %v5926
    %v6095 = vpop.f32.mrf.mxu0
    %v6096 = vadd.f32 %v5727, %v6095
    %v6097 = vpop.f32.mrf.mxu0
    %v6098 = vpop.f32.mrf.mxu0
    %v6099 = vadd.f32 %v5730, %v6098
    %v6100 = vpop.f32.mrf.mxu0
    %6101 = vmatprep.mubr.bf16.mxu0 0
    %6102 = vmatmul.mubr.bf16.gmra.mxu0 %v5929
    %v6103 = vpop.f32.mrf.mxu0
    %v6104 = vadd.f32 %v5735, %v6103
    %v6105 = vpop.f32.mrf.mxu0
    %v6106 = vpop.f32.mrf.mxu0
    %v6107 = vadd.f32 %v5738, %v6106
    %v6108 = vpop.f32.mrf.mxu0
    %6109 = vmatprep.mubr.bf16.mxu0 0
    %6110 = vmatmul.mubr.bf16.gmra.mxu0 %v5932
    %v6111 = vpop.f32.mrf.mxu0
    %v6112 = vadd.f32 %v5743, %v6111
    %v6113 = vpop.f32.mrf.mxu0
    %v6114 = vpop.f32.mrf.mxu0
    %v6115 = vadd.f32 %v5746, %v6114
    %v6116 = vpop.f32.mrf.mxu0
    %6117 = vmatprep.mubr.bf16.mxu0 0
    %6118 = vmatmul.mubr.bf16.gmra.mxu0 %v5935
    %v6119 = vpop.f32.mrf.mxu0
    %v6120 = vadd.f32 %v5751, %v6119
    %v6121 = vpop.f32.mrf.mxu0
    %v6122 = vpop.f32.mrf.mxu0
    %v6123 = vadd.f32 %v5754, %v6122
    %v6124 = vpop.f32.mrf.mxu0
    %6125 = vmatprep.mubr.bf16.mxu0 0
    %6126 = vmatmul.mubr.bf16.gmra.mxu0 %v5938
    %v6127 = vpop.f32.mrf.mxu0
    %v6128 = vadd.f32 %v5759, %v6127
    %v6129 = vpop.f32.mrf.mxu0
    %v6130 = vpop.f32.mrf.mxu0
    %v6131 = vadd.f32 %v5762, %v6130
    %v6132 = vpop.f32.mrf.mxu0
    %6133 = vmatprep.mubr.bf16.mxu0 0
    %6134 = vmatmul.mubr.bf16.gmra.mxu0 %v5941
    %v6135 = vpop.f32.mrf.mxu0
    %v6136 = vadd.f32 %v5767, %v6135
    %v6137 = vpop.f32.mrf.mxu0
    %v6138 = vpop.f32.mrf.mxu0
    %v6139 = vadd.f32 %v5770, %v6138
    %v6140 = vpop.f32.mrf.mxu0
    %6141 = vmatprep.mubr.bf16.mxu0 0
    %6142 = vmatmul.mubr.bf16.gmra.mxu0 %v5944
    %v6143 = vpop.f32.mrf.mxu0
    %v6144 = vadd.f32 %v5775, %v6143
    %v6145 = vpop.f32.mrf.mxu0
    %v6146 = vpop.f32.mrf.mxu0
    %v6147 = vadd.f32 %v5778, %v6146
    %v6148 = vpop.f32.mrf.mxu0
    %6149 = vmatprep.mubr.bf16.mxu0 0
    %6150 = vmatmul.mubr.bf16.gmra.mxu0 %v5947
    %v6151 = vpop.f32.mrf.mxu0
    %v6152 = vadd.f32 %v5783, %v6151
    %v6153 = vpop.f32.mrf.mxu0
    %v6154 = vpop.f32.mrf.mxu0
    %v6155 = vadd.f32 %v5786, %v6154
    %v6156 = vpop.f32.mrf.mxu0
    %6157 = vdwg.mxu0
    %6158 = vst [vmem:[#allocation3] sm:$0xff] %v5984
    %6159 = vst [vmem:[#allocation3 + $0x8] sm:$0xff] %v5987
    %6160 = vst [vmem:[#allocation3 + $0x10] sm:$0xff] %v5992
    %6161 = vst [vmem:[#allocation3 + $0x18] sm:$0xff] %v5995
    %6162 = vst [vmem:[#allocation3 + $0x20] sm:$0xff] %v6000
    %6163 = vst [vmem:[#allocation3 + $0x28] sm:$0xff] %v6003
    %6164 = vst [vmem:[#allocation3 + $0x30] sm:$0xff] %v6008
    %6165 = vst [vmem:[#allocation3 + $0x38] sm:$0xff] %v6011
    %6166 = vst [vmem:[#allocation3 + $0x40] sm:$0xff] %v6016
    %6167 = vst [vmem:[#allocation3 + $0x48] sm:$0xff] %v6019
    %6168 = vst [vmem:[#allocation3 + $0x50] sm:$0xff] %v6024
    %6169 = vst [vmem:[#allocation3 + $0x58] sm:$0xff] %v6027
    %6170 = vst [vmem:[#allocation3 + $0x60] sm:$0xff] %v6032
    %6171 = vst [vmem:[#allocation3 + $0x68] sm:$0xff] %v6035
    %6172 = vst [vmem:[#allocation3 + $0x70] sm:$0xff] %v6040
    %6173 = vst [vmem:[#allocation3 + $0x78] sm:$0xff] %v6043
    %6174 = vst [vmem:[#allocation3 + $0x80] sm:$0xff] %v6048
    %6175 = vst [vmem:[#allocation3 + $0x88] sm:$0xff] %v6051
    %6176 = vst [vmem:[#allocation3 + $0x90] sm:$0xff] %v6056
    %6177 = vst [vmem:[#allocation3 + $0x98] sm:$0xff] %v6059
    %6178 = vst [vmem:[#allocation3 + $0xa0] sm:$0xff] %v6064
    %6179 = vst [vmem:[#allocation3 + $0xa8] sm:$0xff] %v6067
    %6180 = vst [vmem:[#allocation3 + $0xb0] sm:$0xff] %v6072
    %6181 = vst [vmem:[#allocation3 + $0xb8] sm:$0xff] %v6075
    %6182 = vst [vmem:[#allocation3 + $0xc0] sm:$0xff] %v6080
    %6183 = vst [vmem:[#allocation3 + $0xc8] sm:$0xff] %v6083
    %6184 = vst [vmem:[#allocation3 + $0xd0] sm:$0xff] %v6088
    %6185 = vst [vmem:[#allocation3 + $0xd8] sm:$0xff] %v6091
    %6186 = vst [vmem:[#allocation3 + $0xe0] sm:$0xff] %v6096
    %6187 = vst [vmem:[#allocation3 + $0xe8] sm:$0xff] %v6099
    %6188 = vst [vmem:[#allocation3 + $0xf0] sm:$0xff] %v6104
    %6189 = vst [vmem:[#allocation3 + $0xf8] sm:$0xff] %v6107
    %6190 = vst [vmem:[#allocation3 + $0x100] sm:$0xff] %v6112
    %6191 = vst [vmem:[#allocation3 + $0x108] sm:$0xff] %v6115
    %6192 = vst [vmem:[#allocation3 + $0x110] sm:$0xff] %v6120
    %6193 = vst [vmem:[#allocation3 + $0x118] sm:$0xff] %v6123
    %6194 = vst [vmem:[#allocation3 + $0x120] sm:$0xff] %v6128
    %6195 = vst [vmem:[#allocation3 + $0x128] sm:$0xff] %v6131
    %6196 = vst [vmem:[#allocation3 + $0x130] sm:$0xff] %v6136
    %6197 = vst [vmem:[#allocation3 + $0x138] sm:$0xff] %v6139
    %6198 = vst [vmem:[#allocation3 + $0x140] sm:$0xff] %v6144
    %6199 = vst [vmem:[#allocation3 + $0x148] sm:$0xff] %v6147
    %6200 = vst [vmem:[#allocation3 + $0x150] sm:$0xff] %v6152
    %6201 = vst [vmem:[#allocation3 + $0x158] sm:$0xff] %v6155
    %v6202 = vld [vmem:[%s0 + $0x1c] sm:$0xc]
    %v6203 = vld [vmem:[%s0 + $0x20] sm:$0xf]
    %v6204 = vld [vmem:[%s0 + $0x24] sm:$0xf]
    %v6205 = vld [vmem:[%s0 + $0x28] sm:$0xf]
    %v6206 = vld [vmem:[%s0 + $0x2c] sm:$0xf]
    %v6207 = vld [vmem:[%s0 + $0x30] sm:$0xf]
    %v6208 = vld [vmem:[%s0 + $0x34] sm:$0xf]
    %v6209 = vld [vmem:[%s0 + $0x38] sm:$0xf]
    %v6210 = vld [vmem:[%s0 + $0x3c] sm:$0xf]
    %v6211 = vld [vmem:[%s0 + $0x40] sm:$0xf]
    %v6212 = vld [vmem:[%s0 + $0x44] sm:$0xf]
    %v6213 = vld [vmem:[%s0 + $0x48] sm:$0xf]
    %v6214 = vld [vmem:[%s0 + $0x4c] sm:$0xf]
    %v6215 = vld [vmem:[%s0 + $0x50] sm:$0xf]
    %v6216 = vld [vmem:[%s0 + $0x54] sm:$0xf]
    %v6217 = vld [vmem:[%s0 + $0x58] sm:$0xf]
    %v6218 = vld [vmem:[%s0 + $0x5c] sm:$0xf]
    %v6219 = vld [vmem:[%s0 + $0x60] sm:$0xf]
    %v6220 = vld [vmem:[%s0 + $0x64] sm:$0xf]
    %v6221 = vld [vmem:[%s0 + $0x68] sm:$0xf]
    %v6222 = vld [vmem:[%s0 + $0x6c] sm:$0xf]
    %v6223 = vld [vmem:[%s0 + $0x70] sm:$0xf]
    %v6224 = vld [vmem:[%s0 + $0x74] sm:$0xf]
    %v6225 = vld [vmem:[%s0 + $0x78] sm:$0xf]
    %v6226 = vld [vmem:[%s0 + $0x7c] sm:$0xf]
    %v6227 = vld [vmem:[%s0 + $0x80] sm:$0xf]
    %v6228 = vld [vmem:[%s0 + $0x84] sm:$0xf]
    %v6229 = vld [vmem:[%s0 + $0x88] sm:$0xf]
    %v6230 = vld [vmem:[%s0 + $0x8c] sm:$0xf]
    %v6231 = vld [vmem:[%s0 + $0x90] sm:$0xf]
    %v6232 = vld [vmem:[%s0 + $0x94] sm:$0xf]
    %v6233 = vld [vmem:[%s0 + $0x98] sm:$0xf]
    %v6234 = vld [vmem:[%s0 + $0x9c] sm:$0xf]
    %v6235 = vld [vmem:[%s0 + $0xa0] sm:$0xf]
    %v6236 = vld [vmem:[%s0 + $0xa4] sm:$0xf]
    %v6237 = vld [vmem:[%s0 + $0xa8] sm:$0xf]
    %v6238 = vld [vmem:[%s0 + $0xac] sm:$0xf]
    %v6239 = vld [vmem:[%s0 + $0xb0] sm:$0xf]
    %v6240 = vld [vmem:[%s0 + $0xb4] sm:$0xf]
    %v6241 = vld [vmem:[%s0 + $0xb8] sm:$0xf]
    %v6242 = vld [vmem:[%s0 + $0xbc] sm:$0xf]
    %v6243 = vld [vmem:[%s0 + $0xc0] sm:$0xf]
    %v6244 = vld [vmem:[%s0 + $0xc4] sm:$0x3]
    %v6245 = vld [vmem:[%s3] sm:$0xf]
    %v6246 = vld [vmem:[%s3 + $0x4] sm:$0xf]
    %v6247 = vld [vmem:[%s3 + $0x8] sm:$0xf]
    %v6248 = vld [vmem:[%s3 + $0xc] sm:$0xf]
    %v6249 = vld [vmem:[%s3 + $0x10] sm:$0xf]
    %v6250 = vld [vmem:[%s3 + $0x14] sm:$0xf]
    %v6251 = vld [vmem:[%s3 + $0x18] sm:$0xf]
    %v6252 = vld [vmem:[%s3 + $0x1c] sm:$0xf]
    %v6253 = vld [vmem:[%s3 + $0x20] sm:$0xf]
    %v6254 = vld [vmem:[%s3 + $0x24] sm:$0xf]
    %v6255 = vld [vmem:[%s3 + $0x28] sm:$0xf]
    %v6256 = vld [vmem:[%s3 + $0x2c] sm:$0xf]
    %v6300 = vunpack.c.l.b16 %v6202
    %v6301 = vunpack.c.l.b16 %v6203
    %v6302 = vunpack.c.l.b16 %v6204
    %v6303 = vunpack.c.l.b16 %v6205
    %v6304 = vunpack.c.l.b16 %v6206
    %v6305 = vunpack.c.l.b16 %v6207
    %v6306 = vunpack.c.l.b16 %v6208
    %v6307 = vunpack.c.l.b16 %v6209
    %v6308 = vunpack.c.l.b16 %v6210
    %v6309 = vunpack.c.l.b16 %v6211
    %v6310 = vunpack.c.l.b16 %v6212
    %v6311 = vunpack.c.l.b16 %v6213
    %v6312 = vunpack.c.l.b16 %v6214
    %v6313 = vunpack.c.l.b16 %v6215
    %v6314 = vunpack.c.l.b16 %v6216
    %v6315 = vunpack.c.l.b16 %v6217
    %v6316 = vunpack.c.l.b16 %v6218
    %v6317 = vunpack.c.l.b16 %v6219
    %v6318 = vunpack.c.l.b16 %v6220
    %v6319 = vunpack.c.l.b16 %v6221
    %v6320 = vunpack.c.l.b16 %v6222
    %v6321 = vunpack.c.l.b16 %v6223
    %v6322 = vunpack.c.l.b16 %v6224
    %v6323 = vunpack.c.l.b16 %v6225
    %v6324 = vunpack.c.l.b16 %v6226
    %v6325 = vunpack.c.l.b16 %v6227
    %v6326 = vunpack.c.l.b16 %v6228
    %v6327 = vunpack.c.l.b16 %v6229
    %v6328 = vunpack.c.l.b16 %v6230
    %v6329 = vunpack.c.l.b16 %v6231
    %v6330 = vunpack.c.l.b16 %v6232
    %v6331 = vunpack.c.l.b16 %v6233
    %v6332 = vunpack.c.l.b16 %v6234
    %v6333 = vunpack.c.l.b16 %v6235
    %v6334 = vunpack.c.l.b16 %v6236
    %v6335 = vunpack.c.l.b16 %v6237
    %v6336 = vunpack.c.l.b16 %v6238
    %v6337 = vunpack.c.l.b16 %v6239
    %v6338 = vunpack.c.l.b16 %v6240
    %v6339 = vunpack.c.l.b16 %v6241
    %v6340 = vunpack.c.l.b16 %v6242
    %v6341 = vunpack.c.l.b16 %v6243
    %v6342 = vunpack.c.l.b16 %v6244
    %v6343 = vpack.c.b16 %v6301, %v6300
    %v6344 = vpack.c.b16 %v6303, %v6302
    %v6345 = vpack.c.b16 %v6305, %v6304
    %v6346 = vpack.c.b16 %v6307, %v6306
    %v6347 = vpack.c.b16 %v6309, %v6308
    %v6348 = vpack.c.b16 %v6311, %v6310
    %v6349 = vpack.c.b16 %v6313, %v6312
    %v6350 = vpack.c.b16 %v6315, %v6314
    %v6351 = vpack.c.b16 %v6317, %v6316
    %v6352 = vpack.c.b16 %v6319, %v6318
    %v6353 = vpack.c.b16 %v6321, %v6320
    %v6354 = vpack.c.b16 %v6323, %v6322
    %v6355 = vpack.c.b16 %v6325, %v6324
    %v6356 = vpack.c.b16 %v6327, %v6326
    %v6357 = vpack.c.b16 %v6329, %v6328
    %v6358 = vpack.c.b16 %v6331, %v6330
    %v6359 = vpack.c.b16 %v6333, %v6332
    %v6360 = vpack.c.b16 %v6335, %v6334
    %v6361 = vpack.c.b16 %v6337, %v6336
    %v6362 = vpack.c.b16 %v6339, %v6338
    %v6363 = vpack.c.b16 %v6341, %v6340
    %v6364 = vpack.c.b16 %v6342, %v6342
    %v6365 = vrot.slane %v6343, 2
    %v6366 = vrot.slane %v6344, 2
    %v6367 = vsel %vm2377, %v6365, %v6366
    %v6368 = vrot.slane %v6345, 2
    %v6369 = vsel %vm2377, %v6366, %v6368
    %v6370 = vrot.slane %v6346, 2
    %v6371 = vsel %vm2377, %v6368, %v6370
    %v6372 = vrot.slane %v6347, 2
    %v6373 = vsel %vm2377, %v6370, %v6372
    %v6374 = vrot.slane %v6348, 2
    %v6375 = vsel %vm2377, %v6372, %v6374
    %v6376 = vrot.slane %v6349, 2
    %v6377 = vsel %vm2377, %v6374, %v6376
    %v6378 = vrot.slane %v6350, 2
    %v6379 = vsel %vm2377, %v6376, %v6378
    %v6380 = vrot.slane %v6351, 2
    %v6381 = vsel %vm2377, %v6378, %v6380
    %v6382 = vrot.slane %v6352, 2
    %v6383 = vsel %vm2377, %v6380, %v6382
    %v6384 = vrot.slane %v6353, 2
    %v6385 = vsel %vm2377, %v6382, %v6384
    %v6386 = vrot.slane %v6354, 2
    %v6387 = vsel %vm2377, %v6384, %v6386
    %v6388 = vrot.slane %v6355, 2
    %v6389 = vsel %vm2377, %v6386, %v6388
    %v6390 = vrot.slane %v6356, 2
    %v6391 = vsel %vm2377, %v6388, %v6390
    %v6392 = vrot.slane %v6357, 2
    %v6393 = vsel %vm2377, %v6390, %v6392
    %v6394 = vrot.slane %v6358, 2
    %v6395 = vsel %vm2377, %v6392, %v6394
    %v6396 = vrot.slane %v6359, 2
    %v6397 = vsel %vm2377, %v6394, %v6396
    %v6398 = vrot.slane %v6360, 2
    %v6399 = vsel %vm2377, %v6396, %v6398
    %v6400 = vrot.slane %v6361, 2
    %v6401 = vsel %vm2377, %v6398, %v6400
    %v6402 = vrot.slane %v6362, 2
    %v6403 = vsel %vm2377, %v6400, %v6402
    %v6404 = vrot.slane %v6363, 2
    %v6405 = vsel %vm2377, %v6402, %v6404
    %v6406 = vrot.slane %v6364, 2
    %v6407 = vsel %vm2377, %v6404, %v6406
    %v6420 = vunpack.c.l.b16 %v6245
    %v6421 = vunpack.c.l.b16 %v6246
    %v6422 = vunpack.c.l.b16 %v6247
    %v6423 = vunpack.c.l.b16 %v6248
    %v6424 = vunpack.c.l.b16 %v6249
    %v6425 = vunpack.c.l.b16 %v6250
    %v6426 = vunpack.c.l.b16 %v6251
    %v6427 = vunpack.c.l.b16 %v6252
    %v6428 = vunpack.c.l.b16 %v6253
    %v6429 = vunpack.c.l.b16 %v6254
    %v6430 = vunpack.c.l.b16 %v6255
    %v6431 = vunpack.c.l.b16 %v6256
    %v6432 = vpack.c.b16 %v6421, %v6420
    %v6433 = vpack.c.b16 %v6423, %v6422
    %v6434 = vpack.c.b16 %v6425, %v6424
    %v6435 = vpack.c.b16 %v6427, %v6426
    %v6436 = vpack.c.b16 %v6429, %v6428
    %v6437 = vpack.c.b16 %v6431, %v6430
    %v6445 = vsel %vm666, %v6367, 0
    %v6448 = vsel %vm666, %v6369, 0
    %v6451 = vsel %vm666, %v6371, 0
    %v6454 = vsel %vm666, %v6373, 0
    %v6457 = vsel %vm666, %v6375, 0
    %v6460 = vsel %vm666, %v6377, 0
    %v6463 = vsel %vm666, %v6379, 0
    %v6466 = vsel %vm666, %v6381, 0
    %v6469 = vsel %vm666, %v6383, 0
    %v6472 = vsel %vm666, %v6385, 0
    %v6475 = vsel %vm666, %v6387, 0
    %v6478 = vsel %vm666, %v6389, 0
    %v6481 = vsel %vm666, %v6391, 0
    %v6484 = vsel %vm666, %v6393, 0
    %v6487 = vsel %vm666, %v6395, 0
    %v6490 = vsel %vm666, %v6397, 0
    %v6493 = vsel %vm666, %v6399, 0
    %v6496 = vsel %vm666, %v6401, 0
    %v6499 = vsel %vm666, %v6403, 0
    %v6502 = vsel %vm666, %v6405, 0
    %v6505 = vsel %vm666, %v6407, 0
    %6507 = vmatprep.subr.bf16.mxu0 0
    %6508 = vmatpush1.bf16.msra.mxu0 0
    %6509 = vmatprep.subr.bf16.mxu0 0
    %6510 = vmatpush1.bf16.msra.mxu0 0
    %6511 = vmatprep.subr.bf16.mxu0 0
    %6512 = vmatpush1.bf16.msra.mxu0 %v6437
    %6513 = vmatprep.subr.bf16.mxu0 0
    %6514 = vmatpush1.bf16.msra.mxu0 %v6436
    %6515 = vmatprep.subr.bf16.mxu0 0
    %6516 = vmatpush1.bf16.msra.mxu0 %v6435
    %6517 = vmatprep.subr.bf16.mxu0 0
    %6518 = vmatpush1.bf16.msra.mxu0 %v6434
    %6519 = vmatprep.subr.bf16.mxu0 0
    %6520 = vmatpush1.bf16.msra.mxu0 %v6433
    %6521 = vmatprep.subr.bf16.mxu0 0
    %6522 = vmatpush1.bf16.msra.mxu0 %v6432
    %6523 = vmatprep.subr.bf16.mxu0 0
    %6524 = vmatpush2.bf16.msra.mxu0 0
    %6525 = vmatprep.subr.bf16.mxu0 0
    %6526 = vmatpush2.bf16.msra.mxu0 0
    %6527 = vmatprep.subr.bf16.mxu0 0
    %6528 = vmatpush2.bf16.msra.mxu0 0
    %6529 = vmatprep.subr.bf16.mxu0 0
    %6530 = vmatpush2.bf16.msra.mxu0 0
    %6531 = vmatprep.subr.bf16.mxu0 0
    %6532 = vmatpush2.bf16.msra.mxu0 0
    %6533 = vmatprep.subr.bf16.mxu0 0
    %6534 = vmatpush2.bf16.msra.mxu0 0
    %6535 = vmatprep.subr.bf16.mxu0 0
    %6536 = vmatpush2.bf16.msra.mxu0 0
    %6537 = vmatprep.subr.bf16.mxu0 0
    %6538 = vmatpush2.bf16.msra.mxu0 0
    %6539 = vmatprep.mubr.bf16.mxu0 0
    %6540 = vmatmul.mubr.bf16.gmra.mxu0 %v6445
    %v6541 = vpop.f32.mrf.mxu0
    %v6542 = vadd.f32 0.0, %v6541
    %v6543 = vpop.f32.mrf.mxu0
    %v6544 = vpop.f32.mrf.mxu0
    %v6545 = vadd.f32 0.0, %v6544
    %v6546 = vpop.f32.mrf.mxu0
    %6547 = vmatprep.mubr.bf16.mxu0 0
    %6548 = vmatmul.mubr.bf16.gmra.mxu0 %v6448
    %v6549 = vpop.f32.mrf.mxu0
    %v6550 = vadd.f32 0.0, %v6549
    %v6551 = vpop.f32.mrf.mxu0
    %v6552 = vpop.f32.mrf.mxu0
    %v6553 = vadd.f32 0.0, %v6552
    %v6554 = vpop.f32.mrf.mxu0
    %6555 = vmatprep.mubr.bf16.mxu0 0
    %6556 = vmatmul.mubr.bf16.gmra.mxu0 %v6451
    %v6557 = vpop.f32.mrf.mxu0
    %v6558 = vadd.f32 0.0, %v6557
    %v6559 = vpop.f32.mrf.mxu0
    %v6560 = vpop.f32.mrf.mxu0
    %v6561 = vadd.f32 0.0, %v6560
    %v6562 = vpop.f32.mrf.mxu0
    %6563 = vmatprep.mubr.bf16.mxu0 0
    %6564 = vmatmul.mubr.bf16.gmra.mxu0 %v6454
    %v6565 = vpop.f32.mrf.mxu0
    %v6566 = vadd.f32 0.0, %v6565
    %v6567 = vpop.f32.mrf.mxu0
    %v6568 = vpop.f32.mrf.mxu0
    %v6569 = vadd.f32 0.0, %v6568
    %v6570 = vpop.f32.mrf.mxu0
    %6571 = vmatprep.mubr.bf16.mxu0 0
    %6572 = vmatmul.mubr.bf16.gmra.mxu0 %v6457
    %v6573 = vpop.f32.mrf.mxu0
    %v6574 = vadd.f32 0.0, %v6573
    %v6575 = vpop.f32.mrf.mxu0
    %v6576 = vpop.f32.mrf.mxu0
    %v6577 = vadd.f32 0.0, %v6576
    %v6578 = vpop.f32.mrf.mxu0
    %6579 = vmatprep.mubr.bf16.mxu0 0
    %6580 = vmatmul.mubr.bf16.gmra.mxu0 %v6460
    %v6581 = vpop.f32.mrf.mxu0
    %v6582 = vadd.f32 0.0, %v6581
    %v6583 = vpop.f32.mrf.mxu0
    %v6584 = vpop.f32.mrf.mxu0
    %v6585 = vadd.f32 0.0, %v6584
    %v6586 = vpop.f32.mrf.mxu0
    %6587 = vmatprep.mubr.bf16.mxu0 0
    %6588 = vmatmul.mubr.bf16.gmra.mxu0 %v6463
    %v6589 = vpop.f32.mrf.mxu0
    %v6590 = vadd.f32 0.0, %v6589
    %v6591 = vpop.f32.mrf.mxu0
    %v6592 = vpop.f32.mrf.mxu0
    %v6593 = vadd.f32 0.0, %v6592
    %v6594 = vpop.f32.mrf.mxu0
    %6595 = vmatprep.mubr.bf16.mxu0 0
    %6596 = vmatmul.mubr.bf16.gmra.mxu0 %v6466
    %v6597 = vpop.f32.mrf.mxu0
    %v6598 = vadd.f32 0.0, %v6597
    %v6599 = vpop.f32.mrf.mxu0
    %v6600 = vpop.f32.mrf.mxu0
    %v6601 = vadd.f32 0.0, %v6600
    %v6602 = vpop.f32.mrf.mxu0
    %6603 = vmatprep.mubr.bf16.mxu0 0
    %6604 = vmatmul.mubr.bf16.gmra.mxu0 %v6469
    %v6605 = vpop.f32.mrf.mxu0
    %v6606 = vadd.f32 0.0, %v6605
    %v6607 = vpop.f32.mrf.mxu0
    %v6608 = vpop.f32.mrf.mxu0
    %v6609 = vadd.f32 0.0, %v6608
    %v6610 = vpop.f32.mrf.mxu0
    %6611 = vmatprep.mubr.bf16.mxu0 0
    %6612 = vmatmul.mubr.bf16.gmra.mxu0 %v6472
    %v6613 = vpop.f32.mrf.mxu0
    %v6614 = vadd.f32 0.0, %v6613
    %v6615 = vpop.f32.mrf.mxu0
    %v6616 = vpop.f32.mrf.mxu0
    %v6617 = vadd.f32 0.0, %v6616
    %v6618 = vpop.f32.mrf.mxu0
    %6619 = vmatprep.mubr.bf16.mxu0 0
    %6620 = vmatmul.mubr.bf16.gmra.mxu0 %v6475
    %v6621 = vpop.f32.mrf.mxu0
    %v6622 = vadd.f32 0.0, %v6621
    %v6623 = vpop.f32.mrf.mxu0
    %v6624 = vpop.f32.mrf.mxu0
    %v6625 = vadd.f32 0.0, %v6624
    %v6626 = vpop.f32.mrf.mxu0
    %6627 = vmatprep.mubr.bf16.mxu0 0
    %6628 = vmatmul.mubr.bf16.gmra.mxu0 %v6478
    %v6629 = vpop.f32.mrf.mxu0
    %v6630 = vadd.f32 0.0, %v6629
    %v6631 = vpop.f32.mrf.mxu0
    %v6632 = vpop.f32.mrf.mxu0
    %v6633 = vadd.f32 0.0, %v6632
    %v6634 = vpop.f32.mrf.mxu0
    %6635 = vmatprep.mubr.bf16.mxu0 0
    %6636 = vmatmul.mubr.bf16.gmra.mxu0 %v6481
    %v6637 = vpop.f32.mrf.mxu0
    %v6638 = vadd.f32 0.0, %v6637
    %v6639 = vpop.f32.mrf.mxu0
    %v6640 = vpop.f32.mrf.mxu0
    %v6641 = vadd.f32 0.0, %v6640
    %v6642 = vpop.f32.mrf.mxu0
    %6643 = vmatprep.mubr.bf16.mxu0 0
    %6644 = vmatmul.mubr.bf16.gmra.mxu0 %v6484
    %v6645 = vpop.f32.mrf.mxu0
    %v6646 = vadd.f32 0.0, %v6645
    %v6647 = vpop.f32.mrf.mxu0
    %v6648 = vpop.f32.mrf.mxu0
    %v6649 = vadd.f32 0.0, %v6648
    %v6650 = vpop.f32.mrf.mxu0
    %6651 = vmatprep.mubr.bf16.mxu0 0
    %6652 = vmatmul.mubr.bf16.gmra.mxu0 %v6487
    %v6653 = vpop.f32.mrf.mxu0
    %v6654 = vadd.f32 0.0, %v6653
    %v6655 = vpop.f32.mrf.mxu0
    %v6656 = vpop.f32.mrf.mxu0
    %v6657 = vadd.f32 0.0, %v6656
    %v6658 = vpop.f32.mrf.mxu0
    %6659 = vmatprep.mubr.bf16.mxu0 0
    %6660 = vmatmul.mubr.bf16.gmra.mxu0 %v6490
    %v6661 = vpop.f32.mrf.mxu0
    %v6662 = vadd.f32 0.0, %v6661
    %v6663 = vpop.f32.mrf.mxu0
    %v6664 = vpop.f32.mrf.mxu0
    %v6665 = vadd.f32 0.0, %v6664
    %v6666 = vpop.f32.mrf.mxu0
    %6667 = vmatprep.mubr.bf16.mxu0 0
    %6668 = vmatmul.mubr.bf16.gmra.mxu0 %v6493
    %v6669 = vpop.f32.mrf.mxu0
    %v6670 = vadd.f32 0.0, %v6669
    %v6671 = vpop.f32.mrf.mxu0
    %v6672 = vpop.f32.mrf.mxu0
    %v6673 = vadd.f32 0.0, %v6672
    %v6674 = vpop.f32.mrf.mxu0
    %6675 = vmatprep.mubr.bf16.mxu0 0
    %6676 = vmatmul.mubr.bf16.gmra.mxu0 %v6496
    %v6677 = vpop.f32.mrf.mxu0
    %v6678 = vadd.f32 0.0, %v6677
    %v6679 = vpop.f32.mrf.mxu0
    %v6680 = vpop.f32.mrf.mxu0
    %v6681 = vadd.f32 0.0, %v6680
    %v6682 = vpop.f32.mrf.mxu0
    %6683 = vmatprep.mubr.bf16.mxu0 0
    %6684 = vmatmul.mubr.bf16.gmra.mxu0 %v6499
    %v6685 = vpop.f32.mrf.mxu0
    %v6686 = vadd.f32 0.0, %v6685
    %v6687 = vpop.f32.mrf.mxu0
    %v6688 = vpop.f32.mrf.mxu0
    %v6689 = vadd.f32 0.0, %v6688
    %v6690 = vpop.f32.mrf.mxu0
    %6691 = vmatprep.mubr.bf16.mxu0 0
    %6692 = vmatmul.mubr.bf16.gmra.mxu0 %v6502
    %v6693 = vpop.f32.mrf.mxu0
    %v6694 = vadd.f32 0.0, %v6693
    %v6695 = vpop.f32.mrf.mxu0
    %v6696 = vpop.f32.mrf.mxu0
    %v6697 = vadd.f32 0.0, %v6696
    %v6698 = vpop.f32.mrf.mxu0
    %6699 = vmatprep.mubr.bf16.mxu0 0
    %6700 = vmatmul.mubr.bf16.gmra.mxu0 %v6505
    %v6701 = vpop.f32.mrf.mxu0
    %v6702 = vadd.f32 0.0, %v6701
    %v6703 = vpop.f32.mrf.mxu0
    %v6704 = vpop.f32.mrf.mxu0
    %v6705 = vadd.f32 0.0, %v6704
    %v6706 = vpop.f32.mrf.mxu0
    %6707 = vdwg.mxu0
    %v6708 = vld [vmem:[#allocation2] sm:$0xff]
    %v6709 = vld [vmem:[#allocation2 + $0x8] sm:$0xff]
    %v6710 = vld [vmem:[#allocation2 + $0x10] sm:$0xff]
    %v6711 = vld [vmem:[#allocation2 + $0x18] sm:$0xff]
    %v6712 = vld [vmem:[#allocation2 + $0x20] sm:$0xff]
    %v6713 = vld [vmem:[#allocation2 + $0x28] sm:$0xff]
    %v6714 = vld [vmem:[#allocation2 + $0x30] sm:$0xff]
    %v6715 = vld [vmem:[#allocation2 + $0x38] sm:$0xff]
    %v6716 = vld [vmem:[#allocation2 + $0x40] sm:$0xff]
    %v6717 = vld [vmem:[#allocation2 + $0x48] sm:$0xff]
    %v6718 = vld [vmem:[#allocation2 + $0x50] sm:$0xff]
    %v6719 = vld [vmem:[#allocation2 + $0x58] sm:$0xff]
    %v6720 = vld [vmem:[#allocation2 + $0x60] sm:$0xff]
    %v6721 = vld [vmem:[#allocation2 + $0x68] sm:$0xff]
    %v6722 = vld [vmem:[#allocation2 + $0x70] sm:$0xff]
    %v6723 = vld [vmem:[#allocation2 + $0x78] sm:$0xff]
    %v6724 = vld [vmem:[#allocation2 + $0x80] sm:$0xff]
    %v6725 = vld [vmem:[#allocation2 + $0x88] sm:$0xff]
    %v6726 = vld [vmem:[#allocation2 + $0x90] sm:$0xff]
    %v6727 = vld [vmem:[#allocation2 + $0x98] sm:$0xff]
    %v6728 = vld [vmem:[#allocation2 + $0xa0] sm:$0xff]
    %v6729 = vld [vmem:[#allocation2 + $0xa8] sm:$0xff]
    %v6730 = vld [vmem:[#allocation2 + $0xb0] sm:$0xff]
    %v6731 = vld [vmem:[#allocation2 + $0xb8] sm:$0xff]
    %v6732 = vld [vmem:[#allocation2 + $0xc0] sm:$0xff]
    %v6733 = vld [vmem:[#allocation2 + $0xc8] sm:$0xff]
    %v6734 = vld [vmem:[#allocation2 + $0xd0] sm:$0xff]
    %v6735 = vld [vmem:[#allocation2 + $0xd8] sm:$0xff]
    %v6736 = vld [vmem:[#allocation2 + $0xe0] sm:$0xff]
    %v6737 = vld [vmem:[#allocation2 + $0xe8] sm:$0xff]
    %v6738 = vld [vmem:[#allocation2 + $0xf0] sm:$0xff]
    %v6739 = vld [vmem:[#allocation2 + $0xf8] sm:$0xff]
    %v6740 = vld [vmem:[#allocation2 + $0x100] sm:$0xff]
    %v6741 = vld [vmem:[#allocation2 + $0x108] sm:$0xff]
    %v6742 = vld [vmem:[#allocation2 + $0x110] sm:$0xff]
    %v6743 = vld [vmem:[#allocation2 + $0x118] sm:$0xff]
    %v6744 = vld [vmem:[#allocation2 + $0x120] sm:$0xff]
    %v6745 = vld [vmem:[#allocation2 + $0x128] sm:$0xff]
    %v6746 = vld [vmem:[#allocation2 + $0x130] sm:$0xff]
    %v6747 = vld [vmem:[#allocation2 + $0x138] sm:$0xff]
    %v6748 = vld [vmem:[#allocation2 + $0x140] sm:$0xff]
    %v6749 = vld [vmem:[#allocation2 + $0x148] sm:$0xff]
    %v6750 = vld [vmem:[#allocation2 + $0x1] sm:$0xff]
    %v6751 = vld [vmem:[#allocation2 + $0x9] sm:$0xff]
    %v6752 = vld [vmem:[#allocation2 + $0x11] sm:$0xff]
    %v6753 = vld [vmem:[#allocation2 + $0x19] sm:$0xff]
    %v6754 = vld [vmem:[#allocation2 + $0x21] sm:$0xff]
    %v6755 = vld [vmem:[#allocation2 + $0x29] sm:$0xff]
    %v6756 = vld [vmem:[#allocation2 + $0x31] sm:$0xff]
    %v6757 = vld [vmem:[#allocation2 + $0x39] sm:$0xff]
    %v6758 = vld [vmem:[#allocation2 + $0x41] sm:$0xff]
    %v6759 = vld [vmem:[#allocation2 + $0x49] sm:$0xff]
    %v6760 = vld [vmem:[#allocation2 + $0x51] sm:$0xff]
    %v6761 = vld [vmem:[#allocation2 + $0x59] sm:$0xff]
    %v6762 = vld [vmem:[#allocation2 + $0x61] sm:$0xff]
    %v6763 = vld [vmem:[#allocation2 + $0x69] sm:$0xff]
    %v6764 = vld [vmem:[#allocation2 + $0x71] sm:$0xff]
    %v6765 = vld [vmem:[#allocation2 + $0x79] sm:$0xff]
    %v6766 = vld [vmem:[#allocation2 + $0x81] sm:$0xff]
    %v6767 = vld [vmem:[#allocation2 + $0x89] sm:$0xff]
    %v6768 = vld [vmem:[#allocation2 + $0x91] sm:$0xff]
    %v6769 = vld [vmem:[#allocation2 + $0x99] sm:$0xff]
    %v6770 = vld [vmem:[#allocation2 + $0xa1] sm:$0xff]
    %v6771 = vld [vmem:[#allocation2 + $0xa9] sm:$0xff]
    %v6772 = vld [vmem:[#allocation2 + $0xb1] sm:$0xff]
    %v6773 = vld [vmem:[#allocation2 + $0xb9] sm:$0xff]
    %v6774 = vld [vmem:[#allocation2 + $0xc1] sm:$0xff]
    %v6775 = vld [vmem:[#allocation2 + $0xc9] sm:$0xff]
    %v6776 = vld [vmem:[#allocation2 + $0xd1] sm:$0xff]
    %v6777 = vld [vmem:[#allocation2 + $0xd9] sm:$0xff]
    %v6778 = vld [vmem:[#allocation2 + $0xe1] sm:$0xff]
    %v6779 = vld [vmem:[#allocation2 + $0xe9] sm:$0xff]
    %v6780 = vld [vmem:[#allocation2 + $0xf1] sm:$0xff]
    %v6781 = vld [vmem:[#allocation2 + $0xf9] sm:$0xff]
    %v6782 = vld [vmem:[#allocation2 + $0x101] sm:$0xff]
    %v6783 = vld [vmem:[#allocation2 + $0x109] sm:$0xff]
    %v6784 = vld [vmem:[#allocation2 + $0x111] sm:$0xff]
    %v6785 = vld [vmem:[#allocation2 + $0x119] sm:$0xff]
    %v6786 = vld [vmem:[#allocation2 + $0x121] sm:$0xff]
    %v6787 = vld [vmem:[#allocation2 + $0x129] sm:$0xff]
    %v6788 = vld [vmem:[#allocation2 + $0x131] sm:$0xff]
    %v6789 = vld [vmem:[#allocation2 + $0x139] sm:$0xff]
    %v6790 = vld [vmem:[#allocation2 + $0x141] sm:$0xff]
    %v6791 = vld [vmem:[#allocation2 + $0x149] sm:$0xff]
    %6834 = vrot.lane.b32.xlu0 %v6750, 64
    %v6835 = vpop.permute.xlu0 %6834
    %6836 = vrot.lane.b32.xlu0 %v6751, 64
    %v6837 = vpop.permute.xlu0 %6836
    %6838 = vrot.lane.b32.xlu0 %v6752, 64
    %v6839 = vpop.permute.xlu0 %6838
    %6840 = vrot.lane.b32.xlu0 %v6753, 64
    %v6841 = vpop.permute.xlu0 %6840
    %6842 = vrot.lane.b32.xlu0 %v6754, 64
    %v6843 = vpop.permute.xlu0 %6842
    %6844 = vrot.lane.b32.xlu0 %v6755, 64
    %v6845 = vpop.permute.xlu0 %6844
    %6846 = vrot.lane.b32.xlu0 %v6756, 64
    %v6847 = vpop.permute.xlu0 %6846
    %6848 = vrot.lane.b32.xlu0 %v6757, 64
    %v6849 = vpop.permute.xlu0 %6848
    %6850 = vrot.lane.b32.xlu0 %v6758, 64
    %v6851 = vpop.permute.xlu0 %6850
    %6852 = vrot.lane.b32.xlu0 %v6759, 64
    %v6853 = vpop.permute.xlu0 %6852
    %6854 = vrot.lane.b32.xlu0 %v6760, 64
    %v6855 = vpop.permute.xlu0 %6854
    %6856 = vrot.lane.b32.xlu0 %v6761, 64
    %v6857 = vpop.permute.xlu0 %6856
    %6858 = vrot.lane.b32.xlu0 %v6762, 64
    %v6859 = vpop.permute.xlu0 %6858
    %6860 = vrot.lane.b32.xlu0 %v6763, 64
    %v6861 = vpop.permute.xlu0 %6860
    %6862 = vrot.lane.b32.xlu0 %v6764, 64
    %v6863 = vpop.permute.xlu0 %6862
    %6864 = vrot.lane.b32.xlu0 %v6765, 64
    %v6865 = vpop.permute.xlu0 %6864
    %6866 = vrot.lane.b32.xlu0 %v6766, 64
    %v6867 = vpop.permute.xlu0 %6866
    %6868 = vrot.lane.b32.xlu0 %v6767, 64
    %v6869 = vpop.permute.xlu0 %6868
    %6870 = vrot.lane.b32.xlu0 %v6768, 64
    %v6871 = vpop.permute.xlu0 %6870
    %6872 = vrot.lane.b32.xlu0 %v6769, 64
    %v6873 = vpop.permute.xlu0 %6872
    %6874 = vrot.lane.b32.xlu0 %v6770, 64
    %v6875 = vpop.permute.xlu0 %6874
    %6876 = vrot.lane.b32.xlu0 %v6771, 64
    %v6877 = vpop.permute.xlu0 %6876
    %6878 = vrot.lane.b32.xlu0 %v6772, 64
    %v6879 = vpop.permute.xlu0 %6878
    %6880 = vrot.lane.b32.xlu0 %v6773, 64
    %v6881 = vpop.permute.xlu0 %6880
    %6882 = vrot.lane.b32.xlu0 %v6774, 64
    %v6883 = vpop.permute.xlu0 %6882
    %6884 = vrot.lane.b32.xlu0 %v6775, 64
    %v6885 = vpop.permute.xlu0 %6884
    %6886 = vrot.lane.b32.xlu0 %v6776, 64
    %v6887 = vpop.permute.xlu0 %6886
    %6888 = vrot.lane.b32.xlu0 %v6777, 64
    %v6889 = vpop.permute.xlu0 %6888
    %6890 = vrot.lane.b32.xlu0 %v6778, 64
    %v6891 = vpop.permute.xlu0 %6890
    %6892 = vrot.lane.b32.xlu0 %v6779, 64
    %v6893 = vpop.permute.xlu0 %6892
    %6894 = vrot.lane.b32.xlu0 %v6780, 64
    %v6895 = vpop.permute.xlu0 %6894
    %6896 = vrot.lane.b32.xlu0 %v6781, 64
    %v6897 = vpop.permute.xlu0 %6896
    %6898 = vrot.lane.b32.xlu0 %v6782, 64
    %v6899 = vpop.permute.xlu0 %6898
    %6900 = vrot.lane.b32.xlu0 %v6783, 64
    %v6901 = vpop.permute.xlu0 %6900
    %6902 = vrot.lane.b32.xlu0 %v6784, 64
    %v6903 = vpop.permute.xlu0 %6902
    %6904 = vrot.lane.b32.xlu0 %v6785, 64
    %v6905 = vpop.permute.xlu0 %6904
    %6906 = vrot.lane.b32.xlu0 %v6786, 64
    %v6907 = vpop.permute.xlu0 %6906
    %6908 = vrot.lane.b32.xlu0 %v6787, 64
    %v6909 = vpop.permute.xlu0 %6908
    %6910 = vrot.lane.b32.xlu0 %v6788, 64
    %v6911 = vpop.permute.xlu0 %6910
    %6912 = vrot.lane.b32.xlu0 %v6789, 64
    %v6913 = vpop.permute.xlu0 %6912
    %6914 = vrot.lane.b32.xlu0 %v6790, 64
    %v6915 = vpop.permute.xlu0 %6914
    %6916 = vrot.lane.b32.xlu0 %v6791, 64
    %v6917 = vpop.permute.xlu0 %6916
    %v6960 = vadd.f32 %v6708, %v6835
    %v6961 = vadd.f32 %v6709, %v6837
    %v6962 = vadd.f32 %v6710, %v6839
    %v6963 = vadd.f32 %v6711, %v6841
    %v6964 = vadd.f32 %v6712, %v6843
    %v6965 = vadd.f32 %v6713, %v6845
    %v6966 = vadd.f32 %v6714, %v6847
    %v6967 = vadd.f32 %v6715, %v6849
    %v6968 = vadd.f32 %v6716, %v6851
    %v6969 = vadd.f32 %v6717, %v6853
    %v6970 = vadd.f32 %v6718, %v6855
    %v6971 = vadd.f32 %v6719, %v6857
    %v6972 = vadd.f32 %v6720, %v6859
    %v6973 = vadd.f32 %v6721, %v6861
    %v6974 = vadd.f32 %v6722, %v6863
    %v6975 = vadd.f32 %v6723, %v6865
    %v6976 = vadd.f32 %v6724, %v6867
    %v6977 = vadd.f32 %v6725, %v6869
    %v6978 = vadd.f32 %v6726, %v6871
    %v6979 = vadd.f32 %v6727, %v6873
    %v6980 = vadd.f32 %v6728, %v6875
    %v6981 = vadd.f32 %v6729, %v6877
    %v6982 = vadd.f32 %v6730, %v6879
    %v6983 = vadd.f32 %v6731, %v6881
    %v6984 = vadd.f32 %v6732, %v6883
    %v6985 = vadd.f32 %v6733, %v6885
    %v6986 = vadd.f32 %v6734, %v6887
    %v6987 = vadd.f32 %v6735, %v6889
    %v6988 = vadd.f32 %v6736, %v6891
    %v6989 = vadd.f32 %v6737, %v6893
    %v6990 = vadd.f32 %v6738, %v6895
    %v6991 = vadd.f32 %v6739, %v6897
    %v6992 = vadd.f32 %v6740, %v6899
    %v6993 = vadd.f32 %v6741, %v6901
    %v6994 = vadd.f32 %v6742, %v6903
    %v6995 = vadd.f32 %v6743, %v6905
    %v6996 = vadd.f32 %v6744, %v6907
    %v6997 = vadd.f32 %v6745, %v6909
    %v6998 = vadd.f32 %v6746, %v6911
    %v6999 = vadd.f32 %v6747, %v6913
    %v7000 = vadd.f32 %v6748, %v6915
    %v7001 = vadd.f32 %v6749, %v6917
    %v7002 = vld [vmem:[#allocation3] sm:$0xff]
    %v7003 = vld [vmem:[#allocation3 + $0x8] sm:$0xff]
    %v7004 = vld [vmem:[#allocation3 + $0x10] sm:$0xff]
    %v7005 = vld [vmem:[#allocation3 + $0x18] sm:$0xff]
    %v7006 = vld [vmem:[#allocation3 + $0x20] sm:$0xff]
    %v7007 = vld [vmem:[#allocation3 + $0x28] sm:$0xff]
    %v7008 = vld [vmem:[#allocation3 + $0x30] sm:$0xff]
    %v7009 = vld [vmem:[#allocation3 + $0x38] sm:$0xff]
    %v7010 = vld [vmem:[#allocation3 + $0x40] sm:$0xff]
    %v7011 = vld [vmem:[#allocation3 + $0x48] sm:$0xff]
    %v7012 = vld [vmem:[#allocation3 + $0x50] sm:$0xff]
    %v7013 = vld [vmem:[#allocation3 + $0x58] sm:$0xff]
    %v7014 = vld [vmem:[#allocation3 + $0x60] sm:$0xff]
    %v7015 = vld [vmem:[#allocation3 + $0x68] sm:$0xff]
    %v7016 = vld [vmem:[#allocation3 + $0x70] sm:$0xff]
    %v7017 = vld [vmem:[#allocation3 + $0x78] sm:$0xff]
    %v7018 = vld [vmem:[#allocation3 + $0x80] sm:$0xff]
    %v7019 = vld [vmem:[#allocation3 + $0x88] sm:$0xff]
    %v7020 = vld [vmem:[#allocation3 + $0x90] sm:$0xff]
    %v7021 = vld [vmem:[#allocation3 + $0x98] sm:$0xff]
    %v7022 = vld [vmem:[#allocation3 + $0xa0] sm:$0xff]
    %v7023 = vld [vmem:[#allocation3 + $0xa8] sm:$0xff]
    %v7024 = vld [vmem:[#allocation3 + $0xb0] sm:$0xff]
    %v7025 = vld [vmem:[#allocation3 + $0xb8] sm:$0xff]
    %v7026 = vld [vmem:[#allocation3 + $0xc0] sm:$0xff]
    %v7027 = vld [vmem:[#allocation3 + $0xc8] sm:$0xff]
    %v7028 = vld [vmem:[#allocation3 + $0xd0] sm:$0xff]
    %v7029 = vld [vmem:[#allocation3 + $0xd8] sm:$0xff]
    %v7030 = vld [vmem:[#allocation3 + $0xe0] sm:$0xff]
    %v7031 = vld [vmem:[#allocation3 + $0xe8] sm:$0xff]
    %v7032 = vld [vmem:[#allocation3 + $0xf0] sm:$0xff]
    %v7033 = vld [vmem:[#allocation3 + $0xf8] sm:$0xff]
    %v7034 = vld [vmem:[#allocation3 + $0x100] sm:$0xff]
    %v7035 = vld [vmem:[#allocation3 + $0x108] sm:$0xff]
    %v7036 = vld [vmem:[#allocation3 + $0x110] sm:$0xff]
    %v7037 = vld [vmem:[#allocation3 + $0x118] sm:$0xff]
    %v7038 = vld [vmem:[#allocation3 + $0x120] sm:$0xff]
    %v7039 = vld [vmem:[#allocation3 + $0x128] sm:$0xff]
    %v7040 = vld [vmem:[#allocation3 + $0x130] sm:$0xff]
    %v7041 = vld [vmem:[#allocation3 + $0x138] sm:$0xff]
    %v7042 = vld [vmem:[#allocation3 + $0x140] sm:$0xff]
    %v7043 = vld [vmem:[#allocation3 + $0x148] sm:$0xff]
    %v7044 = vadd.f32 %v6960, %v7002
    %v7045 = vadd.f32 %v6961, %v7003
    %v7046 = vadd.f32 %v6962, %v7004
    %v7047 = vadd.f32 %v6963, %v7005
    %v7048 = vadd.f32 %v6964, %v7006
    %v7049 = vadd.f32 %v6965, %v7007
    %v7050 = vadd.f32 %v6966, %v7008
    %v7051 = vadd.f32 %v6967, %v7009
    %v7052 = vadd.f32 %v6968, %v7010
    %v7053 = vadd.f32 %v6969, %v7011
    %v7054 = vadd.f32 %v6970, %v7012
    %v7055 = vadd.f32 %v6971, %v7013
    %v7056 = vadd.f32 %v6972, %v7014
    %v7057 = vadd.f32 %v6973, %v7015
    %v7058 = vadd.f32 %v6974, %v7016
    %v7059 = vadd.f32 %v6975, %v7017
    %v7060 = vadd.f32 %v6976, %v7018
    %v7061 = vadd.f32 %v6977, %v7019
    %v7062 = vadd.f32 %v6978, %v7020
    %v7063 = vadd.f32 %v6979, %v7021
    %v7064 = vadd.f32 %v6980, %v7022
    %v7065 = vadd.f32 %v6981, %v7023
    %v7066 = vadd.f32 %v6982, %v7024
    %v7067 = vadd.f32 %v6983, %v7025
    %v7068 = vadd.f32 %v6984, %v7026
    %v7069 = vadd.f32 %v6985, %v7027
    %v7070 = vadd.f32 %v6986, %v7028
    %v7071 = vadd.f32 %v6987, %v7029
    %v7072 = vadd.f32 %v6988, %v7030
    %v7073 = vadd.f32 %v6989, %v7031
    %v7074 = vadd.f32 %v6990, %v7032
    %v7075 = vadd.f32 %v6991, %v7033
    %v7076 = vadd.f32 %v6992, %v7034
    %v7077 = vadd.f32 %v6993, %v7035
    %v7078 = vadd.f32 %v6994, %v7036
    %v7079 = vadd.f32 %v6995, %v7037
    %v7080 = vadd.f32 %v6996, %v7038
    %v7081 = vadd.f32 %v6997, %v7039
    %v7082 = vadd.f32 %v6998, %v7040
    %v7083 = vadd.f32 %v6999, %v7041
    %v7084 = vadd.f32 %v7000, %v7042
    %v7085 = vadd.f32 %v7001, %v7043
    %v7086 = vld [vmem:[#allocation3 + $0xe] sm:$0xff]
    %v7087 = vld [vmem:[#allocation3 + $0x16] sm:$0xff]
    %v7088 = vld [vmem:[#allocation3 + $0x1e] sm:$0xff]
    %v7089 = vld [vmem:[#allocation3 + $0x26] sm:$0xff]
    %v7090 = vld [vmem:[#allocation3 + $0x2e] sm:$0xff]
    %v7091 = vld [vmem:[#allocation3 + $0x36] sm:$0xff]
    %v7092 = vld [vmem:[#allocation3 + $0x3e] sm:$0xff]
    %v7093 = vld [vmem:[#allocation3 + $0x46] sm:$0xff]
    %v7094 = vld [vmem:[#allocation3 + $0x4e] sm:$0xff]
    %v7095 = vld [vmem:[#allocation3 + $0x56] sm:$0xff]
    %v7096 = vld [vmem:[#allocation3 + $0x5e] sm:$0xff]
    %v7097 = vld [vmem:[#allocation3 + $0x66] sm:$0xff]
    %v7098 = vld [vmem:[#allocation3 + $0x6e] sm:$0xff]
    %v7099 = vld [vmem:[#allocation3 + $0x76] sm:$0xff]
    %v7100 = vld [vmem:[#allocation3 + $0x7e] sm:$0xff]
    %v7101 = vld [vmem:[#allocation3 + $0x86] sm:$0xff]
    %v7102 = vld [vmem:[#allocation3 + $0x8e] sm:$0xff]
    %v7103 = vld [vmem:[#allocation3 + $0x96] sm:$0xff]
    %v7104 = vld [vmem:[#allocation3 + $0x9e] sm:$0xff]
    %v7105 = vld [vmem:[#allocation3 + $0xa6] sm:$0xff]
    %v7106 = vld [vmem:[#allocation3 + $0xae] sm:$0xff]
    %v7107 = vld [vmem:[#allocation3 + $0xb6] sm:$0xff]
    %v7108 = vld [vmem:[#allocation3 + $0xbe] sm:$0xff]
    %v7109 = vld [vmem:[#allocation3 + $0xc6] sm:$0xff]
    %v7110 = vld [vmem:[#allocation3 + $0xce] sm:$0xff]
    %v7111 = vld [vmem:[#allocation3 + $0xd6] sm:$0xff]
    %v7112 = vld [vmem:[#allocation3 + $0xde] sm:$0xff]
    %v7113 = vld [vmem:[#allocation3 + $0xe6] sm:$0xff]
    %v7114 = vld [vmem:[#allocation3 + $0xee] sm:$0xff]
    %v7115 = vld [vmem:[#allocation3 + $0xf6] sm:$0xff]
    %v7116 = vld [vmem:[#allocation3 + $0xfe] sm:$0xff]
    %v7117 = vld [vmem:[#allocation3 + $0x106] sm:$0xff]
    %v7118 = vld [vmem:[#allocation3 + $0x10e] sm:$0xff]
    %v7119 = vld [vmem:[#allocation3 + $0x116] sm:$0xff]
    %v7120 = vld [vmem:[#allocation3 + $0x11e] sm:$0xff]
    %v7121 = vld [vmem:[#allocation3 + $0x126] sm:$0xff]
    %v7122 = vld [vmem:[#allocation3 + $0x12e] sm:$0xff]
    %v7123 = vld [vmem:[#allocation3 + $0x136] sm:$0xff]
    %v7124 = vld [vmem:[#allocation3 + $0x13e] sm:$0xff]
    %v7125 = vld [vmem:[#allocation3 + $0x146] sm:$0xff]
    %v7126 = vld [vmem:[#allocation3 + $0x14e] sm:$0xff]
    %v7127 = vld [vmem:[#allocation3 + $0x156] sm:$0xff]
    %7170 = vrot.lane.b32.xlu0 %v7086, 64
    %v7171 = vpop.permute.xlu0 %7170
    %7172 = vrot.lane.b32.xlu0 %v7087, 64
    %v7173 = vpop.permute.xlu0 %7172
    %7174 = vrot.lane.b32.xlu0 %v7088, 64
    %v7175 = vpop.permute.xlu0 %7174
    %7176 = vrot.lane.b32.xlu0 %v7089, 64
    %v7177 = vpop.permute.xlu0 %7176
    %7178 = vrot.lane.b32.xlu0 %v7090, 64
    %v7179 = vpop.permute.xlu0 %7178
    %7180 = vrot.lane.b32.xlu0 %v7091, 64
    %v7181 = vpop.permute.xlu0 %7180
    %7182 = vrot.lane.b32.xlu0 %v7092, 64
    %v7183 = vpop.permute.xlu0 %7182
    %7184 = vrot.lane.b32.xlu0 %v7093, 64
    %v7185 = vpop.permute.xlu0 %7184
    %7186 = vrot.lane.b32.xlu0 %v7094, 64
    %v7187 = vpop.permute.xlu0 %7186
    %7188 = vrot.lane.b32.xlu0 %v7095, 64
    %v7189 = vpop.permute.xlu0 %7188
    %7190 = vrot.lane.b32.xlu0 %v7096, 64
    %v7191 = vpop.permute.xlu0 %7190
    %7192 = vrot.lane.b32.xlu0 %v7097, 64
    %v7193 = vpop.permute.xlu0 %7192
    %7194 = vrot.lane.b32.xlu0 %v7098, 64
    %v7195 = vpop.permute.xlu0 %7194
    %7196 = vrot.lane.b32.xlu0 %v7099, 64
    %v7197 = vpop.permute.xlu0 %7196
    %7198 = vrot.lane.b32.xlu0 %v7100, 64
    %v7199 = vpop.permute.xlu0 %7198
    %7200 = vrot.lane.b32.xlu0 %v7101, 64
    %v7201 = vpop.permute.xlu0 %7200
    %7202 = vrot.lane.b32.xlu0 %v7102, 64
    %v7203 = vpop.permute.xlu0 %7202
    %7204 = vrot.lane.b32.xlu0 %v7103, 64
    %v7205 = vpop.permute.xlu0 %7204
    %7206 = vrot.lane.b32.xlu0 %v7104, 64
    %v7207 = vpop.permute.xlu0 %7206
    %7208 = vrot.lane.b32.xlu0 %v7105, 64
    %v7209 = vpop.permute.xlu0 %7208
    %7210 = vrot.lane.b32.xlu0 %v7106, 64
    %v7211 = vpop.permute.xlu0 %7210
    %7212 = vrot.lane.b32.xlu0 %v7107, 64
    %v7213 = vpop.permute.xlu0 %7212
    %7214 = vrot.lane.b32.xlu0 %v7108, 64
    %v7215 = vpop.permute.xlu0 %7214
    %7216 = vrot.lane.b32.xlu0 %v7109, 64
    %v7217 = vpop.permute.xlu0 %7216
    %7218 = vrot.lane.b32.xlu0 %v7110, 64
    %v7219 = vpop.permute.xlu0 %7218
    %7220 = vrot.lane.b32.xlu0 %v7111, 64
    %v7221 = vpop.permute.xlu0 %7220
    %7222 = vrot.lane.b32.xlu0 %v7112, 64
    %v7223 = vpop.permute.xlu0 %7222
    %7224 = vrot.lane.b32.xlu0 %v7113, 64
    %v7225 = vpop.permute.xlu0 %7224
    %7226 = vrot.lane.b32.xlu0 %v7114, 64
    %v7227 = vpop.permute.xlu0 %7226
    %7228 = vrot.lane.b32.xlu0 %v7115, 64
    %v7229 = vpop.permute.xlu0 %7228
    %7230 = vrot.lane.b32.xlu0 %v7116, 64
    %v7231 = vpop.permute.xlu0 %7230
    %7232 = vrot.lane.b32.xlu0 %v7117, 64
    %v7233 = vpop.permute.xlu0 %7232
    %7234 = vrot.lane.b32.xlu0 %v7118, 64
    %v7235 = vpop.permute.xlu0 %7234
    %7236 = vrot.lane.b32.xlu0 %v7119, 64
    %v7237 = vpop.permute.xlu0 %7236
    %7238 = vrot.lane.b32.xlu0 %v7120, 64
    %v7239 = vpop.permute.xlu0 %7238
    %7240 = vrot.lane.b32.xlu0 %v7121, 64
    %v7241 = vpop.permute.xlu0 %7240
    %7242 = vrot.lane.b32.xlu0 %v7122, 64
    %v7243 = vpop.permute.xlu0 %7242
    %7244 = vrot.lane.b32.xlu0 %v7123, 64
    %v7245 = vpop.permute.xlu0 %7244
    %7246 = vrot.lane.b32.xlu0 %v7124, 64
    %v7247 = vpop.permute.xlu0 %7246
    %7248 = vrot.lane.b32.xlu0 %v7125, 64
    %v7249 = vpop.permute.xlu0 %7248
    %7250 = vrot.lane.b32.xlu0 %v7126, 64
    %v7251 = vpop.permute.xlu0 %7250
    %7252 = vrot.lane.b32.xlu0 %v7127, 64
    %v7253 = vpop.permute.xlu0 %7252
    %v7296 = vadd.f32 %v7044, %v7171
    %v7297 = vadd.f32 %v7045, %v7173
    %v7298 = vadd.f32 %v7046, %v7175
    %v7299 = vadd.f32 %v7047, %v7177
    %v7300 = vadd.f32 %v7048, %v7179
    %v7301 = vadd.f32 %v7049, %v7181
    %v7302 = vadd.f32 %v7050, %v7183
    %v7303 = vadd.f32 %v7051, %v7185
    %v7304 = vadd.f32 %v7052, %v7187
    %v7305 = vadd.f32 %v7053, %v7189
    %v7306 = vadd.f32 %v7054, %v7191
    %v7307 = vadd.f32 %v7055, %v7193
    %v7308 = vadd.f32 %v7056, %v7195
    %v7309 = vadd.f32 %v7057, %v7197
    %v7310 = vadd.f32 %v7058, %v7199
    %v7311 = vadd.f32 %v7059, %v7201
    %v7312 = vadd.f32 %v7060, %v7203
    %v7313 = vadd.f32 %v7061, %v7205
    %v7314 = vadd.f32 %v7062, %v7207
    %v7315 = vadd.f32 %v7063, %v7209
    %v7316 = vadd.f32 %v7064, %v7211
    %v7317 = vadd.f32 %v7065, %v7213
    %v7318 = vadd.f32 %v7066, %v7215
    %v7319 = vadd.f32 %v7067, %v7217
    %v7320 = vadd.f32 %v7068, %v7219
    %v7321 = vadd.f32 %v7069, %v7221
    %v7322 = vadd.f32 %v7070, %v7223
    %v7323 = vadd.f32 %v7071, %v7225
    %v7324 = vadd.f32 %v7072, %v7227
    %v7325 = vadd.f32 %v7073, %v7229
    %v7326 = vadd.f32 %v7074, %v7231
    %v7327 = vadd.f32 %v7075, %v7233
    %v7328 = vadd.f32 %v7076, %v7235
    %v7329 = vadd.f32 %v7077, %v7237
    %v7330 = vadd.f32 %v7078, %v7239
    %v7331 = vadd.f32 %v7079, %v7241
    %v7332 = vadd.f32 %v7080, %v7243
    %v7333 = vadd.f32 %v7081, %v7245
    %v7334 = vadd.f32 %v7082, %v7247
    %v7335 = vadd.f32 %v7083, %v7249
    %v7336 = vadd.f32 %v7084, %v7251
    %v7337 = vadd.f32 %v7085, %v7253
    %v7338 = vadd.f32 %v7296, %v6542
    %v7339 = vadd.f32 %v7297, %v6545
    %v7340 = vadd.f32 %v7298, %v6550
    %v7341 = vadd.f32 %v7299, %v6553
    %v7342 = vadd.f32 %v7300, %v6558
    %v7343 = vadd.f32 %v7301, %v6561
    %v7344 = vadd.f32 %v7302, %v6566
    %v7345 = vadd.f32 %v7303, %v6569
    %v7346 = vadd.f32 %v7304, %v6574
    %v7347 = vadd.f32 %v7305, %v6577
    %v7348 = vadd.f32 %v7306, %v6582
    %v7349 = vadd.f32 %v7307, %v6585
    %v7350 = vadd.f32 %v7308, %v6590
    %v7351 = vadd.f32 %v7309, %v6593
    %v7352 = vadd.f32 %v7310, %v6598
    %v7353 = vadd.f32 %v7311, %v6601
    %v7354 = vadd.f32 %v7312, %v6606
    %v7355 = vadd.f32 %v7313, %v6609
    %v7356 = vadd.f32 %v7314, %v6614
    %v7357 = vadd.f32 %v7315, %v6617
    %v7358 = vadd.f32 %v7316, %v6622
    %v7359 = vadd.f32 %v7317, %v6625
    %v7360 = vadd.f32 %v7318, %v6630
    %v7361 = vadd.f32 %v7319, %v6633
    %v7362 = vadd.f32 %v7320, %v6638
    %v7363 = vadd.f32 %v7321, %v6641
    %v7364 = vadd.f32 %v7322, %v6646
    %v7365 = vadd.f32 %v7323, %v6649
    %v7366 = vadd.f32 %v7324, %v6654
    %v7367 = vadd.f32 %v7325, %v6657
    %v7368 = vadd.f32 %v7326, %v6662
    %v7369 = vadd.f32 %v7327, %v6665
    %v7370 = vadd.f32 %v7328, %v6670
    %v7371 = vadd.f32 %v7329, %v6673
    %v7372 = vadd.f32 %v7330, %v6678
    %v7373 = vadd.f32 %v7331, %v6681
    %v7374 = vadd.f32 %v7332, %v6686
    %v7375 = vadd.f32 %v7333, %v6689
    %v7376 = vadd.f32 %v7334, %v6694
    %v7377 = vadd.f32 %v7335, %v6697
    %v7378 = vadd.f32 %v7336, %v6702
    %v7379 = vadd.f32 %v7337, %v6705
    %v7380 = vpack.c.bf16 %v7339, %v7338
    %v7381 = vpack.c.bf16 %v7341, %v7340
    %v7382 = vpack.c.bf16 %v7343, %v7342
    %v7383 = vpack.c.bf16 %v7345, %v7344
    %v7384 = vpack.c.bf16 %v7347, %v7346
    %v7385 = vpack.c.bf16 %v7349, %v7348
    %v7386 = vpack.c.bf16 %v7351, %v7350
    %v7387 = vpack.c.bf16 %v7353, %v7352
    %v7388 = vpack.c.bf16 %v7355, %v7354
    %v7389 = vpack.c.bf16 %v7357, %v7356
    %v7390 = vpack.c.bf16 %v7359, %v7358
    %v7391 = vpack.c.bf16 %v7361, %v7360
    %v7392 = vpack.c.bf16 %v7363, %v7362
    %v7393 = vpack.c.bf16 %v7365, %v7364
    %v7394 = vpack.c.bf16 %v7367, %v7366
    %v7395 = vpack.c.bf16 %v7369, %v7368
    %v7396 = vpack.c.bf16 %v7371, %v7370
    %v7397 = vpack.c.bf16 %v7373, %v7372
    %v7398 = vpack.c.bf16 %v7375, %v7374
    %v7399 = vpack.c.bf16 %v7377, %v7376
    %v7400 = vpack.c.bf16 %v7379, %v7378
    %s7401 = smul.u32 4, 28
    %s7402 = smul.u32 %s7401, 3
    %s7403 = sshll.u32 %s7402, 4
    %7404 = dma.done [#allocation7], %s7403
    %v7405 = vld [vmem:[#allocation5] sm:$0xff]
    %v7406 = vld [vmem:[#allocation5 + $0x8] sm:$0xf]
    %v7407 = vld [vmem:[#allocation5 + $0xc] sm:$0xff]
    %v7408 = vld [vmem:[#allocation5 + $0x14] sm:$0xf]
    %v7409 = vld [vmem:[#allocation5 + $0x18] sm:$0xff]
    %v7410 = vld [vmem:[#allocation5 + $0x20] sm:$0xf]
    %v7411 = vld [vmem:[#allocation5 + $0x24] sm:$0xff]
    %v7412 = vld [vmem:[#allocation5 + $0x2c] sm:$0xf]
    %v7413 = vld [vmem:[#allocation5 + $0x30] sm:$0xff]
    %v7414 = vld [vmem:[#allocation5 + $0x38] sm:$0xf]
    %v7415 = vld [vmem:[#allocation5 + $0x3c] sm:$0xff]
    %v7416 = vld [vmem:[#allocation5 + $0x44] sm:$0xf]
    %v7417 = vld [vmem:[#allocation5 + $0x48] sm:$0xff]
    %v7418 = vld [vmem:[#allocation5 + $0x50] sm:$0xf]
    %v7419 = vld [vmem:[#allocation5 + $0x54] sm:$0xff]
    %v7420 = vld [vmem:[#allocation5 + $0x5c] sm:$0xf]
    %v7421 = vld [vmem:[#allocation5 + $0x60] sm:$0xff]
    %v7422 = vld [vmem:[#allocation5 + $0x68] sm:$0xf]
    %v7423 = vld [vmem:[#allocation5 + $0x6c] sm:$0xff]
    %v7424 = vld [vmem:[#allocation5 + $0x74] sm:$0xf]
    %v7425 = vld [vmem:[#allocation5 + $0x78] sm:$0xff]
    %v7426 = vld [vmem:[#allocation5 + $0x80] sm:$0xf]
    %v7427 = vld [vmem:[#allocation5 + $0x84] sm:$0xff]
    %v7428 = vld [vmem:[#allocation5 + $0x8c] sm:$0xf]
    %v7429 = vld [vmem:[#allocation5 + $0x90] sm:$0xff]
    %v7430 = vld [vmem:[#allocation5 + $0x98] sm:$0xf]
    %v7431 = vld [vmem:[#allocation5 + $0x9c] sm:$0xff]
    %v7432 = vld [vmem:[#allocation5 + $0xa4] sm:$0xf]
    %v7433 = vld [vmem:[#allocation5 + $0xa8] sm:$0xff]
    %v7434 = vld [vmem:[#allocation5 + $0xb0] sm:$0xf]
    %v7435 = vld [vmem:[#allocation5 + $0xb4] sm:$0xff]
    %v7436 = vld [vmem:[#allocation5 + $0xbc] sm:$0xf]
    %v7437 = vld [vmem:[#allocation5 + $0xc0] sm:$0xff]
    %v7438 = vld [vmem:[#allocation5 + $0xc8] sm:$0xf]
    %v7439 = vld [vmem:[#allocation5 + $0xcc] sm:$0xff]
    %v7440 = vld [vmem:[#allocation5 + $0xd4] sm:$0xf]
    %v7441 = vld [vmem:[#allocation5 + $0xd8] sm:$0xff]
    %v7442 = vld [vmem:[#allocation5 + $0xe0] sm:$0xf]
    %v7443 = vld [vmem:[#allocation5 + $0xe4] sm:$0xff]
    %v7444 = vld [vmem:[#allocation5 + $0xec] sm:$0xf]
    %v7445 = vld [vmem:[#allocation5 + $0xf0] sm:$0xff]
    %v7446 = vld [vmem:[#allocation5 + $0xf8] sm:$0xf]
    %v7447 = vld [vmem:[#allocation5 + $0xfc] sm:$0xff]
    %v7448 = vld [vmem:[#allocation5 + $0x104] sm:$0xf]
    %v7449 = vld [vmem:[#allocation5 + $0x108] sm:$0xff]
    %v7450 = vld [vmem:[#allocation5 + $0x110] sm:$0xf]
    %v7451 = vld [vmem:[#allocation5 + $0x114] sm:$0xff]
    %v7452 = vld [vmem:[#allocation5 + $0x11c] sm:$0xf]
    %v7453 = vld [vmem:[#allocation5 + $0x120] sm:$0xff]
    %v7454 = vld [vmem:[#allocation5 + $0x128] sm:$0xf]
    %v7455 = vld [vmem:[#allocation5 + $0x12c] sm:$0xff]
    %v7456 = vld [vmem:[#allocation5 + $0x134] sm:$0xf]
    %v7457 = vld [vmem:[#allocation5 + $0x138] sm:$0xff]
    %v7458 = vld [vmem:[#allocation5 + $0x140] sm:$0xf]
    %v7459 = vld [vmem:[#allocation5 + $0x144] sm:$0xff]
    %v7460 = vld [vmem:[#allocation5 + $0x14c] sm:$0xf]
    %v7517 = vunpack.c.l.b16 %v7405
    %v7518 = vunpack.c.h.b16 %v7405
    %v7519 = vunpack.c.l.b16 %v7406
    %v7520 = vunpack.c.l.b16 %v7407
    %v7521 = vunpack.c.h.b16 %v7407
    %v7522 = vunpack.c.l.b16 %v7408
    %v7523 = vunpack.c.l.b16 %v7409
    %v7524 = vunpack.c.h.b16 %v7409
    %v7525 = vunpack.c.l.b16 %v7410
    %v7526 = vunpack.c.l.b16 %v7411
    %v7527 = vunpack.c.h.b16 %v7411
    %v7528 = vunpack.c.l.b16 %v7412
    %v7529 = vunpack.c.l.b16 %v7413
    %v7530 = vunpack.c.h.b16 %v7413
    %v7531 = vunpack.c.l.b16 %v7414
    %v7532 = vunpack.c.l.b16 %v7415
    %v7533 = vunpack.c.h.b16 %v7415
    %v7534 = vunpack.c.l.b16 %v7416
    %v7535 = vunpack.c.l.b16 %v7417
    %v7536 = vunpack.c.h.b16 %v7417
    %v7537 = vunpack.c.l.b16 %v7418
    %v7538 = vunpack.c.l.b16 %v7419
    %v7539 = vunpack.c.h.b16 %v7419
    %v7540 = vunpack.c.l.b16 %v7420
    %v7541 = vunpack.c.l.b16 %v7421
    %v7542 = vunpack.c.h.b16 %v7421
    %v7543 = vunpack.c.l.b16 %v7422
    %v7544 = vunpack.c.l.b16 %v7423
    %v7545 = vunpack.c.h.b16 %v7423
    %v7546 = vunpack.c.l.b16 %v7424
    %v7547 = vunpack.c.l.b16 %v7425
    %v7548 = vunpack.c.h.b16 %v7425
    %v7549 = vunpack.c.l.b16 %v7426
    %v7550 = vunpack.c.l.b16 %v7427
    %v7551 = vunpack.c.h.b16 %v7427
    %v7552 = vunpack.c.l.b16 %v7428
    %v7553 = vunpack.c.l.b16 %v7429
    %v7554 = vunpack.c.h.b16 %v7429
    %v7555 = vunpack.c.l.b16 %v7430
    %v7556 = vunpack.c.l.b16 %v7431
    %v7557 = vunpack.c.h.b16 %v7431
    %v7558 = vunpack.c.l.b16 %v7432
    %v7559 = vunpack.c.l.b16 %v7433
    %v7560 = vunpack.c.h.b16 %v7433
    %v7561 = vunpack.c.l.b16 %v7434
    %v7562 = vunpack.c.l.b16 %v7435
    %v7563 = vunpack.c.h.b16 %v7435
    %v7564 = vunpack.c.l.b16 %v7436
    %v7565 = vunpack.c.l.b16 %v7437
    %v7566 = vunpack.c.h.b16 %v7437
    %v7567 = vunpack.c.l.b16 %v7438
    %v7568 = vunpack.c.l.b16 %v7439
    %v7569 = vunpack.c.h.b16 %v7439
    %v7570 = vunpack.c.l.b16 %v7440
    %v7571 = vunpack.c.l.b16 %v7441
    %v7572 = vunpack.c.h.b16 %v7441
    %v7573 = vunpack.c.l.b16 %v7442
    %v7574 = vunpack.c.l.b16 %v7443
    %v7575 = vunpack.c.h.b16 %v7443
    %v7576 = vunpack.c.l.b16 %v7444
    %v7577 = vunpack.c.l.b16 %v7445
    %v7578 = vunpack.c.h.b16 %v7445
    %v7579 = vunpack.c.l.b16 %v7446
    %v7580 = vunpack.c.l.b16 %v7447
    %v7581 = vunpack.c.h.b16 %v7447
    %v7582 = vunpack.c.l.b16 %v7448
    %v7583 = vunpack.c.l.b16 %v7449
    %v7584 = vunpack.c.h.b16 %v7449
    %v7585 = vunpack.c.l.b16 %v7450
    %v7586 = vunpack.c.l.b16 %v7451
    %v7587 = vunpack.c.h.b16 %v7451
    %v7588 = vunpack.c.l.b16 %v7452
    %v7589 = vunpack.c.l.b16 %v7453
    %v7590 = vunpack.c.h.b16 %v7453
    %v7591 = vunpack.c.l.b16 %v7454
    %v7592 = vunpack.c.l.b16 %v7455
    %v7593 = vunpack.c.h.b16 %v7455
    %v7594 = vunpack.c.l.b16 %v7456
    %v7595 = vunpack.c.l.b16 %v7457
    %v7596 = vunpack.c.h.b16 %v7457
    %v7597 = vunpack.c.l.b16 %v7458
    %v7598 = vunpack.c.l.b16 %v7459
    %v7599 = vunpack.c.h.b16 %v7459
    %v7600 = vunpack.c.l.b16 %v7460
    %v7601 = vpack.c.b16 %v7520, %v7517
    %v7602 = vpack.c.b16 %v7521, %v7518
    %v7603 = vpack.c.b16 %v7522, %v7519
    %v7604 = vpack.c.b16 %v7526, %v7523
    %v7605 = vpack.c.b16 %v7527, %v7524
    %v7606 = vpack.c.b16 %v7528, %v7525
    %v7607 = vpack.c.b16 %v7532, %v7529
    %v7608 = vpack.c.b16 %v7533, %v7530
    %v7609 = vpack.c.b16 %v7534, %v7531
    %v7610 = vpack.c.b16 %v7538, %v7535
    %v7611 = vpack.c.b16 %v7539, %v7536
    %v7612 = vpack.c.b16 %v7540, %v7537
    %v7613 = vpack.c.b16 %v7544, %v7541
    %v7614 = vpack.c.b16 %v7545, %v7542
    %v7615 = vpack.c.b16 %v7546, %v7543
    %v7616 = vpack.c.b16 %v7550, %v7547
    %v7617 = vpack.c.b16 %v7551, %v7548
    %v7618 = vpack.c.b16 %v7552, %v7549
    %v7619 = vpack.c.b16 %v7556, %v7553
    %v7620 = vpack.c.b16 %v7557, %v7554
    %v7621 = vpack.c.b16 %v7558, %v7555
    %v7622 = vpack.c.b16 %v7562, %v7559
    %v7623 = vpack.c.b16 %v7563, %v7560
    %v7624 = vpack.c.b16 %v7564, %v7561
    %v7625 = vpack.c.b16 %v7568, %v7565
    %v7626 = vpack.c.b16 %v7569, %v7566
    %v7627 = vpack.c.b16 %v7570, %v7567
    %v7628 = vpack.c.b16 %v7574, %v7571
    %v7629 = vpack.c.b16 %v7575, %v7572
    %v7630 = vpack.c.b16 %v7576, %v7573
    %v7631 = vpack.c.b16 %v7580, %v7577
    %v7632 = vpack.c.b16 %v7581, %v7578
    %v7633 = vpack.c.b16 %v7582, %v7579
    %v7634 = vpack.c.b16 %v7586, %v7583
    %v7635 = vpack.c.b16 %v7587, %v7584
    %v7636 = vpack.c.b16 %v7588, %v7585
    %v7637 = vpack.c.b16 %v7592, %v7589
    %v7638 = vpack.c.b16 %v7593, %v7590
    %v7639 = vpack.c.b16 %v7594, %v7591
    %v7640 = vpack.c.b16 %v7598, %v7595
    %v7641 = vpack.c.b16 %v7599, %v7596
    %v7642 = vpack.c.b16 %v7600, %v7597
    %vm7671 = vcmask 654336
    %v7673 = vsel %vm7671, %v7603, 0
    %v7676 = vsel %vm7671, %v7606, 0
    %v7679 = vsel %vm7671, %v7609, 0
    %v7682 = vsel %vm7671, %v7612, 0
    %v7685 = vsel %vm7671, %v7615, 0
    %v7688 = vsel %vm7671, %v7618, 0
    %v7691 = vsel %vm7671, %v7621, 0
    %v7694 = vsel %vm7671, %v7624, 0
    %v7697 = vsel %vm7671, %v7627, 0
    %v7700 = vsel %vm7671, %v7630, 0
    %v7703 = vsel %vm7671, %v7633, 0
    %v7706 = vsel %vm7671, %v7636, 0
    %v7709 = vsel %vm7671, %v7639, 0
    %v7712 = vsel %vm7671, %v7642, 0
    %7714 = vmatprep.subr.bf16.mxu0 0
    %7715 = vmatpush1.bf16.msra.mxu0 %v7387
    %7716 = vmatprep.subr.bf16.mxu0 0
    %7717 = vmatpush1.bf16.msra.mxu0 %v7386
    %7718 = vmatprep.subr.bf16.mxu0 0
    %7719 = vmatpush1.bf16.msra.mxu0 %v7385
    %7720 = vmatprep.subr.bf16.mxu0 0
    %7721 = vmatpush1.bf16.msra.mxu0 %v7384
    %7722 = vmatprep.subr.bf16.mxu0 0
    %7723 = vmatpush1.bf16.msra.mxu0 %v7383
    %7724 = vmatprep.subr.bf16.mxu0 0
    %7725 = vmatpush1.bf16.msra.mxu0 %v7382
    %7726 = vmatprep.subr.bf16.mxu0 0
    %7727 = vmatpush1.bf16.msra.mxu0 %v7381
    %7728 = vmatprep.subr.bf16.mxu0 0
    %7729 = vmatpush1.bf16.msra.mxu0 %v7380
    %7730 = vmatprep.subr.bf16.mxu0 0
    %7731 = vmatpush2.bf16.msra.mxu0 %v7395
    %7732 = vmatprep.subr.bf16.mxu0 0
    %7733 = vmatpush2.bf16.msra.mxu0 %v7394
    %7734 = vmatprep.subr.bf16.mxu0 0
    %7735 = vmatpush2.bf16.msra.mxu0 %v7393
    %7736 = vmatprep.subr.bf16.mxu0 0
    %7737 = vmatpush2.bf16.msra.mxu0 %v7392
    %7738 = vmatprep.subr.bf16.mxu0 0
    %7739 = vmatpush2.bf16.msra.mxu0 %v7391
    %7740 = vmatprep.subr.bf16.mxu0 0
    %7741 = vmatpush2.bf16.msra.mxu0 %v7390
    %7742 = vmatprep.subr.bf16.mxu0 0
    %7743 = vmatpush2.bf16.msra.mxu0 %v7389
    %7744 = vmatprep.subr.bf16.mxu0 0
    %7745 = vmatpush2.bf16.msra.mxu0 %v7388
    %7746 = vmatprep.mubr.bf16.mxu0 %v7602
    %7747 = vmatmul.mubr.bf16.gmra.mxu0 %v7601
    %v7748 = vpop.f32.mrf.mxu0
    %v7749 = vadd.f32 0.0, %v7748
    %v7750 = vpop.f32.mrf.mxu0
    %v7751 = vpop.f32.mrf.mxu0
    %v7752 = vadd.f32 0.0, %v7751
    %v7753 = vpop.f32.mrf.mxu0
    %7754 = vmatprep.mubr.bf16.mxu0 %v7605
    %7755 = vmatmul.mubr.bf16.gmra.mxu0 %v7604
    %v7756 = vpop.f32.mrf.mxu0
    %v7757 = vadd.f32 0.0, %v7756
    %v7758 = vpop.f32.mrf.mxu0
    %v7759 = vpop.f32.mrf.mxu0
    %v7760 = vadd.f32 0.0, %v7759
    %v7761 = vpop.f32.mrf.mxu0
    %7762 = vmatprep.mubr.bf16.mxu0 %v7608
    %7763 = vmatmul.mubr.bf16.gmra.mxu0 %v7607
    %v7764 = vpop.f32.mrf.mxu0
    %v7765 = vadd.f32 0.0, %v7764
    %v7766 = vpop.f32.mrf.mxu0
    %v7767 = vpop.f32.mrf.mxu0
    %v7768 = vadd.f32 0.0, %v7767
    %v7769 = vpop.f32.mrf.mxu0
    %7770 = vmatprep.mubr.bf16.mxu0 %v7611
    %7771 = vmatmul.mubr.bf16.gmra.mxu0 %v7610
    %v7772 = vpop.f32.mrf.mxu0
    %v7773 = vadd.f32 0.0, %v7772
    %v7774 = vpop.f32.mrf.mxu0
    %v7775 = vpop.f32.mrf.mxu0
    %v7776 = vadd.f32 0.0, %v7775
    %v7777 = vpop.f32.mrf.mxu0
    %7778 = vmatprep.mubr.bf16.mxu0 %v7614
    %7779 = vmatmul.mubr.bf16.gmra.mxu0 %v7613
    %v7780 = vpop.f32.mrf.mxu0
    %v7781 = vadd.f32 0.0, %v7780
    %v7782 = vpop.f32.mrf.mxu0
    %v7783 = vpop.f32.mrf.mxu0
    %v7784 = vadd.f32 0.0, %v7783
    %v7785 = vpop.f32.mrf.mxu0
    %7786 = vmatprep.mubr.bf16.mxu0 %v7617
    %7787 = vmatmul.mubr.bf16.gmra.mxu0 %v7616
    %v7788 = vpop.f32.mrf.mxu0
    %v7789 = vadd.f32 0.0, %v7788
    %v7790 = vpop.f32.mrf.mxu0
    %v7791 = vpop.f32.mrf.mxu0
    %v7792 = vadd.f32 0.0, %v7791
    %v7793 = vpop.f32.mrf.mxu0
    %7794 = vmatprep.mubr.bf16.mxu0 %v7620
    %7795 = vmatmul.mubr.bf16.gmra.mxu0 %v7619
    %v7796 = vpop.f32.mrf.mxu0
    %v7797 = vadd.f32 0.0, %v7796
    %v7798 = vpop.f32.mrf.mxu0
    %v7799 = vpop.f32.mrf.mxu0
    %v7800 = vadd.f32 0.0, %v7799
    %v7801 = vpop.f32.mrf.mxu0
    %7802 = vmatprep.mubr.bf16.mxu0 %v7623
    %7803 = vmatmul.mubr.bf16.gmra.mxu0 %v7622
    %v7804 = vpop.f32.mrf.mxu0
    %v7805 = vadd.f32 0.0, %v7804
    %v7806 = vpop.f32.mrf.mxu0
    %v7807 = vpop.f32.mrf.mxu0
    %v7808 = vadd.f32 0.0, %v7807
    %v7809 = vpop.f32.mrf.mxu0
    %7810 = vmatprep.mubr.bf16.mxu0 %v7626
    %7811 = vmatmul.mubr.bf16.gmra.mxu0 %v7625
    %v7812 = vpop.f32.mrf.mxu0
    %v7813 = vadd.f32 0.0, %v7812
    %v7814 = vpop.f32.mrf.mxu0
    %v7815 = vpop.f32.mrf.mxu0
    %v7816 = vadd.f32 0.0, %v7815
    %v7817 = vpop.f32.mrf.mxu0
    %7818 = vmatprep.mubr.bf16.mxu0 %v7629
    %7819 = vmatmul.mubr.bf16.gmra.mxu0 %v7628
    %v7820 = vpop.f32.mrf.mxu0
    %v7821 = vadd.f32 0.0, %v7820
    %v7822 = vpop.f32.mrf.mxu0
    %v7823 = vpop.f32.mrf.mxu0
    %v7824 = vadd.f32 0.0, %v7823
    %v7825 = vpop.f32.mrf.mxu0
    %7826 = vmatprep.mubr.bf16.mxu0 %v7632
    %7827 = vmatmul.mubr.bf16.gmra.mxu0 %v7631
    %v7828 = vpop.f32.mrf.mxu0
    %v7829 = vadd.f32 0.0, %v7828
    %v7830 = vpop.f32.mrf.mxu0
    %v7831 = vpop.f32.mrf.mxu0
    %v7832 = vadd.f32 0.0, %v7831
    %v7833 = vpop.f32.mrf.mxu0
    %7834 = vmatprep.mubr.bf16.mxu0 %v7635
    %7835 = vmatmul.mubr.bf16.gmra.mxu0 %v7634
    %v7836 = vpop.f32.mrf.mxu0
    %v7837 = vadd.f32 0.0, %v7836
    %v7838 = vpop.f32.mrf.mxu0
    %v7839 = vpop.f32.mrf.mxu0
    %v7840 = vadd.f32 0.0, %v7839
    %v7841 = vpop.f32.mrf.mxu0
    %7842 = vmatprep.mubr.bf16.mxu0 %v7638
    %7843 = vmatmul.mubr.bf16.gmra.mxu0 %v7637
    %v7844 = vpop.f32.mrf.mxu0
    %v7845 = vadd.f32 0.0, %v7844
    %v7846 = vpop.f32.mrf.mxu0
    %v7847 = vpop.f32.mrf.mxu0
    %v7848 = vadd.f32 0.0, %v7847
    %v7849 = vpop.f32.mrf.mxu0
    %7850 = vmatprep.mubr.bf16.mxu0 %v7641
    %7851 = vmatmul.mubr.bf16.gmra.mxu0 %v7640
    %v7852 = vpop.f32.mrf.mxu0
    %v7853 = vadd.f32 0.0, %v7852
    %v7854 = vpop.f32.mrf.mxu0
    %v7855 = vpop.f32.mrf.mxu0
    %v7856 = vadd.f32 0.0, %v7855
    %v7857 = vpop.f32.mrf.mxu0
    %7858 = vdwg.mxu0
    %7859 = vmatprep.subr.bf16.mxu0 0
    %7860 = vmatpush1.bf16.msra.mxu0 0
    %7861 = vmatprep.subr.bf16.mxu0 0
    %7862 = vmatpush1.bf16.msra.mxu0 0
    %7863 = vmatprep.subr.bf16.mxu0 0
    %7864 = vmatpush1.bf16.msra.mxu0 0
    %7865 = vmatprep.subr.bf16.mxu0 0
    %7866 = vmatpush1.bf16.msra.mxu0 %v7400
    %7867 = vmatprep.subr.bf16.mxu0 0
    %7868 = vmatpush1.bf16.msra.mxu0 %v7399
    %7869 = vmatprep.subr.bf16.mxu0 0
    %7870 = vmatpush1.bf16.msra.mxu0 %v7398
    %7871 = vmatprep.subr.bf16.mxu0 0
    %7872 = vmatpush1.bf16.msra.mxu0 %v7397
    %7873 = vmatprep.subr.bf16.mxu0 0
    %7874 = vmatpush1.bf16.msra.mxu0 %v7396
    %7875 = vmatprep.subr.bf16.mxu0 0
    %7876 = vmatpush2.bf16.msra.mxu0 0
    %7877 = vmatprep.subr.bf16.mxu0 0
    %7878 = vmatpush2.bf16.msra.mxu0 0
    %7879 = vmatprep.subr.bf16.mxu0 0
    %7880 = vmatpush2.bf16.msra.mxu0 0
    %7881 = vmatprep.subr.bf16.mxu0 0
    %7882 = vmatpush2.bf16.msra.mxu0 0
    %7883 = vmatprep.subr.bf16.mxu0 0
    %7884 = vmatpush2.bf16.msra.mxu0 0
    %7885 = vmatprep.subr.bf16.mxu0 0
    %7886 = vmatpush2.bf16.msra.mxu0 0
    %7887 = vmatprep.subr.bf16.mxu0 0
    %7888 = vmatpush2.bf16.msra.mxu0 0
    %7889 = vmatprep.subr.bf16.mxu0 0
    %7890 = vmatpush2.bf16.msra.mxu0 0
    %7891 = vmatprep.mubr.bf16.mxu0 0
    %7892 = vmatmul.mubr.bf16.gmra.mxu0 %v7673
    %v7893 = vpop.f32.mrf.mxu0
    %v7894 = vadd.f32 %v7749, %v7893
    %v7895 = vpop.f32.mrf.mxu0
    %v7896 = vpop.f32.mrf.mxu0
    %v7897 = vadd.f32 %v7752, %v7896
    %v7898 = vpop.f32.mrf.mxu0
    %7899 = vmatprep.mubr.bf16.mxu0 0
    %7900 = vmatmul.mubr.bf16.gmra.mxu0 %v7676
    %v7901 = vpop.f32.mrf.mxu0
    %v7902 = vadd.f32 %v7757, %v7901
    %v7903 = vpop.f32.mrf.mxu0
    %v7904 = vpop.f32.mrf.mxu0
    %v7905 = vadd.f32 %v7760, %v7904
    %v7906 = vpop.f32.mrf.mxu0
    %7907 = vmatprep.mubr.bf16.mxu0 0
    %7908 = vmatmul.mubr.bf16.gmra.mxu0 %v7679
    %v7909 = vpop.f32.mrf.mxu0
    %v7910 = vadd.f32 %v7765, %v7909
    %v7911 = vpop.f32.mrf.mxu0
    %v7912 = vpop.f32.mrf.mxu0
    %v7913 = vadd.f32 %v7768, %v7912
    %v7914 = vpop.f32.mrf.mxu0
    %7915 = vmatprep.mubr.bf16.mxu0 0
    %7916 = vmatmul.mubr.bf16.gmra.mxu0 %v7682
    %v7917 = vpop.f32.mrf.mxu0
    %v7918 = vadd.f32 %v7773, %v7917
    %v7919 = vpop.f32.mrf.mxu0
    %v7920 = vpop.f32.mrf.mxu0
    %v7921 = vadd.f32 %v7776, %v7920
    %v7922 = vpop.f32.mrf.mxu0
    %7923 = vmatprep.mubr.bf16.mxu0 0
    %7924 = vmatmul.mubr.bf16.gmra.mxu0 %v7685
    %v7925 = vpop.f32.mrf.mxu0
    %v7926 = vadd.f32 %v7781, %v7925
    %v7927 = vpop.f32.mrf.mxu0
    %v7928 = vpop.f32.mrf.mxu0
    %v7929 = vadd.f32 %v7784, %v7928
    %v7930 = vpop.f32.mrf.mxu0
    %7931 = vmatprep.mubr.bf16.mxu0 0
    %7932 = vmatmul.mubr.bf16.gmra.mxu0 %v7688
    %v7933 = vpop.f32.mrf.mxu0
    %v7934 = vadd.f32 %v7789, %v7933
    %v7935 = vpop.f32.mrf.mxu0
    %v7936 = vpop.f32.mrf.mxu0
    %v7937 = vadd.f32 %v7792, %v7936
    %v7938 = vpop.f32.mrf.mxu0
    %7939 = vmatprep.mubr.bf16.mxu0 0
    %7940 = vmatmul.mubr.bf16.gmra.mxu0 %v7691
    %v7941 = vpop.f32.mrf.mxu0
    %v7942 = vadd.f32 %v7797, %v7941
    %v7943 = vpop.f32.mrf.mxu0
    %v7944 = vpop.f32.mrf.mxu0
    %v7945 = vadd.f32 %v7800, %v7944
    %v7946 = vpop.f32.mrf.mxu0
    %7947 = vmatprep.mubr.bf16.mxu0 0
    %7948 = vmatmul.mubr.bf16.gmra.mxu0 %v7694
    %v7949 = vpop.f32.mrf.mxu0
    %v7950 = vadd.f32 %v7805, %v7949
    %v7951 = vpop.f32.mrf.mxu0
    %v7952 = vpop.f32.mrf.mxu0
    %v7953 = vadd.f32 %v7808, %v7952
    %v7954 = vpop.f32.mrf.mxu0
    %7955 = vmatprep.mubr.bf16.mxu0 0
    %7956 = vmatmul.mubr.bf16.gmra.mxu0 %v7697
    %v7957 = vpop.f32.mrf.mxu0
    %v7958 = vadd.f32 %v7813, %v7957
    %v7959 = vpop.f32.mrf.mxu0
    %v7960 = vpop.f32.mrf.mxu0
    %v7961 = vadd.f32 %v7816, %v7960
    %v7962 = vpop.f32.mrf.mxu0
    %7963 = vmatprep.mubr.bf16.mxu0 0
    %7964 = vmatmul.mubr.bf16.gmra.mxu0 %v7700
    %v7965 = vpop.f32.mrf.mxu0
    %v7966 = vadd.f32 %v7821, %v7965
    %v7967 = vpop.f32.mrf.mxu0
    %v7968 = vpop.f32.mrf.mxu0
    %v7969 = vadd.f32 %v7824, %v7968
    %v7970 = vpop.f32.mrf.mxu0
    %7971 = vmatprep.mubr.bf16.mxu0 0
    %7972 = vmatmul.mubr.bf16.gmra.mxu0 %v7703
    %v7973 = vpop.f32.mrf.mxu0
    %v7974 = vadd.f32 %v7829, %v7973
    %v7975 = vpop.f32.mrf.mxu0
    %v7976 = vpop.f32.mrf.mxu0
    %v7977 = vadd.f32 %v7832, %v7976
    %v7978 = vpop.f32.mrf.mxu0
    %7979 = vmatprep.mubr.bf16.mxu0 0
    %7980 = vmatmul.mubr.bf16.gmra.mxu0 %v7706
    %v7981 = vpop.f32.mrf.mxu0
    %v7982 = vadd.f32 %v7837, %v7981
    %v7983 = vpop.f32.mrf.mxu0
    %v7984 = vpop.f32.mrf.mxu0
    %v7985 = vadd.f32 %v7840, %v7984
    %v7986 = vpop.f32.mrf.mxu0
    %7987 = vmatprep.mubr.bf16.mxu0 0
    %7988 = vmatmul.mubr.bf16.gmra.mxu0 %v7709
    %v7989 = vpop.f32.mrf.mxu0
    %v7990 = vadd.f32 %v7845, %v7989
    %v7991 = vpop.f32.mrf.mxu0
    %v7992 = vpop.f32.mrf.mxu0
    %v7993 = vadd.f32 %v7848, %v7992
    %v7994 = vpop.f32.mrf.mxu0
    %7995 = vmatprep.mubr.bf16.mxu0 0
    %7996 = vmatmul.mubr.bf16.gmra.mxu0 %v7712
    %v7997 = vpop.f32.mrf.mxu0
    %v7998 = vadd.f32 %v7853, %v7997
    %v7999 = vpop.f32.mrf.mxu0
    %v8000 = vpop.f32.mrf.mxu0
    %v8001 = vadd.f32 %v7856, %v8000
    %v8002 = vpop.f32.mrf.mxu0
    %8003 = vdwg.mxu0
    %v8004 = vmax.f32 %v7894, %v7921
    %v8005 = vmax.f32 %v7897, %v7926
    %v8006 = vmax.f32 %v7902, %v7929
    %v8007 = vmax.f32 %v7905, %v7934
    %v8008 = vmax.f32 %v7910, %v7937
    %v8009 = vmax.f32 %v7913, %v7942
    %v8010 = vmax.f32 %v7918, %v7945
    %v8011 = vmax.f32 %v7950, %v7977
    %v8012 = vmax.f32 %v7953, %v7982
    %v8013 = vmax.f32 %v7958, %v7985
    %v8014 = vmax.f32 %v7961, %v7990
    %v8015 = vmax.f32 %v7966, %v7993
    %v8016 = vmax.f32 %v7969, %v7998
    %v8017 = vmax.f32 %v7974, %v8001
    %v8018 = vmax.f32 %v8004, %v8011
    %v8019 = vmax.f32 %v8005, %v8012
    %v8020 = vmax.f32 %v8006, %v8013
    %v8021 = vmax.f32 %v8007, %v8014
    %v8022 = vmax.f32 %v8008, %v8015
    %v8023 = vmax.f32 %v8009, %v8016
    %v8024 = vmax.f32 %v8010, %v8017
    %v8025 = vld [vmem:[%s4] sm:$0x1]
    %v8027 = vlaneseq
    %v8028 = vshrl.u32 %v8027, 7
    %v8029 = vsub.s32 0, %v8028
    %v8030 = vrot.slane %v8025, %v8029
    %v8032 = vadd.f32 %v8018, %v8030
    %v8033 = vadd.f32 %v8019, %v8030
    %v8034 = vadd.f32 %v8020, %v8030
    %v8035 = vadd.f32 %v8021, %v8030
    %v8036 = vadd.f32 %v8022, %v8030
    %v8037 = vadd.f32 %v8023, %v8030
    %v8038 = vadd.f32 %v8024, %v8030
    %v8039 = vmax.f32 %v8032, 0.0
    %v8040 = vmax.f32 %v8033, 0.0
    %v8041 = vmax.f32 %v8034, 0.0
    %v8042 = vmax.f32 %v8035, 0.0
    %v8043 = vmax.f32 %v8036, 0.0
    %v8044 = vmax.f32 %v8037, 0.0
    %v8045 = vmax.f32 %v8038, 0.0
    %v8046 = vpack.c.bf16 %v8040, %v8039
    %v8047 = vpack.c.bf16 %v8042, %v8041
    %v8048 = vpack.c.bf16 %v8044, %v8043
    %v8049 = vpack.c.bf16 %v8045, %v8045
    %vm8050 = vcmask 516096
    %8051 = vst.msk [vmem:[#allocation4] sm:$0x1] %vm8050, %v8046
    %v8054 = vunpack.c.l.s4 1966171168
    %v8055 = vunpack.c.0.s8 %v8054
    %v8056 = vlaneseq
    %v8057 = vshrl.u32 %v8056, 7
    %v8058 = vsub.s32 %v8055, %v8057
    %v8059 = vrot.slane %v8046, %v8058
    %v8060 = vcombine.high %v8059, %v8059
    %v8062 = vunpack.c.l.s4 1966171168
    %v8063 = vunpack.c.0.s8 %v8062
    %v8064 = vlaneseq
    %v8065 = vshrl.u32 %v8064, 7
    %v8066 = vsub.s32 %v8063, %v8065
    %v8067 = vrot.slane %v8059, %v8066
    %v8069 = vunpack.c.l.s4 1966171168
    %v8070 = vunpack.c.0.s8 %v8069
    %v8071 = vlaneseq
    %v8072 = vshrl.u32 %v8071, 7
    %v8073 = vsub.s32 %v8070, %v8072
    %v8074 = vrot.slane %v8060, %v8073
    %8075 = vrot.lane.b32.xlu0 %v8074, 64
    %v8076 = vpop.permute.xlu0 %8075
    %vm8078 = vcmask 1040896
    %8079 = vst.msk [vmem:[#allocation4] sm:$0x1] %vm8078, %v8076
    %v8080 = vcombine.high %v8067, %v8067
    %8082 = vst.msk [vmem:[#allocation4 + $0x1] sm:$0x1] %vm8050, %v8080
    %v8083 = vcombine.high %v8074, %v8074
    %8084 = vrot.lane.b32.xlu0 %v8083, 64
    %v8085 = vpop.permute.xlu0 %8084
    %8087 = vst.msk [vmem:[#allocation4 + $0x1] sm:$0x1] %vm8078, %v8085
    %v8088 = vcombine.high %v8046, %v8046
    %v8090 = vunpack.c.l.s4 1966171168
    %v8091 = vunpack.c.0.s8 %v8090
    %v8092 = vlaneseq
    %v8093 = vshrl.u32 %v8092, 7
    %v8094 = vsub.s32 %v8091, %v8093
    %v8095 = vrot.slane %v8088, %v8094
    %v8097 = vunpack.c.l.s4 1966171168
    %v8098 = vunpack.c.0.s8 %v8097
    %v8099 = vlaneseq
    %v8100 = vshrl.u32 %v8099, 7
    %v8101 = vsub.s32 %v8098, %v8100
    %v8102 = vrot.slane %v8095, %v8101
    %8104 = vst.msk [vmem:[#allocation4 + $0x2] sm:$0x1] %vm8050, %v8102
    %v8105 = vcombine.high %v8095, %v8095
    %v8107 = vunpack.c.l.s4 1966171168
    %v8108 = vunpack.c.0.s8 %v8107
    %v8109 = vlaneseq
    %v8110 = vshrl.u32 %v8109, 7
    %v8111 = vsub.s32 %v8108, %v8110
    %v8112 = vrot.slane %v8105, %v8111
    %8113 = vrot.lane.b32.xlu0 %v8112, 64
    %v8114 = vpop.permute.xlu0 %8113
    %8116 = vst.msk [vmem:[#allocation4 + $0x2] sm:$0x1] %vm8078, %v8114
    %v8117 = vcombine.high %v8102, %v8102
    %8119 = vst.msk [vmem:[#allocation4 + $0x3] sm:$0x1] %vm8050, %v8117
    %v8120 = vcombine.high %v8112, %v8112
    %8121 = vrot.lane.b32.xlu0 %v8120, 64
    %v8122 = vpop.permute.xlu0 %8121
    %8124 = vst.msk [vmem:[#allocation4 + $0x3] sm:$0x1] %vm8078, %v8122
    %8125 = vst.msk [vmem:[#allocation4 + $0x4] sm:$0x1] %vm8050, %v8047
    %v8128 = vunpack.c.l.s4 1966171168
    %v8129 = vunpack.c.0.s8 %v8128
    %v8130 = vlaneseq
    %v8131 = vshrl.u32 %v8130, 7
    %v8132 = vsub.s32 %v8129, %v8131
    %v8133 = vrot.slane %v8047, %v8132
    %v8134 = vcombine.high %v8133, %v8133
    %v8136 = vunpack.c.l.s4 1966171168
    %v8137 = vunpack.c.0.s8 %v8136
    %v8138 = vlaneseq
    %v8139 = vshrl.u32 %v8138, 7
    %v8140 = vsub.s32 %v8137, %v8139
    %v8141 = vrot.slane %v8133, %v8140
    %v8143 = vunpack.c.l.s4 1966171168
    %v8144 = vunpack.c.0.s8 %v8143
    %v8145 = vlaneseq
    %v8146 = vshrl.u32 %v8145, 7
    %v8147 = vsub.s32 %v8144, %v8146
    %v8148 = vrot.slane %v8134, %v8147
    %8149 = vrot.lane.b32.xlu0 %v8148, 64
    %v8150 = vpop.permute.xlu0 %8149
    %8152 = vst.msk [vmem:[#allocation4 + $0x4] sm:$0x1] %vm8078, %v8150
    %v8153 = vcombine.high %v8141, %v8141
    %8155 = vst.msk [vmem:[#allocation4 + $0x5] sm:$0x1] %vm8050, %v8153
    %v8156 = vcombine.high %v8148, %v8148
    %8157 = vrot.lane.b32.xlu0 %v8156, 64
    %v8158 = vpop.permute.xlu0 %8157
    %8160 = vst.msk [vmem:[#allocation4 + $0x5] sm:$0x1] %vm8078, %v8158
    %v8161 = vcombine.high %v8047, %v8047
    %v8163 = vunpack.c.l.s4 1966171168
    %v8164 = vunpack.c.0.s8 %v8163
    %v8165 = vlaneseq
    %v8166 = vshrl.u32 %v8165, 7
    %v8167 = vsub.s32 %v8164, %v8166
    %v8168 = vrot.slane %v8161, %v8167
    %v8170 = vunpack.c.l.s4 1966171168
    %v8171 = vunpack.c.0.s8 %v8170
    %v8172 = vlaneseq
    %v8173 = vshrl.u32 %v8172, 7
    %v8174 = vsub.s32 %v8171, %v8173
    %v8175 = vrot.slane %v8168, %v8174
    %8177 = vst.msk [vmem:[#allocation4 + $0x6] sm:$0x1] %vm8050, %v8175
    %v8178 = vcombine.high %v8168, %v8168
    %v8180 = vunpack.c.l.s4 1966171168
    %v8181 = vunpack.c.0.s8 %v8180
    %v8182 = vlaneseq
    %v8183 = vshrl.u32 %v8182, 7
    %v8184 = vsub.s32 %v8181, %v8183
    %v8185 = vrot.slane %v8178, %v8184
    %8186 = vrot.lane.b32.xlu0 %v8185, 64
    %v8187 = vpop.permute.xlu0 %8186
    %8189 = vst.msk [vmem:[#allocation4 + $0x6] sm:$0x1] %vm8078, %v8187
    %v8190 = vcombine.high %v8175, %v8175
    %8192 = vst.msk [vmem:[#allocation4 + $0x7] sm:$0x1] %vm8050, %v8190
    %v8193 = vcombine.high %v8185, %v8185
    %8194 = vrot.lane.b32.xlu0 %v8193, 64
    %v8195 = vpop.permute.xlu0 %8194
    %8197 = vst.msk [vmem:[#allocation4 + $0x7] sm:$0x1] %vm8078, %v8195
    %8198 = vst.msk [vmem:[#allocation4 + $0x8] sm:$0x1] %vm8050, %v8048
    %v8201 = vunpack.c.l.s4 1966171168
    %v8202 = vunpack.c.0.s8 %v8201
    %v8203 = vlaneseq
    %v8204 = vshrl.u32 %v8203, 7
    %v8205 = vsub.s32 %v8202, %v8204
    %v8206 = vrot.slane %v8048, %v8205
    %v8207 = vcombine.high %v8206, %v8206
    %v8209 = vunpack.c.l.s4 1966171168
    %v8210 = vunpack.c.0.s8 %v8209
    %v8211 = vlaneseq
    %v8212 = vshrl.u32 %v8211, 7
    %v8213 = vsub.s32 %v8210, %v8212
    %v8214 = vrot.slane %v8206, %v8213
    %v8216 = vunpack.c.l.s4 1966171168
    %v8217 = vunpack.c.0.s8 %v8216
    %v8218 = vlaneseq
    %v8219 = vshrl.u32 %v8218, 7
    %v8220 = vsub.s32 %v8217, %v8219
    %v8221 = vrot.slane %v8207, %v8220
    %8222 = vrot.lane.b32.xlu0 %v8221, 64
    %v8223 = vpop.permute.xlu0 %8222
    %8225 = vst.msk [vmem:[#allocation4 + $0x8] sm:$0x1] %vm8078, %v8223
    %v8226 = vcombine.high %v8214, %v8214
    %8228 = vst.msk [vmem:[#allocation4 + $0x9] sm:$0x1] %vm8050, %v8226
    %v8229 = vcombine.high %v8221, %v8221
    %8230 = vrot.lane.b32.xlu0 %v8229, 64
    %v8231 = vpop.permute.xlu0 %8230
    %8233 = vst.msk [vmem:[#allocation4 + $0x9] sm:$0x1] %vm8078, %v8231
    %v8234 = vcombine.high %v8048, %v8048
    %v8236 = vunpack.c.l.s4 1966171168
    %v8237 = vunpack.c.0.s8 %v8236
    %v8238 = vlaneseq
    %v8239 = vshrl.u32 %v8238, 7
    %v8240 = vsub.s32 %v8237, %v8239
    %v8241 = vrot.slane %v8234, %v8240
    %v8243 = vunpack.c.l.s4 1966171168
    %v8244 = vunpack.c.0.s8 %v8243
    %v8245 = vlaneseq
    %v8246 = vshrl.u32 %v8245, 7
    %v8247 = vsub.s32 %v8244, %v8246
    %v8248 = vrot.slane %v8241, %v8247
    %8250 = vst.msk [vmem:[#allocation4 + $0xa] sm:$0x1] %vm8050, %v8248
    %v8251 = vcombine.high %v8241, %v8241
    %v8253 = vunpack.c.l.s4 1966171168
    %v8254 = vunpack.c.0.s8 %v8253
    %v8255 = vlaneseq
    %v8256 = vshrl.u32 %v8255, 7
    %v8257 = vsub.s32 %v8254, %v8256
    %v8258 = vrot.slane %v8251, %v8257
    %8259 = vrot.lane.b32.xlu0 %v8258, 64
    %v8260 = vpop.permute.xlu0 %8259
    %8262 = vst.msk [vmem:[#allocation4 + $0xa] sm:$0x1] %vm8078, %v8260
    %v8263 = vcombine.high %v8248, %v8248
    %8265 = vst.msk [vmem:[#allocation4 + $0xb] sm:$0x1] %vm8050, %v8263
    %v8266 = vcombine.high %v8258, %v8258
    %8267 = vrot.lane.b32.xlu0 %v8266, 64
    %v8268 = vpop.permute.xlu0 %8267
    %8270 = vst.msk [vmem:[#allocation4 + $0xb] sm:$0x1] %vm8078, %v8268
    %8271 = vst.msk [vmem:[#allocation4 + $0xc] sm:$0x1] %vm8050, %v8049
    %v8272 = vld [vmem:[#allocation4] sm:$0xff]
    %v8273 = vld [vmem:[#allocation4 + $0x8] sm:$0x1f]
    %s8274 = smul.u32 4, 200
    %s8275 = smul.u32 %s8274, 1
    %s8276 = sshll.u32 %s8275, 4
    %8277 = dma.done %s164, %s8276
    %v8278 = vld [vmem:[#allocation6] sm:$0xf]
    %v8279 = vld [vmem:[#allocation6 + $0x4] sm:$0xf]
    %v8280 = vld [vmem:[#allocation6 + $0x8] sm:$0xf]
    %v8281 = vld [vmem:[#allocation6 + $0xc] sm:$0xf]
    %v8282 = vld [vmem:[#allocation6 + $0x10] sm:$0xf]
    %v8283 = vld [vmem:[#allocation6 + $0x14] sm:$0xf]
    %v8284 = vld [vmem:[#allocation6 + $0x18] sm:$0xf]
    %v8285 = vld [vmem:[#allocation6 + $0x1c] sm:$0xf]
    %v8286 = vld [vmem:[#allocation6 + $0x20] sm:$0xf]
    %v8287 = vld [vmem:[#allocation6 + $0x24] sm:$0xf]
    %v8288 = vld [vmem:[#allocation6 + $0x28] sm:$0xf]
    %v8289 = vld [vmem:[#allocation6 + $0x2c] sm:$0xf]
    %v8290 = vld [vmem:[#allocation6 + $0x30] sm:$0xf]
    %v8291 = vld [vmem:[#allocation6 + $0x34] sm:$0xf]
    %v8292 = vld [vmem:[#allocation6 + $0x38] sm:$0xf]
    %v8293 = vld [vmem:[#allocation6 + $0x3c] sm:$0xf]
    %v8294 = vld [vmem:[#allocation6 + $0x40] sm:$0xf]
    %v8295 = vld [vmem:[#allocation6 + $0x44] sm:$0xf]
    %v8296 = vld [vmem:[#allocation6 + $0x48] sm:$0xf]
    %v8297 = vld [vmem:[#allocation6 + $0x4c] sm:$0xf]
    %v8298 = vld [vmem:[#allocation6 + $0x50] sm:$0xf]
    %v8299 = vld [vmem:[#allocation6 + $0x54] sm:$0xf]
    %v8300 = vld [vmem:[#allocation6 + $0x58] sm:$0xf]
    %v8301 = vld [vmem:[#allocation6 + $0x5c] sm:$0xf]
    %v8302 = vld [vmem:[#allocation6 + $0x60] sm:$0xf]
    %v8303 = vld [vmem:[#allocation6 + $0x64] sm:$0xf]
    %v8304 = vld [vmem:[#allocation6 + $0x68] sm:$0xf]
    %v8305 = vld [vmem:[#allocation6 + $0x6c] sm:$0xf]
    %v8306 = vld [vmem:[#allocation6 + $0x70] sm:$0xf]
    %v8307 = vld [vmem:[#allocation6 + $0x74] sm:$0xf]
    %v8308 = vld [vmem:[#allocation6 + $0x78] sm:$0xf]
    %v8309 = vld [vmem:[#allocation6 + $0x7c] sm:$0xf]
    %v8310 = vld [vmem:[#allocation6 + $0x80] sm:$0xf]
    %v8311 = vld [vmem:[#allocation6 + $0x84] sm:$0xf]
    %v8312 = vld [vmem:[#allocation6 + $0x88] sm:$0xf]
    %v8313 = vld [vmem:[#allocation6 + $0x8c] sm:$0xf]
    %v8314 = vld [vmem:[#allocation6 + $0x90] sm:$0xf]
    %v8315 = vld [vmem:[#allocation6 + $0x94] sm:$0xf]
    %v8316 = vld [vmem:[#allocation6 + $0x98] sm:$0xf]
    %v8317 = vld [vmem:[#allocation6 + $0x9c] sm:$0xf]
    %v8318 = vld [vmem:[#allocation6 + $0xa0] sm:$0xf]
    %v8319 = vld [vmem:[#allocation6 + $0xa4] sm:$0xf]
    %v8320 = vld [vmem:[#allocation6 + $0xa8] sm:$0xf]
    %v8321 = vld [vmem:[#allocation6 + $0xac] sm:$0xf]
    %v8322 = vld [vmem:[#allocation6 + $0xb0] sm:$0xf]
    %v8323 = vld [vmem:[#allocation6 + $0xb4] sm:$0xf]
    %v8324 = vld [vmem:[#allocation6 + $0xb8] sm:$0xf]
    %v8325 = vld [vmem:[#allocation6 + $0xbc] sm:$0xf]
    %v8326 = vld [vmem:[#allocation6 + $0xc0] sm:$0xf]
    %v8327 = vld [vmem:[#allocation6 + $0xc4] sm:$0xf]
    %v8328 = vld [vmem:[#allocation6 + $0xc8] sm:$0xf]
    %v8329 = vld [vmem:[#allocation6 + $0xcc] sm:$0xf]
    %v8330 = vld [vmem:[#allocation6 + $0xd0] sm:$0xf]
    %v8331 = vld [vmem:[#allocation6 + $0xd4] sm:$0xf]
    %v8332 = vld [vmem:[#allocation6 + $0xd8] sm:$0xf]
    %v8333 = vld [vmem:[#allocation6 + $0xdc] sm:$0xf]
    %v8334 = vld [vmem:[#allocation6 + $0xe0] sm:$0xf]
    %v8335 = vld [vmem:[#allocation6 + $0xe4] sm:$0xf]
    %v8336 = vld [vmem:[#allocation6 + $0xe8] sm:$0xf]
    %v8337 = vld [vmem:[#allocation6 + $0xec] sm:$0xf]
    %v8338 = vld [vmem:[#allocation6 + $0xf0] sm:$0xf]
    %v8339 = vld [vmem:[#allocation6 + $0xf4] sm:$0xf]
    %v8340 = vld [vmem:[#allocation6 + $0xf8] sm:$0xf]
    %v8341 = vld [vmem:[#allocation6 + $0xfc] sm:$0xf]
    %v8342 = vld [vmem:[#allocation6 + $0x100] sm:$0xf]
    %v8343 = vld [vmem:[#allocation6 + $0x104] sm:$0xf]
    %v8344 = vld [vmem:[#allocation6 + $0x108] sm:$0xf]
    %v8345 = vld [vmem:[#allocation6 + $0x10c] sm:$0xf]
    %v8346 = vld [vmem:[#allocation6 + $0x110] sm:$0xf]
    %v8347 = vld [vmem:[#allocation6 + $0x114] sm:$0xf]
    %v8348 = vld [vmem:[#allocation6 + $0x118] sm:$0xf]
    %v8349 = vld [vmem:[#allocation6 + $0x11c] sm:$0xf]
    %v8350 = vld [vmem:[#allocation6 + $0x120] sm:$0xf]
    %v8351 = vld [vmem:[#allocation6 + $0x124] sm:$0xf]
    %v8352 = vld [vmem:[#allocation6 + $0x128] sm:$0xf]
    %v8353 = vld [vmem:[#allocation6 + $0x12c] sm:$0xf]
    %v8354 = vld [vmem:[#allocation6 + $0x130] sm:$0xf]
    %v8355 = vld [vmem:[#allocation6 + $0x134] sm:$0xf]
    %v8356 = vld [vmem:[#allocation6 + $0x138] sm:$0xf]
    %v8357 = vld [vmem:[#allocation6 + $0x13c] sm:$0xf]
    %v8358 = vld [vmem:[#allocation6 + $0x140] sm:$0xf]
    %v8359 = vld [vmem:[#allocation6 + $0x144] sm:$0xf]
    %v8360 = vld [vmem:[#allocation6 + $0x148] sm:$0xf]
    %v8361 = vld [vmem:[#allocation6 + $0x14c] sm:$0xf]
    %v8362 = vld [vmem:[#allocation6 + $0x150] sm:$0xf]
    %v8363 = vld [vmem:[#allocation6 + $0x154] sm:$0xf]
    %v8364 = vld [vmem:[#allocation6 + $0x158] sm:$0xf]
    %v8365 = vld [vmem:[#allocation6 + $0x15c] sm:$0xf]
    %v8366 = vld [vmem:[#allocation6 + $0x160] sm:$0xf]
    %v8367 = vld [vmem:[#allocation6 + $0x164] sm:$0xf]
    %v8368 = vld [vmem:[#allocation6 + $0x168] sm:$0xf]
    %v8369 = vld [vmem:[#allocation6 + $0x16c] sm:$0xf]
    %v8370 = vld [vmem:[#allocation6 + $0x170] sm:$0xf]
    %v8371 = vld [vmem:[#allocation6 + $0x174] sm:$0xf]
    %v8372 = vld [vmem:[#allocation6 + $0x178] sm:$0xf]
    %v8373 = vld [vmem:[#allocation6 + $0x17c] sm:$0xf]
    %v8374 = vld [vmem:[#allocation6 + $0x180] sm:$0xf]
    %v8375 = vld [vmem:[#allocation6 + $0x184] sm:$0xf]
    %v8376 = vld [vmem:[#allocation6 + $0x188] sm:$0xf]
    %v8377 = vld [vmem:[#allocation6 + $0x18c] sm:$0xf]
    %v8378 = vld [vmem:[#allocation6 + $0x190] sm:$0xf]
    %v8379 = vld [vmem:[#allocation6 + $0x194] sm:$0xf]
    %v8380 = vld [vmem:[#allocation6 + $0x198] sm:$0xf]
    %v8381 = vld [vmem:[#allocation6 + $0x19c] sm:$0xf]
    %v8382 = vld [vmem:[#allocation6 + $0x1a0] sm:$0xf]
    %v8383 = vld [vmem:[#allocation6 + $0x1a4] sm:$0xf]
    %v8384 = vld [vmem:[#allocation6 + $0x1a8] sm:$0xf]
    %v8385 = vld [vmem:[#allocation6 + $0x1ac] sm:$0xf]
    %v8386 = vld [vmem:[#allocation6 + $0x1b0] sm:$0xf]
    %v8387 = vld [vmem:[#allocation6 + $0x1b4] sm:$0xf]
    %v8388 = vld [vmem:[#allocation6 + $0x1b8] sm:$0xf]
    %v8389 = vld [vmem:[#allocation6 + $0x1bc] sm:$0xf]
    %v8390 = vld [vmem:[#allocation6 + $0x1c0] sm:$0xf]
    %v8391 = vld [vmem:[#allocation6 + $0x1c4] sm:$0xf]
    %v8392 = vld [vmem:[#allocation6 + $0x1c8] sm:$0xf]
    %v8393 = vld [vmem:[#allocation6 + $0x1cc] sm:$0xf]
    %v8394 = vld [vmem:[#allocation6 + $0x1d0] sm:$0xf]
    %v8395 = vld [vmem:[#allocation6 + $0x1d4] sm:$0xf]
    %v8396 = vld [vmem:[#allocation6 + $0x1d8] sm:$0xf]
    %v8397 = vld [vmem:[#allocation6 + $0x1dc] sm:$0xf]
    %v8398 = vld [vmem:[#allocation6 + $0x1e0] sm:$0xf]
    %v8399 = vld [vmem:[#allocation6 + $0x1e4] sm:$0xf]
    %v8400 = vld [vmem:[#allocation6 + $0x1e8] sm:$0xf]
    %v8401 = vld [vmem:[#allocation6 + $0x1ec] sm:$0xf]
    %v8402 = vld [vmem:[#allocation6 + $0x1f0] sm:$0xf]
    %v8403 = vld [vmem:[#allocation6 + $0x1f4] sm:$0xf]
    %v8404 = vld [vmem:[#allocation6 + $0x1f8] sm:$0xf]
    %v8405 = vld [vmem:[#allocation6 + $0x1fc] sm:$0xf]
    %v8406 = vld [vmem:[#allocation6 + $0x200] sm:$0xf]
    %v8407 = vld [vmem:[#allocation6 + $0x204] sm:$0xf]
    %v8408 = vld [vmem:[#allocation6 + $0x208] sm:$0xf]
    %v8409 = vld [vmem:[#allocation6 + $0x20c] sm:$0xf]
    %v8410 = vld [vmem:[#allocation6 + $0x210] sm:$0xf]
    %v8411 = vld [vmem:[#allocation6 + $0x214] sm:$0xf]
    %v8412 = vld [vmem:[#allocation6 + $0x218] sm:$0xf]
    %v8413 = vld [vmem:[#allocation6 + $0x21c] sm:$0xf]
    %v8414 = vld [vmem:[#allocation6 + $0x220] sm:$0xf]
    %v8415 = vld [vmem:[#allocation6 + $0x224] sm:$0xf]
    %v8416 = vld [vmem:[#allocation6 + $0x228] sm:$0xf]
    %v8417 = vld [vmem:[#allocation6 + $0x22c] sm:$0xf]
    %v8418 = vld [vmem:[#allocation6 + $0x230] sm:$0xf]
    %v8419 = vld [vmem:[#allocation6 + $0x234] sm:$0xf]
    %v8420 = vld [vmem:[#allocation6 + $0x238] sm:$0xf]
    %v8421 = vld [vmem:[#allocation6 + $0x23c] sm:$0xf]
    %v8422 = vld [vmem:[#allocation6 + $0x240] sm:$0xf]
    %v8423 = vld [vmem:[#allocation6 + $0x244] sm:$0xf]
    %v8424 = vld [vmem:[#allocation6 + $0x248] sm:$0xf]
    %v8425 = vld [vmem:[#allocation6 + $0x24c] sm:$0xf]
    %v8426 = vld [vmem:[#allocation6 + $0x250] sm:$0xf]
    %v8427 = vld [vmem:[#allocation6 + $0x254] sm:$0xf]
    %v8428 = vld [vmem:[#allocation6 + $0x258] sm:$0xf]
    %v8429 = vld [vmem:[#allocation6 + $0x25c] sm:$0xf]
    %v8430 = vld [vmem:[#allocation6 + $0x260] sm:$0xf]
    %v8431 = vld [vmem:[#allocation6 + $0x264] sm:$0xf]
    %v8432 = vld [vmem:[#allocation6 + $0x268] sm:$0xf]
    %v8433 = vld [vmem:[#allocation6 + $0x26c] sm:$0xf]
    %v8434 = vld [vmem:[#allocation6 + $0x270] sm:$0xf]
    %v8435 = vld [vmem:[#allocation6 + $0x274] sm:$0xf]
    %v8436 = vld [vmem:[#allocation6 + $0x278] sm:$0xf]
    %v8437 = vld [vmem:[#allocation6 + $0x27c] sm:$0xf]
    %v8438 = vld [vmem:[#allocation6 + $0x280] sm:$0xf]
    %v8439 = vld [vmem:[#allocation6 + $0x284] sm:$0xf]
    %v8440 = vld [vmem:[#allocation6 + $0x288] sm:$0xf]
    %v8441 = vld [vmem:[#allocation6 + $0x28c] sm:$0xf]
    %v8442 = vld [vmem:[#allocation6 + $0x290] sm:$0xf]
    %v8443 = vld [vmem:[#allocation6 + $0x294] sm:$0xf]
    %v8444 = vld [vmem:[#allocation6 + $0x298] sm:$0xf]
    %v8445 = vld [vmem:[#allocation6 + $0x29c] sm:$0xf]
    %v8446 = vld [vmem:[#allocation6 + $0x2a0] sm:$0xf]
    %v8447 = vld [vmem:[#allocation6 + $0x2a4] sm:$0xf]
    %v8448 = vld [vmem:[#allocation6 + $0x2a8] sm:$0xf]
    %v8449 = vld [vmem:[#allocation6 + $0x2ac] sm:$0xf]
    %v8450 = vld [vmem:[#allocation6 + $0x2b0] sm:$0xf]
    %v8451 = vld [vmem:[#allocation6 + $0x2b4] sm:$0xf]
    %v8452 = vld [vmem:[#allocation6 + $0x2b8] sm:$0xf]
    %v8453 = vld [vmem:[#allocation6 + $0x2bc] sm:$0xf]
    %v8454 = vld [vmem:[#allocation6 + $0x2c0] sm:$0xf]
    %v8455 = vld [vmem:[#allocation6 + $0x2c4] sm:$0xf]
    %v8456 = vld [vmem:[#allocation6 + $0x2c8] sm:$0xf]
    %v8457 = vld [vmem:[#allocation6 + $0x2cc] sm:$0xf]
    %v8458 = vld [vmem:[#allocation6 + $0x2d0] sm:$0xf]
    %v8459 = vld [vmem:[#allocation6 + $0x2d4] sm:$0xf]
    %v8460 = vld [vmem:[#allocation6 + $0x2d8] sm:$0xf]
    %v8461 = vld [vmem:[#allocation6 + $0x2dc] sm:$0xf]
    %v8462 = vld [vmem:[#allocation6 + $0x2e0] sm:$0xf]
    %v8463 = vld [vmem:[#allocation6 + $0x2e4] sm:$0xf]
    %v8464 = vld [vmem:[#allocation6 + $0x2e8] sm:$0xf]
    %v8465 = vld [vmem:[#allocation6 + $0x2ec] sm:$0xf]
    %v8466 = vld [vmem:[#allocation6 + $0x2f0] sm:$0xf]
    %v8467 = vld [vmem:[#allocation6 + $0x2f4] sm:$0xf]
    %v8468 = vld [vmem:[#allocation6 + $0x2f8] sm:$0xf]
    %v8469 = vld [vmem:[#allocation6 + $0x2fc] sm:$0xf]
    %v8470 = vld [vmem:[#allocation6 + $0x300] sm:$0xf]
    %v8471 = vld [vmem:[#allocation6 + $0x304] sm:$0xf]
    %v8472 = vld [vmem:[#allocation6 + $0x308] sm:$0xf]
    %v8473 = vld [vmem:[#allocation6 + $0x30c] sm:$0xf]
    %v8474 = vld [vmem:[#allocation6 + $0x310] sm:$0xf]
    %v8475 = vld [vmem:[#allocation6 + $0x314] sm:$0xf]
    %v8476 = vld [vmem:[#allocation6 + $0x318] sm:$0xf]
    %v8477 = vld [vmem:[#allocation6 + $0x31c] sm:$0xf]
    %v8478 = vld [vmem:[%s7] sm:$0x1]
    %v8480 = vlaneseq
    %v8481 = vshrl.u32 %v8480, 7
    %v8482 = vsub.s32 0, %v8481
    %v8483 = vrot.slane %v8478, %v8482
    %v8487 = vcombine.high %v8272, %v8272
    %v8489 = vunpack.c.l.s4 1966171168
    %v8490 = vunpack.c.0.s8 %v8489
    %v8491 = vlaneseq
    %v8492 = vshrl.u32 %v8491, 7
    %v8493 = vsub.s32 %v8490, %v8492
    %v8494 = vrot.slane %v8272, %v8493
    %v8496 = vunpack.c.l.s4 1966171168
    %v8497 = vunpack.c.0.s8 %v8496
    %v8498 = vlaneseq
    %v8499 = vshrl.u32 %v8498, 7
    %v8500 = vsub.s32 %v8497, %v8499
    %v8501 = vrot.slane %v8487, %v8500
    %v8502 = vcombine.high %v8494, %v8494
    %v8503 = vcombine.high %v8501, %v8501
    %v8505 = vunpack.c.l.s4 1966171168
    %v8506 = vunpack.c.0.s8 %v8505
    %v8507 = vlaneseq
    %v8508 = vshrl.u32 %v8507, 7
    %v8509 = vsub.s32 %v8506, %v8508
    %v8510 = vrot.slane %v8494, %v8509
    %v8512 = vunpack.c.l.s4 1966171168
    %v8513 = vunpack.c.0.s8 %v8512
    %v8514 = vlaneseq
    %v8515 = vshrl.u32 %v8514, 7
    %v8516 = vsub.s32 %v8513, %v8515
    %v8517 = vrot.slane %v8501, %v8516
    %v8519 = vunpack.c.l.s4 1966171168
    %v8520 = vunpack.c.0.s8 %v8519
    %v8521 = vlaneseq
    %v8522 = vshrl.u32 %v8521, 7
    %v8523 = vsub.s32 %v8520, %v8522
    %v8524 = vrot.slane %v8502, %v8523
    %v8526 = vunpack.c.l.s4 1966171168
    %v8527 = vunpack.c.0.s8 %v8526
    %v8528 = vlaneseq
    %v8529 = vshrl.u32 %v8528, 7
    %v8530 = vsub.s32 %v8527, %v8529
    %v8531 = vrot.slane %v8503, %v8530
    %v8532 = vcombine.high %v8510, %v8510
    %v8533 = vcombine.high %v8517, %v8517
    %v8534 = vcombine.high %v8524, %v8524
    %v8535 = vcombine.high %v8531, %v8531
    %v8536 = vcombine.high %v8273, %v8273
    %v8538 = vunpack.c.l.s4 1966171168
    %v8539 = vunpack.c.0.s8 %v8538
    %v8540 = vlaneseq
    %v8541 = vshrl.u32 %v8540, 7
    %v8542 = vsub.s32 %v8539, %v8541
    %v8543 = vrot.slane %v8273, %v8542
    %v8545 = vunpack.c.l.s4 1966171168
    %v8546 = vunpack.c.0.s8 %v8545
    %v8547 = vlaneseq
    %v8548 = vshrl.u32 %v8547, 7
    %v8549 = vsub.s32 %v8546, %v8548
    %v8550 = vrot.slane %v8536, %v8549
    %v8551 = vcombine.high %v8543, %v8543
    %v8553 = vunpack.c.l.s4 1966171168
    %v8554 = vunpack.c.0.s8 %v8553
    %v8555 = vlaneseq
    %v8556 = vshrl.u32 %v8555, 7
    %v8557 = vsub.s32 %v8554, %v8556
    %v8558 = vrot.slane %v8543, %v8557
    %v8560 = vunpack.c.l.s4 1966171168
    %v8561 = vunpack.c.0.s8 %v8560
    %v8562 = vlaneseq
    %v8563 = vshrl.u32 %v8562, 7
    %v8564 = vsub.s32 %v8561, %v8563
    %v8565 = vrot.slane %v8550, %v8564
    %v8567 = vunpack.c.l.s4 1966171168
    %v8568 = vunpack.c.0.s8 %v8567
    %v8569 = vlaneseq
    %v8570 = vshrl.u32 %v8569, 7
    %v8571 = vsub.s32 %v8568, %v8570
    %v8572 = vrot.slane %v8551, %v8571
    %v8573 = vcombine.high %v8558, %v8558
    %v8574 = vcombine.high %v8572, %v8572
    %v8787 = vunpack.c.l.b16 %v8278
    %v8788 = vunpack.c.l.b16 %v8279
    %v8789 = vunpack.c.l.b16 %v8280
    %v8790 = vunpack.c.l.b16 %v8281
    %v8791 = vunpack.c.l.b16 %v8282
    %v8792 = vunpack.c.l.b16 %v8283
    %v8793 = vunpack.c.l.b16 %v8284
    %v8794 = vunpack.c.l.b16 %v8285
    %v8795 = vunpack.c.l.b16 %v8286
    %v8796 = vunpack.c.l.b16 %v8287
    %v8797 = vunpack.c.l.b16 %v8288
    %v8798 = vunpack.c.l.b16 %v8289
    %v8799 = vunpack.c.l.b16 %v8290
    %v8800 = vunpack.c.l.b16 %v8291
    %v8801 = vunpack.c.l.b16 %v8292
    %v8802 = vunpack.c.l.b16 %v8293
    %v8803 = vunpack.c.l.b16 %v8294
    %v8804 = vunpack.c.l.b16 %v8295
    %v8805 = vunpack.c.l.b16 %v8296
    %v8806 = vunpack.c.l.b16 %v8297
    %v8807 = vunpack.c.l.b16 %v8298
    %v8808 = vunpack.c.l.b16 %v8299
    %v8809 = vunpack.c.l.b16 %v8300
    %v8810 = vunpack.c.l.b16 %v8301
    %v8811 = vunpack.c.l.b16 %v8302
    %v8812 = vunpack.c.l.b16 %v8303
    %v8813 = vunpack.c.l.b16 %v8304
    %v8814 = vunpack.c.l.b16 %v8305
    %v8815 = vunpack.c.l.b16 %v8306
    %v8816 = vunpack.c.l.b16 %v8307
    %v8817 = vunpack.c.l.b16 %v8308
    %v8818 = vunpack.c.l.b16 %v8309
    %v8819 = vunpack.c.l.b16 %v8310
    %v8820 = vunpack.c.l.b16 %v8311
    %v8821 = vunpack.c.l.b16 %v8312
    %v8822 = vunpack.c.l.b16 %v8313
    %v8823 = vunpack.c.l.b16 %v8314
    %v8824 = vunpack.c.l.b16 %v8315
    %v8825 = vunpack.c.l.b16 %v8316
    %v8826 = vunpack.c.l.b16 %v8317
    %v8827 = vunpack.c.l.b16 %v8318
    %v8828 = vunpack.c.l.b16 %v8319
    %v8829 = vunpack.c.l.b16 %v8320
    %v8830 = vunpack.c.l.b16 %v8321
    %v8831 = vunpack.c.l.b16 %v8322
    %v8832 = vunpack.c.l.b16 %v8323
    %v8833 = vunpack.c.l.b16 %v8324
    %v8834 = vunpack.c.l.b16 %v8325
    %v8835 = vunpack.c.l.b16 %v8326
    %v8836 = vunpack.c.l.b16 %v8327
    %v8837 = vunpack.c.l.b16 %v8328
    %v8838 = vunpack.c.l.b16 %v8329
    %v8839 = vunpack.c.l.b16 %v8330
    %v8840 = vunpack.c.l.b16 %v8331
    %v8841 = vunpack.c.l.b16 %v8332
    %v8842 = vunpack.c.l.b16 %v8333
    %v8843 = vunpack.c.l.b16 %v8334
    %v8844 = vunpack.c.l.b16 %v8335
    %v8845 = vunpack.c.l.b16 %v8336
    %v8846 = vunpack.c.l.b16 %v8337
    %v8847 = vunpack.c.l.b16 %v8338
    %v8848 = vunpack.c.l.b16 %v8339
    %v8849 = vunpack.c.l.b16 %v8340
    %v8850 = vunpack.c.l.b16 %v8341
    %v8851 = vunpack.c.l.b16 %v8342
    %v8852 = vunpack.c.l.b16 %v8343
    %v8853 = vunpack.c.l.b16 %v8344
    %v8854 = vunpack.c.l.b16 %v8345
    %v8855 = vunpack.c.l.b16 %v8346
    %v8856 = vunpack.c.l.b16 %v8347
    %v8857 = vunpack.c.l.b16 %v8348
    %v8858 = vunpack.c.l.b16 %v8349
    %v8859 = vunpack.c.l.b16 %v8350
    %v8860 = vunpack.c.l.b16 %v8351
    %v8861 = vunpack.c.l.b16 %v8352
    %v8862 = vunpack.c.l.b16 %v8353
    %v8863 = vunpack.c.l.b16 %v8354
    %v8864 = vunpack.c.l.b16 %v8355
    %v8865 = vunpack.c.l.b16 %v8356
    %v8866 = vunpack.c.l.b16 %v8357
    %v8867 = vunpack.c.l.b16 %v8358
    %v8868 = vunpack.c.l.b16 %v8359
    %v8869 = vunpack.c.l.b16 %v8360
    %v8870 = vunpack.c.l.b16 %v8361
    %v8871 = vunpack.c.l.b16 %v8362
    %v8872 = vunpack.c.l.b16 %v8363
    %v8873 = vunpack.c.l.b16 %v8364
    %v8874 = vunpack.c.l.b16 %v8365
    %v8875 = vunpack.c.l.b16 %v8366
    %v8876 = vunpack.c.l.b16 %v8367
    %v8877 = vunpack.c.l.b16 %v8368
    %v8878 = vunpack.c.l.b16 %v8369
    %v8879 = vunpack.c.l.b16 %v8370
    %v8880 = vunpack.c.l.b16 %v8371
    %v8881 = vunpack.c.l.b16 %v8372
    %v8882 = vunpack.c.l.b16 %v8373
    %v8883 = vunpack.c.l.b16 %v8374
    %v8884 = vunpack.c.l.b16 %v8375
    %v8885 = vunpack.c.l.b16 %v8376
    %v8886 = vunpack.c.l.b16 %v8377
    %v8887 = vunpack.c.l.b16 %v8378
    %v8888 = vunpack.c.l.b16 %v8379
    %v8889 = vunpack.c.l.b16 %v8380
    %v8890 = vunpack.c.l.b16 %v8381
    %v8891 = vunpack.c.l.b16 %v8382
    %v8892 = vunpack.c.l.b16 %v8383
    %v8893 = vunpack.c.l.b16 %v8384
    %v8894 = vunpack.c.l.b16 %v8385
    %v8895 = vunpack.c.l.b16 %v8386
    %v8896 = vunpack.c.l.b16 %v8387
    %v8897 = vunpack.c.l.b16 %v8388
    %v8898 = vunpack.c.l.b16 %v8389
    %v8899 = vunpack.c.l.b16 %v8390
    %v8900 = vunpack.c.l.b16 %v8391
    %v8901 = vunpack.c.l.b16 %v8392
    %v8902 = vunpack.c.l.b16 %v8393
    %v8903 = vunpack.c.l.b16 %v8394
    %v8904 = vunpack.c.l.b16 %v8395
    %v8905 = vunpack.c.l.b16 %v8396
    %v8906 = vunpack.c.l.b16 %v8397
    %v8907 = vunpack.c.l.b16 %v8398
    %v8908 = vunpack.c.l.b16 %v8399
    %v8909 = vunpack.c.l.b16 %v8400
    %v8910 = vunpack.c.l.b16 %v8401
    %v8911 = vunpack.c.l.b16 %v8402
    %v8912 = vunpack.c.l.b16 %v8403
    %v8913 = vunpack.c.l.b16 %v8404
    %v8914 = vunpack.c.l.b16 %v8405
    %v8915 = vunpack.c.l.b16 %v8406
    %v8916 = vunpack.c.l.b16 %v8407
    %v8917 = vunpack.c.l.b16 %v8408
    %v8918 = vunpack.c.l.b16 %v8409
    %v8919 = vunpack.c.l.b16 %v8410
    %v8920 = vunpack.c.l.b16 %v8411
    %v8921 = vunpack.c.l.b16 %v8412
    %v8922 = vunpack.c.l.b16 %v8413
    %v8923 = vunpack.c.l.b16 %v8414
    %v8924 = vunpack.c.l.b16 %v8415
    %v8925 = vunpack.c.l.b16 %v8416
    %v8926 = vunpack.c.l.b16 %v8417
    %v8927 = vunpack.c.l.b16 %v8418
    %v8928 = vunpack.c.l.b16 %v8419
    %v8929 = vunpack.c.l.b16 %v8420
    %v8930 = vunpack.c.l.b16 %v8421
    %v8931 = vunpack.c.l.b16 %v8422
    %v8932 = vunpack.c.l.b16 %v8423
    %v8933 = vunpack.c.l.b16 %v8424
    %v8934 = vunpack.c.l.b16 %v8425
    %v8935 = vunpack.c.l.b16 %v8426
    %v8936 = vunpack.c.l.b16 %v8427
    %v8937 = vunpack.c.l.b16 %v8428
    %v8938 = vunpack.c.l.b16 %v8429
    %v8939 = vunpack.c.l.b16 %v8430
    %v8940 = vunpack.c.l.b16 %v8431
    %v8941 = vunpack.c.l.b16 %v8432
    %v8942 = vunpack.c.l.b16 %v8433
    %v8943 = vunpack.c.l.b16 %v8434
    %v8944 = vunpack.c.l.b16 %v8435
    %v8945 = vunpack.c.l.b16 %v8436
    %v8946 = vunpack.c.l.b16 %v8437
    %v8947 = vunpack.c.l.b16 %v8438
    %v8948 = vunpack.c.l.b16 %v8439
    %v8949 = vunpack.c.l.b16 %v8440
    %v8950 = vunpack.c.l.b16 %v8441
    %v8951 = vunpack.c.l.b16 %v8442
    %v8952 = vunpack.c.l.b16 %v8443
    %v8953 = vunpack.c.l.b16 %v8444
    %v8954 = vunpack.c.l.b16 %v8445
    %v8955 = vunpack.c.l.b16 %v8446
    %v8956 = vunpack.c.l.b16 %v8447
    %v8957 = vunpack.c.l.b16 %v8448
    %v8958 = vunpack.c.l.b16 %v8449
    %v8959 = vunpack.c.l.b16 %v8450
    %v8960 = vunpack.c.l.b16 %v8451
    %v8961 = vunpack.c.l.b16 %v8452
    %v8962 = vunpack.c.l.b16 %v8453
    %v8963 = vunpack.c.l.b16 %v8454
    %v8964 = vunpack.c.l.b16 %v8455
    %v8965 = vunpack.c.l.b16 %v8456
    %v8966 = vunpack.c.l.b16 %v8457
    %v8967 = vunpack.c.l.b16 %v8458
    %v8968 = vunpack.c.l.b16 %v8459
    %v8969 = vunpack.c.l.b16 %v8460
    %v8970 = vunpack.c.l.b16 %v8461
    %v8971 = vunpack.c.l.b16 %v8462
    %v8972 = vunpack.c.l.b16 %v8463
    %v8973 = vunpack.c.l.b16 %v8464
    %v8974 = vunpack.c.l.b16 %v8465
    %v8975 = vunpack.c.l.b16 %v8466
    %v8976 = vunpack.c.l.b16 %v8467
    %v8977 = vunpack.c.l.b16 %v8468
    %v8978 = vunpack.c.l.b16 %v8469
    %v8979 = vunpack.c.l.b16 %v8470
    %v8980 = vunpack.c.l.b16 %v8471
    %v8981 = vunpack.c.l.b16 %v8472
    %v8982 = vunpack.c.l.b16 %v8473
    %v8983 = vunpack.c.l.b16 %v8474
    %v8984 = vunpack.c.l.b16 %v8475
    %v8985 = vunpack.c.l.b16 %v8476
    %v8986 = vunpack.c.l.b16 %v8477
    %v8987 = vpack.c.b16 %v8788, %v8787
    %v8988 = vpack.c.b16 %v8790, %v8789
    %v8989 = vpack.c.b16 %v8792, %v8791
    %v8990 = vpack.c.b16 %v8794, %v8793
    %v8991 = vpack.c.b16 %v8796, %v8795
    %v8992 = vpack.c.b16 %v8798, %v8797
    %v8993 = vpack.c.b16 %v8800, %v8799
    %v8994 = vpack.c.b16 %v8802, %v8801
    %v8995 = vpack.c.b16 %v8804, %v8803
    %v8996 = vpack.c.b16 %v8806, %v8805
    %v8997 = vpack.c.b16 %v8808, %v8807
    %v8998 = vpack.c.b16 %v8810, %v8809
    %v8999 = vpack.c.b16 %v8812, %v8811
    %v9000 = vpack.c.b16 %v8814, %v8813
    %v9001 = vpack.c.b16 %v8816, %v8815
    %v9002 = vpack.c.b16 %v8818, %v8817
    %v9003 = vpack.c.b16 %v8820, %v8819
    %v9004 = vpack.c.b16 %v8822, %v8821
    %v9005 = vpack.c.b16 %v8824, %v8823
    %v9006 = vpack.c.b16 %v8826, %v8825
    %v9007 = vpack.c.b16 %v8828, %v8827
    %v9008 = vpack.c.b16 %v8830, %v8829
    %v9009 = vpack.c.b16 %v8832, %v8831
    %v9010 = vpack.c.b16 %v8834, %v8833
    %v9011 = vpack.c.b16 %v8836, %v8835
    %v9012 = vpack.c.b16 %v8838, %v8837
    %v9013 = vpack.c.b16 %v8840, %v8839
    %v9014 = vpack.c.b16 %v8842, %v8841
    %v9015 = vpack.c.b16 %v8844, %v8843
    %v9016 = vpack.c.b16 %v8846, %v8845
    %v9017 = vpack.c.b16 %v8848, %v8847
    %v9018 = vpack.c.b16 %v8850, %v8849
    %v9019 = vpack.c.b16 %v8852, %v8851
    %v9020 = vpack.c.b16 %v8854, %v8853
    %v9021 = vpack.c.b16 %v8856, %v8855
    %v9022 = vpack.c.b16 %v8858, %v8857
    %v9023 = vpack.c.b16 %v8860, %v8859
    %v9024 = vpack.c.b16 %v8862, %v8861
    %v9025 = vpack.c.b16 %v8864, %v8863
    %v9026 = vpack.c.b16 %v8866, %v8865
    %v9027 = vpack.c.b16 %v8868, %v8867
    %v9028 = vpack.c.b16 %v8870, %v8869
    %v9029 = vpack.c.b16 %v8872, %v8871
    %v9030 = vpack.c.b16 %v8874, %v8873
    %v9031 = vpack.c.b16 %v8876, %v8875
    %v9032 = vpack.c.b16 %v8878, %v8877
    %v9033 = vpack.c.b16 %v8880, %v8879
    %v9034 = vpack.c.b16 %v8882, %v8881
    %v9035 = vpack.c.b16 %v8884, %v8883
    %v9036 = vpack.c.b16 %v8886, %v8885
    %v9037 = vpack.c.b16 %v8888, %v8887
    %v9038 = vpack.c.b16 %v8890, %v8889
    %v9039 = vpack.c.b16 %v8892, %v8891
    %v9040 = vpack.c.b16 %v8894, %v8893
    %v9041 = vpack.c.b16 %v8896, %v8895
    %v9042 = vpack.c.b16 %v8898, %v8897
    %v9043 = vpack.c.b16 %v8900, %v8899
    %v9044 = vpack.c.b16 %v8902, %v8901
    %v9045 = vpack.c.b16 %v8904, %v8903
    %v9046 = vpack.c.b16 %v8906, %v8905
    %v9047 = vpack.c.b16 %v8908, %v8907
    %v9048 = vpack.c.b16 %v8910, %v8909
    %v9049 = vpack.c.b16 %v8912, %v8911
    %v9050 = vpack.c.b16 %v8914, %v8913
    %v9051 = vpack.c.b16 %v8916, %v8915
    %v9052 = vpack.c.b16 %v8918, %v8917
    %v9053 = vpack.c.b16 %v8920, %v8919
    %v9054 = vpack.c.b16 %v8922, %v8921
    %v9055 = vpack.c.b16 %v8924, %v8923
    %v9056 = vpack.c.b16 %v8926, %v8925
    %v9057 = vpack.c.b16 %v8928, %v8927
    %v9058 = vpack.c.b16 %v8930, %v8929
    %v9059 = vpack.c.b16 %v8932, %v8931
    %v9060 = vpack.c.b16 %v8934, %v8933
    %v9061 = vpack.c.b16 %v8936, %v8935
    %v9062 = vpack.c.b16 %v8938, %v8937
    %v9063 = vpack.c.b16 %v8940, %v8939
    %v9064 = vpack.c.b16 %v8942, %v8941
    %v9065 = vpack.c.b16 %v8944, %v8943
    %v9066 = vpack.c.b16 %v8946, %v8945
    %v9067 = vpack.c.b16 %v8948, %v8947
    %v9068 = vpack.c.b16 %v8950, %v8949
    %v9069 = vpack.c.b16 %v8952, %v8951
    %v9070 = vpack.c.b16 %v8954, %v8953
    %v9071 = vpack.c.b16 %v8956, %v8955
    %v9072 = vpack.c.b16 %v8958, %v8957
    %v9073 = vpack.c.b16 %v8960, %v8959
    %v9074 = vpack.c.b16 %v8962, %v8961
    %v9075 = vpack.c.b16 %v8964, %v8963
    %v9076 = vpack.c.b16 %v8966, %v8965
    %v9077 = vpack.c.b16 %v8968, %v8967
    %v9078 = vpack.c.b16 %v8970, %v8969
    %v9079 = vpack.c.b16 %v8972, %v8971
    %v9080 = vpack.c.b16 %v8974, %v8973
    %v9081 = vpack.c.b16 %v8976, %v8975
    %v9082 = vpack.c.b16 %v8978, %v8977
    %v9083 = vpack.c.b16 %v8980, %v8979
    %v9084 = vpack.c.b16 %v8982, %v8981
    %v9085 = vpack.c.b16 %v8984, %v8983
    %v9086 = vpack.c.b16 %v8986, %v8985
    %vm9187 = vcmask 523264
    %v9189 = vsel %vm9187, %v8565, 0
    %9191 = vmatprep.subr.bf16.mxu0 0
    %9192 = vmatpush1.bf16.msra.mxu0 %v8994
    %9193 = vmatprep.subr.bf16.mxu0 0
    %9194 = vmatpush1.bf16.msra.mxu0 %v8993
    %9195 = vmatprep.subr.bf16.mxu0 0
    %9196 = vmatpush1.bf16.msra.mxu0 %v8992
    %9197 = vmatprep.subr.bf16.mxu0 0
    %9198 = vmatpush1.bf16.msra.mxu0 %v8991
    %9199 = vmatprep.subr.bf16.mxu0 0
    %9200 = vmatpush1.bf16.msra.mxu0 %v8990
    %9201 = vmatprep.subr.bf16.mxu0 0
    %9202 = vmatpush1.bf16.msra.mxu0 %v8989
    %9203 = vmatprep.subr.bf16.mxu0 0
    %9204 = vmatpush1.bf16.msra.mxu0 %v8988
    %9205 = vmatprep.subr.bf16.mxu0 0
    %9206 = vmatpush1.bf16.msra.mxu0 %v8987
    %9207 = vmatprep.subr.bf16.mxu0 0
    %9208 = vmatpush2.bf16.msra.mxu0 %v9002
    %9209 = vmatprep.subr.bf16.mxu0 0
    %9210 = vmatpush2.bf16.msra.mxu0 %v9001
    %9211 = vmatprep.subr.bf16.mxu0 0
    %9212 = vmatpush2.bf16.msra.mxu0 %v9000
    %9213 = vmatprep.subr.bf16.mxu0 0
    %9214 = vmatpush2.bf16.msra.mxu0 %v8999
    %9215 = vmatprep.subr.bf16.mxu0 0
    %9216 = vmatpush2.bf16.msra.mxu0 %v8998
    %9217 = vmatprep.subr.bf16.mxu0 0
    %9218 = vmatpush2.bf16.msra.mxu0 %v8997
    %9219 = vmatprep.subr.bf16.mxu0 0
    %9220 = vmatpush2.bf16.msra.mxu0 %v8996
    %9221 = vmatprep.subr.bf16.mxu0 0
    %9222 = vmatpush2.bf16.msra.mxu0 %v8995
    %9223 = vmatprep.mubr.bf16.mxu0 %v8524
    %9224 = vmatmul.mubr.bf16.gmra.mxu0 %v8510
    %v9225 = vpop.f32.mrf.mxu0
    %v9226 = vadd.f32 %v8483, %v9225
    %v9227 = vpop.f32.mrf.mxu0
    %v9228 = vpop.f32.mrf.mxu0
    %v9229 = vpop.f32.mrf.mxu0
    %9230 = vdwg.mxu0
    %9231 = vmatprep.subr.bf16.mxu0 0
    %9232 = vmatpush1.bf16.msra.mxu0 %v9010
    %9233 = vmatprep.subr.bf16.mxu0 0
    %9234 = vmatpush1.bf16.msra.mxu0 %v9009
    %9235 = vmatprep.subr.bf16.mxu0 0
    %9236 = vmatpush1.bf16.msra.mxu0 %v9008
    %9237 = vmatprep.subr.bf16.mxu0 0
    %9238 = vmatpush1.bf16.msra.mxu0 %v9007
    %9239 = vmatprep.subr.bf16.mxu0 0
    %9240 = vmatpush1.bf16.msra.mxu0 %v9006
    %9241 = vmatprep.subr.bf16.mxu0 0
    %9242 = vmatpush1.bf16.msra.mxu0 %v9005
    %9243 = vmatprep.subr.bf16.mxu0 0
    %9244 = vmatpush1.bf16.msra.mxu0 %v9004
    %9245 = vmatprep.subr.bf16.mxu0 0
    %9246 = vmatpush1.bf16.msra.mxu0 %v9003
    %9247 = vmatprep.subr.bf16.mxu0 0
    %9248 = vmatpush2.bf16.msra.mxu0 %v9018
    %9249 = vmatprep.subr.bf16.mxu0 0
    %9250 = vmatpush2.bf16.msra.mxu0 %v9017
    %9251 = vmatprep.subr.bf16.mxu0 0
    %9252 = vmatpush2.bf16.msra.mxu0 %v9016
    %9253 = vmatprep.subr.bf16.mxu0 0
    %9254 = vmatpush2.bf16.msra.mxu0 %v9015
    %9255 = vmatprep.subr.bf16.mxu0 0
    %9256 = vmatpush2.bf16.msra.mxu0 %v9014
    %9257 = vmatprep.subr.bf16.mxu0 0
    %9258 = vmatpush2.bf16.msra.mxu0 %v9013
    %9259 = vmatprep.subr.bf16.mxu0 0
    %9260 = vmatpush2.bf16.msra.mxu0 %v9012
    %9261 = vmatprep.subr.bf16.mxu0 0
    %9262 = vmatpush2.bf16.msra.mxu0 %v9011
    %9263 = vmatprep.mubr.bf16.mxu0 %v8534
    %9264 = vmatmul.mubr.bf16.gmra.mxu0 %v8532
    %v9265 = vpop.f32.mrf.mxu0
    %v9266 = vadd.f32 %v9226, %v9265
    %v9267 = vpop.f32.mrf.mxu0
    %v9268 = vpop.f32.mrf.mxu0
    %v9269 = vpop.f32.mrf.mxu0
    %9270 = vdwg.mxu0
    %9271 = vmatprep.subr.bf16.mxu0 0
    %9272 = vmatpush1.bf16.msra.mxu0 %v9026
    %9273 = vmatprep.subr.bf16.mxu0 0
    %9274 = vmatpush1.bf16.msra.mxu0 %v9025
    %9275 = vmatprep.subr.bf16.mxu0 0
    %9276 = vmatpush1.bf16.msra.mxu0 %v9024
    %9277 = vmatprep.subr.bf16.mxu0 0
    %9278 = vmatpush1.bf16.msra.mxu0 %v9023
    %9279 = vmatprep.subr.bf16.mxu0 0
    %9280 = vmatpush1.bf16.msra.mxu0 %v9022
    %9281 = vmatprep.subr.bf16.mxu0 0
    %9282 = vmatpush1.bf16.msra.mxu0 %v9021
    %9283 = vmatprep.subr.bf16.mxu0 0
    %9284 = vmatpush1.bf16.msra.mxu0 %v9020
    %9285 = vmatprep.subr.bf16.mxu0 0
    %9286 = vmatpush1.bf16.msra.mxu0 %v9019
    %9287 = vmatprep.subr.bf16.mxu0 0
    %9288 = vmatpush2.bf16.msra.mxu0 %v9034
    %9289 = vmatprep.subr.bf16.mxu0 0
    %9290 = vmatpush2.bf16.msra.mxu0 %v9033
    %9291 = vmatprep.subr.bf16.mxu0 0
    %9292 = vmatpush2.bf16.msra.mxu0 %v9032
    %9293 = vmatprep.subr.bf16.mxu0 0
    %9294 = vmatpush2.bf16.msra.mxu0 %v9031
    %9295 = vmatprep.subr.bf16.mxu0 0
    %9296 = vmatpush2.bf16.msra.mxu0 %v9030
    %9297 = vmatprep.subr.bf16.mxu0 0
    %9298 = vmatpush2.bf16.msra.mxu0 %v9029
    %9299 = vmatprep.subr.bf16.mxu0 0
    %9300 = vmatpush2.bf16.msra.mxu0 %v9028
    %9301 = vmatprep.subr.bf16.mxu0 0
    %9302 = vmatpush2.bf16.msra.mxu0 %v9027
    %9303 = vmatprep.mubr.bf16.mxu0 %v8531
    %9304 = vmatmul.mubr.bf16.gmra.mxu0 %v8517
    %v9305 = vpop.f32.mrf.mxu0
    %v9306 = vadd.f32 %v9266, %v9305
    %v9307 = vpop.f32.mrf.mxu0
    %v9308 = vpop.f32.mrf.mxu0
    %v9309 = vpop.f32.mrf.mxu0
    %9310 = vdwg.mxu0
    %9311 = vmatprep.subr.bf16.mxu0 0
    %9312 = vmatpush1.bf16.msra.mxu0 %v9042
    %9313 = vmatprep.subr.bf16.mxu0 0
    %9314 = vmatpush1.bf16.msra.mxu0 %v9041
    %9315 = vmatprep.subr.bf16.mxu0 0
    %9316 = vmatpush1.bf16.msra.mxu0 %v9040
    %9317 = vmatprep.subr.bf16.mxu0 0
    %9318 = vmatpush1.bf16.msra.mxu0 %v9039
    %9319 = vmatprep.subr.bf16.mxu0 0
    %9320 = vmatpush1.bf16.msra.mxu0 %v9038
    %9321 = vmatprep.subr.bf16.mxu0 0
    %9322 = vmatpush1.bf16.msra.mxu0 %v9037
    %9323 = vmatprep.subr.bf16.mxu0 0
    %9324 = vmatpush1.bf16.msra.mxu0 %v9036
    %9325 = vmatprep.subr.bf16.mxu0 0
    %9326 = vmatpush1.bf16.msra.mxu0 %v9035
    %9327 = vmatprep.subr.bf16.mxu0 0
    %9328 = vmatpush2.bf16.msra.mxu0 %v9050
    %9329 = vmatprep.subr.bf16.mxu0 0
    %9330 = vmatpush2.bf16.msra.mxu0 %v9049
    %9331 = vmatprep.subr.bf16.mxu0 0
    %9332 = vmatpush2.bf16.msra.mxu0 %v9048
    %9333 = vmatprep.subr.bf16.mxu0 0
    %9334 = vmatpush2.bf16.msra.mxu0 %v9047
    %9335 = vmatprep.subr.bf16.mxu0 0
    %9336 = vmatpush2.bf16.msra.mxu0 %v9046
    %9337 = vmatprep.subr.bf16.mxu0 0
    %9338 = vmatpush2.bf16.msra.mxu0 %v9045
    %9339 = vmatprep.subr.bf16.mxu0 0
    %9340 = vmatpush2.bf16.msra.mxu0 %v9044
    %9341 = vmatprep.subr.bf16.mxu0 0
    %9342 = vmatpush2.bf16.msra.mxu0 %v9043
    %9343 = vmatprep.mubr.bf16.mxu0 %v8535
    %9344 = vmatmul.mubr.bf16.gmra.mxu0 %v8533
    %v9345 = vpop.f32.mrf.mxu0
    %v9346 = vadd.f32 %v9306, %v9345
    %v9347 = vpop.f32.mrf.mxu0
    %v9348 = vpop.f32.mrf.mxu0
    %v9349 = vpop.f32.mrf.mxu0
    %9350 = vdwg.mxu0
    %9351 = vmatprep.subr.bf16.mxu0 0
    %9352 = vmatpush1.bf16.msra.mxu0 %v9058
    %9353 = vmatprep.subr.bf16.mxu0 0
    %9354 = vmatpush1.bf16.msra.mxu0 %v9057
    %9355 = vmatprep.subr.bf16.mxu0 0
    %9356 = vmatpush1.bf16.msra.mxu0 %v9056
    %9357 = vmatprep.subr.bf16.mxu0 0
    %9358 = vmatpush1.bf16.msra.mxu0 %v9055
    %9359 = vmatprep.subr.bf16.mxu0 0
    %9360 = vmatpush1.bf16.msra.mxu0 %v9054
    %9361 = vmatprep.subr.bf16.mxu0 0
    %9362 = vmatpush1.bf16.msra.mxu0 %v9053
    %9363 = vmatprep.subr.bf16.mxu0 0
    %9364 = vmatpush1.bf16.msra.mxu0 %v9052
    %9365 = vmatprep.subr.bf16.mxu0 0
    %9366 = vmatpush1.bf16.msra.mxu0 %v9051
    %9367 = vmatprep.subr.bf16.mxu0 0
    %9368 = vmatpush2.bf16.msra.mxu0 %v9066
    %9369 = vmatprep.subr.bf16.mxu0 0
    %9370 = vmatpush2.bf16.msra.mxu0 %v9065
    %9371 = vmatprep.subr.bf16.mxu0 0
    %9372 = vmatpush2.bf16.msra.mxu0 %v9064
    %9373 = vmatprep.subr.bf16.mxu0 0
    %9374 = vmatpush2.bf16.msra.mxu0 %v9063
    %9375 = vmatprep.subr.bf16.mxu0 0
    %9376 = vmatpush2.bf16.msra.mxu0 %v9062
    %9377 = vmatprep.subr.bf16.mxu0 0
    %9378 = vmatpush2.bf16.msra.mxu0 %v9061
    %9379 = vmatprep.subr.bf16.mxu0 0
    %9380 = vmatpush2.bf16.msra.mxu0 %v9060
    %9381 = vmatprep.subr.bf16.mxu0 0
    %9382 = vmatpush2.bf16.msra.mxu0 %v9059
    %9383 = vmatprep.mubr.bf16.mxu0 %v8572
    %9384 = vmatmul.mubr.bf16.gmra.mxu0 %v8558
    %v9385 = vpop.f32.mrf.mxu0
    %v9386 = vadd.f32 %v9346, %v9385
    %v9387 = vpop.f32.mrf.mxu0
    %v9388 = vpop.f32.mrf.mxu0
    %v9389 = vpop.f32.mrf.mxu0
    %9390 = vdwg.mxu0
    %9391 = vmatprep.subr.bf16.mxu0 0
    %9392 = vmatpush1.bf16.msra.mxu0 %v9074
    %9393 = vmatprep.subr.bf16.mxu0 0
    %9394 = vmatpush1.bf16.msra.mxu0 %v9073
    %9395 = vmatprep.subr.bf16.mxu0 0
    %9396 = vmatpush1.bf16.msra.mxu0 %v9072
    %9397 = vmatprep.subr.bf16.mxu0 0
    %9398 = vmatpush1.bf16.msra.mxu0 %v9071
    %9399 = vmatprep.subr.bf16.mxu0 0
    %9400 = vmatpush1.bf16.msra.mxu0 %v9070
    %9401 = vmatprep.subr.bf16.mxu0 0
    %9402 = vmatpush1.bf16.msra.mxu0 %v9069
    %9403 = vmatprep.subr.bf16.mxu0 0
    %9404 = vmatpush1.bf16.msra.mxu0 %v9068
    %9405 = vmatprep.subr.bf16.mxu0 0
    %9406 = vmatpush1.bf16.msra.mxu0 %v9067
    %9407 = vmatprep.subr.bf16.mxu0 0
    %9408 = vmatpush2.bf16.msra.mxu0 %v9082
    %9409 = vmatprep.subr.bf16.mxu0 0
    %9410 = vmatpush2.bf16.msra.mxu0 %v9081
    %9411 = vmatprep.subr.bf16.mxu0 0
    %9412 = vmatpush2.bf16.msra.mxu0 %v9080
    %9413 = vmatprep.subr.bf16.mxu0 0
    %9414 = vmatpush2.bf16.msra.mxu0 %v9079
    %9415 = vmatprep.subr.bf16.mxu0 0
    %9416 = vmatpush2.bf16.msra.mxu0 %v9078
    %9417 = vmatprep.subr.bf16.mxu0 0
    %9418 = vmatpush2.bf16.msra.mxu0 %v9077
    %9419 = vmatprep.subr.bf16.mxu0 0
    %9420 = vmatpush2.bf16.msra.mxu0 %v9076
    %9421 = vmatprep.subr.bf16.mxu0 0
    %9422 = vmatpush2.bf16.msra.mxu0 %v9075
    %9423 = vmatprep.mubr.bf16.mxu0 %v8574
    %9424 = vmatmul.mubr.bf16.gmra.mxu0 %v8573
    %v9425 = vpop.f32.mrf.mxu0
    %v9426 = vadd.f32 %v9386, %v9425
    %v9427 = vpop.f32.mrf.mxu0
    %v9428 = vpop.f32.mrf.mxu0
    %v9429 = vpop.f32.mrf.mxu0
    %9430 = vdwg.mxu0
    %9431 = vmatprep.subr.bf16.mxu0 0
    %9432 = vmatpush1.bf16.msra.mxu0 0
    %9433 = vmatprep.subr.bf16.mxu0 0
    %9434 = vmatpush1.bf16.msra.mxu0 0
    %9435 = vmatprep.subr.bf16.mxu0 0
    %9436 = vmatpush1.bf16.msra.mxu0 0
    %9437 = vmatprep.subr.bf16.mxu0 0
    %9438 = vmatpush1.bf16.msra.mxu0 0
    %9439 = vmatprep.subr.bf16.mxu0 0
    %9440 = vmatpush1.bf16.msra.mxu0 %v9086
    %9441 = vmatprep.subr.bf16.mxu0 0
    %9442 = vmatpush1.bf16.msra.mxu0 %v9085
    %9443 = vmatprep.subr.bf16.mxu0 0
    %9444 = vmatpush1.bf16.msra.mxu0 %v9084
    %9445 = vmatprep.subr.bf16.mxu0 0
    %9446 = vmatpush1.bf16.msra.mxu0 %v9083
    %9447 = vmatprep.subr.bf16.mxu0 0
    %9448 = vmatpush2.bf16.msra.mxu0 0
    %9449 = vmatprep.subr.bf16.mxu0 0
    %9450 = vmatpush2.bf16.msra.mxu0 0
    %9451 = vmatprep.subr.bf16.mxu0 0
    %9452 = vmatpush2.bf16.msra.mxu0 0
    %9453 = vmatprep.subr.bf16.mxu0 0
    %9454 = vmatpush2.bf16.msra.mxu0 0
    %9455 = vmatprep.subr.bf16.mxu0 0
    %9456 = vmatpush2.bf16.msra.mxu0 0
    %9457 = vmatprep.subr.bf16.mxu0 0
    %9458 = vmatpush2.bf16.msra.mxu0 0
    %9459 = vmatprep.subr.bf16.mxu0 0
    %9460 = vmatpush2.bf16.msra.mxu0 0
    %9461 = vmatprep.subr.bf16.mxu0 0
    %9462 = vmatpush2.bf16.msra.mxu0 0
    %9463 = vmatprep.mubr.bf16.mxu0 0
    %9464 = vmatmul.mubr.bf16.gmra.mxu0 %v9189
    %v9465 = vpop.f32.mrf.mxu0
    %v9466 = vadd.f32 %v9426, %v9465
    %v9467 = vpop.f32.mrf.mxu0
    %v9468 = vpop.f32.mrf.mxu0
    %v9469 = vpop.f32.mrf.mxu0
    %9470 = vdwg.mxu0
    %v9471 = vmax.f32 %v9466, 0.0
    %v9472 = vpack.c.bf16 %v9471, %v9471
    %v9473 = vld [vmem:[%s8] sm:$0xf]
    %v9474 = vld [vmem:[%s8 + $0x4] sm:$0xf]
    %v9475 = vld [vmem:[%s8 + $0x8] sm:$0xf]
    %v9476 = vld [vmem:[%s8 + $0xc] sm:$0xf]
    %v9477 = vld [vmem:[%s8 + $0x10] sm:$0xf]
    %v9478 = vld [vmem:[%s8 + $0x14] sm:$0xf]
    %v9479 = vld [vmem:[%s8 + $0x18] sm:$0xf]
    %v9480 = vld [vmem:[%s8 + $0x1c] sm:$0xf]
    %v9481 = vld [vmem:[%s8 + $0x20] sm:$0xf]
    %v9482 = vld [vmem:[%s8 + $0x24] sm:$0xf]
    %v9483 = vld [vmem:[%s8 + $0x28] sm:$0xf]
    %v9484 = vld [vmem:[%s8 + $0x2c] sm:$0xf]
    %v9485 = vld [vmem:[%s8 + $0x30] sm:$0xf]
    %v9486 = vld [vmem:[%s8 + $0x34] sm:$0xf]
    %v9487 = vld [vmem:[%s8 + $0x38] sm:$0xf]
    %v9488 = vld [vmem:[%s8 + $0x3c] sm:$0xf]
    %v9489 = vld [vmem:[%s9] sm:$0x1]
    %v9491 = vlaneseq
    %v9492 = vshrl.u32 %v9491, 7
    %v9493 = vsub.s32 0, %v9492
    %v9494 = vrot.slane %v9489, %v9493
    %v9512 = vunpack.c.l.b16 %v9473
    %v9513 = vunpack.c.l.b16 %v9474
    %v9514 = vunpack.c.l.b16 %v9475
    %v9515 = vunpack.c.l.b16 %v9476
    %v9516 = vunpack.c.l.b16 %v9477
    %v9517 = vunpack.c.l.b16 %v9478
    %v9518 = vunpack.c.l.b16 %v9479
    %v9519 = vunpack.c.l.b16 %v9480
    %v9520 = vunpack.c.l.b16 %v9481
    %v9521 = vunpack.c.l.b16 %v9482
    %v9522 = vunpack.c.l.b16 %v9483
    %v9523 = vunpack.c.l.b16 %v9484
    %v9524 = vunpack.c.l.b16 %v9485
    %v9525 = vunpack.c.l.b16 %v9486
    %v9526 = vunpack.c.l.b16 %v9487
    %v9527 = vunpack.c.l.b16 %v9488
    %v9528 = vpack.c.b16 %v9513, %v9512
    %v9529 = vpack.c.b16 %v9515, %v9514
    %v9530 = vpack.c.b16 %v9517, %v9516
    %v9531 = vpack.c.b16 %v9519, %v9518
    %v9532 = vpack.c.b16 %v9521, %v9520
    %v9533 = vpack.c.b16 %v9523, %v9522
    %v9534 = vpack.c.b16 %v9525, %v9524
    %v9535 = vpack.c.b16 %v9527, %v9526
    %9544 = vmatprep.subr.bf16.mxu0 0
    %9545 = vmatpush1.bf16.msra.mxu0 %v9535
    %9546 = vmatprep.subr.bf16.mxu0 0
    %9547 = vmatpush1.bf16.msra.mxu0 %v9534
    %9548 = vmatprep.subr.bf16.mxu0 0
    %9549 = vmatpush1.bf16.msra.mxu0 %v9533
    %9550 = vmatprep.subr.bf16.mxu0 0
    %9551 = vmatpush1.bf16.msra.mxu0 %v9532
    %9552 = vmatprep.subr.bf16.mxu0 0
    %9553 = vmatpush1.bf16.msra.mxu0 %v9531
    %9554 = vmatprep.subr.bf16.mxu0 0
    %9555 = vmatpush1.bf16.msra.mxu0 %v9530
    %9556 = vmatprep.subr.bf16.mxu0 0
    %9557 = vmatpush1.bf16.msra.mxu0 %v9529
    %9558 = vmatprep.subr.bf16.mxu0 0
    %9559 = vmatpush1.bf16.msra.mxu0 %v9528
    %9560 = vmatprep.subr.bf16.mxu0 0
    %9561 = vmatpush2.bf16.msra.mxu0 0
    %9562 = vmatprep.subr.bf16.mxu0 0
    %9563 = vmatpush2.bf16.msra.mxu0 0
    %9564 = vmatprep.subr.bf16.mxu0 0
    %9565 = vmatpush2.bf16.msra.mxu0 0
    %9566 = vmatprep.subr.bf16.mxu0 0
    %9567 = vmatpush2.bf16.msra.mxu0 0
    %9568 = vmatprep.subr.bf16.mxu0 0
    %9569 = vmatpush2.bf16.msra.mxu0 0
    %9570 = vmatprep.subr.bf16.mxu0 0
    %9571 = vmatpush2.bf16.msra.mxu0 0
    %9572 = vmatprep.subr.bf16.mxu0 0
    %9573 = vmatpush2.bf16.msra.mxu0 0
    %9574 = vmatprep.subr.bf16.mxu0 0
    %9575 = vmatpush2.bf16.msra.mxu0 0
    %9576 = vmatprep.mubr.bf16.mxu0 0
    %9577 = vmatmul.mubr.bf16.gmra.mxu0 %v9472
    %v9578 = vpop.f32.mrf.mxu0
    %v9579 = vadd.f32 %v9494, %v9578
    %v9580 = vpop.f32.mrf.mxu0
    %v9581 = vpop.f32.mrf.mxu0
    %v9582 = vpop.f32.mrf.mxu0
    %9583 = vdwg.mxu0
    %v9584 = vmax.f32 %v9579, 0.0
    %v9585 = vpack.c.bf16 %v9584, %v9584
    %v9586 = vld [vmem:[%s10] sm:$0xf]
    %v9587 = vld [vmem:[%s10 + $0x4] sm:$0xf]
    %v9588 = vld [vmem:[%s10 + $0x8] sm:$0xf]
    %v9589 = vld [vmem:[%s10 + $0xc] sm:$0xf]
    %v9590 = vld [vmem:[%s10 + $0x10] sm:$0xf]
    %v9591 = vld [vmem:[%s10 + $0x14] sm:$0xf]
    %v9592 = vld [vmem:[%s10 + $0x18] sm:$0xf]
    %v9593 = vld [vmem:[%s10 + $0x1c] sm:$0xf]
    %v9594 = vld [vmem:[%s10 + $0x20] sm:$0xf]
    %v9595 = vld [vmem:[%s10 + $0x24] sm:$0xf]
    %v9596 = vld [vmem:[%s10 + $0x28] sm:$0xf]
    %v9597 = vld [vmem:[%s10 + $0x2c] sm:$0xf]
    %v9598 = vld [vmem:[%s10 + $0x30] sm:$0xf]
    %v9599 = vld [vmem:[%s10 + $0x34] sm:$0xf]
    %v9600 = vld [vmem:[%s10 + $0x38] sm:$0xf]
    %v9601 = vld [vmem:[%s10 + $0x3c] sm:$0xf]
    %v9602 = vld [vmem:[%s11] sm:$0x1]
    %v9604 = vlaneseq
    %v9605 = vshrl.u32 %v9604, 7
    %v9606 = vsub.s32 0, %v9605
    %v9607 = vrot.slane %v9602, %v9606
    %v9625 = vunpack.c.l.b16 %v9586
    %v9626 = vunpack.c.l.b16 %v9587
    %v9627 = vunpack.c.l.b16 %v9588
    %v9628 = vunpack.c.l.b16 %v9589
    %v9629 = vunpack.c.l.b16 %v9590
    %v9630 = vunpack.c.l.b16 %v9591
    %v9631 = vunpack.c.l.b16 %v9592
    %v9632 = vunpack.c.l.b16 %v9593
    %v9633 = vunpack.c.l.b16 %v9594
    %v9634 = vunpack.c.l.b16 %v9595
    %v9635 = vunpack.c.l.b16 %v9596
    %v9636 = vunpack.c.l.b16 %v9597
    %v9637 = vunpack.c.l.b16 %v9598
    %v9638 = vunpack.c.l.b16 %v9599
    %v9639 = vunpack.c.l.b16 %v9600
    %v9640 = vunpack.c.l.b16 %v9601
    %v9641 = vpack.c.b16 %v9626, %v9625
    %v9642 = vpack.c.b16 %v9628, %v9627
    %v9643 = vpack.c.b16 %v9630, %v9629
    %v9644 = vpack.c.b16 %v9632, %v9631
    %v9645 = vpack.c.b16 %v9634, %v9633
    %v9646 = vpack.c.b16 %v9636, %v9635
    %v9647 = vpack.c.b16 %v9638, %v9637
    %v9648 = vpack.c.b16 %v9640, %v9639
    %9657 = vmatprep.subr.bf16.mxu0 0
    %9658 = vmatpush1.bf16.msra.mxu0 %v9648
    %9659 = vmatprep.subr.bf16.mxu0 0
    %9660 = vmatpush1.bf16.msra.mxu0 %v9647
    %9661 = vmatprep.subr.bf16.mxu0 0
    %9662 = vmatpush1.bf16.msra.mxu0 %v9646
    %9663 = vmatprep.subr.bf16.mxu0 0
    %9664 = vmatpush1.bf16.msra.mxu0 %v9645
    %9665 = vmatprep.subr.bf16.mxu0 0
    %9666 = vmatpush1.bf16.msra.mxu0 %v9644
    %9667 = vmatprep.subr.bf16.mxu0 0
    %9668 = vmatpush1.bf16.msra.mxu0 %v9643
    %9669 = vmatprep.subr.bf16.mxu0 0
    %9670 = vmatpush1.bf16.msra.mxu0 %v9642
    %9671 = vmatprep.subr.bf16.mxu0 0
    %9672 = vmatpush1.bf16.msra.mxu0 %v9641
    %9673 = vmatprep.subr.bf16.mxu0 0
    %9674 = vmatpush2.bf16.msra.mxu0 0
    %9675 = vmatprep.subr.bf16.mxu0 0
    %9676 = vmatpush2.bf16.msra.mxu0 0
    %9677 = vmatprep.subr.bf16.mxu0 0
    %9678 = vmatpush2.bf16.msra.mxu0 0
    %9679 = vmatprep.subr.bf16.mxu0 0
    %9680 = vmatpush2.bf16.msra.mxu0 0
    %9681 = vmatprep.subr.bf16.mxu0 0
    %9682 = vmatpush2.bf16.msra.mxu0 0
    %9683 = vmatprep.subr.bf16.mxu0 0
    %9684 = vmatpush2.bf16.msra.mxu0 0
    %9685 = vmatprep.subr.bf16.mxu0 0
    %9686 = vmatpush2.bf16.msra.mxu0 0
    %9687 = vmatprep.subr.bf16.mxu0 0
    %9688 = vmatpush2.bf16.msra.mxu0 0
    %9689 = vmatprep.mubr.bf16.mxu0 0
    %9690 = vmatmul.mubr.bf16.gmra.mxu0 %v9585
    %v9691 = vpop.f32.mrf.mxu0
    %v9692 = vadd.f32 %v9607, %v9691
    %v9693 = vpop.f32.mrf.mxu0
    %v9694 = vpop.f32.mrf.mxu0
    %v9695 = vpop.f32.mrf.mxu0
    %9696 = vdwg.mxu0
    %9697 = vst [vmem:[#allocation8] sm:$0x3] %v9692
    // Predicated region
    $region110: #{classifier_cnn_cifar_forward.1} parent=1 // pred_check
      _
    $region111: #{classifier_cnn_cifar_forward.1} parent=1 // pred_check_branch
      %9699 = sbr.rel (0) target = $region113
    $region112: #{classifier_cnn_cifar_forward.1} parent=1 // pred_region
      %s9701 = ssub.s32 32, 32
      %9702 = vsyncadd [#allocation9], %s9701
      %s9704 = sshll.u32 [#allocation8], 4
      %s9705 = int_to_ptr.vmem [resolvable:$true] %s9704
      %9707 = dma.vmem_to_hbm [thread:$0]  %s9705, 32, %s12, [#allocation9]
    $region113: #{classifier_cnn_cifar_forward.1} parent=1 // pred_fallthru
      _
    // Predicated region
    $region114: #{classifier_cnn_cifar_forward.1} parent=1 // pred_check
      _
    $region115: #{classifier_cnn_cifar_forward.1} parent=1 // pred_check_branch
      %9709 = sbr.rel (0) target = $region117
    $region116: #{classifier_cnn_cifar_forward.1} parent=1 // pred_region
      %9710 = dma.done [#allocation9], 32
    $region117: #{classifier_cnn_cifar_forward.1} parent=1 // pred_fallthru
      _
    %9711 = vsyncpa [#allocation9], 1
  %9712 = vsyncmov [#allocation7]
  %s9713 = vpop.sfrf %9712
  %p9714 = scmp.eq.s32.totalorder %s9713, 0
  %p9715 = pneg %p9714
  %9717 = shalt.err (%p9715)
  %s9718 = scalar_lea.sflag [#allocation7], 1
  %9719 = vsyncmov %s9718
  %s9720 = vpop.sfrf %9719
  %p9721 = scmp.eq.s32.totalorder %s9720, 0
  %p9722 = pneg %p9721
  %9724 = shalt.err (%p9722)

</llo_original>
